<compile_context>
chip_gen: v6e
topology: v6e:2x2x1
jax: 0.10.0
libtpu: 0.0.40
codegen_flags: <defaults>
</compile_context>

<pallas_src>
import functools

import jax
import jax.numpy as jnp
from jax.experimental import pallas as pl
from jax.experimental.pallas import tpu as pltpu

_VMEM_LIMIT = 32 * 1024 * 1024   # explicit scoped-VMEM budget, safe on v5e..v7x
_COUT = 32                       # stem conv output channels


# ----------------------------------------------------------------------------
# small host-side helpers
# ----------------------------------------------------------------------------
def _epilogue_dtype():
    """bf16 SiLU/exp epilogue on chips with a bf16 VPU/EUP (v6e/v7x); f32 otherwise."""
    try:
        kind = jax.devices()[0].device_kind.lower()
    except Exception:
        return jnp.float32
    if "v6" in kind or "v7" in kind or "7x" in kind:
        return jnp.bfloat16
    return jnp.float32


def _choose_tw(OW):
    for cand in (4, 2, 1):        # TW=4 -> N_tile = 128 lanes (one full lane tile)
        if OW % cand == 0:
            return cand
    return 1


def _pick_batch_tile(B, rows_per_item, target_m=256):
    """Batch tile that keeps block sublane dims legal (== B or a multiple of 8)."""
    cands = [d for d in range(1, B + 1) if B % d == 0 and (d == B or d % 8 == 0)]
    return min(cands, key=lambda d: abs(d * rows_per_item - target_m))


# ----------------------------------------------------------------------------
# Kernel 1: block-banded stem conv + folded BN + SiLU + scaled global-avg-pool
# ----------------------------------------------------------------------------
def _stem_kernel(x_ref, w_ref, scale_ref, shift_ref, o_ref, *, bt, oh, inv_hw, edt):
    # x_ref:     (1, 1, bt*oh, K) bf16 -- batch tile of per-output-row input windows
    # w_ref:     (K, TW*Cout)     bf16 -- block-banded stem weights (shared by all tiles)
    # scale_ref: (1, TW*Cout)     f32  -- folded BN scale, tiled across the TW columns
    # shift_ref: (1, TW*Cout)     f32
    # o_ref:     (bt, TW*Cout)    bf16 -- per-image GAP-scaled row sums for this ow tile
    x = x_ref[0, 0]                                                  # (bt*oh, K)
    acc = jnp.dot(x, w_ref[...], preferred_element_type=jnp.float32)
    y = acc * scale_ref[...] + shift_ref[...]                        # folded BN, f32
    e = jnp.exp(-(y.astype(edt)))                                    # EUP exp (bf16 on v6e/v7x)
    sig = pl.reciprocal(1.0 + e.astype(jnp.float32), approx=True)    # EUP reciprocal, f32
    s = y * sig                                                      # SiLU, f32
    # Per-image partial GAP: sum over the OH rows of each image in the batch tile and
    # apply the full 1/(OH*OW) mean here (the sum over OW is folded into proj_w).
    for b in range(bt):                                              # 8-aligned static slices
        seg = s[b * oh:(b + 1) * oh, :]
        o_ref[b:b + 1, :] = (jnp.sum(seg, axis=0, keepdims=True) * inv_hw).astype(o_ref.dtype)


def stem_conv_gap(lhs, band, scale, shift, *, B, OW, bt, edt):
    """lhs: (B//bt, OW//TW, bt*OH, K) bf16 -> (B, OW*32) bf16 GAP-scaled row-pooled features."""
    n_bt, n_owt, M, K = lhs.shape
    N = band.shape[1]
    oh = M // bt
    inv_hw = 1.0 / float(oh * OW)
    cost = pl.CostEstimate(
        flops=int(2 * n_bt * n_owt * M * K * N),
        transcendentals=int(2 * n_bt * n_owt * M * N),
        bytes_accessed=int(lhs.size * 2 + band.size * 2 + scale.size * 4
                           + shift.size * 4 + B * OW * _COUT * 2),
    )
    return pl.pallas_call(
        functools.partial(_stem_kernel, bt=bt, oh=oh, inv_hw=inv_hw, edt=edt),
        grid=(n_bt, n_owt),
        in_specs=[
            pl.BlockSpec((1, 1, M, K), lambda i, j: (i, j, 0, 0)),
            pl.BlockSpec((K, N), lambda i, j: (0, 0)),     # grid-invariant, VMEM-resident
            pl.BlockSpec((1, N), lambda i, j: (0, 0)),
            pl.BlockSpec((1, N), lambda i, j: (0, 0)),
        ],
        out_specs=pl.BlockSpec((bt, N), lambda i, j: (i, j)),   # lane-dense (128-wide) blocks
        out_shape=jax.ShapeDtypeStruct((B, OW * _COUT), jnp.bfloat16),
        compiler_params=pltpu.CompilerParams(
            dimension_semantics=("parallel", "parallel"),
            vmem_limit_bytes=_VMEM_LIMIT),
        cost_estimate=cost,
    )(lhs, band, scale, shift)


# ----------------------------------------------------------------------------
# Kernel 2: entire post-stem graph, fused, gridded over batch tiles
# ----------------------------------------------------------------------------
def _tail_kernel(feat_ref, meta_ref, tgt_ref,
                 proj_w_ref, proj_b_ref, fc_w_ref, fc_b_ref,
                 tab1_w_ref, tab1_s_ref, tab1_t_ref,
                 tab2_w_ref, tab2_s_ref, tab2_t_ref,
                 out1_wi_ref, out1_wt_ref, out1_s_ref, out1_t_ref,
                 head_w_ref, head_b_ref,
                 logit_ref, bce_ref, *, edt):
    f32, bf16 = jnp.float32, jnp.bfloat16

    def silu(v):                                   # v: f32; exp rides the EUP slot
        e = jnp.exp(-(v.astype(edt)))
        return v * pl.reciprocal(1.0 + e.astype(f32), approx=True)

    # image branch: (GAP o proj stand-in) -> SiLU -> replaced _fc Linear(1280, 512)
    h = jnp.dot(feat_ref[...], proj_w_ref[...], preferred_element_type=f32) + proj_b_ref[...]
    x1 = jnp.dot(silu(h).astype(bf16), fc_w_ref[...],
                 preferred_element_type=f32) + fc_b_ref[...]                       # (bt, 512)

    # tabular branch (Dropout = identity in eval); K=4 matmul done as 4 VPU FMAs,
    # Linear bias folded into the BN shift.
    m = meta_ref[...]                                                              # (bt, 4) f32
    w1 = tab1_w_ref[...]                                                           # (4, 256) f32
    t = (m[:, 0:1] * w1[0:1, :] + m[:, 1:2] * w1[1:2, :]
         + m[:, 2:3] * w1[2:3, :] + m[:, 3:4] * w1[3:4, :])
    t = jnp.maximum(t * tab1_s_ref[...] + tab1_t_ref[...], 0.0)                    # BN + ReLU
    t = jnp.dot(t.astype(bf16), tab2_w_ref[...], preferred_element_type=f32)
    x2 = jnp.maximum(t * tab2_s_ref[...] + tab2_t_ref[...], 0.0)                   # (bt, 256)

    # fusion: concat([x1, x2]) @ W_out1 as two partial matmuls into one f32 accumulator
    y = jnp.dot(x1.astype(bf16), out1_wi_ref[...], preferred_element_type=f32)
    y = y + jnp.dot(x2.astype(bf16), out1_wt_ref[...], preferred_element_type=f32)
    x4 = jnp.maximum(y * out1_s_ref[...] + out1_t_ref[...], 0.0)                   # (bt, 1024)

    # final Linear(1024, 1) as an f32 lane reduce + numerically-stable per-sample BCE
    z = jnp.sum(x4 * head_w_ref[...], axis=-1, keepdims=True) + head_b_ref[...]    # (bt, 1)
    logit_ref[...] = z
    tgt = tgt_ref[...]
    bce_ref[...] = jnp.maximum(z, 0.0) - z * tgt + jnp.log1p(jnp.exp(-jnp.abs(z)))


def fused_tail(feat, metadata, targets, kp, *, bt, edt):
    B, OWC = feat.shape
    f32 = jnp.float32
    meta = metadata.astype(f32)
    tgt = targets.reshape(B, 1).astype(f32)

    weights = [kp["proj_w"], kp["proj_b"], kp["fc_w"], kp["fc_b"],
               kp["tab1_w"], kp["tab1_scale"], kp["tab1_shift"],
               kp["tab2_w"], kp["tab2_scale"], kp["tab2_shift"],
               kp["out1_w_img"], kp["out1_w_tab"], kp["out1_scale"], kp["out1_shift"],
               kp["head_w"], kp["head_b"]]

    def wspec(w):                 # whole (2-D) weight resident in VMEM, grid-invariant
        return pl.BlockSpec(w.shape, lambda i: (0, 0))

    in_specs = ([pl.BlockSpec((bt, OWC), lambda i: (i, 0)),
                 pl.BlockSpec((bt, 4), lambda i: (i, 0)),
                 pl.BlockSpec((bt, 1), lambda i: (i, 0))]
                + [wspec(w) for w in weights])

    cost = pl.CostEstimate(
        flops=int(2 * B * (OWC * 1280 + 1280 * 512 + 4 * 256 + 256 * 256
                           + 512 * 1024 + 256 * 1024 + 1024)),
        transcendentals=int(B * (1280 + 2)),
        bytes_accessed=int(sum(a.size * a.dtype.itemsize
                               for a in [feat, meta, tgt] + weights) + 8 * B),
    )

    return pl.pallas_call(
        functools.partial(_tail_kernel, edt=edt),
        grid=(B // bt,),
        in_specs=in_specs,
        out_specs=(pl.BlockSpec((bt, 1), lambda i: (i, 0)),
                   pl.BlockSpec((bt, 1), lambda i: (i, 0))),
        out_shape=(jax.ShapeDtypeStruct((B, 1), f32),
                   jax.ShapeDtypeStruct((B, 1), f32)),
        compiler_params=pltpu.CompilerParams(
            dimension_semantics=("parallel",),     # batch tiles shard across TCs on v7x
            vmem_limit_bytes=_VMEM_LIMIT),
        cost_estimate=cost,
    )(feat, meta, tgt, *weights)


# ----------------------------------------------------------------------------
# host-side layout plumbing for the block-banded stem matmul
# ----------------------------------------------------------------------------
def prep_stem_lhs(image_nchw, *, TW, bt):
    """Returns (B//bt, OW//TW, bt*OH, 3*(2*TW+1)*Cin) bf16: each row holds the three
    kernel-row taps of one output row's (2*TW+1)-wide padded input window."""
    x = jnp.transpose(image_nchw, (0, 2, 3, 1)).astype(jnp.float32)   # NCHW -> NHWC
    B, H, W, C = x.shape
    assert H % 2 == 0 and W % 2 == 0, "stride-2 stem assumes even H, W"
    OH, OW = H // 2, W // 2
    n_owt = OW // TW
    WW = 2 * TW + 1
    xp = jnp.pad(x, ((0, 0), (1, 1), (1, 1), (0, 0)))                 # (B, 2OH+2, 2OW+2, C)
    row_idx = 2 * jnp.arange(OH)[:, None] + jnp.arange(3)[None, :]    # padded rows 2*oh + di
    rows = xp[:, row_idx]                                             # (B, OH, 3, Wp, C)
    col_idx = 2 * TW * jnp.arange(n_owt)[:, None] + jnp.arange(WW)[None, :]
    win = rows[:, :, :, col_idx]                                      # (B, OH, 3, n_owt, WW, C)
    K = 3 * WW * C
    lhs = jnp.transpose(win, (0, 3, 1, 2, 4, 5)).reshape(B, n_owt, OH, K)
    lhs = lhs.reshape(B // bt, bt, n_owt, OH, K)
    lhs = jnp.transpose(lhs, (0, 2, 1, 3, 4)).reshape(B // bt, n_owt, bt * OH, K)
    return lhs.astype(jnp.bfloat16)


def build_stem_band(w_hwio, TW):
    """Block-band (shared by every ow tile):
    band[di*WW*Cin + w*Cin + c, r*Cout + co] = W[di, w - 2r, c, co] if 0 <= w-2r < 3."""
    kh, kw, Cin, Cout = w_hwio.shape
    WW = 2 * TW + 1
    w_pos = jnp.arange(WW)[:, None]
    r_pos = jnp.arange(TW)[None, :]
    dj = w_pos - 2 * r_pos                                            # (WW, TW)
    valid = (dj >= 0) & (dj < kw)
    djc = jnp.clip(dj, 0, kw - 1)
    taps = w_hwio[:, djc]                                             # (kh, WW, TW, Cin, Cout)
    taps = jnp.where(valid[None, :, :, None, None], taps, 0.0)
    band = jnp.transpose(taps, (0, 1, 3, 2, 4))                       # (kh, WW, Cin, TW, Cout)
    return band.reshape(kh * WW * Cin, TW * Cout)


# ----------------------------------------------------------------------------
# parameters (deterministic synthetic init) + kernel-ready packing / folding
# ----------------------------------------------------------------------------
def fold_bn(gamma, beta, mean, var, eps=1e-5):
    scale = gamma / jnp.sqrt(var + eps)
    shift = beta - mean * scale
    return scale, shift


def init_params(key):
    ks = iter(jax.random.split(key, 16))

    def lin(k, fan_in, fan_out):
        kw, kb = jax.random.split(k)
        w = jax.random.normal(kw, (fan_in, fan_out), jnp.float32) / jnp.sqrt(fan_in)
        b = jax.random.normal(kb, (fan_out,), jnp.float32) * 0.01
        return w, b

    def bn(k, n):
        k1, k2, k3, k4 = jax.random.split(k, 4)
        gamma = 1.0 + 0.1 * jax.random.normal(k1, (n,), jnp.float32)
        beta = 0.1 * jax.random.normal(k2, (n,), jnp.float32)
        mean = 0.1 * jax.random.normal(k3, (n,), jnp.float32)
        var = jax.random.uniform(k4, (n,), jnp.float32, minval=0.5, maxval=1.5)
        return fold_bn(gamma, beta, mean, var)

    p = {}
    # EfficientNet-b1 stem: Conv2d(3, 32, 3, stride=2, pad=1, bias=False) + BN + SiLU
    p["stem_w"] = jax.random.normal(next(ks), (32, 3, 3, 3), jnp.float32) * 0.1   # OIHW
    p["stem_scale"], p["stem_shift"] = bn(next(ks), 32)
    # stand-in backbone projection to 1280-d features (see TODO at top)
    p["proj_w"], p["proj_b"] = lin(next(ks), 32, 1280)
    # replaced _fc: Linear(1280, 512)
    p["fc_w"], p["fc_b"] = lin(next(ks), 1280, 512)
    # tabular branch
    p["tab1_w"], p["tab1_b"] = lin(next(ks), 4, 256)
    p["tab1_scale"], p["tab1_shift"] = bn(next(ks), 256)
    p["tab2_w"], p["tab2_b"] = lin(next(ks), 256, 256)
    p["tab2_scale"], p["tab2_shift"] = bn(next(ks), 256)
    # fusion head: Linear(768, 1024) + BN + ReLU
    p["out1_w"], p["out1_b"] = lin(next(ks), 768, 1024)
    p["out1_scale"], p["out1_shift"] = bn(next(ks), 1024)
    # final: Linear(1024, 1)
    p["head_w"], p["head_b"] = lin(next(ks), 1024, 1)
    return p


def pack_params(p, OW, TW):
    f32, bf16 = jnp.float32, jnp.bfloat16
    w_hwio = jnp.transpose(p["stem_w"], (2, 3, 1, 0))                 # OIHW -> HWIO
    return {
        # stem: shared block-band weights (bf16 MXU) + BN scale/shift tiled across TW cols
        "stem_band": build_stem_band(w_hwio, TW).astype(bf16),
        "stem_scale": jnp.tile(p["stem_scale"], TW).reshape(1, TW * _COUT).astype(f32),
        "stem_shift": jnp.tile(p["stem_shift"], TW).reshape(1, TW * _COUT).astype(f32),
        # stand-in proj: sum over OW folded in by tiling (1/(OH*OW) now lives in the stem)
        "proj_w": jnp.tile(p["proj_w"], (OW, 1)).astype(bf16),
        "proj_b": p["proj_b"].reshape(1, -1).astype(f32),
        "fc_w": p["fc_w"].astype(bf16),
        "fc_b": p["fc_b"].reshape(1, -1).astype(f32),
        # tabular branch: first layer runs as VPU FMAs (keep f32); bias folded into BN shift
        "tab1_w": p["tab1_w"].astype(f32),
        "tab1_scale": p["tab1_scale"].reshape(1, -1).astype(f32),
        "tab1_shift": (p["tab1_b"] * p["tab1_scale"] + p["tab1_shift"]).reshape(1, -1).astype(f32),
        "tab2_w": p["tab2_w"].astype(bf16),
        "tab2_scale": p["tab2_scale"].reshape(1, -1).astype(f32),
        "tab2_shift": (p["tab2_b"] * p["tab2_scale"] + p["tab2_shift"]).reshape(1, -1).astype(f32),
        # fusion head: concat-free split of out1 weights + bias folded into BN shift
        "out1_w_img": p["out1_w"][:512].astype(bf16),
        "out1_w_tab": p["out1_w"][512:].astype(bf16),
        "out1_scale": p["out1_scale"].reshape(1, -1).astype(f32),
        "out1_shift": (p["out1_b"] * p["out1_scale"] + p["out1_shift"]).reshape(1, -1).astype(f32),
        # final Linear(1024, 1): applied as an f32 lane-reduce in the fused kernel
        "head_w": p["head_w"].reshape(1, -1).astype(f32),
        "head_b": p["head_b"].reshape(1, 1).astype(f32),
    }


# ----------------------------------------------------------------------------
# forward
# ----------------------------------------------------------------------------
def efficientnet_tabular_forward(kp, image, metadata, targets, *, edt=jnp.float32):
    B, _, H, W = image.shape
    OH, OW = H // 2, W // 2
    TW = _choose_tw(OW)
    bt_stem = _pick_batch_tile(B, OH)
    lhs = prep_stem_lhs(image, TW=TW, bt=bt_stem)
    feat = stem_conv_gap(lhs, kp["stem_band"], kp["stem_scale"], kp["stem_shift"],
                         B=B, OW=OW, bt=bt_stem, edt=edt)             # (B, OW*32) bf16
    bt_tail = _pick_batch_tile(B, 1)
    logits, bce = fused_tail(feat, metadata, targets, kp, bt=bt_tail, edt=edt)
    return logits, jnp.mean(bce)


# ----------------------------------------------------------------------------
if __name__ == "__main__":
    key = jax.random.PRNGKey(0)
    kparam, kimg, kmeta, ktgt = jax.random.split(key, 4)

    B, H, W = 2, 16, 16
    image = jax.random.normal(kimg, (B, 3, H, W), jnp.float32)        # NCHW, like PyTorch
    metadata = jax.random.normal(kmeta, (B, 4), jnp.float32)
    targets = jax.random.bernoulli(ktgt, 0.5, (B,)).astype(jnp.float32)

    raw_params = init_params(kparam)
    OW = W // 2
    packed = pack_params(raw_params, OW=OW, TW=_choose_tw(OW))

    EDT = _epilogue_dtype()
    fwd = jax.jit(functools.partial(efficientnet_tabular_forward, edt=EDT))
    out, loss = fwd(packed, image, metadata, targets)
    jax.block_until_ready((out, loss))

    assert out.shape == (B, 1)
    assert loss.shape == ()
    assert bool(jnp.isfinite(loss)) and bool(jnp.all(jnp.isfinite(out)))
    print("KERNEL_OK")
</pallas_src>

<mosaic_0001>
module attributes {stable_mosaic.version = 11 : i64} {
  func.func @_stem_kernel(%arg0: i32, %arg1: i32, %arg2: memref<1x1x16x81xbf16, #tpu.memory_space<vmem>>, %arg3: memref<81x128xbf16, #tpu.memory_space<vmem>>, %arg4: memref<1x128xf32, #tpu.memory_space<vmem>>, %arg5: memref<1x128xf32, #tpu.memory_space<vmem>>, %arg6: memref<2x128xbf16, #tpu.memory_space<vmem>>) attributes {dimension_semantics = [#tpu.dimension_semantics<parallel>, #tpu.dimension_semantics<parallel>], iteration_bounds = array<i64: 1, 2>, scalar_prefetch = 0 : i64, scratch_operands = 0 : i64, tpu.core_type = #tpu.core_type<tc>, window_params = [{transform_indices = @transform_0, window_bounds = array<i64: 1, 1, 16, 81>}, {pipeline_mode = #tpu.pipeline_mode<synchronous>, transform_indices = @transform_1, window_bounds = array<i64: 81, 128>}, {pipeline_mode = #tpu.pipeline_mode<synchronous>, transform_indices = @transform_2, window_bounds = array<i64: 1, 128>}, {pipeline_mode = #tpu.pipeline_mode<synchronous>, transform_indices = @transform_3, window_bounds = array<i64: 1, 128>}, {transform_indices = @transform_4, window_bounds = array<i64: 2, 128>}]} {
    %c0 = arith.constant 0 : index
    %c0_0 = arith.constant 0 : index
    %c0_1 = arith.constant 0 : index
    %c0_2 = arith.constant 0 : index
    %0 = vector.load %arg2[%c0, %c0_0, %c0_1, %c0_2] : memref<1x1x16x81xbf16, #tpu.memory_space<vmem>>, vector<1x1x16x81xbf16>
    %1 = vector.shape_cast %0 : vector<1x1x16x81xbf16> to vector<16x81xbf16>
    %c0_3 = arith.constant 0 : index
    %c0_4 = arith.constant 0 : index
    %2 = vector.load %arg3[%c0_3, %c0_4] : memref<81x128xbf16, #tpu.memory_space<vmem>>, vector<81x128xbf16>
    %cst = arith.constant dense<0.000000e+00> : vector<16x128xf32>
    %3 = tpu.matmul %1, %2, %cst {dimension_numbers = #tpu.dot_dimension_numbers<[1], [0], [0], [1], [0, 0, 1, 1], [], []>} : vector<16x81xbf16>, vector<81x128xbf16>, vector<16x128xf32> -> vector<16x128xf32>
    %c0_5 = arith.constant 0 : index
    %c0_6 = arith.constant 0 : index
    %4 = vector.load %arg4[%c0_5, %c0_6] : memref<1x128xf32, #tpu.memory_space<vmem>>, vector<1x128xf32>
    %5 = vector.broadcast %4 : vector<1x128xf32> to vector<16x128xf32>
    %6 = arith.mulf %3, %5 : vector<16x128xf32>
    %c0_7 = arith.constant 0 : index
    %c0_8 = arith.constant 0 : index
    %7 = vector.load %arg5[%c0_7, %c0_8] : memref<1x128xf32, #tpu.memory_space<vmem>>, vector<1x128xf32>
    %8 = vector.broadcast %7 : vector<1x128xf32> to vector<16x128xf32>
    %9 = arith.addf %6, %8 : vector<16x128xf32>
    %cst_9 = arith.constant 0.000000e+00 : f32
    %10 = vector.broadcast %cst_9 : f32 to vector<16x128xf32>
    %11 = arith.subf %10, %9 : vector<16x128xf32>
    %12 = math.exp %11 : vector<16x128xf32>
    %cst_10 = arith.constant 1.000000e+00 : f32
    %13 = vector.broadcast %cst_10 : f32 to vector<16x128xf32>
    %14 = arith.addf %13, %12 : vector<16x128xf32>
    %15 = tpu.reciprocal %14 {approx = true} : vector<16x128xf32> -> vector<16x128xf32>
    %16 = arith.mulf %9, %15 : vector<16x128xf32>
    %17 = vector.extract_strided_slice %16 {offsets = [0, 0], sizes = [8, 128], strides = [1, 1]} : vector<16x128xf32> to vector<8x128xf32>
    %cst_11 = arith.constant dense<0.000000e+00> : vector<128xf32>
    %18 = vector.multi_reduction <add>, %17, %cst_11 [0] : vector<8x128xf32> to vector<128xf32>
    %19 = vector.shape_cast %18 : vector<128xf32> to vector<1x128xf32>
    %cst_12 = arith.constant 1.562500e-02 : f32
    %20 = vector.broadcast %cst_12 : f32 to vector<1x128xf32>
    %21 = arith.mulf %19, %20 : vector<1x128xf32>
    %22 = arith.truncf %21 : vector<1x128xf32> to vector<1x128xbf16>
    %c0_13 = arith.constant 0 : index
    %c0_14 = arith.constant 0 : index
    %23 = vector.load %arg6[%c0_13, %c0_14] : memref<2x128xbf16, #tpu.memory_space<vmem>>, vector<1x128xbf16>
    tpu.vector_store %arg6[%c0_13, %c0_14], %22 {strides = array<i32>} : memref<2x128xbf16, #tpu.memory_space<vmem>>, vector<1x128xbf16>,
    %24 = vector.extract_strided_slice %16 {offsets = [8, 0], sizes = [8, 128], strides = [1, 1]} : vector<16x128xf32> to vector<8x128xf32>
    %cst_15 = arith.constant dense<0.000000e+00> : vector<128xf32>
    %25 = vector.multi_reduction <add>, %24, %cst_15 [0] : vector<8x128xf32> to vector<128xf32>
    %26 = vector.shape_cast %25 : vector<128xf32> to vector<1x128xf32>
    %cst_16 = arith.constant 1.562500e-02 : f32
    %27 = vector.broadcast %cst_16 : f32 to vector<1x128xf32>
    %28 = arith.mulf %26, %27 : vector<1x128xf32>
    %29 = arith.truncf %28 : vector<1x128xf32> to vector<1x128xbf16>
    %c1 = arith.constant 1 : index
    %c0_17 = arith.constant 0 : index
    %30 = vector.load %arg6[%c1, %c0_17] : memref<2x128xbf16, #tpu.memory_space<vmem>>, vector<1x128xbf16>
    tpu.vector_store %arg6[%c1, %c0_17], %29 {strides = array<i32>} : memref<2x128xbf16, #tpu.memory_space<vmem>>, vector<1x128xbf16>,
    return
  }
  func.func @transform_0(%arg0: i32, %arg1: i32) -> (i32, i32, i32, i32) {
    %c0_i32 = arith.constant 0 : i32
    %c0_i32_0 = arith.constant 0 : i32
    %c0_i32_1 = arith.constant 0 : i32
    return %arg0, %arg1, %c0_i32, %c0_i32_0 : i32, i32, i32, i32
  }
  func.func @transform_1(%arg0: i32, %arg1: i32) -> (i32, i32) {
    %c0_i32 = arith.constant 0 : i32
    %c0_i32_0 = arith.constant 0 : i32
    %c0_i32_1 = arith.constant 0 : i32
    return %c0_i32, %c0_i32_0 : i32, i32
  }
  func.func @transform_2(%arg0: i32, %arg1: i32) -> (i32, i32) {
    %c0_i32 = arith.constant 0 : i32
    %c0_i32_0 = arith.constant 0 : i32
    %c0_i32_1 = arith.constant 0 : i32
    return %c0_i32, %c0_i32_0 : i32, i32
  }
  func.func @transform_3(%arg0: i32, %arg1: i32) -> (i32, i32) {
    %c0_i32 = arith.constant 0 : i32
    %c0_i32_0 = arith.constant 0 : i32
    %c0_i32_1 = arith.constant 0 : i32
    return %c0_i32, %c0_i32_0 : i32, i32
  }
  func.func @transform_4(%arg0: i32, %arg1: i32) -> (i32, i32) {
    %c0_i32 = arith.constant 0 : i32
    return %arg0, %arg1 : i32, i32
  }
}

module attributes {stable_mosaic.version = 11 : i64} {
  func.func @_tail_kernel(%arg0: i32, %arg1: memref<2x256xbf16, #tpu.memory_space<vmem>>, %arg2: memref<2x4xf32, #tpu.memory_space<vmem>>, %arg3: memref<2x1xf32, #tpu.memory_space<vmem>>, %arg4: memref<256x1280xbf16, #tpu.memory_space<vmem>>, %arg5: memref<1x1280xf32, #tpu.memory_space<vmem>>, %arg6: memref<1280x512xbf16, #tpu.memory_space<vmem>>, %arg7: memref<1x512xf32, #tpu.memory_space<vmem>>, %arg8: memref<4x256xf32, #tpu.memory_space<vmem>>, %arg9: memref<1x256xf32, #tpu.memory_space<vmem>>, %arg10: memref<1x256xf32, #tpu.memory_space<vmem>>, %arg11: memref<256x256xbf16, #tpu.memory_space<vmem>>, %arg12: memref<1x256xf32, #tpu.memory_space<vmem>>, %arg13: memref<1x256xf32, #tpu.memory_space<vmem>>, %arg14: memref<512x1024xbf16, #tpu.memory_space<vmem>>, %arg15: memref<256x1024xbf16, #tpu.memory_space<vmem>>, %arg16: memref<1x1024xf32, #tpu.memory_space<vmem>>, %arg17: memref<1x1024xf32, #tpu.memory_space<vmem>>, %arg18: memref<1x1024xf32, #tpu.memory_space<vmem>>, %arg19: memref<1x1xf32, #tpu.memory_space<vmem>>, %arg20: memref<2x1xf32, #tpu.memory_space<vmem>>, %arg21: memref<2x1xf32, #tpu.memory_space<vmem>>) attributes {dimension_semantics = [#tpu.dimension_semantics<parallel>], iteration_bounds = array<i64: 1>, scalar_prefetch = 0 : i64, scratch_operands = 0 : i64, tpu.core_type = #tpu.core_type<tc>, window_params = [{transform_indices = @transform_0, window_bounds = array<i64: 2, 256>}, {transform_indices = @transform_1, window_bounds = array<i64: 2, 4>}, {transform_indices = @transform_2, window_bounds = array<i64: 2, 1>}, {pipeline_mode = #tpu.pipeline_mode<synchronous>, transform_indices = @transform_3, window_bounds = array<i64: 256, 1280>}, {pipeline_mode = #tpu.pipeline_mode<synchronous>, transform_indices = @transform_4, window_bounds = array<i64: 1, 1280>}, {pipeline_mode = #tpu.pipeline_mode<synchronous>, transform_indices = @transform_5, window_bounds = array<i64: 1280, 512>}, {pipeline_mode = #tpu.pipeline_mode<synchronous>, transform_indices = @transform_6, window_bounds = array<i64: 1, 512>}, {pipeline_mode = #tpu.pipeline_mode<synchronous>, transform_indices = @transform_7, window_bounds = array<i64: 4, 256>}, {pipeline_mode = #tpu.pipeline_mode<synchronous>, transform_indices = @transform_8, window_bounds = array<i64: 1, 256>}, {pipeline_mode = #tpu.pipeline_mode<synchronous>, transform_indices = @transform_9, window_bounds = array<i64: 1, 256>}, {pipeline_mode = #tpu.pipeline_mode<synchronous>, transform_indices = @transform_10, window_bounds = array<i64: 256, 256>}, {pipeline_mode = #tpu.pipeline_mode<synchronous>, transform_indices = @transform_11, window_bounds = array<i64: 1, 256>}, {pipeline_mode = #tpu.pipeline_mode<synchronous>, transform_indices = @transform_12, window_bounds = array<i64: 1, 256>}, {pipeline_mode = #tpu.pipeline_mode<synchronous>, transform_indices = @transform_13, window_bounds = array<i64: 512, 1024>}, {pipeline_mode = #tpu.pipeline_mode<synchronous>, transform_indices = @transform_14, window_bounds = array<i64: 256, 1024>}, {pipeline_mode = #tpu.pipeline_mode<synchronous>, transform_indices = @transform_15, window_bounds = array<i64: 1, 1024>}, {pipeline_mode = #tpu.pipeline_mode<synchronous>, transform_indices = @transform_16, window_bounds = array<i64: 1, 1024>}, {pipeline_mode = #tpu.pipeline_mode<synchronous>, transform_indices = @transform_17, window_bounds = array<i64: 1, 1024>}, {pipeline_mode = #tpu.pipeline_mode<synchronous>, transform_indices = @transform_18, window_bounds = array<i64: 1, 1>}, {transform_indices = @transform_19, window_bounds = array<i64: 2, 1>}, {transform_indices = @transform_20, window_bounds = array<i64: 2, 1>}]} {
    %c0 = arith.constant 0 : index
    %c0_0 = arith.constant 0 : index
    %0 = vector.load %arg1[%c0, %c0_0] : memref<2x256xbf16, #tpu.memory_space<vmem>>, vector<2x256xbf16>
    %c0_1 = arith.constant 0 : index
    %c0_2 = arith.constant 0 : index
    %1 = vector.load %arg4[%c0_1, %c0_2] : memref<256x1280xbf16, #tpu.memory_space<vmem>>, vector<256x1280xbf16>
    %cst = arith.constant dense<0.000000e+00> : vector<2x1280xf32>
    %2 = tpu.matmul %0, %1, %cst {dimension_numbers = #tpu.dot_dimension_numbers<[1], [0], [0], [1], [0, 0, 1, 1], [], []>} : vector<2x256xbf16>, vector<256x1280xbf16>, vector<2x1280xf32> -> vector<2x1280xf32>
    %c0_3 = arith.constant 0 : index
    %c0_4 = arith.constant 0 : index
    %3 = vector.load %arg5[%c0_3, %c0_4] : memref<1x1280xf32, #tpu.memory_space<vmem>>, vector<1x1280xf32>
    %4 = vector.broadcast %3 : vector<1x1280xf32> to vector<2x1280xf32>
    %5 = arith.addf %2, %4 : vector<2x1280xf32>
    %cst_5 = arith.constant 0.000000e+00 : f32
    %6 = vector.broadcast %cst_5 : f32 to vector<2x1280xf32>
    %7 = arith.subf %6, %5 : vector<2x1280xf32>
    %8 = math.exp %7 : vector<2x1280xf32>
    %cst_6 = arith.constant 1.000000e+00 : f32
    %9 = vector.broadcast %cst_6 : f32 to vector<2x1280xf32>
    %10 = arith.addf %9, %8 : vector<2x1280xf32>
    %11 = tpu.reciprocal %10 {approx = true} : vector<2x1280xf32> -> vector<2x1280xf32>
    %12 = arith.mulf %5, %11 : vector<2x1280xf32>
    %13 = arith.truncf %12 : vector<2x1280xf32> to vector<2x1280xbf16>
    %c0_7 = arith.constant 0 : index
    %c0_8 = arith.constant 0 : index
    %14 = vector.load %arg6[%c0_7, %c0_8] : memref<1280x512xbf16, #tpu.memory_space<vmem>>, vector<1280x512xbf16>
    %cst_9 = arith.constant dense<0.000000e+00> : vector<2x512xf32>
    %15 = tpu.matmul %13, %14, %cst_9 {dimension_numbers = #tpu.dot_dimension_numbers<[1], [0], [0], [1], [0, 0, 1, 1], [], []>} : vector<2x1280xbf16>, vector<1280x512xbf16>, vector<2x512xf32> -> vector<2x512xf32>
    %c0_10 = arith.constant 0 : index
    %c0_11 = arith.constant 0 : index
    %16 = vector.load %arg7[%c0_10, %c0_11] : memref<1x512xf32, #tpu.memory_space<vmem>>, vector<1x512xf32>
    %17 = vector.broadcast %16 : vector<1x512xf32> to vector<2x512xf32>
    %18 = arith.addf %15, %17 : vector<2x512xf32>
    %c0_12 = arith.constant 0 : index
    %c0_13 = arith.constant 0 : index
    %19 = vector.load %arg2[%c0_12, %c0_13] : memref<2x4xf32, #tpu.memory_space<vmem>>, vector<2x4xf32>
    %c0_14 = arith.constant 0 : index
    %c0_15 = arith.constant 0 : index
    %20 = vector.load %arg8[%c0_14, %c0_15] : memref<4x256xf32, #tpu.memory_space<vmem>>, vector<4x256xf32>
    %21 = vector.extract_strided_slice %19 {offsets = [0, 0], sizes = [2, 1], strides = [1, 1]} : vector<2x4xf32> to vector<2x1xf32>
    %22 = vector.extract_strided_slice %20 {offsets = [0, 0], sizes = [1, 256], strides = [1, 1]} : vector<4x256xf32> to vector<1x256xf32>
    %23 = vector.broadcast %21 : vector<2x1xf32> to vector<2x256xf32>
    %24 = vector.broadcast %22 : vector<1x256xf32> to vector<2x256xf32>
    %25 = arith.mulf %23, %24 : vector<2x256xf32>
    %26 = vector.extract_strided_slice %19 {offsets = [0, 1], sizes = [2, 1], strides = [1, 1]} : vector<2x4xf32> to vector<2x1xf32>
    %27 = vector.extract_strided_slice %20 {offsets = [1, 0], sizes = [1, 256], strides = [1, 1]} : vector<4x256xf32> to vector<1x256xf32>
    %28 = vector.broadcast %26 : vector<2x1xf32> to vector<2x256xf32>
    %29 = vector.broadcast %27 : vector<1x256xf32> to vector<2x256xf32>
    %30 = arith.mulf %28, %29 : vector<2x256xf32>
    %31 = arith.addf %25, %30 : vector<2x256xf32>
    %32 = vector.extract_strided_slice %19 {offsets = [0, 2], sizes = [2, 1], strides = [1, 1]} : vector<2x4xf32> to vector<2x1xf32>
    %33 = vector.extract_strided_slice %20 {offsets = [2, 0], sizes = [1, 256], strides = [1, 1]} : vector<4x256xf32> to vector<1x256xf32>
    %34 = vector.broadcast %32 : vector<2x1xf32> to vector<2x256xf32>
    %35 = vector.broadcast %33 : vector<1x256xf32> to vector<2x256xf32>
    %36 = arith.mulf %34, %35 : vector<2x256xf32>
    %37 = arith.addf %31, %36 : vector<2x256xf32>
    %38 = vector.extract_strided_slice %19 {offsets = [0, 3], sizes = [2, 1], strides = [1, 1]} : vector<2x4xf32> to vector<2x1xf32>
    %39 = vector.extract_strided_slice %20 {offsets = [3, 0], sizes = [1, 256], strides = [1, 1]} : vector<4x256xf32> to vector<1x256xf32>
    %40 = vector.broadcast %38 : vector<2x1xf32> to vector<2x256xf32>
    %41 = vector.broadcast %39 : vector<1x256xf32> to vector<2x256xf32>
    %42 = arith.mulf %40, %41 : vector<2x256xf32>
    %43 = arith.addf %37, %42 : vector<2x256xf32>
    %c0_16 = arith.constant 0 : index
    %c0_17 = arith.constant 0 : index
    %44 = vector.load %arg9[%c0_16, %c0_17] : memref<1x256xf32, #tpu.memory_space<vmem>>, vector<1x256xf32>
    %45 = vector.broadcast %44 : vector<1x256xf32> to vector<2x256xf32>
    %46 = arith.mulf %43, %45 : vector<2x256xf32>
    %c0_18 = arith.constant 0 : index
    %c0_19 = arith.constant 0 : index
    %47 = vector.load %arg10[%c0_18, %c0_19] : memref<1x256xf32, #tpu.memory_space<vmem>>, vector<1x256xf32>
    %48 = vector.broadcast %47 : vector<1x256xf32> to vector<2x256xf32>
    %49 = arith.addf %46, %48 : vector<2x256xf32>
    %cst_20 = arith.constant 0.000000e+00 : f32
    %50 = vector.broadcast %cst_20 : f32 to vector<2x256xf32>
    %51 = arith.maximumf %49, %50 : vector<2x256xf32>
    %52 = arith.truncf %51 : vector<2x256xf32> to vector<2x256xbf16>
    %c0_21 = arith.constant 0 : index
    %c0_22 = arith.constant 0 : index
    %53 = vector.load %arg11[%c0_21, %c0_22] : memref<256x256xbf16, #tpu.memory_space<vmem>>, vector<256x256xbf16>
    %cst_23 = arith.constant dense<0.000000e+00> : vector<2x256xf32>
    %54 = tpu.matmul %52, %53, %cst_23 {dimension_numbers = #tpu.dot_dimension_numbers<[1], [0], [0], [1], [0, 0, 1, 1], [], []>} : vector<2x256xbf16>, vector<256x256xbf16>, vector<2x256xf32> -> vector<2x256xf32>
    %c0_24 = arith.constant 0 : index
    %c0_25 = arith.constant 0 : index
    %55 = vector.load %arg12[%c0_24, %c0_25] : memref<1x256xf32, #tpu.memory_space<vmem>>, vector<1x256xf32>
    %56 = vector.broadcast %55 : vector<1x256xf32> to vector<2x256xf32>
    %57 = arith.mulf %54, %56 : vector<2x256xf32>
    %c0_26 = arith.constant 0 : index
    %c0_27 = arith.constant 0 : index
    %58 = vector.load %arg13[%c0_26, %c0_27] : memref<1x256xf32, #tpu.memory_space<vmem>>, vector<1x256xf32>
    %59 = vector.broadcast %58 : vector<1x256xf32> to vector<2x256xf32>
    %60 = arith.addf %57, %59 : vector<2x256xf32>
    %cst_28 = arith.constant 0.000000e+00 : f32
    %61 = vector.broadcast %cst_28 : f32 to vector<2x256xf32>
    %62 = arith.maximumf %60, %61 : vector<2x256xf32>
    %63 = arith.truncf %18 : vector<2x512xf32> to vector<2x512xbf16>
    %c0_29 = arith.constant 0 : index
    %c0_30 = arith.constant 0 : index
    %64 = vector.load %arg14[%c0_29, %c0_30] : memref<512x1024xbf16, #tpu.memory_space<vmem>>, vector<512x1024xbf16>
    %cst_31 = arith.constant dense<0.000000e+00> : vector<2x1024xf32>
    %65 = tpu.matmul %63, %64, %cst_31 {dimension_numbers = #tpu.dot_dimension_numbers<[1], [0], [0], [1], [0, 0, 1, 1], [], []>} : vector<2x512xbf16>, vector<512x1024xbf16>, vector<2x1024xf32> -> vector<2x1024xf32>
    %66 = arith.truncf %62 : vector<2x256xf32> to vector<2x256xbf16>
    %c0_32 = arith.constant 0 : index
    %c0_33 = arith.constant 0 : index
    %67 = vector.load %arg15[%c0_32, %c0_33] : memref<256x1024xbf16, #tpu.memory_space<vmem>>, vector<256x1024xbf16>
    %cst_34 = arith.constant dense<0.000000e+00> : vector<2x1024xf32>
    %68 = tpu.matmul %66, %67, %cst_34 {dimension_numbers = #tpu.dot_dimension_numbers<[1], [0], [0], [1], [0, 0, 1, 1], [], []>} : vector<2x256xbf16>, vector<256x1024xbf16>, vector<2x1024xf32> -> vector<2x1024xf32>
    %69 = arith.addf %65, %68 : vector<2x1024xf32>
    %c0_35 = arith.constant 0 : index
    %c0_36 = arith.constant 0 : index
    %70 = vector.load %arg16[%c0_35, %c0_36] : memref<1x1024xf32, #tpu.memory_space<vmem>>, vector<1x1024xf32>
    %71 = vector.broadcast %70 : vector<1x1024xf32> to vector<2x1024xf32>
    %72 = arith.mulf %69, %71 : vector<2x1024xf32>
    %c0_37 = arith.constant 0 : index
    %c0_38 = arith.constant 0 : index
    %73 = vector.load %arg17[%c0_37, %c0_38] : memref<1x1024xf32, #tpu.memory_space<vmem>>, vector<1x1024xf32>
    %74 = vector.broadcast %73 : vector<1x1024xf32> to vector<2x1024xf32>
    %75 = arith.addf %72, %74 : vector<2x1024xf32>
    %cst_39 = arith.constant 0.000000e+00 : f32
    %76 = vector.broadcast %cst_39 : f32 to vector<2x1024xf32>
    %77 = arith.maximumf %75, %76 : vector<2x1024xf32>
    %c0_40 = arith.constant 0 : index
    %c0_41 = arith.constant 0 : index
    %78 = vector.load %arg18[%c0_40, %c0_41] : memref<1x1024xf32, #tpu.memory_space<vmem>>, vector<1x1024xf32>
    %79 = vector.broadcast %78 : vector<1x1024xf32> to vector<2x1024xf32>
    %80 = arith.mulf %77, %79 : vector<2x1024xf32>
    %cst_42 = arith.constant dense<0.000000e+00> : vector<2xf32>
    %81 = vector.multi_reduction <add>, %80, %cst_42 [1] : vector<2x1024xf32> to vector<2xf32>
    %82 = vector.shape_cast %81 : vector<2xf32> to vector<2x1xf32>
    %c0_43 = arith.constant 0 : index
    %c0_44 = arith.constant 0 : index
    %83 = vector.load %arg19[%c0_43, %c0_44] : memref<1x1xf32, #tpu.memory_space<vmem>>, vector<1x1xf32>
    %84 = vector.broadcast %83 : vector<1x1xf32> to vector<2x1xf32>
    %85 = arith.addf %82, %84 : vector<2x1xf32>
    %c0_45 = arith.constant 0 : index
    %c0_46 = arith.constant 0 : index
    %86 = vector.load %arg20[%c0_45, %c0_46] : memref<2x1xf32, #tpu.memory_space<vmem>>, vector<2x1xf32>
    tpu.vector_store %arg20[%c0_45, %c0_46], %85 {strides = array<i32>} : memref<2x1xf32, #tpu.memory_space<vmem>>, vector<2x1xf32>,
    %c0_47 = arith.constant 0 : index
    %c0_48 = arith.constant 0 : index
    %87 = vector.load %arg3[%c0_47, %c0_48] : memref<2x1xf32, #tpu.memory_space<vmem>>, vector<2x1xf32>
    %cst_49 = arith.constant 0.000000e+00 : f32
    %88 = vector.broadcast %cst_49 : f32 to vector<2x1xf32>
    %89 = arith.maximumf %85, %88 : vector<2x1xf32>
    %90 = arith.mulf %85, %87 : vector<2x1xf32>
    %91 = arith.subf %89, %90 : vector<2x1xf32>
    %92 = math.absf %85 : vector<2x1xf32>
    %cst_50 = arith.constant 0.000000e+00 : f32
    %93 = vector.broadcast %cst_50 : f32 to vector<2x1xf32>
    %94 = arith.subf %93, %92 : vector<2x1xf32>
    %95 = math.exp %94 : vector<2x1xf32>
    %96 = math.log1p %95 : vector<2x1xf32>
    %97 = arith.addf %91, %96 : vector<2x1xf32>
    %c0_51 = arith.constant 0 : index
    %c0_52 = arith.constant 0 : index
    %98 = vector.load %arg21[%c0_51, %c0_52] : memref<2x1xf32, #tpu.memory_space<vmem>>, vector<2x1xf32>
    tpu.vector_store %arg21[%c0_51, %c0_52], %97 {strides = array<i32>} : memref<2x1xf32, #tpu.memory_space<vmem>>, vector<2x1xf32>,
    return
  }
  func.func @transform_0(%arg0: i32) -> (i32, i32) {
    %c0_i32 = arith.constant 0 : i32
    %c0_i32_0 = arith.constant 0 : i32
    return %arg0, %c0_i32 : i32, i32
  }
  func.func @transform_1(%arg0: i32) -> (i32, i32) {
    %c0_i32 = arith.constant 0 : i32
    %c0_i32_0 = arith.constant 0 : i32
    return %arg0, %c0_i32 : i32, i32
  }
  func.func @transform_2(%arg0: i32) -> (i32, i32) {
    %c0_i32 = arith.constant 0 : i32
    %c0_i32_0 = arith.constant 0 : i32
    return %arg0, %c0_i32 : i32, i32
  }
  func.func @transform_3(%arg0: i32) -> (i32, i32) {
    %c0_i32 = arith.constant 0 : i32
    %c0_i32_0 = arith.constant 0 : i32
    %c0_i32_1 = arith.constant 0 : i32
    return %c0_i32, %c0_i32_0 : i32, i32
  }
  func.func @transform_4(%arg0: i32) -> (i32, i32) {
    %c0_i32 = arith.constant 0 : i32
    %c0_i32_0 = arith.constant 0 : i32
    %c0_i32_1 = arith.constant 0 : i32
    return %c0_i32, %c0_i32_0 : i32, i32
  }
  func.func @transform_5(%arg0: i32) -> (i32, i32) {
    %c0_i32 = arith.constant 0 : i32
    %c0_i32_0 = arith.constant 0 : i32
    %c0_i32_1 = arith.constant 0 : i32
    return %c0_i32, %c0_i32_0 : i32, i32
  }
  func.func @transform_6(%arg0: i32) -> (i32, i32) {
    %c0_i32 = arith.constant 0 : i32
    %c0_i32_0 = arith.constant 0 : i32
    %c0_i32_1 = arith.constant 0 : i32
    return %c0_i32, %c0_i32_0 : i32, i32
  }
  func.func @transform_7(%arg0: i32) -> (i32, i32) {
    %c0_i32 = arith.constant 0 : i32
    %c0_i32_0 = arith.constant 0 : i32
    %c0_i32_1 = arith.constant 0 : i32
    return %c0_i32, %c0_i32_0 : i32, i32
  }
  func.func @transform_8(%arg0: i32) -> (i32, i32) {
    %c0_i32 = arith.constant 0 : i32
    %c0_i32_0 = arith.constant 0 : i32
    %c0_i32_1 = arith.constant 0 : i32
    return %c0_i32, %c0_i32_0 : i32, i32
  }
  func.func @transform_9(%arg0: i32) -> (i32, i32) {
    %c0_i32 = arith.constant 0 : i32
    %c0_i32_0 = arith.constant 0 : i32
    %c0_i32_1 = arith.constant 0 : i32
    return %c0_i32, %c0_i32_0 : i32, i32
  }
  func.func @transform_10(%arg0: i32) -> (i32, i32) {
    %c0_i32 = arith.constant 0 : i32
    %c0_i32_0 = arith.constant 0 : i32
    %c0_i32_1 = arith.constant 0 : i32
    return %c0_i32, %c0_i32_0 : i32, i32
  }
  func.func @transform_11(%arg0: i32) -> (i32, i32) {
    %c0_i32 = arith.constant 0 : i32
    %c0_i32_0 = arith.constant 0 : i32
    %c0_i32_1 = arith.constant 0 : i32
    return %c0_i32, %c0_i32_0 : i32, i32
  }
  func.func @transform_12(%arg0: i32) -> (i32, i32) {
    %c0_i32 = arith.constant 0 : i32
    %c0_i32_0 = arith.constant 0 : i32
    %c0_i32_1 = arith.constant 0 : i32
    return %c0_i32, %c0_i32_0 : i32, i32
  }
  func.func @transform_13(%arg0: i32) -> (i32, i32) {
    %c0_i32 = arith.constant 0 : i32
    %c0_i32_0 = arith.constant 0 : i32
    %c0_i32_1 = arith.constant 0 : i32
    return %c0_i32, %c0_i32_0 : i32, i32
  }
  func.func @transform_14(%arg0: i32) -> (i32, i32) {
    %c0_i32 = arith.constant 0 : i32
    %c0_i32_0 = arith.constant 0 : i32
    %c0_i32_1 = arith.constant 0 : i32
    return %c0_i32, %c0_i32_0 : i32, i32
  }
  func.func @transform_15(%arg0: i32) -> (i32, i32) {
    %c0_i32 = arith.constant 0 : i32
    %c0_i32_0 = arith.constant 0 : i32
    %c0_i32_1 = arith.constant 0 : i32
    return %c0_i32, %c0_i32_0 : i32, i32
  }
  func.func @transform_16(%arg0: i32) -> (i32, i32) {
    %c0_i32 = arith.constant 0 : i32
    %c0_i32_0 = arith.constant 0 : i32
    %c0_i32_1 = arith.constant 0 : i32
    return %c0_i32, %c0_i32_0 : i32, i32
  }
  func.func @transform_17(%arg0: i32) -> (i32, i32) {
    %c0_i32 = arith.constant 0 : i32
    %c0_i32_0 = arith.constant 0 : i32
    %c0_i32_1 = arith.constant 0 : i32
    return %c0_i32, %c0_i32_0 : i32, i32
  }
  func.func @transform_18(%arg0: i32) -> (i32, i32) {
    %c0_i32 = arith.constant 0 : i32
    %c0_i32_0 = arith.constant 0 : i32
    %c0_i32_1 = arith.constant 0 : i32
    return %c0_i32, %c0_i32_0 : i32, i32
  }
  func.func @transform_19(%arg0: i32) -> (i32, i32) {
    %c0_i32 = arith.constant 0 : i32
    %c0_i32_0 = arith.constant 0 : i32
    return %arg0, %c0_i32 : i32, i32
  }
  func.func @transform_20(%arg0: i32) -> (i32, i32) {
    %c0_i32 = arith.constant 0 : i32
    %c0_i32_0 = arith.constant 0 : i32
    return %arg0, %c0_i32 : i32, i32
  }
}

</mosaic_0001>

<llo_original>
// kernel: efficientnet_tabular_forward.2
$region0: #{efficientnet_tabular_forward.2}
  #allocation0 [shape = 'u32[]', space=smem, size = 0x4, offset = 0x4, fixed_abs, tag = 'smem constant byte address 0x4 - core index']
  #allocation1 [shape = 'u32[144,128]{1,0:T(1,128)}', space=vmem, size = 0x12000, scoped, tag = 'internal scratch']
  %s0 = inlined_call_operand.vmem [shape: bf16[1,2,16,81], index: 0, kind: input, shape index: {}]
  %s1 = inlined_call_operand.vmem [shape: bf16[81,128], index: 1, kind: input, shape index: {}]
  %s2 = inlined_call_operand.vmem [shape: f32[1,128], index: 2, kind: input, shape index: {}]
  %s3 = inlined_call_operand.vmem [shape: f32[1,128], index: 3, kind: input, shape index: {}]
  %s4 = inlined_call_operand.vmem [shape: bf16[2,256], index: 4, kind: output, shape index: {}]
  %s5 = sld [smem:[#allocation0]]
  $region49: #{efficientnet_tabular_forward.2} parent=0
    _
  %s7 = ssub.s32 1, %s5
  %s8 = scalar_select 0, %s7, %s5
  loop: start=0, step=1, limit=4
  $region2: #{efficientnet_tabular_forward.2} parent=0 // loop_pre_header
    _
  $region3: #{efficientnet_tabular_forward.2} parent=0 // loop_header
    %s10 = sphi 0, %s14
    %p11 = scmp.ge.s32.totalorder %s10, 4
    %s17 = sphi 0, %s29
    %s18 = sphi 0, %s25
    %s19 = sphi 0, %s17
    %s20 = sphi 0, %s18
    %s21 = sphi 0, %s19
    %s22 = sphi 0, %s20
    %s34 = sphi 0, %s36
    %s37 = sphi 0, %s34
    %s38 = sphi 0, %s37
    %s54 = sphi 0, %s38
    %s58 = sphi 0, %s58
    %s60 = sphi 0, %s58
    %s61 = sphi 0, %s60
    %s75 = sphi 0, %s61
    %s79 = sphi 0, %s79
    %s81 = sphi 0, %s79
    %s82 = sphi 0, %s81
    %s96 = sphi 0, %s82
    %s100 = sphi 0, %s100
    %s102 = sphi 0, %s100
    %s103 = sphi 0, %s102
    %s117 = sphi 0, %s103
    %s125 = sphi 0, %s127
    %s128 = sphi 0, %s125
    %s129 = sphi 0, %s128
    %s145 = sphi 0, %s129
  $region4: #{efficientnet_tabular_forward.2} parent=0 // loop_header_branch
    %13 = sbr.rel (%p11) target = $region8
  $region5: #{efficientnet_tabular_forward.2} parent=0 // loop_body
    %s15 = ssub.s32 %s10, 1
    %s16 = ssub.s32 %s10, 2
    %s23 = sadd.s32 1, %s18
    %p24 = scmp.ge.s32.totalorder %s23, 2
    %s25 = scalar_select %p24, 0, %s23
    %s26 = sadd.s32 1, %s17
    %s27 = scalar_select %p24, %s26, %s17
    %p28 = scmp.ge.s32.totalorder %s27, 1
    %s29 = scalar_select %p28, 0, %s27
    %s30 = ssub.s32 %s17, %s29
    %s31 = ssub.s32 %s18, %s25
    %s32 = sor.u32 %s30, %s31
    %p33 = scmp.eq.s32.totalorder %s32, 0
    %s35 = sadd.s32 %s34, 1
    %s36 = scalar_select %p33, %s34, %s35
    %p39 = pneg %p33
    %p40 = scmp.eq.s32.totalorder %s10, 1
    %p41 = por %p39, %p40
    %p42 = scmp.ne.s32.totalorder %s34, %s37
    %p43 = scmp.eq.s32.totalorder %s10, 0
    %p44 = por %p42, %p43
    %p45 = scmp.ne.s32.totalorder %s34, %s37
    %p46 = scmp.eq.s32.totalorder %s15, 1
    %p47 = por %p45, %p46
    %p48 = scmp.ne.s32.totalorder %s37, %s38
    %p49 = scmp.eq.s32.totalorder %s15, 0
    %p50 = por %p48, %p49
    %p51 = scmp.ne.s32.totalorder %s37, %s38
    %p52 = scmp.eq.s32.totalorder %s16, 1
    %p53 = por %p51, %p52
    %p55 = scmp.ne.s32.totalorder %s38, %s54
    %p56 = scmp.eq.s32.totalorder %s16, 0
    %p57 = por %p55, %p56
    %s59 = sadd.s32 %s58, 1
    %p62 = scmp.eq.s32.totalorder %s10, 1
    %p63 = scmp.ne.s32.totalorder %s58, %s60
    %p64 = scmp.eq.s32.totalorder %s10, 0
    %p65 = por %p63, %p64
    %p66 = scmp.ne.s32.totalorder %s58, %s60
    %p67 = scmp.eq.s32.totalorder %s15, 1
    %p68 = por %p66, %p67
    %p69 = scmp.ne.s32.totalorder %s60, %s61
    %p70 = scmp.eq.s32.totalorder %s15, 0
    %p71 = por %p69, %p70
    %p72 = scmp.ne.s32.totalorder %s60, %s61
    %p73 = scmp.eq.s32.totalorder %s16, 1
    %p74 = por %p72, %p73
    %p76 = scmp.ne.s32.totalorder %s61, %s75
    %p77 = scmp.eq.s32.totalorder %s16, 0
    %p78 = por %p76, %p77
    %s80 = sadd.s32 %s79, 1
    %p83 = scmp.eq.s32.totalorder %s10, 1
    %p84 = scmp.ne.s32.totalorder %s79, %s81
    %p85 = scmp.eq.s32.totalorder %s10, 0
    %p86 = por %p84, %p85
    %p87 = scmp.ne.s32.totalorder %s79, %s81
    %p88 = scmp.eq.s32.totalorder %s15, 1
    %p89 = por %p87, %p88
    %p90 = scmp.ne.s32.totalorder %s81, %s82
    %p91 = scmp.eq.s32.totalorder %s15, 0
    %p92 = por %p90, %p91
    %p93 = scmp.ne.s32.totalorder %s81, %s82
    %p94 = scmp.eq.s32.totalorder %s16, 1
    %p95 = por %p93, %p94
    %p97 = scmp.ne.s32.totalorder %s82, %s96
    %p98 = scmp.eq.s32.totalorder %s16, 0
    %p99 = por %p97, %p98
    %s101 = sadd.s32 %s100, 1
    %p104 = scmp.eq.s32.totalorder %s10, 1
    %p105 = scmp.ne.s32.totalorder %s100, %s102
    %p106 = scmp.eq.s32.totalorder %s10, 0
    %p107 = por %p105, %p106
    %p108 = scmp.ne.s32.totalorder %s100, %s102
    %p109 = scmp.eq.s32.totalorder %s15, 1
    %p110 = por %p108, %p109
    %p111 = scmp.ne.s32.totalorder %s102, %s103
    %p112 = scmp.eq.s32.totalorder %s15, 0
    %p113 = por %p111, %p112
    %p114 = scmp.ne.s32.totalorder %s102, %s103
    %p115 = scmp.eq.s32.totalorder %s16, 1
    %p116 = por %p114, %p115
    %p118 = scmp.ne.s32.totalorder %s103, %s117
    %p119 = scmp.eq.s32.totalorder %s16, 0
    %p120 = por %p118, %p119
    %s121 = ssub.s32 %s17, %s29
    %s122 = ssub.s32 %s18, %s25
    %s123 = sor.u32 %s121, %s122
    %p124 = scmp.eq.s32.totalorder %s123, 0
    %s126 = sadd.s32 %s125, 1
    %s127 = scalar_select %p124, %s125, %s126
    %p130 = pneg %p124
    %p131 = scmp.eq.s32.totalorder %s10, 1
    %p132 = por %p130, %p131
    %p133 = scmp.ne.s32.totalorder %s125, %s128
    %p134 = scmp.eq.s32.totalorder %s10, 0
    %p135 = por %p133, %p134
    %p136 = scmp.ne.s32.totalorder %s125, %s128
    %p137 = scmp.eq.s32.totalorder %s15, 1
    %p138 = por %p136, %p137
    %p139 = scmp.ne.s32.totalorder %s128, %s129
    %p140 = scmp.eq.s32.totalorder %s15, 0
    %p141 = por %p139, %p140
    %p142 = scmp.ne.s32.totalorder %s128, %s129
    %p143 = scmp.eq.s32.totalorder %s16, 1
    %p144 = por %p142, %p143
    %p146 = scmp.ne.s32.totalorder %s129, %s145
    %p147 = scmp.eq.s32.totalorder %s16, 0
    %p148 = por %p146, %p147
    %p149 = scmp.le.s32.totalorder 1, %s10
    %p150 = scmp.lt.s32.totalorder %s10, 3
    %p151 = pnand %p149, %p150
    %p152 = pneg %p151
    // Predicated region
    $region9: #{efficientnet_tabular_forward.2} parent=5 // pred_check
      _
    $region10: #{efficientnet_tabular_forward.2} parent=5 // pred_check_branch
      %154 = sbr.rel (%p151) target = $region12
    $region11: #{efficientnet_tabular_forward.2} parent=5 // pred_region
      %s155 = ssub.s32 %s10, 1
      // Predicated region
      $region13: #{efficientnet_tabular_forward.2} parent=11 // pred_check
        %p156 = pneg %p71
      $region14: #{efficientnet_tabular_forward.2} parent=11 // pred_check_branch
        %158 = sbr.rel (%p156) target = $region16
      $region15: #{efficientnet_tabular_forward.2} parent=11 // pred_region
        _
      $region16: #{efficientnet_tabular_forward.2} parent=11 // pred_fallthru
        _
      // Predicated region
      $region17: #{efficientnet_tabular_forward.2} parent=11 // pred_check
        %p159 = pneg %p92
      $region18: #{efficientnet_tabular_forward.2} parent=11 // pred_check_branch
        %161 = sbr.rel (%p159) target = $region20
      $region19: #{efficientnet_tabular_forward.2} parent=11 // pred_region
        _
      $region20: #{efficientnet_tabular_forward.2} parent=11 // pred_fallthru
        _
      // Predicated region
      $region21: #{efficientnet_tabular_forward.2} parent=11 // pred_check
        %p162 = pneg %p113
      $region22: #{efficientnet_tabular_forward.2} parent=11 // pred_check_branch
        %164 = sbr.rel (%p162) target = $region24
      $region23: #{efficientnet_tabular_forward.2} parent=11 // pred_region
        _
      $region24: #{efficientnet_tabular_forward.2} parent=11 // pred_fallthru
        _
    $region12: #{efficientnet_tabular_forward.2} parent=5 // pred_fallthru
      _
    %p165 = scmp.lt.s32.totalorder %s10, 2
    // Predicated region
    $region25: #{efficientnet_tabular_forward.2} parent=5 // pred_check
      %p166 = pneg %p165
    $region26: #{efficientnet_tabular_forward.2} parent=5 // pred_check_branch
      %168 = sbr.rel (%p166) target = $region28
    $region27: #{efficientnet_tabular_forward.2} parent=5 // pred_region
      // Predicated region
      $region29: #{efficientnet_tabular_forward.2} parent=27 // pred_check
        %p169 = pneg %p44
      $region30: #{efficientnet_tabular_forward.2} parent=27 // pred_check_branch
        %171 = sbr.rel (%p169) target = $region32
      $region31: #{efficientnet_tabular_forward.2} parent=27 // pred_region
        %p172 = scmp.lt.s32.totalorder %s17, 0
        %s173 = scalar_select %p172, %s17, 0
        %p174 = scmp.lt.s32.totalorder %s18, 1
        %s175 = scalar_select %p174, %s18, 1
        %s176 = smul.addr %s175, 2
        %s177 = smul.addr %s173, 4
        %s178 = sadd.s32 %s176, %s177
        %s179 = smul.addr %s178, 4
        %s180 = scalar_lea.vmem %s0, %s179
      $region32: #{efficientnet_tabular_forward.2} parent=27 // pred_fallthru
        _
    $region28: #{efficientnet_tabular_forward.2} parent=5 // pred_fallthru
      _
    %p181 = scmp.le.s32.totalorder 1, %s10
    %p182 = scmp.lt.s32.totalorder %s10, 3
    %p183 = pnand %p181, %p182
    %p184 = pneg %p183
    // Predicated region
    $region33: #{efficientnet_tabular_forward.2} parent=5 // pred_check
      _
    $region34: #{efficientnet_tabular_forward.2} parent=5 // pred_check_branch
      %186 = sbr.rel (%p183) target = $region36
    $region35: #{efficientnet_tabular_forward.2} parent=5 // pred_region
      %s187 = ssub.s32 %s10, 1
      %p188 = scmp.lt.s32.totalorder %s19, 0
      %s189 = scalar_select %p188, %s19, 0
      %p190 = scmp.lt.s32.totalorder %s20, 1
      %s191 = scalar_select %p190, %s20, 1
      %s192 = smul.addr %s191, 2
      %s193 = smul.addr %s189, 4
      %s194 = sadd.s32 %s192, %s193
      %s195 = smul.addr %s194, 4
      %s196 = scalar_lea.vmem %s0, %s195
      %p197 = pneg %p50
      %p198 = pneg %p47
      %p199 = pneg %p71
      %p200 = pneg %p68
      %p201 = pneg %p92
      %p202 = pneg %p89
      %p203 = pneg %p113
      %p204 = pneg %p110
      %p205 = pneg %p141
      %p206 = pneg %p138
      %p207 = scmp.lt.s32.totalorder %s19, 0
      %s208 = scalar_select %p207, %s19, 0
      %p209 = scmp.lt.s32.totalorder %s20, 1
      %s210 = scalar_select %p209, %s20, 1
      %s211 = smul.addr %s208, 2
      %s212 = sadd.s32 %s210, %s211
      %s213 = scalar_lea.vmem %s4, %s212
      %p214 = scmp.lt.s32.totalorder %s19, 0
      %s215 = scalar_select %p214, %s19, 0
      %p216 = scmp.lt.s32.totalorder %s20, 1
      %s217 = scalar_select %p216, %s20, 1
      %s218 = smul.addr %s217, 2
      %s219 = smul.addr %s215, 4
      %s220 = sadd.s32 %s218, %s219
      %s221 = smul.addr %s220, 4
      %s222 = scalar_lea.vmem %s0, %s221
      %p223 = scmp.lt.s32.totalorder %s19, 0
      %s224 = scalar_select %p223, %s19, 0
      %p225 = scmp.lt.s32.totalorder %s20, 1
      %s226 = scalar_select %p225, %s20, 1
      %s227 = smul.addr %s224, 2
      %s228 = sadd.s32 %s226, %s227
      %s229 = scalar_lea.vmem %s4, %s228
      %v231 = vld [vmem:[%s222] sm:$0xf]
      %v232 = vld [vmem:[%s222 + $0x4] sm:$0xf]
      %v233 = vld [vmem:[%s1] sm:$0xf]
      %v234 = vld [vmem:[%s1 + $0x4] sm:$0xf]
      %v235 = vld [vmem:[%s1 + $0x8] sm:$0xf]
      %v236 = vld [vmem:[%s1 + $0xc] sm:$0xf]
      %v237 = vld [vmem:[%s1 + $0x10] sm:$0xf]
      %v238 = vld [vmem:[%s1 + $0x14] sm:$0xf]
      %v239 = vld [vmem:[%s1 + $0x18] sm:$0xf]
      %v240 = vld [vmem:[%s1 + $0x1c] sm:$0xf]
      %v241 = vld [vmem:[%s1 + $0x20] sm:$0xf]
      %v242 = vld [vmem:[%s1 + $0x24] sm:$0xf]
      %v243 = vld [vmem:[%s1 + $0x28] sm:$0x1]
      %v246 = vunpack.c.l.b16 %v231
      %v247 = vunpack.c.l.b16 %v232
      %v248 = vpack.c.b16 %v247, %v246
      %v260 = vunpack.c.l.b16 %v233
      %v261 = vunpack.c.l.b16 %v234
      %v262 = vunpack.c.l.b16 %v235
      %v263 = vunpack.c.l.b16 %v236
      %v264 = vunpack.c.l.b16 %v237
      %v265 = vunpack.c.l.b16 %v238
      %v266 = vunpack.c.l.b16 %v239
      %v267 = vunpack.c.l.b16 %v240
      %v268 = vunpack.c.l.b16 %v241
      %v269 = vunpack.c.l.b16 %v242
      %v270 = vunpack.c.l.b16 %v243
      %v271 = vpack.c.b16 %v261, %v260
      %v272 = vpack.c.b16 %v263, %v262
      %v273 = vpack.c.b16 %v265, %v264
      %v274 = vpack.c.b16 %v267, %v266
      %v275 = vpack.c.b16 %v269, %v268
      %v276 = vpack.c.b16 %v270, %v270
      %vm282 = vcmask 662528
      %v284 = vsel %vm282, %v248, 0
      %vm286 = vcmask 1040384
      %v287 = vsel 0, 4294967295, 65535
      %v288 = vsel %vm286, %v287, 0
      %v290 = vand.u32 %v276, %v288
      %292 = vmatprep.subr.bf16.mxu0 0
      %293 = vmatpush1.bf16.msra.mxu0 0
      %294 = vmatprep.subr.bf16.mxu0 0
      %295 = vmatpush1.bf16.msra.mxu0 0
      %296 = vmatprep.subr.bf16.mxu0 0
      %297 = vmatpush1.bf16.msra.mxu0 %v290
      %298 = vmatprep.subr.bf16.mxu0 0
      %299 = vmatpush1.bf16.msra.mxu0 %v275
      %300 = vmatprep.subr.bf16.mxu0 0
      %301 = vmatpush1.bf16.msra.mxu0 %v274
      %302 = vmatprep.subr.bf16.mxu0 0
      %303 = vmatpush1.bf16.msra.mxu0 %v273
      %304 = vmatprep.subr.bf16.mxu0 0
      %305 = vmatpush1.bf16.msra.mxu0 %v272
      %306 = vmatprep.subr.bf16.mxu0 0
      %307 = vmatpush1.bf16.msra.mxu0 %v271
      %308 = vmatprep.subr.bf16.mxu0 0
      %309 = vmatpush2.bf16.msra.mxu0 0
      %310 = vmatprep.subr.bf16.mxu0 0
      %311 = vmatpush2.bf16.msra.mxu0 0
      %312 = vmatprep.subr.bf16.mxu0 0
      %313 = vmatpush2.bf16.msra.mxu0 0
      %314 = vmatprep.subr.bf16.mxu0 0
      %315 = vmatpush2.bf16.msra.mxu0 0
      %316 = vmatprep.subr.bf16.mxu0 0
      %317 = vmatpush2.bf16.msra.mxu0 0
      %318 = vmatprep.subr.bf16.mxu0 0
      %319 = vmatpush2.bf16.msra.mxu0 0
      %320 = vmatprep.subr.bf16.mxu0 0
      %321 = vmatpush2.bf16.msra.mxu0 0
      %322 = vmatprep.subr.bf16.mxu0 0
      %323 = vmatpush2.bf16.msra.mxu0 0
      %324 = vmatprep.mubr.bf16.mxu0 0
      %325 = vmatmul.mubr.bf16.gmra.mxu0 %v284
      %v326 = vpop.f32.mrf.mxu0
      %v327 = vadd.f32 0.0, %v326
      %v328 = vpop.f32.mrf.mxu0
      %v329 = vpop.f32.mrf.mxu0
      %v330 = vadd.f32 0.0, %v329
      %v331 = vpop.f32.mrf.mxu0
      %332 = vdwg.mxu0
      %v333 = vld [vmem:[%s2] sm:$0x1]
      %v335 = vlaneseq
      %v336 = vshrl.u32 %v335, 7
      %v337 = vsub.s32 0, %v336
      %v338 = vrot.slane %v333, %v337
      %v340 = vmul.f32 %v327, %v338
      %v341 = vmul.f32 %v330, %v338
      %v342 = vld [vmem:[%s3] sm:$0x1]
      %v344 = vlaneseq
      %v345 = vshrl.u32 %v344, 7
      %v346 = vsub.s32 0, %v345
      %v347 = vrot.slane %v342, %v346
      %v349 = vadd.f32 %v340, %v347
      %v350 = vadd.f32 %v341, %v347
      %v351 = vsub.f32 0.0, %v349
      %v352 = vsub.f32 0.0, %v350
      %v353 = vmul.f32 %v351, 1.442695
      %v354 = vpow.pop %v353
      %v355 = vmul.f32 %v352, 1.442695
      %v356 = vpow.pop %v355
      %v357 = vadd.f32 %v354, 1.0
      %v358 = vadd.f32 %v356, 1.0
      %v359 = vrcp.pop %v357
      %v360 = vrcp.pop %v358
      %v361 = vmul.f32 %v349, %v359
      %v362 = vmul.f32 %v350, %v360
      %v363 = vrot.slane %v361, 4
      %v364 = vadd.f32 %v361, %v363
      %v365 = vrot.slane %v364, 2
      %v366 = vadd.f32 %v364, %v365
      %v367 = vrot.slane %v366, 1
      %v368 = vadd.f32 %v366, %v367
      %v369 = vmul.f32 %v368, 0.015625
      %v370 = vpack.c.bf16 %v369, %v369
      %vm371 = vcmask 1040384
      %vm372 = vsmask.f32 256
      %vm373 = vmand %vm371, %vm372
      %v374 = vld [vmem:[%s229] sm:$0x1]
      %v375 = vsel %vm373, %v370, %v374
      %376 = vst [vmem:[%s229] sm:$0x1] %v375
      %v377 = vrot.slane %v362, 4
      %v378 = vadd.f32 %v362, %v377
      %v379 = vrot.slane %v378, 2
      %v380 = vadd.f32 %v378, %v379
      %v381 = vrot.slane %v380, 1
      %v382 = vadd.f32 %v380, %v381
      %v383 = vmul.f32 %v382, 0.015625
      %v384 = vpack.c.bf16 %v383, %v383
      %vm385 = vsmask.f32 7938
      %vm386 = vmand %vm371, %vm385
      %v387 = vld [vmem:[%s229] sm:$0x1]
      %v388 = vsel %vm386, %v384, %v387
      %389 = vst [vmem:[%s229] sm:$0x1] %v388
      %p390 = scmp.lt.s32.totalorder %s19, 0
      %s391 = scalar_select %p390, %s19, 0
      %p392 = scmp.lt.s32.totalorder %s20, 1
      %s393 = scalar_select %p392, %s20, 1
      %s394 = smul.addr %s391, 2
      %s395 = sadd.s32 %s393, %s394
      %s396 = scalar_lea.vmem %s4, %s395
      // Predicated region
      $region37: #{efficientnet_tabular_forward.2} parent=35 // pred_check
        %p397 = pneg %p138
      $region38: #{efficientnet_tabular_forward.2} parent=35 // pred_check_branch
        %399 = sbr.rel (%p397) target = $region40
      $region39: #{efficientnet_tabular_forward.2} parent=35 // pred_region
        _
      $region40: #{efficientnet_tabular_forward.2} parent=35 // pred_fallthru
        _
    $region36: #{efficientnet_tabular_forward.2} parent=5 // pred_fallthru
      _
    %p400 = scmp.le.s32.totalorder 2, %s10
    // Predicated region
    $region41: #{efficientnet_tabular_forward.2} parent=5 // pred_check
      %p401 = pneg %p400
    $region42: #{efficientnet_tabular_forward.2} parent=5 // pred_check_branch
      %403 = sbr.rel (%p401) target = $region44
    $region43: #{efficientnet_tabular_forward.2} parent=5 // pred_region
      %s404 = ssub.s32 %s10, 2
      // Predicated region
      $region45: #{efficientnet_tabular_forward.2} parent=43 // pred_check
        %p405 = pneg %p144
      $region46: #{efficientnet_tabular_forward.2} parent=43 // pred_check_branch
        %407 = sbr.rel (%p405) target = $region48
      $region47: #{efficientnet_tabular_forward.2} parent=43 // pred_region
        %p408 = scmp.lt.s32.totalorder %s21, 0
        %s409 = scalar_select %p408, %s21, 0
        %p410 = scmp.lt.s32.totalorder %s22, 1
        %s411 = scalar_select %p410, %s22, 1
        %s412 = smul.addr %s409, 2
        %s413 = sadd.s32 %s411, %s412
        %s414 = scalar_lea.vmem %s4, %s413
      $region48: #{efficientnet_tabular_forward.2} parent=43 // pred_fallthru
        _
    $region44: #{efficientnet_tabular_forward.2} parent=5 // pred_fallthru
      _
  $region6: #{efficientnet_tabular_forward.2} parent=0 // loop_footer
    %s14 = sadd.s32 1, %s10
  $region7: #{efficientnet_tabular_forward.2} parent=0 // loop_footer_branch
    %9 = sbr.rel target = $region3
  $region8: #{efficientnet_tabular_forward.2} parent=0 // loop_exit
    _

// kernel: efficientnet_tabular_forward.3
$region0: #{efficientnet_tabular_forward.3}
  #allocation0 [shape = 'u32[]', space=smem, size = 0x4, offset = 0x4, fixed_abs, tag = 'smem constant byte address 0x4 - core index']
  #allocation1 [shape = 'u32[144,128]{1,0:T(1,128)}', space=vmem, size = 0x12000, scoped, tag = 'internal scratch']
  #allocation2 [shape = 'f32[1,1]{1,0:T(1,128)S(1)}', space=vmem, size = 0x200, scoped, tag = 'scoped memory for efficientnet_tabular_forward.3']
  %s0 = inlined_call_operand.vmem [shape: bf16[2,256], index: 0, kind: input, shape index: {}]
  %s1 = inlined_call_operand.vmem [shape: f32[2,4], index: 1, kind: input, shape index: {}]
  %s2 = inlined_call_operand.vmem [shape: f32[2,1], index: 2, kind: input, shape index: {}]
  %s3 = inlined_call_operand.vmem [shape: bf16[256,1280], index: 3, kind: input, shape index: {}]
  %s4 = inlined_call_operand.vmem [shape: f32[1,1280], index: 4, kind: input, shape index: {}]
  %s5 = inlined_call_operand.vmem [shape: bf16[1280,512], index: 5, kind: input, shape index: {}]
  %s6 = inlined_call_operand.vmem [shape: f32[1,512], index: 6, kind: input, shape index: {}]
  %s7 = inlined_call_operand.vmem [shape: f32[4,256], index: 7, kind: input, shape index: {}]
  %s8 = inlined_call_operand.vmem [shape: f32[1,256], index: 8, kind: input, shape index: {}]
  %s9 = inlined_call_operand.vmem [shape: f32[1,256], index: 9, kind: input, shape index: {}]
  %s10 = inlined_call_operand.vmem [shape: bf16[256,256], index: 10, kind: input, shape index: {}]
  %s11 = inlined_call_operand.vmem [shape: f32[1,256], index: 11, kind: input, shape index: {}]
  %s12 = inlined_call_operand.vmem [shape: f32[1,256], index: 12, kind: input, shape index: {}]
  %s13 = inlined_call_operand.hbm [shape: bf16[512,1024], index: 13, kind: input, shape index: {}]
  %s14 = inlined_call_operand.hbm [shape: bf16[256,1024], index: 14, kind: input, shape index: {}]
  %s15 = inlined_call_operand.vmem [shape: f32[1,1024], index: 15, kind: input, shape index: {}]
  %s16 = inlined_call_operand.vmem [shape: f32[1,1024], index: 16, kind: input, shape index: {}]
  %s17 = inlined_call_operand.vmem [shape: f32[1,1024], index: 17, kind: input, shape index: {}]
  %s18 = inlined_call_operand.<no memory space> [shape: f32[1,1], index: 18, kind: input, shape index: {}]
  %s19 = inlined_call_operand.vmem [shape: f32[2,1], index: 19, kind: output, shape index: {0}]
  %s20 = inlined_call_operand.vmem [shape: f32[2,1], index: 20, kind: output, shape index: {1}]
  %21 = xla_tuple %s19, %s20
  %s22 = sld [smem:[#allocation0]]
  $region102: #{efficientnet_tabular_forward.3} parent=0
    _
  %s24 = ssub.s32 1, %s22
  %s25 = scalar_select 0, %s24, %s22
  %v26 = vstv %s18
  %27 = vst [vmem:[#allocation2] sm:$0x1] %v26
  $region1: #{efficientnet_tabular_forward.3} parent=0
    #allocation3 [shape = 'u8[1048576]{0}', space=vmem, size = 0x100000, scoped, tag = 'input window, operand 13, single buffered']
    #allocation4 [shape = 's32[1]{0}', space=sflag, size = 0x4, scoped, tag = 'scoped memory for efficientnet_tabular_forward.3']
    #allocation5 [shape = 'u8[524288]{0}', space=vmem, size = 0x80000, scoped, tag = 'input window, operand 14, single buffered']
    #allocation6 [shape = 's32[1]{0}', space=sflag, size = 0x4, scoped, tag = 'scoped memory for efficientnet_tabular_forward.3']
    %28 = vsyncpa [#allocation4], 0
    %29 = vsyncpa [#allocation6], 0
    // Predicated region
    $region2: #{efficientnet_tabular_forward.3} parent=1 // pred_check
      _
    $region3: #{efficientnet_tabular_forward.3} parent=1 // pred_check_branch
      %31 = sbr.rel (0) target = $region5
    $region4: #{efficientnet_tabular_forward.3} parent=1 // pred_region
      _
    $region5: #{efficientnet_tabular_forward.3} parent=1 // pred_fallthru
      _
    // Predicated region
    $region6: #{efficientnet_tabular_forward.3} parent=1 // pred_check
      _
    $region7: #{efficientnet_tabular_forward.3} parent=1 // pred_check_branch
      %33 = sbr.rel (0) target = $region9
    $region8: #{efficientnet_tabular_forward.3} parent=1 // pred_region
      _
    $region9: #{efficientnet_tabular_forward.3} parent=1 // pred_fallthru
      _
    // Predicated region
    $region10: #{efficientnet_tabular_forward.3} parent=1 // pred_check
      _
    $region11: #{efficientnet_tabular_forward.3} parent=1 // pred_check_branch
      %35 = sbr.rel (0) target = $region13
    $region12: #{efficientnet_tabular_forward.3} parent=1 // pred_region
      _
    $region13: #{efficientnet_tabular_forward.3} parent=1 // pred_fallthru
      _
    // Predicated region
    $region14: #{efficientnet_tabular_forward.3} parent=1 // pred_check
      _
    $region15: #{efficientnet_tabular_forward.3} parent=1 // pred_check_branch
      %37 = sbr.rel (0) target = $region17
    $region16: #{efficientnet_tabular_forward.3} parent=1 // pred_region
      _
    $region17: #{efficientnet_tabular_forward.3} parent=1 // pred_fallthru
      _
    // Predicated region
    $region18: #{efficientnet_tabular_forward.3} parent=1 // pred_check
      _
    $region19: #{efficientnet_tabular_forward.3} parent=1 // pred_check_branch
      %39 = sbr.rel (0) target = $region21
    $region20: #{efficientnet_tabular_forward.3} parent=1 // pred_region
      _
    $region21: #{efficientnet_tabular_forward.3} parent=1 // pred_fallthru
      _
    // Predicated region
    $region22: #{efficientnet_tabular_forward.3} parent=1 // pred_check
      _
    $region23: #{efficientnet_tabular_forward.3} parent=1 // pred_check_branch
      %41 = sbr.rel (0) target = $region25
    $region24: #{efficientnet_tabular_forward.3} parent=1 // pred_region
      _
    $region25: #{efficientnet_tabular_forward.3} parent=1 // pred_fallthru
      _
    // Predicated region
    $region26: #{efficientnet_tabular_forward.3} parent=1 // pred_check
      _
    $region27: #{efficientnet_tabular_forward.3} parent=1 // pred_check_branch
      %43 = sbr.rel (0) target = $region29
    $region28: #{efficientnet_tabular_forward.3} parent=1 // pred_region
      _
    $region29: #{efficientnet_tabular_forward.3} parent=1 // pred_fallthru
      _
    // Predicated region
    $region30: #{efficientnet_tabular_forward.3} parent=1 // pred_check
      _
    $region31: #{efficientnet_tabular_forward.3} parent=1 // pred_check_branch
      %45 = sbr.rel (0) target = $region33
    $region32: #{efficientnet_tabular_forward.3} parent=1 // pred_region
      _
    $region33: #{efficientnet_tabular_forward.3} parent=1 // pred_fallthru
      _
    // Predicated region
    $region34: #{efficientnet_tabular_forward.3} parent=1 // pred_check
      _
    $region35: #{efficientnet_tabular_forward.3} parent=1 // pred_check_branch
      %47 = sbr.rel (0) target = $region37
    $region36: #{efficientnet_tabular_forward.3} parent=1 // pred_region
      _
    $region37: #{efficientnet_tabular_forward.3} parent=1 // pred_fallthru
      _
    // Predicated region
    $region38: #{efficientnet_tabular_forward.3} parent=1 // pred_check
      _
    $region39: #{efficientnet_tabular_forward.3} parent=1 // pred_check_branch
      %49 = sbr.rel (0) target = $region41
    $region40: #{efficientnet_tabular_forward.3} parent=1 // pred_region
      _
    $region41: #{efficientnet_tabular_forward.3} parent=1 // pred_fallthru
      _
    // Predicated region
    $region42: #{efficientnet_tabular_forward.3} parent=1 // pred_check
      _
    $region43: #{efficientnet_tabular_forward.3} parent=1 // pred_check_branch
      %51 = sbr.rel (0) target = $region45
    $region44: #{efficientnet_tabular_forward.3} parent=1 // pred_region
      _
    $region45: #{efficientnet_tabular_forward.3} parent=1 // pred_fallthru
      _
    // Predicated region
    $region46: #{efficientnet_tabular_forward.3} parent=1 // pred_check
      _
    $region47: #{efficientnet_tabular_forward.3} parent=1 // pred_check_branch
      %53 = sbr.rel (0) target = $region49
    $region48: #{efficientnet_tabular_forward.3} parent=1 // pred_region
      _
    $region49: #{efficientnet_tabular_forward.3} parent=1 // pred_fallthru
      _
    // Predicated region
    $region50: #{efficientnet_tabular_forward.3} parent=1 // pred_check
      _
    $region51: #{efficientnet_tabular_forward.3} parent=1 // pred_check_branch
      %55 = sbr.rel (0) target = $region53
    $region52: #{efficientnet_tabular_forward.3} parent=1 // pred_region
      _
    $region53: #{efficientnet_tabular_forward.3} parent=1 // pred_fallthru
      _
    // Predicated region
    $region54: #{efficientnet_tabular_forward.3} parent=1 // pred_check
      _
    $region55: #{efficientnet_tabular_forward.3} parent=1 // pred_check_branch
      %57 = sbr.rel (0) target = $region57
    $region56: #{efficientnet_tabular_forward.3} parent=1 // pred_region
      %s59 = ssub.s32 32768, 32768
      %60 = vsyncadd [#allocation4], %s59
      %s61 = sshll.u32 [#allocation3], 4
      %s62 = int_to_ptr.vmem [resolvable:$true] %s61
      %67 = dma.hbm_to_vmem [thread:$0]  %s13, 32768, %s62, [#allocation4], 512, 512, 32
    $region57: #{efficientnet_tabular_forward.3} parent=1 // pred_fallthru
      _
    // Predicated region
    $region58: #{efficientnet_tabular_forward.3} parent=1 // pred_check
      _
    $region59: #{efficientnet_tabular_forward.3} parent=1 // pred_check_branch
      %69 = sbr.rel (0) target = $region61
    $region60: #{efficientnet_tabular_forward.3} parent=1 // pred_region
      %s71 = ssub.s32 16384, 16384
      %72 = vsyncadd [#allocation6], %s71
      %s73 = sshll.u32 [#allocation5], 4
      %s74 = int_to_ptr.vmem [resolvable:$true] %s73
      %79 = dma.hbm_to_vmem [thread:$0]  %s14, 16384, %s74, [#allocation6], 512, 512, 32
    $region61: #{efficientnet_tabular_forward.3} parent=1 // pred_fallthru
      _
    // Predicated region
    $region62: #{efficientnet_tabular_forward.3} parent=1 // pred_check
      _
    $region63: #{efficientnet_tabular_forward.3} parent=1 // pred_check_branch
      %81 = sbr.rel (0) target = $region65
    $region64: #{efficientnet_tabular_forward.3} parent=1 // pred_region
      _
    $region65: #{efficientnet_tabular_forward.3} parent=1 // pred_fallthru
      _
    // Predicated region
    $region66: #{efficientnet_tabular_forward.3} parent=1 // pred_check
      _
    $region67: #{efficientnet_tabular_forward.3} parent=1 // pred_check_branch
      %83 = sbr.rel (0) target = $region69
    $region68: #{efficientnet_tabular_forward.3} parent=1 // pred_region
      _
    $region69: #{efficientnet_tabular_forward.3} parent=1 // pred_fallthru
      _
    // Predicated region
    $region70: #{efficientnet_tabular_forward.3} parent=1 // pred_check
      _
    $region71: #{efficientnet_tabular_forward.3} parent=1 // pred_check_branch
      %85 = sbr.rel (0) target = $region73
    $region72: #{efficientnet_tabular_forward.3} parent=1 // pred_region
      _
    $region73: #{efficientnet_tabular_forward.3} parent=1 // pred_fallthru
      _
    // Predicated region
    $region74: #{efficientnet_tabular_forward.3} parent=1 // pred_check
      _
    $region75: #{efficientnet_tabular_forward.3} parent=1 // pred_check_branch
      %87 = sbr.rel (0) target = $region77
    $region76: #{efficientnet_tabular_forward.3} parent=1 // pred_region
      _
    $region77: #{efficientnet_tabular_forward.3} parent=1 // pred_fallthru
      _
    // Predicated region
    $region78: #{efficientnet_tabular_forward.3} parent=1 // pred_check
      _
    $region79: #{efficientnet_tabular_forward.3} parent=1 // pred_check_branch
      %89 = sbr.rel (0) target = $region81
    $region80: #{efficientnet_tabular_forward.3} parent=1 // pred_region
      %90 = dma.done [#allocation4], 32768
    $region81: #{efficientnet_tabular_forward.3} parent=1 // pred_fallthru
      _
    // Predicated region
    $region82: #{efficientnet_tabular_forward.3} parent=1 // pred_check
      _
    $region83: #{efficientnet_tabular_forward.3} parent=1 // pred_check_branch
      %92 = sbr.rel (0) target = $region85
    $region84: #{efficientnet_tabular_forward.3} parent=1 // pred_region
      %93 = dma.done [#allocation6], 16384
    $region85: #{efficientnet_tabular_forward.3} parent=1 // pred_fallthru
      _
    %v94 = vld [vmem:[%s0] sm:$0x3]
    %v95 = vld [vmem:[%s3] sm:$0xff]
    %v96 = vld [vmem:[%s3 + $0x8] sm:$0xff]
    %v97 = vld [vmem:[%s3 + $0x10] sm:$0xff]
    %v98 = vld [vmem:[%s3 + $0x18] sm:$0xff]
    %v99 = vld [vmem:[%s3 + $0x20] sm:$0xff]
    %v100 = vld [vmem:[%s3 + $0x28] sm:$0xff]
    %v101 = vld [vmem:[%s3 + $0x30] sm:$0xff]
    %v102 = vld [vmem:[%s3 + $0x38] sm:$0xff]
    %v103 = vld [vmem:[%s3 + $0x40] sm:$0xff]
    %v104 = vld [vmem:[%s3 + $0x48] sm:$0xff]
    %v105 = vld [vmem:[%s3 + $0x50] sm:$0xff]
    %v106 = vld [vmem:[%s3 + $0x58] sm:$0xff]
    %v107 = vld [vmem:[%s3 + $0x60] sm:$0xff]
    %v108 = vld [vmem:[%s3 + $0x68] sm:$0xff]
    %v109 = vld [vmem:[%s3 + $0x70] sm:$0xff]
    %v110 = vld [vmem:[%s3 + $0x78] sm:$0xff]
    %v111 = vld [vmem:[%s3 + $0x80] sm:$0xff]
    %v112 = vld [vmem:[%s3 + $0x88] sm:$0xff]
    %v113 = vld [vmem:[%s3 + $0x90] sm:$0xff]
    %v114 = vld [vmem:[%s3 + $0x98] sm:$0xff]
    %v115 = vld [vmem:[%s3 + $0xa0] sm:$0xff]
    %v116 = vld [vmem:[%s3 + $0xa8] sm:$0xff]
    %v117 = vld [vmem:[%s3 + $0xb0] sm:$0xff]
    %v118 = vld [vmem:[%s3 + $0xb8] sm:$0xff]
    %v119 = vld [vmem:[%s3 + $0xc0] sm:$0xff]
    %v120 = vld [vmem:[%s3 + $0xc8] sm:$0xff]
    %v121 = vld [vmem:[%s3 + $0xd0] sm:$0xff]
    %v122 = vld [vmem:[%s3 + $0xd8] sm:$0xff]
    %v123 = vld [vmem:[%s3 + $0xe0] sm:$0xff]
    %v124 = vld [vmem:[%s3 + $0xe8] sm:$0xff]
    %v125 = vld [vmem:[%s3 + $0xf0] sm:$0xff]
    %v126 = vld [vmem:[%s3 + $0xf8] sm:$0xff]
    %v127 = vld [vmem:[%s3 + $0x100] sm:$0xff]
    %v128 = vld [vmem:[%s3 + $0x108] sm:$0xff]
    %v129 = vld [vmem:[%s3 + $0x110] sm:$0xff]
    %v130 = vld [vmem:[%s3 + $0x118] sm:$0xff]
    %v131 = vld [vmem:[%s3 + $0x120] sm:$0xff]
    %v132 = vld [vmem:[%s3 + $0x128] sm:$0xff]
    %v133 = vld [vmem:[%s3 + $0x130] sm:$0xff]
    %v134 = vld [vmem:[%s3 + $0x138] sm:$0xff]
    %v135 = vld [vmem:[%s3 + $0x140] sm:$0xff]
    %v136 = vld [vmem:[%s3 + $0x148] sm:$0xff]
    %v137 = vld [vmem:[%s3 + $0x150] sm:$0xff]
    %v138 = vld [vmem:[%s3 + $0x158] sm:$0xff]
    %v139 = vld [vmem:[%s3 + $0x160] sm:$0xff]
    %v140 = vld [vmem:[%s3 + $0x168] sm:$0xff]
    %v141 = vld [vmem:[%s3 + $0x170] sm:$0xff]
    %v142 = vld [vmem:[%s3 + $0x178] sm:$0xff]
    %v143 = vld [vmem:[%s3 + $0x180] sm:$0xff]
    %v144 = vld [vmem:[%s3 + $0x188] sm:$0xff]
    %v145 = vld [vmem:[%s3 + $0x190] sm:$0xff]
    %v146 = vld [vmem:[%s3 + $0x198] sm:$0xff]
    %v147 = vld [vmem:[%s3 + $0x1a0] sm:$0xff]
    %v148 = vld [vmem:[%s3 + $0x1a8] sm:$0xff]
    %v149 = vld [vmem:[%s3 + $0x1b0] sm:$0xff]
    %v150 = vld [vmem:[%s3 + $0x1b8] sm:$0xff]
    %v151 = vld [vmem:[%s3 + $0x1c0] sm:$0xff]
    %v152 = vld [vmem:[%s3 + $0x1c8] sm:$0xff]
    %v153 = vld [vmem:[%s3 + $0x1d0] sm:$0xff]
    %v154 = vld [vmem:[%s3 + $0x1d8] sm:$0xff]
    %v155 = vld [vmem:[%s3 + $0x1e0] sm:$0xff]
    %v156 = vld [vmem:[%s3 + $0x1e8] sm:$0xff]
    %v157 = vld [vmem:[%s3 + $0x1f0] sm:$0xff]
    %v158 = vld [vmem:[%s3 + $0x1f8] sm:$0xff]
    %v159 = vld [vmem:[%s3 + $0x200] sm:$0xff]
    %v160 = vld [vmem:[%s3 + $0x208] sm:$0xff]
    %v161 = vld [vmem:[%s3 + $0x210] sm:$0xff]
    %v162 = vld [vmem:[%s3 + $0x218] sm:$0xff]
    %v163 = vld [vmem:[%s3 + $0x220] sm:$0xff]
    %v164 = vld [vmem:[%s3 + $0x228] sm:$0xff]
    %v165 = vld [vmem:[%s3 + $0x230] sm:$0xff]
    %v166 = vld [vmem:[%s3 + $0x238] sm:$0xff]
    %v167 = vld [vmem:[%s3 + $0x240] sm:$0xff]
    %v168 = vld [vmem:[%s3 + $0x248] sm:$0xff]
    %v169 = vld [vmem:[%s3 + $0x250] sm:$0xff]
    %v170 = vld [vmem:[%s3 + $0x258] sm:$0xff]
    %v171 = vld [vmem:[%s3 + $0x260] sm:$0xff]
    %v172 = vld [vmem:[%s3 + $0x268] sm:$0xff]
    %v173 = vld [vmem:[%s3 + $0x270] sm:$0xff]
    %v174 = vld [vmem:[%s3 + $0x278] sm:$0xff]
    %v175 = vld [vmem:[%s3 + $0x280] sm:$0xff]
    %v176 = vld [vmem:[%s3 + $0x288] sm:$0xff]
    %v177 = vld [vmem:[%s3 + $0x290] sm:$0xff]
    %v178 = vld [vmem:[%s3 + $0x298] sm:$0xff]
    %v179 = vld [vmem:[%s3 + $0x2a0] sm:$0xff]
    %v180 = vld [vmem:[%s3 + $0x2a8] sm:$0xff]
    %v181 = vld [vmem:[%s3 + $0x2b0] sm:$0xff]
    %v182 = vld [vmem:[%s3 + $0x2b8] sm:$0xff]
    %v183 = vld [vmem:[%s3 + $0x2c0] sm:$0xff]
    %v184 = vld [vmem:[%s3 + $0x2c8] sm:$0xff]
    %v185 = vld [vmem:[%s3 + $0x2d0] sm:$0xff]
    %v186 = vld [vmem:[%s3 + $0x2d8] sm:$0xff]
    %v187 = vld [vmem:[%s3 + $0x2e0] sm:$0xff]
    %v188 = vld [vmem:[%s3 + $0x2e8] sm:$0xff]
    %v189 = vld [vmem:[%s3 + $0x2f0] sm:$0xff]
    %v190 = vld [vmem:[%s3 + $0x2f8] sm:$0xff]
    %v191 = vld [vmem:[%s3 + $0x300] sm:$0xff]
    %v192 = vld [vmem:[%s3 + $0x308] sm:$0xff]
    %v193 = vld [vmem:[%s3 + $0x310] sm:$0xff]
    %v194 = vld [vmem:[%s3 + $0x318] sm:$0xff]
    %v195 = vld [vmem:[%s3 + $0x320] sm:$0xff]
    %v196 = vld [vmem:[%s3 + $0x328] sm:$0xff]
    %v197 = vld [vmem:[%s3 + $0x330] sm:$0xff]
    %v198 = vld [vmem:[%s3 + $0x338] sm:$0xff]
    %v199 = vld [vmem:[%s3 + $0x340] sm:$0xff]
    %v200 = vld [vmem:[%s3 + $0x348] sm:$0xff]
    %v201 = vld [vmem:[%s3 + $0x350] sm:$0xff]
    %v202 = vld [vmem:[%s3 + $0x358] sm:$0xff]
    %v203 = vld [vmem:[%s3 + $0x360] sm:$0xff]
    %v204 = vld [vmem:[%s3 + $0x368] sm:$0xff]
    %v205 = vld [vmem:[%s3 + $0x370] sm:$0xff]
    %v206 = vld [vmem:[%s3 + $0x378] sm:$0xff]
    %v207 = vld [vmem:[%s3 + $0x380] sm:$0xff]
    %v208 = vld [vmem:[%s3 + $0x388] sm:$0xff]
    %v209 = vld [vmem:[%s3 + $0x390] sm:$0xff]
    %v210 = vld [vmem:[%s3 + $0x398] sm:$0xff]
    %v211 = vld [vmem:[%s3 + $0x3a0] sm:$0xff]
    %v212 = vld [vmem:[%s3 + $0x3a8] sm:$0xff]
    %v213 = vld [vmem:[%s3 + $0x3b0] sm:$0xff]
    %v214 = vld [vmem:[%s3 + $0x3b8] sm:$0xff]
    %v215 = vld [vmem:[%s3 + $0x3c0] sm:$0xff]
    %v216 = vld [vmem:[%s3 + $0x3c8] sm:$0xff]
    %v217 = vld [vmem:[%s3 + $0x3d0] sm:$0xff]
    %v218 = vld [vmem:[%s3 + $0x3d8] sm:$0xff]
    %v219 = vld [vmem:[%s3 + $0x3e0] sm:$0xff]
    %v220 = vld [vmem:[%s3 + $0x3e8] sm:$0xff]
    %v221 = vld [vmem:[%s3 + $0x3f0] sm:$0xff]
    %v222 = vld [vmem:[%s3 + $0x3f8] sm:$0xff]
    %v223 = vld [vmem:[%s3 + $0x400] sm:$0xff]
    %v224 = vld [vmem:[%s3 + $0x408] sm:$0xff]
    %v225 = vld [vmem:[%s3 + $0x410] sm:$0xff]
    %v226 = vld [vmem:[%s3 + $0x418] sm:$0xff]
    %v227 = vld [vmem:[%s3 + $0x420] sm:$0xff]
    %v228 = vld [vmem:[%s3 + $0x428] sm:$0xff]
    %v229 = vld [vmem:[%s3 + $0x430] sm:$0xff]
    %v230 = vld [vmem:[%s3 + $0x438] sm:$0xff]
    %v231 = vld [vmem:[%s3 + $0x440] sm:$0xff]
    %v232 = vld [vmem:[%s3 + $0x448] sm:$0xff]
    %v233 = vld [vmem:[%s3 + $0x450] sm:$0xff]
    %v234 = vld [vmem:[%s3 + $0x458] sm:$0xff]
    %v235 = vld [vmem:[%s3 + $0x460] sm:$0xff]
    %v236 = vld [vmem:[%s3 + $0x468] sm:$0xff]
    %v237 = vld [vmem:[%s3 + $0x470] sm:$0xff]
    %v238 = vld [vmem:[%s3 + $0x478] sm:$0xff]
    %v239 = vld [vmem:[%s3 + $0x480] sm:$0xff]
    %v240 = vld [vmem:[%s3 + $0x488] sm:$0xff]
    %v241 = vld [vmem:[%s3 + $0x490] sm:$0xff]
    %v242 = vld [vmem:[%s3 + $0x498] sm:$0xff]
    %v243 = vld [vmem:[%s3 + $0x4a0] sm:$0xff]
    %v244 = vld [vmem:[%s3 + $0x4a8] sm:$0xff]
    %v245 = vld [vmem:[%s3 + $0x4b0] sm:$0xff]
    %v246 = vld [vmem:[%s3 + $0x4b8] sm:$0xff]
    %v247 = vld [vmem:[%s3 + $0x4c0] sm:$0xff]
    %v248 = vld [vmem:[%s3 + $0x4c8] sm:$0xff]
    %v249 = vld [vmem:[%s3 + $0x4d0] sm:$0xff]
    %v250 = vld [vmem:[%s3 + $0x4d8] sm:$0xff]
    %v251 = vld [vmem:[%s3 + $0x4e0] sm:$0xff]
    %v252 = vld [vmem:[%s3 + $0x4e8] sm:$0xff]
    %v253 = vld [vmem:[%s3 + $0x4f0] sm:$0xff]
    %v254 = vld [vmem:[%s3 + $0x4f8] sm:$0xff]
    %v255 = vld [vmem:[%s4] sm:$0xff]
    %v256 = vld [vmem:[%s4 + $0x8] sm:$0x3]
    %v259 = vlaneseq
    %v260 = vshrl.u32 %v259, 7
    %v261 = vsub.s32 0, %v260
    %v262 = vrot.slane %v255, %v261
    %v263 = vlaneseq
    %v264 = vshrl.u32 %v263, 7
    %v265 = vsub.s32 1, %v264
    %v266 = vrot.slane %v255, %v265
    %v267 = vlaneseq
    %v268 = vshrl.u32 %v267, 7
    %v269 = vsub.s32 2, %v268
    %v270 = vrot.slane %v255, %v269
    %v271 = vlaneseq
    %v272 = vshrl.u32 %v271, 7
    %v273 = vsub.s32 3, %v272
    %v274 = vrot.slane %v255, %v273
    %v275 = vlaneseq
    %v276 = vshrl.u32 %v275, 7
    %v277 = vsub.s32 4, %v276
    %v278 = vrot.slane %v255, %v277
    %v279 = vlaneseq
    %v280 = vshrl.u32 %v279, 7
    %v281 = vsub.s32 5, %v280
    %v282 = vrot.slane %v255, %v281
    %v283 = vlaneseq
    %v284 = vshrl.u32 %v283, 7
    %v285 = vsub.s32 6, %v284
    %v286 = vrot.slane %v255, %v285
    %v287 = vlaneseq
    %v288 = vshrl.u32 %v287, 7
    %v289 = vsub.s32 7, %v288
    %v290 = vrot.slane %v255, %v289
    %v291 = vlaneseq
    %v292 = vshrl.u32 %v291, 7
    %v293 = vsub.s32 0, %v292
    %v294 = vrot.slane %v256, %v293
    %v295 = vlaneseq
    %v296 = vshrl.u32 %v295, 7
    %v297 = vsub.s32 1, %v296
    %v298 = vrot.slane %v256, %v297
    %v311 = vunpack.c.l.s4 1966171168
    %v312 = vunpack.c.0.s8 %v311
    %v313 = vlaneseq
    %v314 = vshrl.u32 %v313, 7
    %v315 = vsub.s32 %v312, %v314
    %v316 = vrot.slane %v94, %v315
    %v317 = vcombine.high %v316, %v316
    %v319 = vunpack.c.l.s4 1966171168
    %v320 = vunpack.c.0.s8 %v319
    %v321 = vlaneseq
    %v322 = vshrl.u32 %v321, 7
    %v323 = vsub.s32 %v320, %v322
    %v324 = vrot.slane %v316, %v323
    %v326 = vunpack.c.l.s4 1966171168
    %v327 = vunpack.c.0.s8 %v326
    %v328 = vlaneseq
    %v329 = vshrl.u32 %v328, 7
    %v330 = vsub.s32 %v327, %v329
    %v331 = vrot.slane %v317, %v330
    %v494 = vunpack.c.l.b16 %v95
    %v495 = vunpack.c.h.b16 %v95
    %v496 = vunpack.c.l.b16 %v96
    %v497 = vunpack.c.h.b16 %v96
    %v498 = vunpack.c.l.b16 %v97
    %v499 = vunpack.c.h.b16 %v97
    %v500 = vunpack.c.l.b16 %v98
    %v501 = vunpack.c.h.b16 %v98
    %v502 = vunpack.c.l.b16 %v99
    %v503 = vunpack.c.h.b16 %v99
    %v504 = vunpack.c.l.b16 %v100
    %v505 = vunpack.c.h.b16 %v100
    %v506 = vunpack.c.l.b16 %v101
    %v507 = vunpack.c.h.b16 %v101
    %v508 = vunpack.c.l.b16 %v102
    %v509 = vunpack.c.h.b16 %v102
    %v510 = vunpack.c.l.b16 %v103
    %v511 = vunpack.c.h.b16 %v103
    %v512 = vunpack.c.l.b16 %v104
    %v513 = vunpack.c.h.b16 %v104
    %v514 = vunpack.c.l.b16 %v105
    %v515 = vunpack.c.h.b16 %v105
    %v516 = vunpack.c.l.b16 %v106
    %v517 = vunpack.c.h.b16 %v106
    %v518 = vunpack.c.l.b16 %v107
    %v519 = vunpack.c.h.b16 %v107
    %v520 = vunpack.c.l.b16 %v108
    %v521 = vunpack.c.h.b16 %v108
    %v522 = vunpack.c.l.b16 %v109
    %v523 = vunpack.c.h.b16 %v109
    %v524 = vunpack.c.l.b16 %v110
    %v525 = vunpack.c.h.b16 %v110
    %v526 = vunpack.c.l.b16 %v111
    %v527 = vunpack.c.h.b16 %v111
    %v528 = vunpack.c.l.b16 %v112
    %v529 = vunpack.c.h.b16 %v112
    %v530 = vunpack.c.l.b16 %v113
    %v531 = vunpack.c.h.b16 %v113
    %v532 = vunpack.c.l.b16 %v114
    %v533 = vunpack.c.h.b16 %v114
    %v534 = vunpack.c.l.b16 %v115
    %v535 = vunpack.c.h.b16 %v115
    %v536 = vunpack.c.l.b16 %v116
    %v537 = vunpack.c.h.b16 %v116
    %v538 = vunpack.c.l.b16 %v117
    %v539 = vunpack.c.h.b16 %v117
    %v540 = vunpack.c.l.b16 %v118
    %v541 = vunpack.c.h.b16 %v118
    %v542 = vunpack.c.l.b16 %v119
    %v543 = vunpack.c.h.b16 %v119
    %v544 = vunpack.c.l.b16 %v120
    %v545 = vunpack.c.h.b16 %v120
    %v546 = vunpack.c.l.b16 %v121
    %v547 = vunpack.c.h.b16 %v121
    %v548 = vunpack.c.l.b16 %v122
    %v549 = vunpack.c.h.b16 %v122
    %v550 = vunpack.c.l.b16 %v123
    %v551 = vunpack.c.h.b16 %v123
    %v552 = vunpack.c.l.b16 %v124
    %v553 = vunpack.c.h.b16 %v124
    %v554 = vunpack.c.l.b16 %v125
    %v555 = vunpack.c.h.b16 %v125
    %v556 = vunpack.c.l.b16 %v126
    %v557 = vunpack.c.h.b16 %v126
    %v558 = vunpack.c.l.b16 %v127
    %v559 = vunpack.c.h.b16 %v127
    %v560 = vunpack.c.l.b16 %v128
    %v561 = vunpack.c.h.b16 %v128
    %v562 = vunpack.c.l.b16 %v129
    %v563 = vunpack.c.h.b16 %v129
    %v564 = vunpack.c.l.b16 %v130
    %v565 = vunpack.c.h.b16 %v130
    %v566 = vunpack.c.l.b16 %v131
    %v567 = vunpack.c.h.b16 %v131
    %v568 = vunpack.c.l.b16 %v132
    %v569 = vunpack.c.h.b16 %v132
    %v570 = vunpack.c.l.b16 %v133
    %v571 = vunpack.c.h.b16 %v133
    %v572 = vunpack.c.l.b16 %v134
    %v573 = vunpack.c.h.b16 %v134
    %v574 = vunpack.c.l.b16 %v135
    %v575 = vunpack.c.h.b16 %v135
    %v576 = vunpack.c.l.b16 %v136
    %v577 = vunpack.c.h.b16 %v136
    %v578 = vunpack.c.l.b16 %v137
    %v579 = vunpack.c.h.b16 %v137
    %v580 = vunpack.c.l.b16 %v138
    %v581 = vunpack.c.h.b16 %v138
    %v582 = vunpack.c.l.b16 %v139
    %v583 = vunpack.c.h.b16 %v139
    %v584 = vunpack.c.l.b16 %v140
    %v585 = vunpack.c.h.b16 %v140
    %v586 = vunpack.c.l.b16 %v141
    %v587 = vunpack.c.h.b16 %v141
    %v588 = vunpack.c.l.b16 %v142
    %v589 = vunpack.c.h.b16 %v142
    %v590 = vunpack.c.l.b16 %v143
    %v591 = vunpack.c.h.b16 %v143
    %v592 = vunpack.c.l.b16 %v144
    %v593 = vunpack.c.h.b16 %v144
    %v594 = vunpack.c.l.b16 %v145
    %v595 = vunpack.c.h.b16 %v145
    %v596 = vunpack.c.l.b16 %v146
    %v597 = vunpack.c.h.b16 %v146
    %v598 = vunpack.c.l.b16 %v147
    %v599 = vunpack.c.h.b16 %v147
    %v600 = vunpack.c.l.b16 %v148
    %v601 = vunpack.c.h.b16 %v148
    %v602 = vunpack.c.l.b16 %v149
    %v603 = vunpack.c.h.b16 %v149
    %v604 = vunpack.c.l.b16 %v150
    %v605 = vunpack.c.h.b16 %v150
    %v606 = vunpack.c.l.b16 %v151
    %v607 = vunpack.c.h.b16 %v151
    %v608 = vunpack.c.l.b16 %v152
    %v609 = vunpack.c.h.b16 %v152
    %v610 = vunpack.c.l.b16 %v153
    %v611 = vunpack.c.h.b16 %v153
    %v612 = vunpack.c.l.b16 %v154
    %v613 = vunpack.c.h.b16 %v154
    %v614 = vunpack.c.l.b16 %v155
    %v615 = vunpack.c.h.b16 %v155
    %v616 = vunpack.c.l.b16 %v156
    %v617 = vunpack.c.h.b16 %v156
    %v618 = vunpack.c.l.b16 %v157
    %v619 = vunpack.c.h.b16 %v157
    %v620 = vunpack.c.l.b16 %v158
    %v621 = vunpack.c.h.b16 %v158
    %v622 = vunpack.c.l.b16 %v159
    %v623 = vunpack.c.h.b16 %v159
    %v624 = vunpack.c.l.b16 %v160
    %v625 = vunpack.c.h.b16 %v160
    %v626 = vunpack.c.l.b16 %v161
    %v627 = vunpack.c.h.b16 %v161
    %v628 = vunpack.c.l.b16 %v162
    %v629 = vunpack.c.h.b16 %v162
    %v630 = vunpack.c.l.b16 %v163
    %v631 = vunpack.c.h.b16 %v163
    %v632 = vunpack.c.l.b16 %v164
    %v633 = vunpack.c.h.b16 %v164
    %v634 = vunpack.c.l.b16 %v165
    %v635 = vunpack.c.h.b16 %v165
    %v636 = vunpack.c.l.b16 %v166
    %v637 = vunpack.c.h.b16 %v166
    %v638 = vunpack.c.l.b16 %v167
    %v639 = vunpack.c.h.b16 %v167
    %v640 = vunpack.c.l.b16 %v168
    %v641 = vunpack.c.h.b16 %v168
    %v642 = vunpack.c.l.b16 %v169
    %v643 = vunpack.c.h.b16 %v169
    %v644 = vunpack.c.l.b16 %v170
    %v645 = vunpack.c.h.b16 %v170
    %v646 = vunpack.c.l.b16 %v171
    %v647 = vunpack.c.h.b16 %v171
    %v648 = vunpack.c.l.b16 %v172
    %v649 = vunpack.c.h.b16 %v172
    %v650 = vunpack.c.l.b16 %v173
    %v651 = vunpack.c.h.b16 %v173
    %v652 = vunpack.c.l.b16 %v174
    %v653 = vunpack.c.h.b16 %v174
    %v654 = vunpack.c.l.b16 %v175
    %v655 = vunpack.c.h.b16 %v175
    %v656 = vunpack.c.l.b16 %v176
    %v657 = vunpack.c.h.b16 %v176
    %v658 = vunpack.c.l.b16 %v177
    %v659 = vunpack.c.h.b16 %v177
    %v660 = vunpack.c.l.b16 %v178
    %v661 = vunpack.c.h.b16 %v178
    %v662 = vunpack.c.l.b16 %v179
    %v663 = vunpack.c.h.b16 %v179
    %v664 = vunpack.c.l.b16 %v180
    %v665 = vunpack.c.h.b16 %v180
    %v666 = vunpack.c.l.b16 %v181
    %v667 = vunpack.c.h.b16 %v181
    %v668 = vunpack.c.l.b16 %v182
    %v669 = vunpack.c.h.b16 %v182
    %v670 = vunpack.c.l.b16 %v183
    %v671 = vunpack.c.h.b16 %v183
    %v672 = vunpack.c.l.b16 %v184
    %v673 = vunpack.c.h.b16 %v184
    %v674 = vunpack.c.l.b16 %v185
    %v675 = vunpack.c.h.b16 %v185
    %v676 = vunpack.c.l.b16 %v186
    %v677 = vunpack.c.h.b16 %v186
    %v678 = vunpack.c.l.b16 %v187
    %v679 = vunpack.c.h.b16 %v187
    %v680 = vunpack.c.l.b16 %v188
    %v681 = vunpack.c.h.b16 %v188
    %v682 = vunpack.c.l.b16 %v189
    %v683 = vunpack.c.h.b16 %v189
    %v684 = vunpack.c.l.b16 %v190
    %v685 = vunpack.c.h.b16 %v190
    %v686 = vunpack.c.l.b16 %v191
    %v687 = vunpack.c.h.b16 %v191
    %v688 = vunpack.c.l.b16 %v192
    %v689 = vunpack.c.h.b16 %v192
    %v690 = vunpack.c.l.b16 %v193
    %v691 = vunpack.c.h.b16 %v193
    %v692 = vunpack.c.l.b16 %v194
    %v693 = vunpack.c.h.b16 %v194
    %v694 = vunpack.c.l.b16 %v195
    %v695 = vunpack.c.h.b16 %v195
    %v696 = vunpack.c.l.b16 %v196
    %v697 = vunpack.c.h.b16 %v196
    %v698 = vunpack.c.l.b16 %v197
    %v699 = vunpack.c.h.b16 %v197
    %v700 = vunpack.c.l.b16 %v198
    %v701 = vunpack.c.h.b16 %v198
    %v702 = vunpack.c.l.b16 %v199
    %v703 = vunpack.c.h.b16 %v199
    %v704 = vunpack.c.l.b16 %v200
    %v705 = vunpack.c.h.b16 %v200
    %v706 = vunpack.c.l.b16 %v201
    %v707 = vunpack.c.h.b16 %v201
    %v708 = vunpack.c.l.b16 %v202
    %v709 = vunpack.c.h.b16 %v202
    %v710 = vunpack.c.l.b16 %v203
    %v711 = vunpack.c.h.b16 %v203
    %v712 = vunpack.c.l.b16 %v204
    %v713 = vunpack.c.h.b16 %v204
    %v714 = vunpack.c.l.b16 %v205
    %v715 = vunpack.c.h.b16 %v205
    %v716 = vunpack.c.l.b16 %v206
    %v717 = vunpack.c.h.b16 %v206
    %v718 = vunpack.c.l.b16 %v207
    %v719 = vunpack.c.h.b16 %v207
    %v720 = vunpack.c.l.b16 %v208
    %v721 = vunpack.c.h.b16 %v208
    %v722 = vunpack.c.l.b16 %v209
    %v723 = vunpack.c.h.b16 %v209
    %v724 = vunpack.c.l.b16 %v210
    %v725 = vunpack.c.h.b16 %v210
    %v726 = vunpack.c.l.b16 %v211
    %v727 = vunpack.c.h.b16 %v211
    %v728 = vunpack.c.l.b16 %v212
    %v729 = vunpack.c.h.b16 %v212
    %v730 = vunpack.c.l.b16 %v213
    %v731 = vunpack.c.h.b16 %v213
    %v732 = vunpack.c.l.b16 %v214
    %v733 = vunpack.c.h.b16 %v214
    %v734 = vunpack.c.l.b16 %v215
    %v735 = vunpack.c.h.b16 %v215
    %v736 = vunpack.c.l.b16 %v216
    %v737 = vunpack.c.h.b16 %v216
    %v738 = vunpack.c.l.b16 %v217
    %v739 = vunpack.c.h.b16 %v217
    %v740 = vunpack.c.l.b16 %v218
    %v741 = vunpack.c.h.b16 %v218
    %v742 = vunpack.c.l.b16 %v219
    %v743 = vunpack.c.h.b16 %v219
    %v744 = vunpack.c.l.b16 %v220
    %v745 = vunpack.c.h.b16 %v220
    %v746 = vunpack.c.l.b16 %v221
    %v747 = vunpack.c.h.b16 %v221
    %v748 = vunpack.c.l.b16 %v222
    %v749 = vunpack.c.h.b16 %v222
    %v750 = vunpack.c.l.b16 %v223
    %v751 = vunpack.c.h.b16 %v223
    %v752 = vunpack.c.l.b16 %v224
    %v753 = vunpack.c.h.b16 %v224
    %v754 = vunpack.c.l.b16 %v225
    %v755 = vunpack.c.h.b16 %v225
    %v756 = vunpack.c.l.b16 %v226
    %v757 = vunpack.c.h.b16 %v226
    %v758 = vunpack.c.l.b16 %v227
    %v759 = vunpack.c.h.b16 %v227
    %v760 = vunpack.c.l.b16 %v228
    %v761 = vunpack.c.h.b16 %v228
    %v762 = vunpack.c.l.b16 %v229
    %v763 = vunpack.c.h.b16 %v229
    %v764 = vunpack.c.l.b16 %v230
    %v765 = vunpack.c.h.b16 %v230
    %v766 = vunpack.c.l.b16 %v231
    %v767 = vunpack.c.h.b16 %v231
    %v768 = vunpack.c.l.b16 %v232
    %v769 = vunpack.c.h.b16 %v232
    %v770 = vunpack.c.l.b16 %v233
    %v771 = vunpack.c.h.b16 %v233
    %v772 = vunpack.c.l.b16 %v234
    %v773 = vunpack.c.h.b16 %v234
    %v774 = vunpack.c.l.b16 %v235
    %v775 = vunpack.c.h.b16 %v235
    %v776 = vunpack.c.l.b16 %v236
    %v777 = vunpack.c.h.b16 %v236
    %v778 = vunpack.c.l.b16 %v237
    %v779 = vunpack.c.h.b16 %v237
    %v780 = vunpack.c.l.b16 %v238
    %v781 = vunpack.c.h.b16 %v238
    %v782 = vunpack.c.l.b16 %v239
    %v783 = vunpack.c.h.b16 %v239
    %v784 = vunpack.c.l.b16 %v240
    %v785 = vunpack.c.h.b16 %v240
    %v786 = vunpack.c.l.b16 %v241
    %v787 = vunpack.c.h.b16 %v241
    %v788 = vunpack.c.l.b16 %v242
    %v789 = vunpack.c.h.b16 %v242
    %v790 = vunpack.c.l.b16 %v243
    %v791 = vunpack.c.h.b16 %v243
    %v792 = vunpack.c.l.b16 %v244
    %v793 = vunpack.c.h.b16 %v244
    %v794 = vunpack.c.l.b16 %v245
    %v795 = vunpack.c.h.b16 %v245
    %v796 = vunpack.c.l.b16 %v246
    %v797 = vunpack.c.h.b16 %v246
    %v798 = vunpack.c.l.b16 %v247
    %v799 = vunpack.c.h.b16 %v247
    %v800 = vunpack.c.l.b16 %v248
    %v801 = vunpack.c.h.b16 %v248
    %v802 = vunpack.c.l.b16 %v249
    %v803 = vunpack.c.h.b16 %v249
    %v804 = vunpack.c.l.b16 %v250
    %v805 = vunpack.c.h.b16 %v250
    %v806 = vunpack.c.l.b16 %v251
    %v807 = vunpack.c.h.b16 %v251
    %v808 = vunpack.c.l.b16 %v252
    %v809 = vunpack.c.h.b16 %v252
    %v810 = vunpack.c.l.b16 %v253
    %v811 = vunpack.c.h.b16 %v253
    %v812 = vunpack.c.l.b16 %v254
    %v813 = vunpack.c.h.b16 %v254
    %v814 = vpack.c.b16 %v504, %v494
    %v815 = vpack.c.b16 %v505, %v495
    %v816 = vpack.c.b16 %v506, %v496
    %v817 = vpack.c.b16 %v507, %v497
    %v818 = vpack.c.b16 %v508, %v498
    %v819 = vpack.c.b16 %v509, %v499
    %v820 = vpack.c.b16 %v510, %v500
    %v821 = vpack.c.b16 %v511, %v501
    %v822 = vpack.c.b16 %v512, %v502
    %v823 = vpack.c.b16 %v513, %v503
    %v824 = vpack.c.b16 %v524, %v514
    %v825 = vpack.c.b16 %v525, %v515
    %v826 = vpack.c.b16 %v526, %v516
    %v827 = vpack.c.b16 %v527, %v517
    %v828 = vpack.c.b16 %v528, %v518
    %v829 = vpack.c.b16 %v529, %v519
    %v830 = vpack.c.b16 %v530, %v520
    %v831 = vpack.c.b16 %v531, %v521
    %v832 = vpack.c.b16 %v532, %v522
    %v833 = vpack.c.b16 %v533, %v523
    %v834 = vpack.c.b16 %v544, %v534
    %v835 = vpack.c.b16 %v545, %v535
    %v836 = vpack.c.b16 %v546, %v536
    %v837 = vpack.c.b16 %v547, %v537
    %v838 = vpack.c.b16 %v548, %v538
    %v839 = vpack.c.b16 %v549, %v539
    %v840 = vpack.c.b16 %v550, %v540
    %v841 = vpack.c.b16 %v551, %v541
    %v842 = vpack.c.b16 %v552, %v542
    %v843 = vpack.c.b16 %v553, %v543
    %v844 = vpack.c.b16 %v564, %v554
    %v845 = vpack.c.b16 %v565, %v555
    %v846 = vpack.c.b16 %v566, %v556
    %v847 = vpack.c.b16 %v567, %v557
    %v848 = vpack.c.b16 %v568, %v558
    %v849 = vpack.c.b16 %v569, %v559
    %v850 = vpack.c.b16 %v570, %v560
    %v851 = vpack.c.b16 %v571, %v561
    %v852 = vpack.c.b16 %v572, %v562
    %v853 = vpack.c.b16 %v573, %v563
    %v854 = vpack.c.b16 %v584, %v574
    %v855 = vpack.c.b16 %v585, %v575
    %v856 = vpack.c.b16 %v586, %v576
    %v857 = vpack.c.b16 %v587, %v577
    %v858 = vpack.c.b16 %v588, %v578
    %v859 = vpack.c.b16 %v589, %v579
    %v860 = vpack.c.b16 %v590, %v580
    %v861 = vpack.c.b16 %v591, %v581
    %v862 = vpack.c.b16 %v592, %v582
    %v863 = vpack.c.b16 %v593, %v583
    %v864 = vpack.c.b16 %v604, %v594
    %v865 = vpack.c.b16 %v605, %v595
    %v866 = vpack.c.b16 %v606, %v596
    %v867 = vpack.c.b16 %v607, %v597
    %v868 = vpack.c.b16 %v608, %v598
    %v869 = vpack.c.b16 %v609, %v599
    %v870 = vpack.c.b16 %v610, %v600
    %v871 = vpack.c.b16 %v611, %v601
    %v872 = vpack.c.b16 %v612, %v602
    %v873 = vpack.c.b16 %v613, %v603
    %v874 = vpack.c.b16 %v624, %v614
    %v875 = vpack.c.b16 %v625, %v615
    %v876 = vpack.c.b16 %v626, %v616
    %v877 = vpack.c.b16 %v627, %v617
    %v878 = vpack.c.b16 %v628, %v618
    %v879 = vpack.c.b16 %v629, %v619
    %v880 = vpack.c.b16 %v630, %v620
    %v881 = vpack.c.b16 %v631, %v621
    %v882 = vpack.c.b16 %v632, %v622
    %v883 = vpack.c.b16 %v633, %v623
    %v884 = vpack.c.b16 %v644, %v634
    %v885 = vpack.c.b16 %v645, %v635
    %v886 = vpack.c.b16 %v646, %v636
    %v887 = vpack.c.b16 %v647, %v637
    %v888 = vpack.c.b16 %v648, %v638
    %v889 = vpack.c.b16 %v649, %v639
    %v890 = vpack.c.b16 %v650, %v640
    %v891 = vpack.c.b16 %v651, %v641
    %v892 = vpack.c.b16 %v652, %v642
    %v893 = vpack.c.b16 %v653, %v643
    %v894 = vpack.c.b16 %v664, %v654
    %v895 = vpack.c.b16 %v665, %v655
    %v896 = vpack.c.b16 %v666, %v656
    %v897 = vpack.c.b16 %v667, %v657
    %v898 = vpack.c.b16 %v668, %v658
    %v899 = vpack.c.b16 %v669, %v659
    %v900 = vpack.c.b16 %v670, %v660
    %v901 = vpack.c.b16 %v671, %v661
    %v902 = vpack.c.b16 %v672, %v662
    %v903 = vpack.c.b16 %v673, %v663
    %v904 = vpack.c.b16 %v684, %v674
    %v905 = vpack.c.b16 %v685, %v675
    %v906 = vpack.c.b16 %v686, %v676
    %v907 = vpack.c.b16 %v687, %v677
    %v908 = vpack.c.b16 %v688, %v678
    %v909 = vpack.c.b16 %v689, %v679
    %v910 = vpack.c.b16 %v690, %v680
    %v911 = vpack.c.b16 %v691, %v681
    %v912 = vpack.c.b16 %v692, %v682
    %v913 = vpack.c.b16 %v693, %v683
    %v914 = vpack.c.b16 %v704, %v694
    %v915 = vpack.c.b16 %v705, %v695
    %v916 = vpack.c.b16 %v706, %v696
    %v917 = vpack.c.b16 %v707, %v697
    %v918 = vpack.c.b16 %v708, %v698
    %v919 = vpack.c.b16 %v709, %v699
    %v920 = vpack.c.b16 %v710, %v700
    %v921 = vpack.c.b16 %v711, %v701
    %v922 = vpack.c.b16 %v712, %v702
    %v923 = vpack.c.b16 %v713, %v703
    %v924 = vpack.c.b16 %v724, %v714
    %v925 = vpack.c.b16 %v725, %v715
    %v926 = vpack.c.b16 %v726, %v716
    %v927 = vpack.c.b16 %v727, %v717
    %v928 = vpack.c.b16 %v728, %v718
    %v929 = vpack.c.b16 %v729, %v719
    %v930 = vpack.c.b16 %v730, %v720
    %v931 = vpack.c.b16 %v731, %v721
    %v932 = vpack.c.b16 %v732, %v722
    %v933 = vpack.c.b16 %v733, %v723
    %v934 = vpack.c.b16 %v744, %v734
    %v935 = vpack.c.b16 %v745, %v735
    %v936 = vpack.c.b16 %v746, %v736
    %v937 = vpack.c.b16 %v747, %v737
    %v938 = vpack.c.b16 %v748, %v738
    %v939 = vpack.c.b16 %v749, %v739
    %v940 = vpack.c.b16 %v750, %v740
    %v941 = vpack.c.b16 %v751, %v741
    %v942 = vpack.c.b16 %v752, %v742
    %v943 = vpack.c.b16 %v753, %v743
    %v944 = vpack.c.b16 %v764, %v754
    %v945 = vpack.c.b16 %v765, %v755
    %v946 = vpack.c.b16 %v766, %v756
    %v947 = vpack.c.b16 %v767, %v757
    %v948 = vpack.c.b16 %v768, %v758
    %v949 = vpack.c.b16 %v769, %v759
    %v950 = vpack.c.b16 %v770, %v760
    %v951 = vpack.c.b16 %v771, %v761
    %v952 = vpack.c.b16 %v772, %v762
    %v953 = vpack.c.b16 %v773, %v763
    %v954 = vpack.c.b16 %v784, %v774
    %v955 = vpack.c.b16 %v785, %v775
    %v956 = vpack.c.b16 %v786, %v776
    %v957 = vpack.c.b16 %v787, %v777
    %v958 = vpack.c.b16 %v788, %v778
    %v959 = vpack.c.b16 %v789, %v779
    %v960 = vpack.c.b16 %v790, %v780
    %v961 = vpack.c.b16 %v791, %v781
    %v962 = vpack.c.b16 %v792, %v782
    %v963 = vpack.c.b16 %v793, %v783
    %v964 = vpack.c.b16 %v804, %v794
    %v965 = vpack.c.b16 %v805, %v795
    %v966 = vpack.c.b16 %v806, %v796
    %v967 = vpack.c.b16 %v807, %v797
    %v968 = vpack.c.b16 %v808, %v798
    %v969 = vpack.c.b16 %v809, %v799
    %v970 = vpack.c.b16 %v810, %v800
    %v971 = vpack.c.b16 %v811, %v801
    %v972 = vpack.c.b16 %v812, %v802
    %v973 = vpack.c.b16 %v813, %v803
    %1134 = vmatprep.subr.bf16.mxu0 %v885
    %1135 = vmatpush1.bf16.msra.mxu0 %v884
    %1136 = vmatprep.subr.bf16.mxu0 %v875
    %1137 = vmatpush1.bf16.msra.mxu0 %v874
    %1138 = vmatprep.subr.bf16.mxu0 %v865
    %1139 = vmatpush1.bf16.msra.mxu0 %v864
    %1140 = vmatprep.subr.bf16.mxu0 %v855
    %1141 = vmatpush1.bf16.msra.mxu0 %v854
    %1142 = vmatprep.subr.bf16.mxu0 %v845
    %1143 = vmatpush1.bf16.msra.mxu0 %v844
    %1144 = vmatprep.subr.bf16.mxu0 %v835
    %1145 = vmatpush1.bf16.msra.mxu0 %v834
    %1146 = vmatprep.subr.bf16.mxu0 %v825
    %1147 = vmatpush1.bf16.msra.mxu0 %v824
    %1148 = vmatprep.subr.bf16.mxu0 %v815
    %1149 = vmatpush1.bf16.msra.mxu0 %v814
    %1150 = vmatprep.subr.bf16.mxu0 %v965
    %1151 = vmatpush2.bf16.msra.mxu0 %v964
    %1152 = vmatprep.subr.bf16.mxu0 %v955
    %1153 = vmatpush2.bf16.msra.mxu0 %v954
    %1154 = vmatprep.subr.bf16.mxu0 %v945
    %1155 = vmatpush2.bf16.msra.mxu0 %v944
    %1156 = vmatprep.subr.bf16.mxu0 %v935
    %1157 = vmatpush2.bf16.msra.mxu0 %v934
    %1158 = vmatprep.subr.bf16.mxu0 %v925
    %1159 = vmatpush2.bf16.msra.mxu0 %v924
    %1160 = vmatprep.subr.bf16.mxu0 %v915
    %1161 = vmatpush2.bf16.msra.mxu0 %v914
    %1162 = vmatprep.subr.bf16.mxu0 %v905
    %1163 = vmatpush2.bf16.msra.mxu0 %v904
    %1164 = vmatprep.subr.bf16.mxu0 %v895
    %1165 = vmatpush2.bf16.msra.mxu0 %v894
    %1166 = vmatprep.mubr.bf16.mxu0 %v331
    %1167 = vmatmul.mubr.bf16.gmra.mxu0 %v324
    %v1168 = vpop.f32.mrf.mxu0
    %v1169 = vadd.f32 %v262, %v1168
    %v1170 = vpop.f32.mrf.mxu0
    %v1171 = vadd.f32 %v266, %v1170
    %v1172 = vpop.f32.mrf.mxu0
    %v1173 = vpop.f32.mrf.mxu0
    %1174 = vdwg.mxu0
    %1175 = vmatprep.subr.bf16.mxu0 %v887
    %1176 = vmatpush1.bf16.msra.mxu0 %v886
    %1177 = vmatprep.subr.bf16.mxu0 %v877
    %1178 = vmatpush1.bf16.msra.mxu0 %v876
    %1179 = vmatprep.subr.bf16.mxu0 %v867
    %1180 = vmatpush1.bf16.msra.mxu0 %v866
    %1181 = vmatprep.subr.bf16.mxu0 %v857
    %1182 = vmatpush1.bf16.msra.mxu0 %v856
    %1183 = vmatprep.subr.bf16.mxu0 %v847
    %1184 = vmatpush1.bf16.msra.mxu0 %v846
    %1185 = vmatprep.subr.bf16.mxu0 %v837
    %1186 = vmatpush1.bf16.msra.mxu0 %v836
    %1187 = vmatprep.subr.bf16.mxu0 %v827
    %1188 = vmatpush1.bf16.msra.mxu0 %v826
    %1189 = vmatprep.subr.bf16.mxu0 %v817
    %1190 = vmatpush1.bf16.msra.mxu0 %v816
    %1191 = vmatprep.subr.bf16.mxu0 %v967
    %1192 = vmatpush2.bf16.msra.mxu0 %v966
    %1193 = vmatprep.subr.bf16.mxu0 %v957
    %1194 = vmatpush2.bf16.msra.mxu0 %v956
    %1195 = vmatprep.subr.bf16.mxu0 %v947
    %1196 = vmatpush2.bf16.msra.mxu0 %v946
    %1197 = vmatprep.subr.bf16.mxu0 %v937
    %1198 = vmatpush2.bf16.msra.mxu0 %v936
    %1199 = vmatprep.subr.bf16.mxu0 %v927
    %1200 = vmatpush2.bf16.msra.mxu0 %v926
    %1201 = vmatprep.subr.bf16.mxu0 %v917
    %1202 = vmatpush2.bf16.msra.mxu0 %v916
    %1203 = vmatprep.subr.bf16.mxu0 %v907
    %1204 = vmatpush2.bf16.msra.mxu0 %v906
    %1205 = vmatprep.subr.bf16.mxu0 %v897
    %1206 = vmatpush2.bf16.msra.mxu0 %v896
    %1207 = vmatprep.mubr.bf16.mxu0 %v331
    %1208 = vmatmul.mubr.bf16.gmra.mxu0 %v324
    %v1209 = vpop.f32.mrf.mxu0
    %v1210 = vadd.f32 %v270, %v1209
    %v1211 = vpop.f32.mrf.mxu0
    %v1212 = vadd.f32 %v274, %v1211
    %v1213 = vpop.f32.mrf.mxu0
    %v1214 = vpop.f32.mrf.mxu0
    %1215 = vdwg.mxu0
    %1216 = vmatprep.subr.bf16.mxu0 %v889
    %1217 = vmatpush1.bf16.msra.mxu0 %v888
    %1218 = vmatprep.subr.bf16.mxu0 %v879
    %1219 = vmatpush1.bf16.msra.mxu0 %v878
    %1220 = vmatprep.subr.bf16.mxu0 %v869
    %1221 = vmatpush1.bf16.msra.mxu0 %v868
    %1222 = vmatprep.subr.bf16.mxu0 %v859
    %1223 = vmatpush1.bf16.msra.mxu0 %v858
    %1224 = vmatprep.subr.bf16.mxu0 %v849
    %1225 = vmatpush1.bf16.msra.mxu0 %v848
    %1226 = vmatprep.subr.bf16.mxu0 %v839
    %1227 = vmatpush1.bf16.msra.mxu0 %v838
    %1228 = vmatprep.subr.bf16.mxu0 %v829
    %1229 = vmatpush1.bf16.msra.mxu0 %v828
    %1230 = vmatprep.subr.bf16.mxu0 %v819
    %1231 = vmatpush1.bf16.msra.mxu0 %v818
    %1232 = vmatprep.subr.bf16.mxu0 %v969
    %1233 = vmatpush2.bf16.msra.mxu0 %v968
    %1234 = vmatprep.subr.bf16.mxu0 %v959
    %1235 = vmatpush2.bf16.msra.mxu0 %v958
    %1236 = vmatprep.subr.bf16.mxu0 %v949
    %1237 = vmatpush2.bf16.msra.mxu0 %v948
    %1238 = vmatprep.subr.bf16.mxu0 %v939
    %1239 = vmatpush2.bf16.msra.mxu0 %v938
    %1240 = vmatprep.subr.bf16.mxu0 %v929
    %1241 = vmatpush2.bf16.msra.mxu0 %v928
    %1242 = vmatprep.subr.bf16.mxu0 %v919
    %1243 = vmatpush2.bf16.msra.mxu0 %v918
    %1244 = vmatprep.subr.bf16.mxu0 %v909
    %1245 = vmatpush2.bf16.msra.mxu0 %v908
    %1246 = vmatprep.subr.bf16.mxu0 %v899
    %1247 = vmatpush2.bf16.msra.mxu0 %v898
    %1248 = vmatprep.mubr.bf16.mxu0 %v331
    %1249 = vmatmul.mubr.bf16.gmra.mxu0 %v324
    %v1250 = vpop.f32.mrf.mxu0
    %v1251 = vadd.f32 %v278, %v1250
    %v1252 = vpop.f32.mrf.mxu0
    %v1253 = vadd.f32 %v282, %v1252
    %v1254 = vpop.f32.mrf.mxu0
    %v1255 = vpop.f32.mrf.mxu0
    %1256 = vdwg.mxu0
    %1257 = vmatprep.subr.bf16.mxu0 %v891
    %1258 = vmatpush1.bf16.msra.mxu0 %v890
    %1259 = vmatprep.subr.bf16.mxu0 %v881
    %1260 = vmatpush1.bf16.msra.mxu0 %v880
    %1261 = vmatprep.subr.bf16.mxu0 %v871
    %1262 = vmatpush1.bf16.msra.mxu0 %v870
    %1263 = vmatprep.subr.bf16.mxu0 %v861
    %1264 = vmatpush1.bf16.msra.mxu0 %v860
    %1265 = vmatprep.subr.bf16.mxu0 %v851
    %1266 = vmatpush1.bf16.msra.mxu0 %v850
    %1267 = vmatprep.subr.bf16.mxu0 %v841
    %1268 = vmatpush1.bf16.msra.mxu0 %v840
    %1269 = vmatprep.subr.bf16.mxu0 %v831
    %1270 = vmatpush1.bf16.msra.mxu0 %v830
    %1271 = vmatprep.subr.bf16.mxu0 %v821
    %1272 = vmatpush1.bf16.msra.mxu0 %v820
    %1273 = vmatprep.subr.bf16.mxu0 %v971
    %1274 = vmatpush2.bf16.msra.mxu0 %v970
    %1275 = vmatprep.subr.bf16.mxu0 %v961
    %1276 = vmatpush2.bf16.msra.mxu0 %v960
    %1277 = vmatprep.subr.bf16.mxu0 %v951
    %1278 = vmatpush2.bf16.msra.mxu0 %v950
    %1279 = vmatprep.subr.bf16.mxu0 %v941
    %1280 = vmatpush2.bf16.msra.mxu0 %v940
    %1281 = vmatprep.subr.bf16.mxu0 %v931
    %1282 = vmatpush2.bf16.msra.mxu0 %v930
    %1283 = vmatprep.subr.bf16.mxu0 %v921
    %1284 = vmatpush2.bf16.msra.mxu0 %v920
    %1285 = vmatprep.subr.bf16.mxu0 %v911
    %1286 = vmatpush2.bf16.msra.mxu0 %v910
    %1287 = vmatprep.subr.bf16.mxu0 %v901
    %1288 = vmatpush2.bf16.msra.mxu0 %v900
    %1289 = vmatprep.mubr.bf16.mxu0 %v331
    %1290 = vmatmul.mubr.bf16.gmra.mxu0 %v324
    %v1291 = vpop.f32.mrf.mxu0
    %v1292 = vadd.f32 %v286, %v1291
    %v1293 = vpop.f32.mrf.mxu0
    %v1294 = vadd.f32 %v290, %v1293
    %v1295 = vpop.f32.mrf.mxu0
    %v1296 = vpop.f32.mrf.mxu0
    %1297 = vdwg.mxu0
    %1298 = vmatprep.subr.bf16.mxu0 %v893
    %1299 = vmatpush1.bf16.msra.mxu0 %v892
    %1300 = vmatprep.subr.bf16.mxu0 %v883
    %1301 = vmatpush1.bf16.msra.mxu0 %v882
    %1302 = vmatprep.subr.bf16.mxu0 %v873
    %1303 = vmatpush1.bf16.msra.mxu0 %v872
    %1304 = vmatprep.subr.bf16.mxu0 %v863
    %1305 = vmatpush1.bf16.msra.mxu0 %v862
    %1306 = vmatprep.subr.bf16.mxu0 %v853
    %1307 = vmatpush1.bf16.msra.mxu0 %v852
    %1308 = vmatprep.subr.bf16.mxu0 %v843
    %1309 = vmatpush1.bf16.msra.mxu0 %v842
    %1310 = vmatprep.subr.bf16.mxu0 %v833
    %1311 = vmatpush1.bf16.msra.mxu0 %v832
    %1312 = vmatprep.subr.bf16.mxu0 %v823
    %1313 = vmatpush1.bf16.msra.mxu0 %v822
    %1314 = vmatprep.subr.bf16.mxu0 %v973
    %1315 = vmatpush2.bf16.msra.mxu0 %v972
    %1316 = vmatprep.subr.bf16.mxu0 %v963
    %1317 = vmatpush2.bf16.msra.mxu0 %v962
    %1318 = vmatprep.subr.bf16.mxu0 %v953
    %1319 = vmatpush2.bf16.msra.mxu0 %v952
    %1320 = vmatprep.subr.bf16.mxu0 %v943
    %1321 = vmatpush2.bf16.msra.mxu0 %v942
    %1322 = vmatprep.subr.bf16.mxu0 %v933
    %1323 = vmatpush2.bf16.msra.mxu0 %v932
    %1324 = vmatprep.subr.bf16.mxu0 %v923
    %1325 = vmatpush2.bf16.msra.mxu0 %v922
    %1326 = vmatprep.subr.bf16.mxu0 %v913
    %1327 = vmatpush2.bf16.msra.mxu0 %v912
    %1328 = vmatprep.subr.bf16.mxu0 %v903
    %1329 = vmatpush2.bf16.msra.mxu0 %v902
    %1330 = vmatprep.mubr.bf16.mxu0 %v331
    %1331 = vmatmul.mubr.bf16.gmra.mxu0 %v324
    %v1332 = vpop.f32.mrf.mxu0
    %v1333 = vadd.f32 %v294, %v1332
    %v1334 = vpop.f32.mrf.mxu0
    %v1335 = vadd.f32 %v298, %v1334
    %v1336 = vpop.f32.mrf.mxu0
    %v1337 = vpop.f32.mrf.mxu0
    %1338 = vdwg.mxu0
    %v1339 = vsub.f32 0.0, %v1169
    %v1340 = vsub.f32 0.0, %v1171
    %v1341 = vsub.f32 0.0, %v1210
    %v1342 = vsub.f32 0.0, %v1212
    %v1343 = vsub.f32 0.0, %v1251
    %v1344 = vsub.f32 0.0, %v1253
    %v1345 = vsub.f32 0.0, %v1292
    %v1346 = vsub.f32 0.0, %v1294
    %v1347 = vsub.f32 0.0, %v1333
    %v1348 = vsub.f32 0.0, %v1335
    %v1349 = vmul.f32 %v1339, 1.442695
    %v1350 = vpow.pop %v1349
    %v1351 = vmul.f32 %v1340, 1.442695
    %v1352 = vpow.pop %v1351
    %v1353 = vmul.f32 %v1341, 1.442695
    %v1354 = vpow.pop %v1353
    %v1355 = vmul.f32 %v1342, 1.442695
    %v1356 = vpow.pop %v1355
    %v1357 = vmul.f32 %v1343, 1.442695
    %v1358 = vpow.pop %v1357
    %v1359 = vmul.f32 %v1344, 1.442695
    %v1360 = vpow.pop %v1359
    %v1361 = vmul.f32 %v1345, 1.442695
    %v1362 = vpow.pop %v1361
    %v1363 = vmul.f32 %v1346, 1.442695
    %v1364 = vpow.pop %v1363
    %v1365 = vmul.f32 %v1347, 1.442695
    %v1366 = vpow.pop %v1365
    %v1367 = vmul.f32 %v1348, 1.442695
    %v1368 = vpow.pop %v1367
    %v1369 = vadd.f32 %v1350, 1.0
    %v1370 = vadd.f32 %v1352, 1.0
    %v1371 = vadd.f32 %v1354, 1.0
    %v1372 = vadd.f32 %v1356, 1.0
    %v1373 = vadd.f32 %v1358, 1.0
    %v1374 = vadd.f32 %v1360, 1.0
    %v1375 = vadd.f32 %v1362, 1.0
    %v1376 = vadd.f32 %v1364, 1.0
    %v1377 = vadd.f32 %v1366, 1.0
    %v1378 = vadd.f32 %v1368, 1.0
    %v1379 = vrcp.pop %v1369
    %v1380 = vrcp.pop %v1370
    %v1381 = vrcp.pop %v1371
    %v1382 = vrcp.pop %v1372
    %v1383 = vrcp.pop %v1373
    %v1384 = vrcp.pop %v1374
    %v1385 = vrcp.pop %v1375
    %v1386 = vrcp.pop %v1376
    %v1387 = vrcp.pop %v1377
    %v1388 = vrcp.pop %v1378
    %v1389 = vmul.f32 %v1169, %v1379
    %v1390 = vmul.f32 %v1171, %v1380
    %v1391 = vmul.f32 %v1210, %v1381
    %v1392 = vmul.f32 %v1212, %v1382
    %v1393 = vmul.f32 %v1251, %v1383
    %v1394 = vmul.f32 %v1253, %v1384
    %v1395 = vmul.f32 %v1292, %v1385
    %v1396 = vmul.f32 %v1294, %v1386
    %v1397 = vmul.f32 %v1333, %v1387
    %v1398 = vmul.f32 %v1335, %v1388
    %v1399 = vpack.c.bf16 %v1389, %v1389
    %v1400 = vpack.c.bf16 %v1390, %v1390
    %v1401 = vpack.c.bf16 %v1391, %v1391
    %v1402 = vpack.c.bf16 %v1392, %v1392
    %v1403 = vpack.c.bf16 %v1393, %v1393
    %v1404 = vpack.c.bf16 %v1394, %v1394
    %v1405 = vpack.c.bf16 %v1395, %v1395
    %v1406 = vpack.c.bf16 %v1396, %v1396
    %v1407 = vpack.c.bf16 %v1397, %v1397
    %v1408 = vpack.c.bf16 %v1398, %v1398
    %v1409 = vld [vmem:[%s5] sm:$0xff]
    %v1410 = vld [vmem:[%s5 + $0x8] sm:$0xff]
    %v1411 = vld [vmem:[%s5 + $0x10] sm:$0xff]
    %v1412 = vld [vmem:[%s5 + $0x18] sm:$0xff]
    %v1413 = vld [vmem:[%s5 + $0x20] sm:$0xff]
    %v1414 = vld [vmem:[%s5 + $0x28] sm:$0xff]
    %v1415 = vld [vmem:[%s5 + $0x30] sm:$0xff]
    %v1416 = vld [vmem:[%s5 + $0x38] sm:$0xff]
    %v1417 = vld [vmem:[%s5 + $0x40] sm:$0xff]
    %v1418 = vld [vmem:[%s5 + $0x48] sm:$0xff]
    %v1419 = vld [vmem:[%s5 + $0x50] sm:$0xff]
    %v1420 = vld [vmem:[%s5 + $0x58] sm:$0xff]
    %v1421 = vld [vmem:[%s5 + $0x60] sm:$0xff]
    %v1422 = vld [vmem:[%s5 + $0x68] sm:$0xff]
    %v1423 = vld [vmem:[%s5 + $0x70] sm:$0xff]
    %v1424 = vld [vmem:[%s5 + $0x78] sm:$0xff]
    %v1425 = vld [vmem:[%s5 + $0x80] sm:$0xff]
    %v1426 = vld [vmem:[%s5 + $0x88] sm:$0xff]
    %v1427 = vld [vmem:[%s5 + $0x90] sm:$0xff]
    %v1428 = vld [vmem:[%s5 + $0x98] sm:$0xff]
    %v1429 = vld [vmem:[%s5 + $0xa0] sm:$0xff]
    %v1430 = vld [vmem:[%s5 + $0xa8] sm:$0xff]
    %v1431 = vld [vmem:[%s5 + $0xb0] sm:$0xff]
    %v1432 = vld [vmem:[%s5 + $0xb8] sm:$0xff]
    %v1433 = vld [vmem:[%s5 + $0xc0] sm:$0xff]
    %v1434 = vld [vmem:[%s5 + $0xc8] sm:$0xff]
    %v1435 = vld [vmem:[%s5 + $0xd0] sm:$0xff]
    %v1436 = vld [vmem:[%s5 + $0xd8] sm:$0xff]
    %v1437 = vld [vmem:[%s5 + $0xe0] sm:$0xff]
    %v1438 = vld [vmem:[%s5 + $0xe8] sm:$0xff]
    %v1439 = vld [vmem:[%s5 + $0xf0] sm:$0xff]
    %v1440 = vld [vmem:[%s5 + $0xf8] sm:$0xff]
    %v1441 = vld [vmem:[%s5 + $0x100] sm:$0xff]
    %v1442 = vld [vmem:[%s5 + $0x108] sm:$0xff]
    %v1443 = vld [vmem:[%s5 + $0x110] sm:$0xff]
    %v1444 = vld [vmem:[%s5 + $0x118] sm:$0xff]
    %v1445 = vld [vmem:[%s5 + $0x120] sm:$0xff]
    %v1446 = vld [vmem:[%s5 + $0x128] sm:$0xff]
    %v1447 = vld [vmem:[%s5 + $0x130] sm:$0xff]
    %v1448 = vld [vmem:[%s5 + $0x138] sm:$0xff]
    %v1449 = vld [vmem:[%s5 + $0x140] sm:$0xff]
    %v1450 = vld [vmem:[%s5 + $0x148] sm:$0xff]
    %v1451 = vld [vmem:[%s5 + $0x150] sm:$0xff]
    %v1452 = vld [vmem:[%s5 + $0x158] sm:$0xff]
    %v1453 = vld [vmem:[%s5 + $0x160] sm:$0xff]
    %v1454 = vld [vmem:[%s5 + $0x168] sm:$0xff]
    %v1455 = vld [vmem:[%s5 + $0x170] sm:$0xff]
    %v1456 = vld [vmem:[%s5 + $0x178] sm:$0xff]
    %v1457 = vld [vmem:[%s5 + $0x180] sm:$0xff]
    %v1458 = vld [vmem:[%s5 + $0x188] sm:$0xff]
    %v1459 = vld [vmem:[%s5 + $0x190] sm:$0xff]
    %v1460 = vld [vmem:[%s5 + $0x198] sm:$0xff]
    %v1461 = vld [vmem:[%s5 + $0x1a0] sm:$0xff]
    %v1462 = vld [vmem:[%s5 + $0x1a8] sm:$0xff]
    %v1463 = vld [vmem:[%s5 + $0x1b0] sm:$0xff]
    %v1464 = vld [vmem:[%s5 + $0x1b8] sm:$0xff]
    %v1465 = vld [vmem:[%s5 + $0x1c0] sm:$0xff]
    %v1466 = vld [vmem:[%s5 + $0x1c8] sm:$0xff]
    %v1467 = vld [vmem:[%s5 + $0x1d0] sm:$0xff]
    %v1468 = vld [vmem:[%s5 + $0x1d8] sm:$0xff]
    %v1469 = vld [vmem:[%s5 + $0x1e0] sm:$0xff]
    %v1470 = vld [vmem:[%s5 + $0x1e8] sm:$0xff]
    %v1471 = vld [vmem:[%s5 + $0x1f0] sm:$0xff]
    %v1472 = vld [vmem:[%s5 + $0x1f8] sm:$0xff]
    %v1473 = vld [vmem:[%s5 + $0x200] sm:$0xff]
    %v1474 = vld [vmem:[%s5 + $0x208] sm:$0xff]
    %v1475 = vld [vmem:[%s5 + $0x210] sm:$0xff]
    %v1476 = vld [vmem:[%s5 + $0x218] sm:$0xff]
    %v1477 = vld [vmem:[%s5 + $0x220] sm:$0xff]
    %v1478 = vld [vmem:[%s5 + $0x228] sm:$0xff]
    %v1479 = vld [vmem:[%s5 + $0x230] sm:$0xff]
    %v1480 = vld [vmem:[%s5 + $0x238] sm:$0xff]
    %v1481 = vld [vmem:[%s5 + $0x240] sm:$0xff]
    %v1482 = vld [vmem:[%s5 + $0x248] sm:$0xff]
    %v1483 = vld [vmem:[%s5 + $0x250] sm:$0xff]
    %v1484 = vld [vmem:[%s5 + $0x258] sm:$0xff]
    %v1485 = vld [vmem:[%s5 + $0x260] sm:$0xff]
    %v1486 = vld [vmem:[%s5 + $0x268] sm:$0xff]
    %v1487 = vld [vmem:[%s5 + $0x270] sm:$0xff]
    %v1488 = vld [vmem:[%s5 + $0x278] sm:$0xff]
    %v1489 = vld [vmem:[%s5 + $0x280] sm:$0xff]
    %v1490 = vld [vmem:[%s5 + $0x288] sm:$0xff]
    %v1491 = vld [vmem:[%s5 + $0x290] sm:$0xff]
    %v1492 = vld [vmem:[%s5 + $0x298] sm:$0xff]
    %v1493 = vld [vmem:[%s5 + $0x2a0] sm:$0xff]
    %v1494 = vld [vmem:[%s5 + $0x2a8] sm:$0xff]
    %v1495 = vld [vmem:[%s5 + $0x2b0] sm:$0xff]
    %v1496 = vld [vmem:[%s5 + $0x2b8] sm:$0xff]
    %v1497 = vld [vmem:[%s5 + $0x2c0] sm:$0xff]
    %v1498 = vld [vmem:[%s5 + $0x2c8] sm:$0xff]
    %v1499 = vld [vmem:[%s5 + $0x2d0] sm:$0xff]
    %v1500 = vld [vmem:[%s5 + $0x2d8] sm:$0xff]
    %v1501 = vld [vmem:[%s5 + $0x2e0] sm:$0xff]
    %v1502 = vld [vmem:[%s5 + $0x2e8] sm:$0xff]
    %v1503 = vld [vmem:[%s5 + $0x2f0] sm:$0xff]
    %v1504 = vld [vmem:[%s5 + $0x2f8] sm:$0xff]
    %v1505 = vld [vmem:[%s5 + $0x300] sm:$0xff]
    %v1506 = vld [vmem:[%s5 + $0x308] sm:$0xff]
    %v1507 = vld [vmem:[%s5 + $0x310] sm:$0xff]
    %v1508 = vld [vmem:[%s5 + $0x318] sm:$0xff]
    %v1509 = vld [vmem:[%s5 + $0x320] sm:$0xff]
    %v1510 = vld [vmem:[%s5 + $0x328] sm:$0xff]
    %v1511 = vld [vmem:[%s5 + $0x330] sm:$0xff]
    %v1512 = vld [vmem:[%s5 + $0x338] sm:$0xff]
    %v1513 = vld [vmem:[%s5 + $0x340] sm:$0xff]
    %v1514 = vld [vmem:[%s5 + $0x348] sm:$0xff]
    %v1515 = vld [vmem:[%s5 + $0x350] sm:$0xff]
    %v1516 = vld [vmem:[%s5 + $0x358] sm:$0xff]
    %v1517 = vld [vmem:[%s5 + $0x360] sm:$0xff]
    %v1518 = vld [vmem:[%s5 + $0x368] sm:$0xff]
    %v1519 = vld [vmem:[%s5 + $0x370] sm:$0xff]
    %v1520 = vld [vmem:[%s5 + $0x378] sm:$0xff]
    %v1521 = vld [vmem:[%s5 + $0x380] sm:$0xff]
    %v1522 = vld [vmem:[%s5 + $0x388] sm:$0xff]
    %v1523 = vld [vmem:[%s5 + $0x390] sm:$0xff]
    %v1524 = vld [vmem:[%s5 + $0x398] sm:$0xff]
    %v1525 = vld [vmem:[%s5 + $0x3a0] sm:$0xff]
    %v1526 = vld [vmem:[%s5 + $0x3a8] sm:$0xff]
    %v1527 = vld [vmem:[%s5 + $0x3b0] sm:$0xff]
    %v1528 = vld [vmem:[%s5 + $0x3b8] sm:$0xff]
    %v1529 = vld [vmem:[%s5 + $0x3c0] sm:$0xff]
    %v1530 = vld [vmem:[%s5 + $0x3c8] sm:$0xff]
    %v1531 = vld [vmem:[%s5 + $0x3d0] sm:$0xff]
    %v1532 = vld [vmem:[%s5 + $0x3d8] sm:$0xff]
    %v1533 = vld [vmem:[%s5 + $0x3e0] sm:$0xff]
    %v1534 = vld [vmem:[%s5 + $0x3e8] sm:$0xff]
    %v1535 = vld [vmem:[%s5 + $0x3f0] sm:$0xff]
    %v1536 = vld [vmem:[%s5 + $0x3f8] sm:$0xff]
    %v1537 = vld [vmem:[%s5 + $0x400] sm:$0xff]
    %v1538 = vld [vmem:[%s5 + $0x408] sm:$0xff]
    %v1539 = vld [vmem:[%s5 + $0x410] sm:$0xff]
    %v1540 = vld [vmem:[%s5 + $0x418] sm:$0xff]
    %v1541 = vld [vmem:[%s5 + $0x420] sm:$0xff]
    %v1542 = vld [vmem:[%s5 + $0x428] sm:$0xff]
    %v1543 = vld [vmem:[%s5 + $0x430] sm:$0xff]
    %v1544 = vld [vmem:[%s5 + $0x438] sm:$0xff]
    %v1545 = vld [vmem:[%s5 + $0x440] sm:$0xff]
    %v1546 = vld [vmem:[%s5 + $0x448] sm:$0xff]
    %v1547 = vld [vmem:[%s5 + $0x450] sm:$0xff]
    %v1548 = vld [vmem:[%s5 + $0x458] sm:$0xff]
    %v1549 = vld [vmem:[%s5 + $0x460] sm:$0xff]
    %v1550 = vld [vmem:[%s5 + $0x468] sm:$0xff]
    %v1551 = vld [vmem:[%s5 + $0x470] sm:$0xff]
    %v1552 = vld [vmem:[%s5 + $0x478] sm:$0xff]
    %v1553 = vld [vmem:[%s5 + $0x480] sm:$0xff]
    %v1554 = vld [vmem:[%s5 + $0x488] sm:$0xff]
    %v1555 = vld [vmem:[%s5 + $0x490] sm:$0xff]
    %v1556 = vld [vmem:[%s5 + $0x498] sm:$0xff]
    %v1557 = vld [vmem:[%s5 + $0x4a0] sm:$0xff]
    %v1558 = vld [vmem:[%s5 + $0x4a8] sm:$0xff]
    %v1559 = vld [vmem:[%s5 + $0x4b0] sm:$0xff]
    %v1560 = vld [vmem:[%s5 + $0x4b8] sm:$0xff]
    %v1561 = vld [vmem:[%s5 + $0x4c0] sm:$0xff]
    %v1562 = vld [vmem:[%s5 + $0x4c8] sm:$0xff]
    %v1563 = vld [vmem:[%s5 + $0x4d0] sm:$0xff]
    %v1564 = vld [vmem:[%s5 + $0x4d8] sm:$0xff]
    %v1565 = vld [vmem:[%s5 + $0x4e0] sm:$0xff]
    %v1566 = vld [vmem:[%s5 + $0x4e8] sm:$0xff]
    %v1567 = vld [vmem:[%s5 + $0x4f0] sm:$0xff]
    %v1568 = vld [vmem:[%s5 + $0x4f8] sm:$0xff]
    %v1569 = vld [vmem:[%s5 + $0x500] sm:$0xff]
    %v1570 = vld [vmem:[%s5 + $0x508] sm:$0xff]
    %v1571 = vld [vmem:[%s5 + $0x510] sm:$0xff]
    %v1572 = vld [vmem:[%s5 + $0x518] sm:$0xff]
    %v1573 = vld [vmem:[%s5 + $0x520] sm:$0xff]
    %v1574 = vld [vmem:[%s5 + $0x528] sm:$0xff]
    %v1575 = vld [vmem:[%s5 + $0x530] sm:$0xff]
    %v1576 = vld [vmem:[%s5 + $0x538] sm:$0xff]
    %v1577 = vld [vmem:[%s5 + $0x540] sm:$0xff]
    %v1578 = vld [vmem:[%s5 + $0x548] sm:$0xff]
    %v1579 = vld [vmem:[%s5 + $0x550] sm:$0xff]
    %v1580 = vld [vmem:[%s5 + $0x558] sm:$0xff]
    %v1581 = vld [vmem:[%s5 + $0x560] sm:$0xff]
    %v1582 = vld [vmem:[%s5 + $0x568] sm:$0xff]
    %v1583 = vld [vmem:[%s5 + $0x570] sm:$0xff]
    %v1584 = vld [vmem:[%s5 + $0x578] sm:$0xff]
    %v1585 = vld [vmem:[%s5 + $0x580] sm:$0xff]
    %v1586 = vld [vmem:[%s5 + $0x588] sm:$0xff]
    %v1587 = vld [vmem:[%s5 + $0x590] sm:$0xff]
    %v1588 = vld [vmem:[%s5 + $0x598] sm:$0xff]
    %v1589 = vld [vmem:[%s5 + $0x5a0] sm:$0xff]
    %v1590 = vld [vmem:[%s5 + $0x5a8] sm:$0xff]
    %v1591 = vld [vmem:[%s5 + $0x5b0] sm:$0xff]
    %v1592 = vld [vmem:[%s5 + $0x5b8] sm:$0xff]
    %v1593 = vld [vmem:[%s5 + $0x5c0] sm:$0xff]
    %v1594 = vld [vmem:[%s5 + $0x5c8] sm:$0xff]
    %v1595 = vld [vmem:[%s5 + $0x5d0] sm:$0xff]
    %v1596 = vld [vmem:[%s5 + $0x5d8] sm:$0xff]
    %v1597 = vld [vmem:[%s5 + $0x5e0] sm:$0xff]
    %v1598 = vld [vmem:[%s5 + $0x5e8] sm:$0xff]
    %v1599 = vld [vmem:[%s5 + $0x5f0] sm:$0xff]
    %v1600 = vld [vmem:[%s5 + $0x5f8] sm:$0xff]
    %v1601 = vld [vmem:[%s5 + $0x600] sm:$0xff]
    %v1602 = vld [vmem:[%s5 + $0x608] sm:$0xff]
    %v1603 = vld [vmem:[%s5 + $0x610] sm:$0xff]
    %v1604 = vld [vmem:[%s5 + $0x618] sm:$0xff]
    %v1605 = vld [vmem:[%s5 + $0x620] sm:$0xff]
    %v1606 = vld [vmem:[%s5 + $0x628] sm:$0xff]
    %v1607 = vld [vmem:[%s5 + $0x630] sm:$0xff]
    %v1608 = vld [vmem:[%s5 + $0x638] sm:$0xff]
    %v1609 = vld [vmem:[%s5 + $0x640] sm:$0xff]
    %v1610 = vld [vmem:[%s5 + $0x648] sm:$0xff]
    %v1611 = vld [vmem:[%s5 + $0x650] sm:$0xff]
    %v1612 = vld [vmem:[%s5 + $0x658] sm:$0xff]
    %v1613 = vld [vmem:[%s5 + $0x660] sm:$0xff]
    %v1614 = vld [vmem:[%s5 + $0x668] sm:$0xff]
    %v1615 = vld [vmem:[%s5 + $0x670] sm:$0xff]
    %v1616 = vld [vmem:[%s5 + $0x678] sm:$0xff]
    %v1617 = vld [vmem:[%s5 + $0x680] sm:$0xff]
    %v1618 = vld [vmem:[%s5 + $0x688] sm:$0xff]
    %v1619 = vld [vmem:[%s5 + $0x690] sm:$0xff]
    %v1620 = vld [vmem:[%s5 + $0x698] sm:$0xff]
    %v1621 = vld [vmem:[%s5 + $0x6a0] sm:$0xff]
    %v1622 = vld [vmem:[%s5 + $0x6a8] sm:$0xff]
    %v1623 = vld [vmem:[%s5 + $0x6b0] sm:$0xff]
    %v1624 = vld [vmem:[%s5 + $0x6b8] sm:$0xff]
    %v1625 = vld [vmem:[%s5 + $0x6c0] sm:$0xff]
    %v1626 = vld [vmem:[%s5 + $0x6c8] sm:$0xff]
    %v1627 = vld [vmem:[%s5 + $0x6d0] sm:$0xff]
    %v1628 = vld [vmem:[%s5 + $0x6d8] sm:$0xff]
    %v1629 = vld [vmem:[%s5 + $0x6e0] sm:$0xff]
    %v1630 = vld [vmem:[%s5 + $0x6e8] sm:$0xff]
    %v1631 = vld [vmem:[%s5 + $0x6f0] sm:$0xff]
    %v1632 = vld [vmem:[%s5 + $0x6f8] sm:$0xff]
    %v1633 = vld [vmem:[%s5 + $0x700] sm:$0xff]
    %v1634 = vld [vmem:[%s5 + $0x708] sm:$0xff]
    %v1635 = vld [vmem:[%s5 + $0x710] sm:$0xff]
    %v1636 = vld [vmem:[%s5 + $0x718] sm:$0xff]
    %v1637 = vld [vmem:[%s5 + $0x720] sm:$0xff]
    %v1638 = vld [vmem:[%s5 + $0x728] sm:$0xff]
    %v1639 = vld [vmem:[%s5 + $0x730] sm:$0xff]
    %v1640 = vld [vmem:[%s5 + $0x738] sm:$0xff]
    %v1641 = vld [vmem:[%s5 + $0x740] sm:$0xff]
    %v1642 = vld [vmem:[%s5 + $0x748] sm:$0xff]
    %v1643 = vld [vmem:[%s5 + $0x750] sm:$0xff]
    %v1644 = vld [vmem:[%s5 + $0x758] sm:$0xff]
    %v1645 = vld [vmem:[%s5 + $0x760] sm:$0xff]
    %v1646 = vld [vmem:[%s5 + $0x768] sm:$0xff]
    %v1647 = vld [vmem:[%s5 + $0x770] sm:$0xff]
    %v1648 = vld [vmem:[%s5 + $0x778] sm:$0xff]
    %v1649 = vld [vmem:[%s5 + $0x780] sm:$0xff]
    %v1650 = vld [vmem:[%s5 + $0x788] sm:$0xff]
    %v1651 = vld [vmem:[%s5 + $0x790] sm:$0xff]
    %v1652 = vld [vmem:[%s5 + $0x798] sm:$0xff]
    %v1653 = vld [vmem:[%s5 + $0x7a0] sm:$0xff]
    %v1654 = vld [vmem:[%s5 + $0x7a8] sm:$0xff]
    %v1655 = vld [vmem:[%s5 + $0x7b0] sm:$0xff]
    %v1656 = vld [vmem:[%s5 + $0x7b8] sm:$0xff]
    %v1657 = vld [vmem:[%s5 + $0x7c0] sm:$0xff]
    %v1658 = vld [vmem:[%s5 + $0x7c8] sm:$0xff]
    %v1659 = vld [vmem:[%s5 + $0x7d0] sm:$0xff]
    %v1660 = vld [vmem:[%s5 + $0x7d8] sm:$0xff]
    %v1661 = vld [vmem:[%s5 + $0x7e0] sm:$0xff]
    %v1662 = vld [vmem:[%s5 + $0x7e8] sm:$0xff]
    %v1663 = vld [vmem:[%s5 + $0x7f0] sm:$0xff]
    %v1664 = vld [vmem:[%s5 + $0x7f8] sm:$0xff]
    %v1665 = vld [vmem:[%s5 + $0x800] sm:$0xff]
    %v1666 = vld [vmem:[%s5 + $0x808] sm:$0xff]
    %v1667 = vld [vmem:[%s5 + $0x810] sm:$0xff]
    %v1668 = vld [vmem:[%s5 + $0x818] sm:$0xff]
    %v1669 = vld [vmem:[%s5 + $0x820] sm:$0xff]
    %v1670 = vld [vmem:[%s5 + $0x828] sm:$0xff]
    %v1671 = vld [vmem:[%s5 + $0x830] sm:$0xff]
    %v1672 = vld [vmem:[%s5 + $0x838] sm:$0xff]
    %v1673 = vld [vmem:[%s5 + $0x840] sm:$0xff]
    %v1674 = vld [vmem:[%s5 + $0x848] sm:$0xff]
    %v1675 = vld [vmem:[%s5 + $0x850] sm:$0xff]
    %v1676 = vld [vmem:[%s5 + $0x858] sm:$0xff]
    %v1677 = vld [vmem:[%s5 + $0x860] sm:$0xff]
    %v1678 = vld [vmem:[%s5 + $0x868] sm:$0xff]
    %v1679 = vld [vmem:[%s5 + $0x870] sm:$0xff]
    %v1680 = vld [vmem:[%s5 + $0x878] sm:$0xff]
    %v1681 = vld [vmem:[%s5 + $0x880] sm:$0xff]
    %v1682 = vld [vmem:[%s5 + $0x888] sm:$0xff]
    %v1683 = vld [vmem:[%s5 + $0x890] sm:$0xff]
    %v1684 = vld [vmem:[%s5 + $0x898] sm:$0xff]
    %v1685 = vld [vmem:[%s5 + $0x8a0] sm:$0xff]
    %v1686 = vld [vmem:[%s5 + $0x8a8] sm:$0xff]
    %v1687 = vld [vmem:[%s5 + $0x8b0] sm:$0xff]
    %v1688 = vld [vmem:[%s5 + $0x8b8] sm:$0xff]
    %v1689 = vld [vmem:[%s5 + $0x8c0] sm:$0xff]
    %v1690 = vld [vmem:[%s5 + $0x8c8] sm:$0xff]
    %v1691 = vld [vmem:[%s5 + $0x8d0] sm:$0xff]
    %v1692 = vld [vmem:[%s5 + $0x8d8] sm:$0xff]
    %v1693 = vld [vmem:[%s5 + $0x8e0] sm:$0xff]
    %v1694 = vld [vmem:[%s5 + $0x8e8] sm:$0xff]
    %v1695 = vld [vmem:[%s5 + $0x8f0] sm:$0xff]
    %v1696 = vld [vmem:[%s5 + $0x8f8] sm:$0xff]
    %v1697 = vld [vmem:[%s5 + $0x900] sm:$0xff]
    %v1698 = vld [vmem:[%s5 + $0x908] sm:$0xff]
    %v1699 = vld [vmem:[%s5 + $0x910] sm:$0xff]
    %v1700 = vld [vmem:[%s5 + $0x918] sm:$0xff]
    %v1701 = vld [vmem:[%s5 + $0x920] sm:$0xff]
    %v1702 = vld [vmem:[%s5 + $0x928] sm:$0xff]
    %v1703 = vld [vmem:[%s5 + $0x930] sm:$0xff]
    %v1704 = vld [vmem:[%s5 + $0x938] sm:$0xff]
    %v1705 = vld [vmem:[%s5 + $0x940] sm:$0xff]
    %v1706 = vld [vmem:[%s5 + $0x948] sm:$0xff]
    %v1707 = vld [vmem:[%s5 + $0x950] sm:$0xff]
    %v1708 = vld [vmem:[%s5 + $0x958] sm:$0xff]
    %v1709 = vld [vmem:[%s5 + $0x960] sm:$0xff]
    %v1710 = vld [vmem:[%s5 + $0x968] sm:$0xff]
    %v1711 = vld [vmem:[%s5 + $0x970] sm:$0xff]
    %v1712 = vld [vmem:[%s5 + $0x978] sm:$0xff]
    %v1713 = vld [vmem:[%s5 + $0x980] sm:$0xff]
    %v1714 = vld [vmem:[%s5 + $0x988] sm:$0xff]
    %v1715 = vld [vmem:[%s5 + $0x990] sm:$0xff]
    %v1716 = vld [vmem:[%s5 + $0x998] sm:$0xff]
    %v1717 = vld [vmem:[%s5 + $0x9a0] sm:$0xff]
    %v1718 = vld [vmem:[%s5 + $0x9a8] sm:$0xff]
    %v1719 = vld [vmem:[%s5 + $0x9b0] sm:$0xff]
    %v1720 = vld [vmem:[%s5 + $0x9b8] sm:$0xff]
    %v1721 = vld [vmem:[%s5 + $0x9c0] sm:$0xff]
    %v1722 = vld [vmem:[%s5 + $0x9c8] sm:$0xff]
    %v1723 = vld [vmem:[%s5 + $0x9d0] sm:$0xff]
    %v1724 = vld [vmem:[%s5 + $0x9d8] sm:$0xff]
    %v1725 = vld [vmem:[%s5 + $0x9e0] sm:$0xff]
    %v1726 = vld [vmem:[%s5 + $0x9e8] sm:$0xff]
    %v1727 = vld [vmem:[%s5 + $0x9f0] sm:$0xff]
    %v1728 = vld [vmem:[%s5 + $0x9f8] sm:$0xff]
    %v1729 = vld [vmem:[%s6] sm:$0xf]
    %v1731 = vlaneseq
    %v1732 = vshrl.u32 %v1731, 7
    %v1733 = vsub.s32 0, %v1732
    %v1734 = vrot.slane %v1729, %v1733
    %v1735 = vlaneseq
    %v1736 = vshrl.u32 %v1735, 7
    %v1737 = vsub.s32 1, %v1736
    %v1738 = vrot.slane %v1729, %v1737
    %v1739 = vlaneseq
    %v1740 = vshrl.u32 %v1739, 7
    %v1741 = vsub.s32 2, %v1740
    %v1742 = vrot.slane %v1729, %v1741
    %v1743 = vlaneseq
    %v1744 = vshrl.u32 %v1743, 7
    %v1745 = vsub.s32 3, %v1744
    %v1746 = vrot.slane %v1729, %v1745
    %v2071 = vunpack.c.l.b16 %v1409
    %v2072 = vunpack.c.h.b16 %v1409
    %v2073 = vunpack.c.l.b16 %v1410
    %v2074 = vunpack.c.h.b16 %v1410
    %v2075 = vunpack.c.l.b16 %v1411
    %v2076 = vunpack.c.h.b16 %v1411
    %v2077 = vunpack.c.l.b16 %v1412
    %v2078 = vunpack.c.h.b16 %v1412
    %v2079 = vunpack.c.l.b16 %v1413
    %v2080 = vunpack.c.h.b16 %v1413
    %v2081 = vunpack.c.l.b16 %v1414
    %v2082 = vunpack.c.h.b16 %v1414
    %v2083 = vunpack.c.l.b16 %v1415
    %v2084 = vunpack.c.h.b16 %v1415
    %v2085 = vunpack.c.l.b16 %v1416
    %v2086 = vunpack.c.h.b16 %v1416
    %v2087 = vunpack.c.l.b16 %v1417
    %v2088 = vunpack.c.h.b16 %v1417
    %v2089 = vunpack.c.l.b16 %v1418
    %v2090 = vunpack.c.h.b16 %v1418
    %v2091 = vunpack.c.l.b16 %v1419
    %v2092 = vunpack.c.h.b16 %v1419
    %v2093 = vunpack.c.l.b16 %v1420
    %v2094 = vunpack.c.h.b16 %v1420
    %v2095 = vunpack.c.l.b16 %v1421
    %v2096 = vunpack.c.h.b16 %v1421
    %v2097 = vunpack.c.l.b16 %v1422
    %v2098 = vunpack.c.h.b16 %v1422
    %v2099 = vunpack.c.l.b16 %v1423
    %v2100 = vunpack.c.h.b16 %v1423
    %v2101 = vunpack.c.l.b16 %v1424
    %v2102 = vunpack.c.h.b16 %v1424
    %v2103 = vunpack.c.l.b16 %v1425
    %v2104 = vunpack.c.h.b16 %v1425
    %v2105 = vunpack.c.l.b16 %v1426
    %v2106 = vunpack.c.h.b16 %v1426
    %v2107 = vunpack.c.l.b16 %v1427
    %v2108 = vunpack.c.h.b16 %v1427
    %v2109 = vunpack.c.l.b16 %v1428
    %v2110 = vunpack.c.h.b16 %v1428
    %v2111 = vunpack.c.l.b16 %v1429
    %v2112 = vunpack.c.h.b16 %v1429
    %v2113 = vunpack.c.l.b16 %v1430
    %v2114 = vunpack.c.h.b16 %v1430
    %v2115 = vunpack.c.l.b16 %v1431
    %v2116 = vunpack.c.h.b16 %v1431
    %v2117 = vunpack.c.l.b16 %v1432
    %v2118 = vunpack.c.h.b16 %v1432
    %v2119 = vunpack.c.l.b16 %v1433
    %v2120 = vunpack.c.h.b16 %v1433
    %v2121 = vunpack.c.l.b16 %v1434
    %v2122 = vunpack.c.h.b16 %v1434
    %v2123 = vunpack.c.l.b16 %v1435
    %v2124 = vunpack.c.h.b16 %v1435
    %v2125 = vunpack.c.l.b16 %v1436
    %v2126 = vunpack.c.h.b16 %v1436
    %v2127 = vunpack.c.l.b16 %v1437
    %v2128 = vunpack.c.h.b16 %v1437
    %v2129 = vunpack.c.l.b16 %v1438
    %v2130 = vunpack.c.h.b16 %v1438
    %v2131 = vunpack.c.l.b16 %v1439
    %v2132 = vunpack.c.h.b16 %v1439
    %v2133 = vunpack.c.l.b16 %v1440
    %v2134 = vunpack.c.h.b16 %v1440
    %v2135 = vunpack.c.l.b16 %v1441
    %v2136 = vunpack.c.h.b16 %v1441
    %v2137 = vunpack.c.l.b16 %v1442
    %v2138 = vunpack.c.h.b16 %v1442
    %v2139 = vunpack.c.l.b16 %v1443
    %v2140 = vunpack.c.h.b16 %v1443
    %v2141 = vunpack.c.l.b16 %v1444
    %v2142 = vunpack.c.h.b16 %v1444
    %v2143 = vunpack.c.l.b16 %v1445
    %v2144 = vunpack.c.h.b16 %v1445
    %v2145 = vunpack.c.l.b16 %v1446
    %v2146 = vunpack.c.h.b16 %v1446
    %v2147 = vunpack.c.l.b16 %v1447
    %v2148 = vunpack.c.h.b16 %v1447
    %v2149 = vunpack.c.l.b16 %v1448
    %v2150 = vunpack.c.h.b16 %v1448
    %v2151 = vunpack.c.l.b16 %v1449
    %v2152 = vunpack.c.h.b16 %v1449
    %v2153 = vunpack.c.l.b16 %v1450
    %v2154 = vunpack.c.h.b16 %v1450
    %v2155 = vunpack.c.l.b16 %v1451
    %v2156 = vunpack.c.h.b16 %v1451
    %v2157 = vunpack.c.l.b16 %v1452
    %v2158 = vunpack.c.h.b16 %v1452
    %v2159 = vunpack.c.l.b16 %v1453
    %v2160 = vunpack.c.h.b16 %v1453
    %v2161 = vunpack.c.l.b16 %v1454
    %v2162 = vunpack.c.h.b16 %v1454
    %v2163 = vunpack.c.l.b16 %v1455
    %v2164 = vunpack.c.h.b16 %v1455
    %v2165 = vunpack.c.l.b16 %v1456
    %v2166 = vunpack.c.h.b16 %v1456
    %v2167 = vunpack.c.l.b16 %v1457
    %v2168 = vunpack.c.h.b16 %v1457
    %v2169 = vunpack.c.l.b16 %v1458
    %v2170 = vunpack.c.h.b16 %v1458
    %v2171 = vunpack.c.l.b16 %v1459
    %v2172 = vunpack.c.h.b16 %v1459
    %v2173 = vunpack.c.l.b16 %v1460
    %v2174 = vunpack.c.h.b16 %v1460
    %v2175 = vunpack.c.l.b16 %v1461
    %v2176 = vunpack.c.h.b16 %v1461
    %v2177 = vunpack.c.l.b16 %v1462
    %v2178 = vunpack.c.h.b16 %v1462
    %v2179 = vunpack.c.l.b16 %v1463
    %v2180 = vunpack.c.h.b16 %v1463
    %v2181 = vunpack.c.l.b16 %v1464
    %v2182 = vunpack.c.h.b16 %v1464
    %v2183 = vunpack.c.l.b16 %v1465
    %v2184 = vunpack.c.h.b16 %v1465
    %v2185 = vunpack.c.l.b16 %v1466
    %v2186 = vunpack.c.h.b16 %v1466
    %v2187 = vunpack.c.l.b16 %v1467
    %v2188 = vunpack.c.h.b16 %v1467
    %v2189 = vunpack.c.l.b16 %v1468
    %v2190 = vunpack.c.h.b16 %v1468
    %v2191 = vunpack.c.l.b16 %v1469
    %v2192 = vunpack.c.h.b16 %v1469
    %v2193 = vunpack.c.l.b16 %v1470
    %v2194 = vunpack.c.h.b16 %v1470
    %v2195 = vunpack.c.l.b16 %v1471
    %v2196 = vunpack.c.h.b16 %v1471
    %v2197 = vunpack.c.l.b16 %v1472
    %v2198 = vunpack.c.h.b16 %v1472
    %v2199 = vunpack.c.l.b16 %v1473
    %v2200 = vunpack.c.h.b16 %v1473
    %v2201 = vunpack.c.l.b16 %v1474
    %v2202 = vunpack.c.h.b16 %v1474
    %v2203 = vunpack.c.l.b16 %v1475
    %v2204 = vunpack.c.h.b16 %v1475
    %v2205 = vunpack.c.l.b16 %v1476
    %v2206 = vunpack.c.h.b16 %v1476
    %v2207 = vunpack.c.l.b16 %v1477
    %v2208 = vunpack.c.h.b16 %v1477
    %v2209 = vunpack.c.l.b16 %v1478
    %v2210 = vunpack.c.h.b16 %v1478
    %v2211 = vunpack.c.l.b16 %v1479
    %v2212 = vunpack.c.h.b16 %v1479
    %v2213 = vunpack.c.l.b16 %v1480
    %v2214 = vunpack.c.h.b16 %v1480
    %v2215 = vunpack.c.l.b16 %v1481
    %v2216 = vunpack.c.h.b16 %v1481
    %v2217 = vunpack.c.l.b16 %v1482
    %v2218 = vunpack.c.h.b16 %v1482
    %v2219 = vunpack.c.l.b16 %v1483
    %v2220 = vunpack.c.h.b16 %v1483
    %v2221 = vunpack.c.l.b16 %v1484
    %v2222 = vunpack.c.h.b16 %v1484
    %v2223 = vunpack.c.l.b16 %v1485
    %v2224 = vunpack.c.h.b16 %v1485
    %v2225 = vunpack.c.l.b16 %v1486
    %v2226 = vunpack.c.h.b16 %v1486
    %v2227 = vunpack.c.l.b16 %v1487
    %v2228 = vunpack.c.h.b16 %v1487
    %v2229 = vunpack.c.l.b16 %v1488
    %v2230 = vunpack.c.h.b16 %v1488
    %v2231 = vunpack.c.l.b16 %v1489
    %v2232 = vunpack.c.h.b16 %v1489
    %v2233 = vunpack.c.l.b16 %v1490
    %v2234 = vunpack.c.h.b16 %v1490
    %v2235 = vunpack.c.l.b16 %v1491
    %v2236 = vunpack.c.h.b16 %v1491
    %v2237 = vunpack.c.l.b16 %v1492
    %v2238 = vunpack.c.h.b16 %v1492
    %v2239 = vunpack.c.l.b16 %v1493
    %v2240 = vunpack.c.h.b16 %v1493
    %v2241 = vunpack.c.l.b16 %v1494
    %v2242 = vunpack.c.h.b16 %v1494
    %v2243 = vunpack.c.l.b16 %v1495
    %v2244 = vunpack.c.h.b16 %v1495
    %v2245 = vunpack.c.l.b16 %v1496
    %v2246 = vunpack.c.h.b16 %v1496
    %v2247 = vunpack.c.l.b16 %v1497
    %v2248 = vunpack.c.h.b16 %v1497
    %v2249 = vunpack.c.l.b16 %v1498
    %v2250 = vunpack.c.h.b16 %v1498
    %v2251 = vunpack.c.l.b16 %v1499
    %v2252 = vunpack.c.h.b16 %v1499
    %v2253 = vunpack.c.l.b16 %v1500
    %v2254 = vunpack.c.h.b16 %v1500
    %v2255 = vunpack.c.l.b16 %v1501
    %v2256 = vunpack.c.h.b16 %v1501
    %v2257 = vunpack.c.l.b16 %v1502
    %v2258 = vunpack.c.h.b16 %v1502
    %v2259 = vunpack.c.l.b16 %v1503
    %v2260 = vunpack.c.h.b16 %v1503
    %v2261 = vunpack.c.l.b16 %v1504
    %v2262 = vunpack.c.h.b16 %v1504
    %v2263 = vunpack.c.l.b16 %v1505
    %v2264 = vunpack.c.h.b16 %v1505
    %v2265 = vunpack.c.l.b16 %v1506
    %v2266 = vunpack.c.h.b16 %v1506
    %v2267 = vunpack.c.l.b16 %v1507
    %v2268 = vunpack.c.h.b16 %v1507
    %v2269 = vunpack.c.l.b16 %v1508
    %v2270 = vunpack.c.h.b16 %v1508
    %v2271 = vunpack.c.l.b16 %v1509
    %v2272 = vunpack.c.h.b16 %v1509
    %v2273 = vunpack.c.l.b16 %v1510
    %v2274 = vunpack.c.h.b16 %v1510
    %v2275 = vunpack.c.l.b16 %v1511
    %v2276 = vunpack.c.h.b16 %v1511
    %v2277 = vunpack.c.l.b16 %v1512
    %v2278 = vunpack.c.h.b16 %v1512
    %v2279 = vunpack.c.l.b16 %v1513
    %v2280 = vunpack.c.h.b16 %v1513
    %v2281 = vunpack.c.l.b16 %v1514
    %v2282 = vunpack.c.h.b16 %v1514
    %v2283 = vunpack.c.l.b16 %v1515
    %v2284 = vunpack.c.h.b16 %v1515
    %v2285 = vunpack.c.l.b16 %v1516
    %v2286 = vunpack.c.h.b16 %v1516
    %v2287 = vunpack.c.l.b16 %v1517
    %v2288 = vunpack.c.h.b16 %v1517
    %v2289 = vunpack.c.l.b16 %v1518
    %v2290 = vunpack.c.h.b16 %v1518
    %v2291 = vunpack.c.l.b16 %v1519
    %v2292 = vunpack.c.h.b16 %v1519
    %v2293 = vunpack.c.l.b16 %v1520
    %v2294 = vunpack.c.h.b16 %v1520
    %v2295 = vunpack.c.l.b16 %v1521
    %v2296 = vunpack.c.h.b16 %v1521
    %v2297 = vunpack.c.l.b16 %v1522
    %v2298 = vunpack.c.h.b16 %v1522
    %v2299 = vunpack.c.l.b16 %v1523
    %v2300 = vunpack.c.h.b16 %v1523
    %v2301 = vunpack.c.l.b16 %v1524
    %v2302 = vunpack.c.h.b16 %v1524
    %v2303 = vunpack.c.l.b16 %v1525
    %v2304 = vunpack.c.h.b16 %v1525
    %v2305 = vunpack.c.l.b16 %v1526
    %v2306 = vunpack.c.h.b16 %v1526
    %v2307 = vunpack.c.l.b16 %v1527
    %v2308 = vunpack.c.h.b16 %v1527
    %v2309 = vunpack.c.l.b16 %v1528
    %v2310 = vunpack.c.h.b16 %v1528
    %v2311 = vunpack.c.l.b16 %v1529
    %v2312 = vunpack.c.h.b16 %v1529
    %v2313 = vunpack.c.l.b16 %v1530
    %v2314 = vunpack.c.h.b16 %v1530
    %v2315 = vunpack.c.l.b16 %v1531
    %v2316 = vunpack.c.h.b16 %v1531
    %v2317 = vunpack.c.l.b16 %v1532
    %v2318 = vunpack.c.h.b16 %v1532
    %v2319 = vunpack.c.l.b16 %v1533
    %v2320 = vunpack.c.h.b16 %v1533
    %v2321 = vunpack.c.l.b16 %v1534
    %v2322 = vunpack.c.h.b16 %v1534
    %v2323 = vunpack.c.l.b16 %v1535
    %v2324 = vunpack.c.h.b16 %v1535
    %v2325 = vunpack.c.l.b16 %v1536
    %v2326 = vunpack.c.h.b16 %v1536
    %v2327 = vunpack.c.l.b16 %v1537
    %v2328 = vunpack.c.h.b16 %v1537
    %v2329 = vunpack.c.l.b16 %v1538
    %v2330 = vunpack.c.h.b16 %v1538
    %v2331 = vunpack.c.l.b16 %v1539
    %v2332 = vunpack.c.h.b16 %v1539
    %v2333 = vunpack.c.l.b16 %v1540
    %v2334 = vunpack.c.h.b16 %v1540
    %v2335 = vunpack.c.l.b16 %v1541
    %v2336 = vunpack.c.h.b16 %v1541
    %v2337 = vunpack.c.l.b16 %v1542
    %v2338 = vunpack.c.h.b16 %v1542
    %v2339 = vunpack.c.l.b16 %v1543
    %v2340 = vunpack.c.h.b16 %v1543
    %v2341 = vunpack.c.l.b16 %v1544
    %v2342 = vunpack.c.h.b16 %v1544
    %v2343 = vunpack.c.l.b16 %v1545
    %v2344 = vunpack.c.h.b16 %v1545
    %v2345 = vunpack.c.l.b16 %v1546
    %v2346 = vunpack.c.h.b16 %v1546
    %v2347 = vunpack.c.l.b16 %v1547
    %v2348 = vunpack.c.h.b16 %v1547
    %v2349 = vunpack.c.l.b16 %v1548
    %v2350 = vunpack.c.h.b16 %v1548
    %v2351 = vunpack.c.l.b16 %v1549
    %v2352 = vunpack.c.h.b16 %v1549
    %v2353 = vunpack.c.l.b16 %v1550
    %v2354 = vunpack.c.h.b16 %v1550
    %v2355 = vunpack.c.l.b16 %v1551
    %v2356 = vunpack.c.h.b16 %v1551
    %v2357 = vunpack.c.l.b16 %v1552
    %v2358 = vunpack.c.h.b16 %v1552
    %v2359 = vunpack.c.l.b16 %v1553
    %v2360 = vunpack.c.h.b16 %v1553
    %v2361 = vunpack.c.l.b16 %v1554
    %v2362 = vunpack.c.h.b16 %v1554
    %v2363 = vunpack.c.l.b16 %v1555
    %v2364 = vunpack.c.h.b16 %v1555
    %v2365 = vunpack.c.l.b16 %v1556
    %v2366 = vunpack.c.h.b16 %v1556
    %v2367 = vunpack.c.l.b16 %v1557
    %v2368 = vunpack.c.h.b16 %v1557
    %v2369 = vunpack.c.l.b16 %v1558
    %v2370 = vunpack.c.h.b16 %v1558
    %v2371 = vunpack.c.l.b16 %v1559
    %v2372 = vunpack.c.h.b16 %v1559
    %v2373 = vunpack.c.l.b16 %v1560
    %v2374 = vunpack.c.h.b16 %v1560
    %v2375 = vunpack.c.l.b16 %v1561
    %v2376 = vunpack.c.h.b16 %v1561
    %v2377 = vunpack.c.l.b16 %v1562
    %v2378 = vunpack.c.h.b16 %v1562
    %v2379 = vunpack.c.l.b16 %v1563
    %v2380 = vunpack.c.h.b16 %v1563
    %v2381 = vunpack.c.l.b16 %v1564
    %v2382 = vunpack.c.h.b16 %v1564
    %v2383 = vunpack.c.l.b16 %v1565
    %v2384 = vunpack.c.h.b16 %v1565
    %v2385 = vunpack.c.l.b16 %v1566
    %v2386 = vunpack.c.h.b16 %v1566
    %v2387 = vunpack.c.l.b16 %v1567
    %v2388 = vunpack.c.h.b16 %v1567
    %v2389 = vunpack.c.l.b16 %v1568
    %v2390 = vunpack.c.h.b16 %v1568
    %v2391 = vunpack.c.l.b16 %v1569
    %v2392 = vunpack.c.h.b16 %v1569
    %v2393 = vunpack.c.l.b16 %v1570
    %v2394 = vunpack.c.h.b16 %v1570
    %v2395 = vunpack.c.l.b16 %v1571
    %v2396 = vunpack.c.h.b16 %v1571
    %v2397 = vunpack.c.l.b16 %v1572
    %v2398 = vunpack.c.h.b16 %v1572
    %v2399 = vunpack.c.l.b16 %v1573
    %v2400 = vunpack.c.h.b16 %v1573
    %v2401 = vunpack.c.l.b16 %v1574
    %v2402 = vunpack.c.h.b16 %v1574
    %v2403 = vunpack.c.l.b16 %v1575
    %v2404 = vunpack.c.h.b16 %v1575
    %v2405 = vunpack.c.l.b16 %v1576
    %v2406 = vunpack.c.h.b16 %v1576
    %v2407 = vunpack.c.l.b16 %v1577
    %v2408 = vunpack.c.h.b16 %v1577
    %v2409 = vunpack.c.l.b16 %v1578
    %v2410 = vunpack.c.h.b16 %v1578
    %v2411 = vunpack.c.l.b16 %v1579
    %v2412 = vunpack.c.h.b16 %v1579
    %v2413 = vunpack.c.l.b16 %v1580
    %v2414 = vunpack.c.h.b16 %v1580
    %v2415 = vunpack.c.l.b16 %v1581
    %v2416 = vunpack.c.h.b16 %v1581
    %v2417 = vunpack.c.l.b16 %v1582
    %v2418 = vunpack.c.h.b16 %v1582
    %v2419 = vunpack.c.l.b16 %v1583
    %v2420 = vunpack.c.h.b16 %v1583
    %v2421 = vunpack.c.l.b16 %v1584
    %v2422 = vunpack.c.h.b16 %v1584
    %v2423 = vunpack.c.l.b16 %v1585
    %v2424 = vunpack.c.h.b16 %v1585
    %v2425 = vunpack.c.l.b16 %v1586
    %v2426 = vunpack.c.h.b16 %v1586
    %v2427 = vunpack.c.l.b16 %v1587
    %v2428 = vunpack.c.h.b16 %v1587
    %v2429 = vunpack.c.l.b16 %v1588
    %v2430 = vunpack.c.h.b16 %v1588
    %v2431 = vunpack.c.l.b16 %v1589
    %v2432 = vunpack.c.h.b16 %v1589
    %v2433 = vunpack.c.l.b16 %v1590
    %v2434 = vunpack.c.h.b16 %v1590
    %v2435 = vunpack.c.l.b16 %v1591
    %v2436 = vunpack.c.h.b16 %v1591
    %v2437 = vunpack.c.l.b16 %v1592
    %v2438 = vunpack.c.h.b16 %v1592
    %v2439 = vunpack.c.l.b16 %v1593
    %v2440 = vunpack.c.h.b16 %v1593
    %v2441 = vunpack.c.l.b16 %v1594
    %v2442 = vunpack.c.h.b16 %v1594
    %v2443 = vunpack.c.l.b16 %v1595
    %v2444 = vunpack.c.h.b16 %v1595
    %v2445 = vunpack.c.l.b16 %v1596
    %v2446 = vunpack.c.h.b16 %v1596
    %v2447 = vunpack.c.l.b16 %v1597
    %v2448 = vunpack.c.h.b16 %v1597
    %v2449 = vunpack.c.l.b16 %v1598
    %v2450 = vunpack.c.h.b16 %v1598
    %v2451 = vunpack.c.l.b16 %v1599
    %v2452 = vunpack.c.h.b16 %v1599
    %v2453 = vunpack.c.l.b16 %v1600
    %v2454 = vunpack.c.h.b16 %v1600
    %v2455 = vunpack.c.l.b16 %v1601
    %v2456 = vunpack.c.h.b16 %v1601
    %v2457 = vunpack.c.l.b16 %v1602
    %v2458 = vunpack.c.h.b16 %v1602
    %v2459 = vunpack.c.l.b16 %v1603
    %v2460 = vunpack.c.h.b16 %v1603
    %v2461 = vunpack.c.l.b16 %v1604
    %v2462 = vunpack.c.h.b16 %v1604
    %v2463 = vunpack.c.l.b16 %v1605
    %v2464 = vunpack.c.h.b16 %v1605
    %v2465 = vunpack.c.l.b16 %v1606
    %v2466 = vunpack.c.h.b16 %v1606
    %v2467 = vunpack.c.l.b16 %v1607
    %v2468 = vunpack.c.h.b16 %v1607
    %v2469 = vunpack.c.l.b16 %v1608
    %v2470 = vunpack.c.h.b16 %v1608
    %v2471 = vunpack.c.l.b16 %v1609
    %v2472 = vunpack.c.h.b16 %v1609
    %v2473 = vunpack.c.l.b16 %v1610
    %v2474 = vunpack.c.h.b16 %v1610
    %v2475 = vunpack.c.l.b16 %v1611
    %v2476 = vunpack.c.h.b16 %v1611
    %v2477 = vunpack.c.l.b16 %v1612
    %v2478 = vunpack.c.h.b16 %v1612
    %v2479 = vunpack.c.l.b16 %v1613
    %v2480 = vunpack.c.h.b16 %v1613
    %v2481 = vunpack.c.l.b16 %v1614
    %v2482 = vunpack.c.h.b16 %v1614
    %v2483 = vunpack.c.l.b16 %v1615
    %v2484 = vunpack.c.h.b16 %v1615
    %v2485 = vunpack.c.l.b16 %v1616
    %v2486 = vunpack.c.h.b16 %v1616
    %v2487 = vunpack.c.l.b16 %v1617
    %v2488 = vunpack.c.h.b16 %v1617
    %v2489 = vunpack.c.l.b16 %v1618
    %v2490 = vunpack.c.h.b16 %v1618
    %v2491 = vunpack.c.l.b16 %v1619
    %v2492 = vunpack.c.h.b16 %v1619
    %v2493 = vunpack.c.l.b16 %v1620
    %v2494 = vunpack.c.h.b16 %v1620
    %v2495 = vunpack.c.l.b16 %v1621
    %v2496 = vunpack.c.h.b16 %v1621
    %v2497 = vunpack.c.l.b16 %v1622
    %v2498 = vunpack.c.h.b16 %v1622
    %v2499 = vunpack.c.l.b16 %v1623
    %v2500 = vunpack.c.h.b16 %v1623
    %v2501 = vunpack.c.l.b16 %v1624
    %v2502 = vunpack.c.h.b16 %v1624
    %v2503 = vunpack.c.l.b16 %v1625
    %v2504 = vunpack.c.h.b16 %v1625
    %v2505 = vunpack.c.l.b16 %v1626
    %v2506 = vunpack.c.h.b16 %v1626
    %v2507 = vunpack.c.l.b16 %v1627
    %v2508 = vunpack.c.h.b16 %v1627
    %v2509 = vunpack.c.l.b16 %v1628
    %v2510 = vunpack.c.h.b16 %v1628
    %v2511 = vunpack.c.l.b16 %v1629
    %v2512 = vunpack.c.h.b16 %v1629
    %v2513 = vunpack.c.l.b16 %v1630
    %v2514 = vunpack.c.h.b16 %v1630
    %v2515 = vunpack.c.l.b16 %v1631
    %v2516 = vunpack.c.h.b16 %v1631
    %v2517 = vunpack.c.l.b16 %v1632
    %v2518 = vunpack.c.h.b16 %v1632
    %v2519 = vunpack.c.l.b16 %v1633
    %v2520 = vunpack.c.h.b16 %v1633
    %v2521 = vunpack.c.l.b16 %v1634
    %v2522 = vunpack.c.h.b16 %v1634
    %v2523 = vunpack.c.l.b16 %v1635
    %v2524 = vunpack.c.h.b16 %v1635
    %v2525 = vunpack.c.l.b16 %v1636
    %v2526 = vunpack.c.h.b16 %v1636
    %v2527 = vunpack.c.l.b16 %v1637
    %v2528 = vunpack.c.h.b16 %v1637
    %v2529 = vunpack.c.l.b16 %v1638
    %v2530 = vunpack.c.h.b16 %v1638
    %v2531 = vunpack.c.l.b16 %v1639
    %v2532 = vunpack.c.h.b16 %v1639
    %v2533 = vunpack.c.l.b16 %v1640
    %v2534 = vunpack.c.h.b16 %v1640
    %v2535 = vunpack.c.l.b16 %v1641
    %v2536 = vunpack.c.h.b16 %v1641
    %v2537 = vunpack.c.l.b16 %v1642
    %v2538 = vunpack.c.h.b16 %v1642
    %v2539 = vunpack.c.l.b16 %v1643
    %v2540 = vunpack.c.h.b16 %v1643
    %v2541 = vunpack.c.l.b16 %v1644
    %v2542 = vunpack.c.h.b16 %v1644
    %v2543 = vunpack.c.l.b16 %v1645
    %v2544 = vunpack.c.h.b16 %v1645
    %v2545 = vunpack.c.l.b16 %v1646
    %v2546 = vunpack.c.h.b16 %v1646
    %v2547 = vunpack.c.l.b16 %v1647
    %v2548 = vunpack.c.h.b16 %v1647
    %v2549 = vunpack.c.l.b16 %v1648
    %v2550 = vunpack.c.h.b16 %v1648
    %v2551 = vunpack.c.l.b16 %v1649
    %v2552 = vunpack.c.h.b16 %v1649
    %v2553 = vunpack.c.l.b16 %v1650
    %v2554 = vunpack.c.h.b16 %v1650
    %v2555 = vunpack.c.l.b16 %v1651
    %v2556 = vunpack.c.h.b16 %v1651
    %v2557 = vunpack.c.l.b16 %v1652
    %v2558 = vunpack.c.h.b16 %v1652
    %v2559 = vunpack.c.l.b16 %v1653
    %v2560 = vunpack.c.h.b16 %v1653
    %v2561 = vunpack.c.l.b16 %v1654
    %v2562 = vunpack.c.h.b16 %v1654
    %v2563 = vunpack.c.l.b16 %v1655
    %v2564 = vunpack.c.h.b16 %v1655
    %v2565 = vunpack.c.l.b16 %v1656
    %v2566 = vunpack.c.h.b16 %v1656
    %v2567 = vunpack.c.l.b16 %v1657
    %v2568 = vunpack.c.h.b16 %v1657
    %v2569 = vunpack.c.l.b16 %v1658
    %v2570 = vunpack.c.h.b16 %v1658
    %v2571 = vunpack.c.l.b16 %v1659
    %v2572 = vunpack.c.h.b16 %v1659
    %v2573 = vunpack.c.l.b16 %v1660
    %v2574 = vunpack.c.h.b16 %v1660
    %v2575 = vunpack.c.l.b16 %v1661
    %v2576 = vunpack.c.h.b16 %v1661
    %v2577 = vunpack.c.l.b16 %v1662
    %v2578 = vunpack.c.h.b16 %v1662
    %v2579 = vunpack.c.l.b16 %v1663
    %v2580 = vunpack.c.h.b16 %v1663
    %v2581 = vunpack.c.l.b16 %v1664
    %v2582 = vunpack.c.h.b16 %v1664
    %v2583 = vunpack.c.l.b16 %v1665
    %v2584 = vunpack.c.h.b16 %v1665
    %v2585 = vunpack.c.l.b16 %v1666
    %v2586 = vunpack.c.h.b16 %v1666
    %v2587 = vunpack.c.l.b16 %v1667
    %v2588 = vunpack.c.h.b16 %v1667
    %v2589 = vunpack.c.l.b16 %v1668
    %v2590 = vunpack.c.h.b16 %v1668
    %v2591 = vunpack.c.l.b16 %v1669
    %v2592 = vunpack.c.h.b16 %v1669
    %v2593 = vunpack.c.l.b16 %v1670
    %v2594 = vunpack.c.h.b16 %v1670
    %v2595 = vunpack.c.l.b16 %v1671
    %v2596 = vunpack.c.h.b16 %v1671
    %v2597 = vunpack.c.l.b16 %v1672
    %v2598 = vunpack.c.h.b16 %v1672
    %v2599 = vunpack.c.l.b16 %v1673
    %v2600 = vunpack.c.h.b16 %v1673
    %v2601 = vunpack.c.l.b16 %v1674
    %v2602 = vunpack.c.h.b16 %v1674
    %v2603 = vunpack.c.l.b16 %v1675
    %v2604 = vunpack.c.h.b16 %v1675
    %v2605 = vunpack.c.l.b16 %v1676
    %v2606 = vunpack.c.h.b16 %v1676
    %v2607 = vunpack.c.l.b16 %v1677
    %v2608 = vunpack.c.h.b16 %v1677
    %v2609 = vunpack.c.l.b16 %v1678
    %v2610 = vunpack.c.h.b16 %v1678
    %v2611 = vunpack.c.l.b16 %v1679
    %v2612 = vunpack.c.h.b16 %v1679
    %v2613 = vunpack.c.l.b16 %v1680
    %v2614 = vunpack.c.h.b16 %v1680
    %v2615 = vunpack.c.l.b16 %v1681
    %v2616 = vunpack.c.h.b16 %v1681
    %v2617 = vunpack.c.l.b16 %v1682
    %v2618 = vunpack.c.h.b16 %v1682
    %v2619 = vunpack.c.l.b16 %v1683
    %v2620 = vunpack.c.h.b16 %v1683
    %v2621 = vunpack.c.l.b16 %v1684
    %v2622 = vunpack.c.h.b16 %v1684
    %v2623 = vunpack.c.l.b16 %v1685
    %v2624 = vunpack.c.h.b16 %v1685
    %v2625 = vunpack.c.l.b16 %v1686
    %v2626 = vunpack.c.h.b16 %v1686
    %v2627 = vunpack.c.l.b16 %v1687
    %v2628 = vunpack.c.h.b16 %v1687
    %v2629 = vunpack.c.l.b16 %v1688
    %v2630 = vunpack.c.h.b16 %v1688
    %v2631 = vunpack.c.l.b16 %v1689
    %v2632 = vunpack.c.h.b16 %v1689
    %v2633 = vunpack.c.l.b16 %v1690
    %v2634 = vunpack.c.h.b16 %v1690
    %v2635 = vunpack.c.l.b16 %v1691
    %v2636 = vunpack.c.h.b16 %v1691
    %v2637 = vunpack.c.l.b16 %v1692
    %v2638 = vunpack.c.h.b16 %v1692
    %v2639 = vunpack.c.l.b16 %v1693
    %v2640 = vunpack.c.h.b16 %v1693
    %v2641 = vunpack.c.l.b16 %v1694
    %v2642 = vunpack.c.h.b16 %v1694
    %v2643 = vunpack.c.l.b16 %v1695
    %v2644 = vunpack.c.h.b16 %v1695
    %v2645 = vunpack.c.l.b16 %v1696
    %v2646 = vunpack.c.h.b16 %v1696
    %v2647 = vunpack.c.l.b16 %v1697
    %v2648 = vunpack.c.h.b16 %v1697
    %v2649 = vunpack.c.l.b16 %v1698
    %v2650 = vunpack.c.h.b16 %v1698
    %v2651 = vunpack.c.l.b16 %v1699
    %v2652 = vunpack.c.h.b16 %v1699
    %v2653 = vunpack.c.l.b16 %v1700
    %v2654 = vunpack.c.h.b16 %v1700
    %v2655 = vunpack.c.l.b16 %v1701
    %v2656 = vunpack.c.h.b16 %v1701
    %v2657 = vunpack.c.l.b16 %v1702
    %v2658 = vunpack.c.h.b16 %v1702
    %v2659 = vunpack.c.l.b16 %v1703
    %v2660 = vunpack.c.h.b16 %v1703
    %v2661 = vunpack.c.l.b16 %v1704
    %v2662 = vunpack.c.h.b16 %v1704
    %v2663 = vunpack.c.l.b16 %v1705
    %v2664 = vunpack.c.h.b16 %v1705
    %v2665 = vunpack.c.l.b16 %v1706
    %v2666 = vunpack.c.h.b16 %v1706
    %v2667 = vunpack.c.l.b16 %v1707
    %v2668 = vunpack.c.h.b16 %v1707
    %v2669 = vunpack.c.l.b16 %v1708
    %v2670 = vunpack.c.h.b16 %v1708
    %v2671 = vunpack.c.l.b16 %v1709
    %v2672 = vunpack.c.h.b16 %v1709
    %v2673 = vunpack.c.l.b16 %v1710
    %v2674 = vunpack.c.h.b16 %v1710
    %v2675 = vunpack.c.l.b16 %v1711
    %v2676 = vunpack.c.h.b16 %v1711
    %v2677 = vunpack.c.l.b16 %v1712
    %v2678 = vunpack.c.h.b16 %v1712
    %v2679 = vunpack.c.l.b16 %v1713
    %v2680 = vunpack.c.h.b16 %v1713
    %v2681 = vunpack.c.l.b16 %v1714
    %v2682 = vunpack.c.h.b16 %v1714
    %v2683 = vunpack.c.l.b16 %v1715
    %v2684 = vunpack.c.h.b16 %v1715
    %v2685 = vunpack.c.l.b16 %v1716
    %v2686 = vunpack.c.h.b16 %v1716
    %v2687 = vunpack.c.l.b16 %v1717
    %v2688 = vunpack.c.h.b16 %v1717
    %v2689 = vunpack.c.l.b16 %v1718
    %v2690 = vunpack.c.h.b16 %v1718
    %v2691 = vunpack.c.l.b16 %v1719
    %v2692 = vunpack.c.h.b16 %v1719
    %v2693 = vunpack.c.l.b16 %v1720
    %v2694 = vunpack.c.h.b16 %v1720
    %v2695 = vunpack.c.l.b16 %v1721
    %v2696 = vunpack.c.h.b16 %v1721
    %v2697 = vunpack.c.l.b16 %v1722
    %v2698 = vunpack.c.h.b16 %v1722
    %v2699 = vunpack.c.l.b16 %v1723
    %v2700 = vunpack.c.h.b16 %v1723
    %v2701 = vunpack.c.l.b16 %v1724
    %v2702 = vunpack.c.h.b16 %v1724
    %v2703 = vunpack.c.l.b16 %v1725
    %v2704 = vunpack.c.h.b16 %v1725
    %v2705 = vunpack.c.l.b16 %v1726
    %v2706 = vunpack.c.h.b16 %v1726
    %v2707 = vunpack.c.l.b16 %v1727
    %v2708 = vunpack.c.h.b16 %v1727
    %v2709 = vunpack.c.l.b16 %v1728
    %v2710 = vunpack.c.h.b16 %v1728
    %v2711 = vpack.c.b16 %v2075, %v2071
    %v2712 = vpack.c.b16 %v2076, %v2072
    %v2713 = vpack.c.b16 %v2077, %v2073
    %v2714 = vpack.c.b16 %v2078, %v2074
    %v2715 = vpack.c.b16 %v2083, %v2079
    %v2716 = vpack.c.b16 %v2084, %v2080
    %v2717 = vpack.c.b16 %v2085, %v2081
    %v2718 = vpack.c.b16 %v2086, %v2082
    %v2719 = vpack.c.b16 %v2091, %v2087
    %v2720 = vpack.c.b16 %v2092, %v2088
    %v2721 = vpack.c.b16 %v2093, %v2089
    %v2722 = vpack.c.b16 %v2094, %v2090
    %v2723 = vpack.c.b16 %v2099, %v2095
    %v2724 = vpack.c.b16 %v2100, %v2096
    %v2725 = vpack.c.b16 %v2101, %v2097
    %v2726 = vpack.c.b16 %v2102, %v2098
    %v2727 = vpack.c.b16 %v2107, %v2103
    %v2728 = vpack.c.b16 %v2108, %v2104
    %v2729 = vpack.c.b16 %v2109, %v2105
    %v2730 = vpack.c.b16 %v2110, %v2106
    %v2731 = vpack.c.b16 %v2115, %v2111
    %v2732 = vpack.c.b16 %v2116, %v2112
    %v2733 = vpack.c.b16 %v2117, %v2113
    %v2734 = vpack.c.b16 %v2118, %v2114
    %v2735 = vpack.c.b16 %v2123, %v2119
    %v2736 = vpack.c.b16 %v2124, %v2120
    %v2737 = vpack.c.b16 %v2125, %v2121
    %v2738 = vpack.c.b16 %v2126, %v2122
    %v2739 = vpack.c.b16 %v2131, %v2127
    %v2740 = vpack.c.b16 %v2132, %v2128
    %v2741 = vpack.c.b16 %v2133, %v2129
    %v2742 = vpack.c.b16 %v2134, %v2130
    %v2743 = vpack.c.b16 %v2139, %v2135
    %v2744 = vpack.c.b16 %v2140, %v2136
    %v2745 = vpack.c.b16 %v2141, %v2137
    %v2746 = vpack.c.b16 %v2142, %v2138
    %v2747 = vpack.c.b16 %v2147, %v2143
    %v2748 = vpack.c.b16 %v2148, %v2144
    %v2749 = vpack.c.b16 %v2149, %v2145
    %v2750 = vpack.c.b16 %v2150, %v2146
    %v2751 = vpack.c.b16 %v2155, %v2151
    %v2752 = vpack.c.b16 %v2156, %v2152
    %v2753 = vpack.c.b16 %v2157, %v2153
    %v2754 = vpack.c.b16 %v2158, %v2154
    %v2755 = vpack.c.b16 %v2163, %v2159
    %v2756 = vpack.c.b16 %v2164, %v2160
    %v2757 = vpack.c.b16 %v2165, %v2161
    %v2758 = vpack.c.b16 %v2166, %v2162
    %v2759 = vpack.c.b16 %v2171, %v2167
    %v2760 = vpack.c.b16 %v2172, %v2168
    %v2761 = vpack.c.b16 %v2173, %v2169
    %v2762 = vpack.c.b16 %v2174, %v2170
    %v2763 = vpack.c.b16 %v2179, %v2175
    %v2764 = vpack.c.b16 %v2180, %v2176
    %v2765 = vpack.c.b16 %v2181, %v2177
    %v2766 = vpack.c.b16 %v2182, %v2178
    %v2767 = vpack.c.b16 %v2187, %v2183
    %v2768 = vpack.c.b16 %v2188, %v2184
    %v2769 = vpack.c.b16 %v2189, %v2185
    %v2770 = vpack.c.b16 %v2190, %v2186
    %v2771 = vpack.c.b16 %v2195, %v2191
    %v2772 = vpack.c.b16 %v2196, %v2192
    %v2773 = vpack.c.b16 %v2197, %v2193
    %v2774 = vpack.c.b16 %v2198, %v2194
    %v2775 = vpack.c.b16 %v2203, %v2199
    %v2776 = vpack.c.b16 %v2204, %v2200
    %v2777 = vpack.c.b16 %v2205, %v2201
    %v2778 = vpack.c.b16 %v2206, %v2202
    %v2779 = vpack.c.b16 %v2211, %v2207
    %v2780 = vpack.c.b16 %v2212, %v2208
    %v2781 = vpack.c.b16 %v2213, %v2209
    %v2782 = vpack.c.b16 %v2214, %v2210
    %v2783 = vpack.c.b16 %v2219, %v2215
    %v2784 = vpack.c.b16 %v2220, %v2216
    %v2785 = vpack.c.b16 %v2221, %v2217
    %v2786 = vpack.c.b16 %v2222, %v2218
    %v2787 = vpack.c.b16 %v2227, %v2223
    %v2788 = vpack.c.b16 %v2228, %v2224
    %v2789 = vpack.c.b16 %v2229, %v2225
    %v2790 = vpack.c.b16 %v2230, %v2226
    %v2791 = vpack.c.b16 %v2235, %v2231
    %v2792 = vpack.c.b16 %v2236, %v2232
    %v2793 = vpack.c.b16 %v2237, %v2233
    %v2794 = vpack.c.b16 %v2238, %v2234
    %v2795 = vpack.c.b16 %v2243, %v2239
    %v2796 = vpack.c.b16 %v2244, %v2240
    %v2797 = vpack.c.b16 %v2245, %v2241
    %v2798 = vpack.c.b16 %v2246, %v2242
    %v2799 = vpack.c.b16 %v2251, %v2247
    %v2800 = vpack.c.b16 %v2252, %v2248
    %v2801 = vpack.c.b16 %v2253, %v2249
    %v2802 = vpack.c.b16 %v2254, %v2250
    %v2803 = vpack.c.b16 %v2259, %v2255
    %v2804 = vpack.c.b16 %v2260, %v2256
    %v2805 = vpack.c.b16 %v2261, %v2257
    %v2806 = vpack.c.b16 %v2262, %v2258
    %v2807 = vpack.c.b16 %v2267, %v2263
    %v2808 = vpack.c.b16 %v2268, %v2264
    %v2809 = vpack.c.b16 %v2269, %v2265
    %v2810 = vpack.c.b16 %v2270, %v2266
    %v2811 = vpack.c.b16 %v2275, %v2271
    %v2812 = vpack.c.b16 %v2276, %v2272
    %v2813 = vpack.c.b16 %v2277, %v2273
    %v2814 = vpack.c.b16 %v2278, %v2274
    %v2815 = vpack.c.b16 %v2283, %v2279
    %v2816 = vpack.c.b16 %v2284, %v2280
    %v2817 = vpack.c.b16 %v2285, %v2281
    %v2818 = vpack.c.b16 %v2286, %v2282
    %v2819 = vpack.c.b16 %v2291, %v2287
    %v2820 = vpack.c.b16 %v2292, %v2288
    %v2821 = vpack.c.b16 %v2293, %v2289
    %v2822 = vpack.c.b16 %v2294, %v2290
    %v2823 = vpack.c.b16 %v2299, %v2295
    %v2824 = vpack.c.b16 %v2300, %v2296
    %v2825 = vpack.c.b16 %v2301, %v2297
    %v2826 = vpack.c.b16 %v2302, %v2298
    %v2827 = vpack.c.b16 %v2307, %v2303
    %v2828 = vpack.c.b16 %v2308, %v2304
    %v2829 = vpack.c.b16 %v2309, %v2305
    %v2830 = vpack.c.b16 %v2310, %v2306
    %v2831 = vpack.c.b16 %v2315, %v2311
    %v2832 = vpack.c.b16 %v2316, %v2312
    %v2833 = vpack.c.b16 %v2317, %v2313
    %v2834 = vpack.c.b16 %v2318, %v2314
    %v2835 = vpack.c.b16 %v2323, %v2319
    %v2836 = vpack.c.b16 %v2324, %v2320
    %v2837 = vpack.c.b16 %v2325, %v2321
    %v2838 = vpack.c.b16 %v2326, %v2322
    %v2839 = vpack.c.b16 %v2331, %v2327
    %v2840 = vpack.c.b16 %v2332, %v2328
    %v2841 = vpack.c.b16 %v2333, %v2329
    %v2842 = vpack.c.b16 %v2334, %v2330
    %v2843 = vpack.c.b16 %v2339, %v2335
    %v2844 = vpack.c.b16 %v2340, %v2336
    %v2845 = vpack.c.b16 %v2341, %v2337
    %v2846 = vpack.c.b16 %v2342, %v2338
    %v2847 = vpack.c.b16 %v2347, %v2343
    %v2848 = vpack.c.b16 %v2348, %v2344
    %v2849 = vpack.c.b16 %v2349, %v2345
    %v2850 = vpack.c.b16 %v2350, %v2346
    %v2851 = vpack.c.b16 %v2355, %v2351
    %v2852 = vpack.c.b16 %v2356, %v2352
    %v2853 = vpack.c.b16 %v2357, %v2353
    %v2854 = vpack.c.b16 %v2358, %v2354
    %v2855 = vpack.c.b16 %v2363, %v2359
    %v2856 = vpack.c.b16 %v2364, %v2360
    %v2857 = vpack.c.b16 %v2365, %v2361
    %v2858 = vpack.c.b16 %v2366, %v2362
    %v2859 = vpack.c.b16 %v2371, %v2367
    %v2860 = vpack.c.b16 %v2372, %v2368
    %v2861 = vpack.c.b16 %v2373, %v2369
    %v2862 = vpack.c.b16 %v2374, %v2370
    %v2863 = vpack.c.b16 %v2379, %v2375
    %v2864 = vpack.c.b16 %v2380, %v2376
    %v2865 = vpack.c.b16 %v2381, %v2377
    %v2866 = vpack.c.b16 %v2382, %v2378
    %v2867 = vpack.c.b16 %v2387, %v2383
    %v2868 = vpack.c.b16 %v2388, %v2384
    %v2869 = vpack.c.b16 %v2389, %v2385
    %v2870 = vpack.c.b16 %v2390, %v2386
    %v2871 = vpack.c.b16 %v2395, %v2391
    %v2872 = vpack.c.b16 %v2396, %v2392
    %v2873 = vpack.c.b16 %v2397, %v2393
    %v2874 = vpack.c.b16 %v2398, %v2394
    %v2875 = vpack.c.b16 %v2403, %v2399
    %v2876 = vpack.c.b16 %v2404, %v2400
    %v2877 = vpack.c.b16 %v2405, %v2401
    %v2878 = vpack.c.b16 %v2406, %v2402
    %v2879 = vpack.c.b16 %v2411, %v2407
    %v2880 = vpack.c.b16 %v2412, %v2408
    %v2881 = vpack.c.b16 %v2413, %v2409
    %v2882 = vpack.c.b16 %v2414, %v2410
    %v2883 = vpack.c.b16 %v2419, %v2415
    %v2884 = vpack.c.b16 %v2420, %v2416
    %v2885 = vpack.c.b16 %v2421, %v2417
    %v2886 = vpack.c.b16 %v2422, %v2418
    %v2887 = vpack.c.b16 %v2427, %v2423
    %v2888 = vpack.c.b16 %v2428, %v2424
    %v2889 = vpack.c.b16 %v2429, %v2425
    %v2890 = vpack.c.b16 %v2430, %v2426
    %v2891 = vpack.c.b16 %v2435, %v2431
    %v2892 = vpack.c.b16 %v2436, %v2432
    %v2893 = vpack.c.b16 %v2437, %v2433
    %v2894 = vpack.c.b16 %v2438, %v2434
    %v2895 = vpack.c.b16 %v2443, %v2439
    %v2896 = vpack.c.b16 %v2444, %v2440
    %v2897 = vpack.c.b16 %v2445, %v2441
    %v2898 = vpack.c.b16 %v2446, %v2442
    %v2899 = vpack.c.b16 %v2451, %v2447
    %v2900 = vpack.c.b16 %v2452, %v2448
    %v2901 = vpack.c.b16 %v2453, %v2449
    %v2902 = vpack.c.b16 %v2454, %v2450
    %v2903 = vpack.c.b16 %v2459, %v2455
    %v2904 = vpack.c.b16 %v2460, %v2456
    %v2905 = vpack.c.b16 %v2461, %v2457
    %v2906 = vpack.c.b16 %v2462, %v2458
    %v2907 = vpack.c.b16 %v2467, %v2463
    %v2908 = vpack.c.b16 %v2468, %v2464
    %v2909 = vpack.c.b16 %v2469, %v2465
    %v2910 = vpack.c.b16 %v2470, %v2466
    %v2911 = vpack.c.b16 %v2475, %v2471
    %v2912 = vpack.c.b16 %v2476, %v2472
    %v2913 = vpack.c.b16 %v2477, %v2473
    %v2914 = vpack.c.b16 %v2478, %v2474
    %v2915 = vpack.c.b16 %v2483, %v2479
    %v2916 = vpack.c.b16 %v2484, %v2480
    %v2917 = vpack.c.b16 %v2485, %v2481
    %v2918 = vpack.c.b16 %v2486, %v2482
    %v2919 = vpack.c.b16 %v2491, %v2487
    %v2920 = vpack.c.b16 %v2492, %v2488
    %v2921 = vpack.c.b16 %v2493, %v2489
    %v2922 = vpack.c.b16 %v2494, %v2490
    %v2923 = vpack.c.b16 %v2499, %v2495
    %v2924 = vpack.c.b16 %v2500, %v2496
    %v2925 = vpack.c.b16 %v2501, %v2497
    %v2926 = vpack.c.b16 %v2502, %v2498
    %v2927 = vpack.c.b16 %v2507, %v2503
    %v2928 = vpack.c.b16 %v2508, %v2504
    %v2929 = vpack.c.b16 %v2509, %v2505
    %v2930 = vpack.c.b16 %v2510, %v2506
    %v2931 = vpack.c.b16 %v2515, %v2511
    %v2932 = vpack.c.b16 %v2516, %v2512
    %v2933 = vpack.c.b16 %v2517, %v2513
    %v2934 = vpack.c.b16 %v2518, %v2514
    %v2935 = vpack.c.b16 %v2523, %v2519
    %v2936 = vpack.c.b16 %v2524, %v2520
    %v2937 = vpack.c.b16 %v2525, %v2521
    %v2938 = vpack.c.b16 %v2526, %v2522
    %v2939 = vpack.c.b16 %v2531, %v2527
    %v2940 = vpack.c.b16 %v2532, %v2528
    %v2941 = vpack.c.b16 %v2533, %v2529
    %v2942 = vpack.c.b16 %v2534, %v2530
    %v2943 = vpack.c.b16 %v2539, %v2535
    %v2944 = vpack.c.b16 %v2540, %v2536
    %v2945 = vpack.c.b16 %v2541, %v2537
    %v2946 = vpack.c.b16 %v2542, %v2538
    %v2947 = vpack.c.b16 %v2547, %v2543
    %v2948 = vpack.c.b16 %v2548, %v2544
    %v2949 = vpack.c.b16 %v2549, %v2545
    %v2950 = vpack.c.b16 %v2550, %v2546
    %v2951 = vpack.c.b16 %v2555, %v2551
    %v2952 = vpack.c.b16 %v2556, %v2552
    %v2953 = vpack.c.b16 %v2557, %v2553
    %v2954 = vpack.c.b16 %v2558, %v2554
    %v2955 = vpack.c.b16 %v2563, %v2559
    %v2956 = vpack.c.b16 %v2564, %v2560
    %v2957 = vpack.c.b16 %v2565, %v2561
    %v2958 = vpack.c.b16 %v2566, %v2562
    %v2959 = vpack.c.b16 %v2571, %v2567
    %v2960 = vpack.c.b16 %v2572, %v2568
    %v2961 = vpack.c.b16 %v2573, %v2569
    %v2962 = vpack.c.b16 %v2574, %v2570
    %v2963 = vpack.c.b16 %v2579, %v2575
    %v2964 = vpack.c.b16 %v2580, %v2576
    %v2965 = vpack.c.b16 %v2581, %v2577
    %v2966 = vpack.c.b16 %v2582, %v2578
    %v2967 = vpack.c.b16 %v2587, %v2583
    %v2968 = vpack.c.b16 %v2588, %v2584
    %v2969 = vpack.c.b16 %v2589, %v2585
    %v2970 = vpack.c.b16 %v2590, %v2586
    %v2971 = vpack.c.b16 %v2595, %v2591
    %v2972 = vpack.c.b16 %v2596, %v2592
    %v2973 = vpack.c.b16 %v2597, %v2593
    %v2974 = vpack.c.b16 %v2598, %v2594
    %v2975 = vpack.c.b16 %v2603, %v2599
    %v2976 = vpack.c.b16 %v2604, %v2600
    %v2977 = vpack.c.b16 %v2605, %v2601
    %v2978 = vpack.c.b16 %v2606, %v2602
    %v2979 = vpack.c.b16 %v2611, %v2607
    %v2980 = vpack.c.b16 %v2612, %v2608
    %v2981 = vpack.c.b16 %v2613, %v2609
    %v2982 = vpack.c.b16 %v2614, %v2610
    %v2983 = vpack.c.b16 %v2619, %v2615
    %v2984 = vpack.c.b16 %v2620, %v2616
    %v2985 = vpack.c.b16 %v2621, %v2617
    %v2986 = vpack.c.b16 %v2622, %v2618
    %v2987 = vpack.c.b16 %v2627, %v2623
    %v2988 = vpack.c.b16 %v2628, %v2624
    %v2989 = vpack.c.b16 %v2629, %v2625
    %v2990 = vpack.c.b16 %v2630, %v2626
    %v2991 = vpack.c.b16 %v2635, %v2631
    %v2992 = vpack.c.b16 %v2636, %v2632
    %v2993 = vpack.c.b16 %v2637, %v2633
    %v2994 = vpack.c.b16 %v2638, %v2634
    %v2995 = vpack.c.b16 %v2643, %v2639
    %v2996 = vpack.c.b16 %v2644, %v2640
    %v2997 = vpack.c.b16 %v2645, %v2641
    %v2998 = vpack.c.b16 %v2646, %v2642
    %v2999 = vpack.c.b16 %v2651, %v2647
    %v3000 = vpack.c.b16 %v2652, %v2648
    %v3001 = vpack.c.b16 %v2653, %v2649
    %v3002 = vpack.c.b16 %v2654, %v2650
    %v3003 = vpack.c.b16 %v2659, %v2655
    %v3004 = vpack.c.b16 %v2660, %v2656
    %v3005 = vpack.c.b16 %v2661, %v2657
    %v3006 = vpack.c.b16 %v2662, %v2658
    %v3007 = vpack.c.b16 %v2667, %v2663
    %v3008 = vpack.c.b16 %v2668, %v2664
    %v3009 = vpack.c.b16 %v2669, %v2665
    %v3010 = vpack.c.b16 %v2670, %v2666
    %v3011 = vpack.c.b16 %v2675, %v2671
    %v3012 = vpack.c.b16 %v2676, %v2672
    %v3013 = vpack.c.b16 %v2677, %v2673
    %v3014 = vpack.c.b16 %v2678, %v2674
    %v3015 = vpack.c.b16 %v2683, %v2679
    %v3016 = vpack.c.b16 %v2684, %v2680
    %v3017 = vpack.c.b16 %v2685, %v2681
    %v3018 = vpack.c.b16 %v2686, %v2682
    %v3019 = vpack.c.b16 %v2691, %v2687
    %v3020 = vpack.c.b16 %v2692, %v2688
    %v3021 = vpack.c.b16 %v2693, %v2689
    %v3022 = vpack.c.b16 %v2694, %v2690
    %v3023 = vpack.c.b16 %v2699, %v2695
    %v3024 = vpack.c.b16 %v2700, %v2696
    %v3025 = vpack.c.b16 %v2701, %v2697
    %v3026 = vpack.c.b16 %v2702, %v2698
    %v3027 = vpack.c.b16 %v2707, %v2703
    %v3028 = vpack.c.b16 %v2708, %v2704
    %v3029 = vpack.c.b16 %v2709, %v2705
    %v3030 = vpack.c.b16 %v2710, %v2706
    %3351 = vmatprep.subr.bf16.mxu0 %v2740
    %3352 = vmatpush1.bf16.msra.mxu0 %v2739
    %3353 = vmatprep.subr.bf16.mxu0 %v2736
    %3354 = vmatpush1.bf16.msra.mxu0 %v2735
    %3355 = vmatprep.subr.bf16.mxu0 %v2732
    %3356 = vmatpush1.bf16.msra.mxu0 %v2731
    %3357 = vmatprep.subr.bf16.mxu0 %v2728
    %3358 = vmatpush1.bf16.msra.mxu0 %v2727
    %3359 = vmatprep.subr.bf16.mxu0 %v2724
    %3360 = vmatpush1.bf16.msra.mxu0 %v2723
    %3361 = vmatprep.subr.bf16.mxu0 %v2720
    %3362 = vmatpush1.bf16.msra.mxu0 %v2719
    %3363 = vmatprep.subr.bf16.mxu0 %v2716
    %3364 = vmatpush1.bf16.msra.mxu0 %v2715
    %3365 = vmatprep.subr.bf16.mxu0 %v2712
    %3366 = vmatpush1.bf16.msra.mxu0 %v2711
    %3367 = vmatprep.subr.bf16.mxu0 %v2772
    %3368 = vmatpush2.bf16.msra.mxu0 %v2771
    %3369 = vmatprep.subr.bf16.mxu0 %v2768
    %3370 = vmatpush2.bf16.msra.mxu0 %v2767
    %3371 = vmatprep.subr.bf16.mxu0 %v2764
    %3372 = vmatpush2.bf16.msra.mxu0 %v2763
    %3373 = vmatprep.subr.bf16.mxu0 %v2760
    %3374 = vmatpush2.bf16.msra.mxu0 %v2759
    %3375 = vmatprep.subr.bf16.mxu0 %v2756
    %3376 = vmatpush2.bf16.msra.mxu0 %v2755
    %3377 = vmatprep.subr.bf16.mxu0 %v2752
    %3378 = vmatpush2.bf16.msra.mxu0 %v2751
    %3379 = vmatprep.subr.bf16.mxu0 %v2748
    %3380 = vmatpush2.bf16.msra.mxu0 %v2747
    %3381 = vmatprep.subr.bf16.mxu0 %v2744
    %3382 = vmatpush2.bf16.msra.mxu0 %v2743
    %3383 = vmatprep.mubr.bf16.mxu0 %v1400
    %3384 = vmatmul.mubr.bf16.gmra.mxu0 %v1399
    %v3385 = vpop.f32.mrf.mxu0
    %v3386 = vadd.f32 %v1734, %v3385
    %v3387 = vpop.f32.mrf.mxu0
    %v3388 = vadd.f32 %v1738, %v3387
    %v3389 = vpop.f32.mrf.mxu0
    %v3390 = vpop.f32.mrf.mxu0
    %3391 = vdwg.mxu0
    %3392 = vmatprep.subr.bf16.mxu0 %v2804
    %3393 = vmatpush1.bf16.msra.mxu0 %v2803
    %3394 = vmatprep.subr.bf16.mxu0 %v2800
    %3395 = vmatpush1.bf16.msra.mxu0 %v2799
    %3396 = vmatprep.subr.bf16.mxu0 %v2796
    %3397 = vmatpush1.bf16.msra.mxu0 %v2795
    %3398 = vmatprep.subr.bf16.mxu0 %v2792
    %3399 = vmatpush1.bf16.msra.mxu0 %v2791
    %3400 = vmatprep.subr.bf16.mxu0 %v2788
    %3401 = vmatpush1.bf16.msra.mxu0 %v2787
    %3402 = vmatprep.subr.bf16.mxu0 %v2784
    %3403 = vmatpush1.bf16.msra.mxu0 %v2783
    %3404 = vmatprep.subr.bf16.mxu0 %v2780
    %3405 = vmatpush1.bf16.msra.mxu0 %v2779
    %3406 = vmatprep.subr.bf16.mxu0 %v2776
    %3407 = vmatpush1.bf16.msra.mxu0 %v2775
    %3408 = vmatprep.subr.bf16.mxu0 %v2836
    %3409 = vmatpush2.bf16.msra.mxu0 %v2835
    %3410 = vmatprep.subr.bf16.mxu0 %v2832
    %3411 = vmatpush2.bf16.msra.mxu0 %v2831
    %3412 = vmatprep.subr.bf16.mxu0 %v2828
    %3413 = vmatpush2.bf16.msra.mxu0 %v2827
    %3414 = vmatprep.subr.bf16.mxu0 %v2824
    %3415 = vmatpush2.bf16.msra.mxu0 %v2823
    %3416 = vmatprep.subr.bf16.mxu0 %v2820
    %3417 = vmatpush2.bf16.msra.mxu0 %v2819
    %3418 = vmatprep.subr.bf16.mxu0 %v2816
    %3419 = vmatpush2.bf16.msra.mxu0 %v2815
    %3420 = vmatprep.subr.bf16.mxu0 %v2812
    %3421 = vmatpush2.bf16.msra.mxu0 %v2811
    %3422 = vmatprep.subr.bf16.mxu0 %v2808
    %3423 = vmatpush2.bf16.msra.mxu0 %v2807
    %3424 = vmatprep.mubr.bf16.mxu0 %v1402
    %3425 = vmatmul.mubr.bf16.gmra.mxu0 %v1401
    %v3426 = vpop.f32.mrf.mxu0
    %v3427 = vadd.f32 %v3386, %v3426
    %v3428 = vpop.f32.mrf.mxu0
    %v3429 = vadd.f32 %v3388, %v3428
    %v3430 = vpop.f32.mrf.mxu0
    %v3431 = vpop.f32.mrf.mxu0
    %3432 = vdwg.mxu0
    %3433 = vmatprep.subr.bf16.mxu0 %v2868
    %3434 = vmatpush1.bf16.msra.mxu0 %v2867
    %3435 = vmatprep.subr.bf16.mxu0 %v2864
    %3436 = vmatpush1.bf16.msra.mxu0 %v2863
    %3437 = vmatprep.subr.bf16.mxu0 %v2860
    %3438 = vmatpush1.bf16.msra.mxu0 %v2859
    %3439 = vmatprep.subr.bf16.mxu0 %v2856
    %3440 = vmatpush1.bf16.msra.mxu0 %v2855
    %3441 = vmatprep.subr.bf16.mxu0 %v2852
    %3442 = vmatpush1.bf16.msra.mxu0 %v2851
    %3443 = vmatprep.subr.bf16.mxu0 %v2848
    %3444 = vmatpush1.bf16.msra.mxu0 %v2847
    %3445 = vmatprep.subr.bf16.mxu0 %v2844
    %3446 = vmatpush1.bf16.msra.mxu0 %v2843
    %3447 = vmatprep.subr.bf16.mxu0 %v2840
    %3448 = vmatpush1.bf16.msra.mxu0 %v2839
    %3449 = vmatprep.subr.bf16.mxu0 %v2900
    %3450 = vmatpush2.bf16.msra.mxu0 %v2899
    %3451 = vmatprep.subr.bf16.mxu0 %v2896
    %3452 = vmatpush2.bf16.msra.mxu0 %v2895
    %3453 = vmatprep.subr.bf16.mxu0 %v2892
    %3454 = vmatpush2.bf16.msra.mxu0 %v2891
    %3455 = vmatprep.subr.bf16.mxu0 %v2888
    %3456 = vmatpush2.bf16.msra.mxu0 %v2887
    %3457 = vmatprep.subr.bf16.mxu0 %v2884
    %3458 = vmatpush2.bf16.msra.mxu0 %v2883
    %3459 = vmatprep.subr.bf16.mxu0 %v2880
    %3460 = vmatpush2.bf16.msra.mxu0 %v2879
    %3461 = vmatprep.subr.bf16.mxu0 %v2876
    %3462 = vmatpush2.bf16.msra.mxu0 %v2875
    %3463 = vmatprep.subr.bf16.mxu0 %v2872
    %3464 = vmatpush2.bf16.msra.mxu0 %v2871
    %3465 = vmatprep.mubr.bf16.mxu0 %v1404
    %3466 = vmatmul.mubr.bf16.gmra.mxu0 %v1403
    %v3467 = vpop.f32.mrf.mxu0
    %v3468 = vadd.f32 %v3427, %v3467
    %v3469 = vpop.f32.mrf.mxu0
    %v3470 = vadd.f32 %v3429, %v3469
    %v3471 = vpop.f32.mrf.mxu0
    %v3472 = vpop.f32.mrf.mxu0
    %3473 = vdwg.mxu0
    %3474 = vmatprep.subr.bf16.mxu0 %v2932
    %3475 = vmatpush1.bf16.msra.mxu0 %v2931
    %3476 = vmatprep.subr.bf16.mxu0 %v2928
    %3477 = vmatpush1.bf16.msra.mxu0 %v2927
    %3478 = vmatprep.subr.bf16.mxu0 %v2924
    %3479 = vmatpush1.bf16.msra.mxu0 %v2923
    %3480 = vmatprep.subr.bf16.mxu0 %v2920
    %3481 = vmatpush1.bf16.msra.mxu0 %v2919
    %3482 = vmatprep.subr.bf16.mxu0 %v2916
    %3483 = vmatpush1.bf16.msra.mxu0 %v2915
    %3484 = vmatprep.subr.bf16.mxu0 %v2912
    %3485 = vmatpush1.bf16.msra.mxu0 %v2911
    %3486 = vmatprep.subr.bf16.mxu0 %v2908
    %3487 = vmatpush1.bf16.msra.mxu0 %v2907
    %3488 = vmatprep.subr.bf16.mxu0 %v2904
    %3489 = vmatpush1.bf16.msra.mxu0 %v2903
    %3490 = vmatprep.subr.bf16.mxu0 %v2964
    %3491 = vmatpush2.bf16.msra.mxu0 %v2963
    %3492 = vmatprep.subr.bf16.mxu0 %v2960
    %3493 = vmatpush2.bf16.msra.mxu0 %v2959
    %3494 = vmatprep.subr.bf16.mxu0 %v2956
    %3495 = vmatpush2.bf16.msra.mxu0 %v2955
    %3496 = vmatprep.subr.bf16.mxu0 %v2952
    %3497 = vmatpush2.bf16.msra.mxu0 %v2951
    %3498 = vmatprep.subr.bf16.mxu0 %v2948
    %3499 = vmatpush2.bf16.msra.mxu0 %v2947
    %3500 = vmatprep.subr.bf16.mxu0 %v2944
    %3501 = vmatpush2.bf16.msra.mxu0 %v2943
    %3502 = vmatprep.subr.bf16.mxu0 %v2940
    %3503 = vmatpush2.bf16.msra.mxu0 %v2939
    %3504 = vmatprep.subr.bf16.mxu0 %v2936
    %3505 = vmatpush2.bf16.msra.mxu0 %v2935
    %3506 = vmatprep.mubr.bf16.mxu0 %v1406
    %3507 = vmatmul.mubr.bf16.gmra.mxu0 %v1405
    %v3508 = vpop.f32.mrf.mxu0
    %v3509 = vadd.f32 %v3468, %v3508
    %v3510 = vpop.f32.mrf.mxu0
    %v3511 = vadd.f32 %v3470, %v3510
    %v3512 = vpop.f32.mrf.mxu0
    %v3513 = vpop.f32.mrf.mxu0
    %3514 = vdwg.mxu0
    %3515 = vmatprep.subr.bf16.mxu0 %v2996
    %3516 = vmatpush1.bf16.msra.mxu0 %v2995
    %3517 = vmatprep.subr.bf16.mxu0 %v2992
    %3518 = vmatpush1.bf16.msra.mxu0 %v2991
    %3519 = vmatprep.subr.bf16.mxu0 %v2988
    %3520 = vmatpush1.bf16.msra.mxu0 %v2987
    %3521 = vmatprep.subr.bf16.mxu0 %v2984
    %3522 = vmatpush1.bf16.msra.mxu0 %v2983
    %3523 = vmatprep.subr.bf16.mxu0 %v2980
    %3524 = vmatpush1.bf16.msra.mxu0 %v2979
    %3525 = vmatprep.subr.bf16.mxu0 %v2976
    %3526 = vmatpush1.bf16.msra.mxu0 %v2975
    %3527 = vmatprep.subr.bf16.mxu0 %v2972
    %3528 = vmatpush1.bf16.msra.mxu0 %v2971
    %3529 = vmatprep.subr.bf16.mxu0 %v2968
    %3530 = vmatpush1.bf16.msra.mxu0 %v2967
    %3531 = vmatprep.subr.bf16.mxu0 %v3028
    %3532 = vmatpush2.bf16.msra.mxu0 %v3027
    %3533 = vmatprep.subr.bf16.mxu0 %v3024
    %3534 = vmatpush2.bf16.msra.mxu0 %v3023
    %3535 = vmatprep.subr.bf16.mxu0 %v3020
    %3536 = vmatpush2.bf16.msra.mxu0 %v3019
    %3537 = vmatprep.subr.bf16.mxu0 %v3016
    %3538 = vmatpush2.bf16.msra.mxu0 %v3015
    %3539 = vmatprep.subr.bf16.mxu0 %v3012
    %3540 = vmatpush2.bf16.msra.mxu0 %v3011
    %3541 = vmatprep.subr.bf16.mxu0 %v3008
    %3542 = vmatpush2.bf16.msra.mxu0 %v3007
    %3543 = vmatprep.subr.bf16.mxu0 %v3004
    %3544 = vmatpush2.bf16.msra.mxu0 %v3003
    %3545 = vmatprep.subr.bf16.mxu0 %v3000
    %3546 = vmatpush2.bf16.msra.mxu0 %v2999
    %3547 = vmatprep.mubr.bf16.mxu0 %v1408
    %3548 = vmatmul.mubr.bf16.gmra.mxu0 %v1407
    %v3549 = vpop.f32.mrf.mxu0
    %v3550 = vadd.f32 %v3509, %v3549
    %v3551 = vpop.f32.mrf.mxu0
    %v3552 = vadd.f32 %v3511, %v3551
    %v3553 = vpop.f32.mrf.mxu0
    %v3554 = vpop.f32.mrf.mxu0
    %3555 = vdwg.mxu0
    %3556 = vmatprep.subr.bf16.mxu0 %v2742
    %3557 = vmatpush1.bf16.msra.mxu0 %v2741
    %3558 = vmatprep.subr.bf16.mxu0 %v2738
    %3559 = vmatpush1.bf16.msra.mxu0 %v2737
    %3560 = vmatprep.subr.bf16.mxu0 %v2734
    %3561 = vmatpush1.bf16.msra.mxu0 %v2733
    %3562 = vmatprep.subr.bf16.mxu0 %v2730
    %3563 = vmatpush1.bf16.msra.mxu0 %v2729
    %3564 = vmatprep.subr.bf16.mxu0 %v2726
    %3565 = vmatpush1.bf16.msra.mxu0 %v2725
    %3566 = vmatprep.subr.bf16.mxu0 %v2722
    %3567 = vmatpush1.bf16.msra.mxu0 %v2721
    %3568 = vmatprep.subr.bf16.mxu0 %v2718
    %3569 = vmatpush1.bf16.msra.mxu0 %v2717
    %3570 = vmatprep.subr.bf16.mxu0 %v2714
    %3571 = vmatpush1.bf16.msra.mxu0 %v2713
    %3572 = vmatprep.subr.bf16.mxu0 %v2774
    %3573 = vmatpush2.bf16.msra.mxu0 %v2773
    %3574 = vmatprep.subr.bf16.mxu0 %v2770
    %3575 = vmatpush2.bf16.msra.mxu0 %v2769
    %3576 = vmatprep.subr.bf16.mxu0 %v2766
    %3577 = vmatpush2.bf16.msra.mxu0 %v2765
    %3578 = vmatprep.subr.bf16.mxu0 %v2762
    %3579 = vmatpush2.bf16.msra.mxu0 %v2761
    %3580 = vmatprep.subr.bf16.mxu0 %v2758
    %3581 = vmatpush2.bf16.msra.mxu0 %v2757
    %3582 = vmatprep.subr.bf16.mxu0 %v2754
    %3583 = vmatpush2.bf16.msra.mxu0 %v2753
    %3584 = vmatprep.subr.bf16.mxu0 %v2750
    %3585 = vmatpush2.bf16.msra.mxu0 %v2749
    %3586 = vmatprep.subr.bf16.mxu0 %v2746
    %3587 = vmatpush2.bf16.msra.mxu0 %v2745
    %3588 = vmatprep.mubr.bf16.mxu0 %v1400
    %3589 = vmatmul.mubr.bf16.gmra.mxu0 %v1399
    %v3590 = vpop.f32.mrf.mxu0
    %v3591 = vadd.f32 %v1742, %v3590
    %v3592 = vpop.f32.mrf.mxu0
    %v3593 = vadd.f32 %v1746, %v3592
    %v3594 = vpop.f32.mrf.mxu0
    %v3595 = vpop.f32.mrf.mxu0
    %3596 = vdwg.mxu0
    %3597 = vmatprep.subr.bf16.mxu0 %v2806
    %3598 = vmatpush1.bf16.msra.mxu0 %v2805
    %3599 = vmatprep.subr.bf16.mxu0 %v2802
    %3600 = vmatpush1.bf16.msra.mxu0 %v2801
    %3601 = vmatprep.subr.bf16.mxu0 %v2798
    %3602 = vmatpush1.bf16.msra.mxu0 %v2797
    %3603 = vmatprep.subr.bf16.mxu0 %v2794
    %3604 = vmatpush1.bf16.msra.mxu0 %v2793
    %3605 = vmatprep.subr.bf16.mxu0 %v2790
    %3606 = vmatpush1.bf16.msra.mxu0 %v2789
    %3607 = vmatprep.subr.bf16.mxu0 %v2786
    %3608 = vmatpush1.bf16.msra.mxu0 %v2785
    %3609 = vmatprep.subr.bf16.mxu0 %v2782
    %3610 = vmatpush1.bf16.msra.mxu0 %v2781
    %3611 = vmatprep.subr.bf16.mxu0 %v2778
    %3612 = vmatpush1.bf16.msra.mxu0 %v2777
    %3613 = vmatprep.subr.bf16.mxu0 %v2838
    %3614 = vmatpush2.bf16.msra.mxu0 %v2837
    %3615 = vmatprep.subr.bf16.mxu0 %v2834
    %3616 = vmatpush2.bf16.msra.mxu0 %v2833
    %3617 = vmatprep.subr.bf16.mxu0 %v2830
    %3618 = vmatpush2.bf16.msra.mxu0 %v2829
    %3619 = vmatprep.subr.bf16.mxu0 %v2826
    %3620 = vmatpush2.bf16.msra.mxu0 %v2825
    %3621 = vmatprep.subr.bf16.mxu0 %v2822
    %3622 = vmatpush2.bf16.msra.mxu0 %v2821
    %3623 = vmatprep.subr.bf16.mxu0 %v2818
    %3624 = vmatpush2.bf16.msra.mxu0 %v2817
    %3625 = vmatprep.subr.bf16.mxu0 %v2814
    %3626 = vmatpush2.bf16.msra.mxu0 %v2813
    %3627 = vmatprep.subr.bf16.mxu0 %v2810
    %3628 = vmatpush2.bf16.msra.mxu0 %v2809
    %3629 = vmatprep.mubr.bf16.mxu0 %v1402
    %3630 = vmatmul.mubr.bf16.gmra.mxu0 %v1401
    %v3631 = vpop.f32.mrf.mxu0
    %v3632 = vadd.f32 %v3591, %v3631
    %v3633 = vpop.f32.mrf.mxu0
    %v3634 = vadd.f32 %v3593, %v3633
    %v3635 = vpop.f32.mrf.mxu0
    %v3636 = vpop.f32.mrf.mxu0
    %3637 = vdwg.mxu0
    %3638 = vmatprep.subr.bf16.mxu0 %v2870
    %3639 = vmatpush1.bf16.msra.mxu0 %v2869
    %3640 = vmatprep.subr.bf16.mxu0 %v2866
    %3641 = vmatpush1.bf16.msra.mxu0 %v2865
    %3642 = vmatprep.subr.bf16.mxu0 %v2862
    %3643 = vmatpush1.bf16.msra.mxu0 %v2861
    %3644 = vmatprep.subr.bf16.mxu0 %v2858
    %3645 = vmatpush1.bf16.msra.mxu0 %v2857
    %3646 = vmatprep.subr.bf16.mxu0 %v2854
    %3647 = vmatpush1.bf16.msra.mxu0 %v2853
    %3648 = vmatprep.subr.bf16.mxu0 %v2850
    %3649 = vmatpush1.bf16.msra.mxu0 %v2849
    %3650 = vmatprep.subr.bf16.mxu0 %v2846
    %3651 = vmatpush1.bf16.msra.mxu0 %v2845
    %3652 = vmatprep.subr.bf16.mxu0 %v2842
    %3653 = vmatpush1.bf16.msra.mxu0 %v2841
    %3654 = vmatprep.subr.bf16.mxu0 %v2902
    %3655 = vmatpush2.bf16.msra.mxu0 %v2901
    %3656 = vmatprep.subr.bf16.mxu0 %v2898
    %3657 = vmatpush2.bf16.msra.mxu0 %v2897
    %3658 = vmatprep.subr.bf16.mxu0 %v2894
    %3659 = vmatpush2.bf16.msra.mxu0 %v2893
    %3660 = vmatprep.subr.bf16.mxu0 %v2890
    %3661 = vmatpush2.bf16.msra.mxu0 %v2889
    %3662 = vmatprep.subr.bf16.mxu0 %v2886
    %3663 = vmatpush2.bf16.msra.mxu0 %v2885
    %3664 = vmatprep.subr.bf16.mxu0 %v2882
    %3665 = vmatpush2.bf16.msra.mxu0 %v2881
    %3666 = vmatprep.subr.bf16.mxu0 %v2878
    %3667 = vmatpush2.bf16.msra.mxu0 %v2877
    %3668 = vmatprep.subr.bf16.mxu0 %v2874
    %3669 = vmatpush2.bf16.msra.mxu0 %v2873
    %3670 = vmatprep.mubr.bf16.mxu0 %v1404
    %3671 = vmatmul.mubr.bf16.gmra.mxu0 %v1403
    %v3672 = vpop.f32.mrf.mxu0
    %v3673 = vadd.f32 %v3632, %v3672
    %v3674 = vpop.f32.mrf.mxu0
    %v3675 = vadd.f32 %v3634, %v3674
    %v3676 = vpop.f32.mrf.mxu0
    %v3677 = vpop.f32.mrf.mxu0
    %3678 = vdwg.mxu0
    %3679 = vmatprep.subr.bf16.mxu0 %v2934
    %3680 = vmatpush1.bf16.msra.mxu0 %v2933
    %3681 = vmatprep.subr.bf16.mxu0 %v2930
    %3682 = vmatpush1.bf16.msra.mxu0 %v2929
    %3683 = vmatprep.subr.bf16.mxu0 %v2926
    %3684 = vmatpush1.bf16.msra.mxu0 %v2925
    %3685 = vmatprep.subr.bf16.mxu0 %v2922
    %3686 = vmatpush1.bf16.msra.mxu0 %v2921
    %3687 = vmatprep.subr.bf16.mxu0 %v2918
    %3688 = vmatpush1.bf16.msra.mxu0 %v2917
    %3689 = vmatprep.subr.bf16.mxu0 %v2914
    %3690 = vmatpush1.bf16.msra.mxu0 %v2913
    %3691 = vmatprep.subr.bf16.mxu0 %v2910
    %3692 = vmatpush1.bf16.msra.mxu0 %v2909
    %3693 = vmatprep.subr.bf16.mxu0 %v2906
    %3694 = vmatpush1.bf16.msra.mxu0 %v2905
    %3695 = vmatprep.subr.bf16.mxu0 %v2966
    %3696 = vmatpush2.bf16.msra.mxu0 %v2965
    %3697 = vmatprep.subr.bf16.mxu0 %v2962
    %3698 = vmatpush2.bf16.msra.mxu0 %v2961
    %3699 = vmatprep.subr.bf16.mxu0 %v2958
    %3700 = vmatpush2.bf16.msra.mxu0 %v2957
    %3701 = vmatprep.subr.bf16.mxu0 %v2954
    %3702 = vmatpush2.bf16.msra.mxu0 %v2953
    %3703 = vmatprep.subr.bf16.mxu0 %v2950
    %3704 = vmatpush2.bf16.msra.mxu0 %v2949
    %3705 = vmatprep.subr.bf16.mxu0 %v2946
    %3706 = vmatpush2.bf16.msra.mxu0 %v2945
    %3707 = vmatprep.subr.bf16.mxu0 %v2942
    %3708 = vmatpush2.bf16.msra.mxu0 %v2941
    %3709 = vmatprep.subr.bf16.mxu0 %v2938
    %3710 = vmatpush2.bf16.msra.mxu0 %v2937
    %3711 = vmatprep.mubr.bf16.mxu0 %v1406
    %3712 = vmatmul.mubr.bf16.gmra.mxu0 %v1405
    %v3713 = vpop.f32.mrf.mxu0
    %v3714 = vadd.f32 %v3673, %v3713
    %v3715 = vpop.f32.mrf.mxu0
    %v3716 = vadd.f32 %v3675, %v3715
    %v3717 = vpop.f32.mrf.mxu0
    %v3718 = vpop.f32.mrf.mxu0
    %3719 = vdwg.mxu0
    %3720 = vmatprep.subr.bf16.mxu0 %v2998
    %3721 = vmatpush1.bf16.msra.mxu0 %v2997
    %3722 = vmatprep.subr.bf16.mxu0 %v2994
    %3723 = vmatpush1.bf16.msra.mxu0 %v2993
    %3724 = vmatprep.subr.bf16.mxu0 %v2990
    %3725 = vmatpush1.bf16.msra.mxu0 %v2989
    %3726 = vmatprep.subr.bf16.mxu0 %v2986
    %3727 = vmatpush1.bf16.msra.mxu0 %v2985
    %3728 = vmatprep.subr.bf16.mxu0 %v2982
    %3729 = vmatpush1.bf16.msra.mxu0 %v2981
    %3730 = vmatprep.subr.bf16.mxu0 %v2978
    %3731 = vmatpush1.bf16.msra.mxu0 %v2977
    %3732 = vmatprep.subr.bf16.mxu0 %v2974
    %3733 = vmatpush1.bf16.msra.mxu0 %v2973
    %3734 = vmatprep.subr.bf16.mxu0 %v2970
    %3735 = vmatpush1.bf16.msra.mxu0 %v2969
    %3736 = vmatprep.subr.bf16.mxu0 %v3030
    %3737 = vmatpush2.bf16.msra.mxu0 %v3029
    %3738 = vmatprep.subr.bf16.mxu0 %v3026
    %3739 = vmatpush2.bf16.msra.mxu0 %v3025
    %3740 = vmatprep.subr.bf16.mxu0 %v3022
    %3741 = vmatpush2.bf16.msra.mxu0 %v3021
    %3742 = vmatprep.subr.bf16.mxu0 %v3018
    %3743 = vmatpush2.bf16.msra.mxu0 %v3017
    %3744 = vmatprep.subr.bf16.mxu0 %v3014
    %3745 = vmatpush2.bf16.msra.mxu0 %v3013
    %3746 = vmatprep.subr.bf16.mxu0 %v3010
    %3747 = vmatpush2.bf16.msra.mxu0 %v3009
    %3748 = vmatprep.subr.bf16.mxu0 %v3006
    %3749 = vmatpush2.bf16.msra.mxu0 %v3005
    %3750 = vmatprep.subr.bf16.mxu0 %v3002
    %3751 = vmatpush2.bf16.msra.mxu0 %v3001
    %3752 = vmatprep.mubr.bf16.mxu0 %v1408
    %3753 = vmatmul.mubr.bf16.gmra.mxu0 %v1407
    %v3754 = vpop.f32.mrf.mxu0
    %v3755 = vadd.f32 %v3714, %v3754
    %v3756 = vpop.f32.mrf.mxu0
    %v3757 = vadd.f32 %v3716, %v3756
    %v3758 = vpop.f32.mrf.mxu0
    %v3759 = vpop.f32.mrf.mxu0
    %3760 = vdwg.mxu0
    %v3761 = vld [vmem:[%s1] sm:$0x3]
    %v3762 = vld [vmem:[%s7] sm:$0xff]
    %3764 = vset.pattern.permute.xlu0 0
    %3765 = vperm.xlu0 %3764, %v3761
    %v3766 = vpop.permute.xlu0 %3765
    %v3769 = vlaneseq
    %v3770 = vshrl.u32 %v3769, 7
    %v3771 = vsub.s32 0, %v3770
    %v3772 = vrot.slane %v3762, %v3771
    %v3773 = vlaneseq
    %v3774 = vshrl.u32 %v3773, 7
    %v3775 = vsub.s32 4, %v3774
    %v3776 = vrot.slane %v3762, %v3775
    %v3779 = vlaneseq
    %v3780 = vshrl.u32 %v3779, 7
    %v3781 = vsub.s32 0, %v3780
    %v3782 = vrot.slane %v3772, %v3781
    %v3783 = vlaneseq
    %v3784 = vshrl.u32 %v3783, 7
    %v3785 = vsub.s32 0, %v3784
    %v3786 = vrot.slane %v3776, %v3785
    %v3787 = vmul.f32 %v3766, %v3782
    %v3788 = vmul.f32 %v3766, %v3786
    %3789 = vset.pattern.permute.xlu0 1
    %3790 = vperm.xlu0 %3789, %v3761
    %v3791 = vpop.permute.xlu0 %3790
    %v3793 = vlaneseq
    %v3794 = vshrl.u32 %v3793, 7
    %v3795 = vsub.s32 1, %v3794
    %v3796 = vrot.slane %v3762, %v3795
    %v3797 = vlaneseq
    %v3798 = vshrl.u32 %v3797, 7
    %v3799 = vsub.s32 5, %v3798
    %v3800 = vrot.slane %v3762, %v3799
    %v3803 = vlaneseq
    %v3804 = vshrl.u32 %v3803, 7
    %v3805 = vsub.s32 1, %v3804
    %v3806 = vrot.slane %v3796, %v3805
    %v3807 = vlaneseq
    %v3808 = vshrl.u32 %v3807, 7
    %v3809 = vsub.s32 1, %v3808
    %v3810 = vrot.slane %v3800, %v3809
    %v3811 = vmul.f32 %v3791, %v3806
    %v3812 = vmul.f32 %v3791, %v3810
    %v3813 = vadd.f32 %v3787, %v3811
    %v3814 = vadd.f32 %v3788, %v3812
    %3815 = vset.pattern.permute.xlu0 2
    %3816 = vperm.xlu0 %3815, %v3761
    %v3817 = vpop.permute.xlu0 %3816
    %v3819 = vlaneseq
    %v3820 = vshrl.u32 %v3819, 7
    %v3821 = vsub.s32 2, %v3820
    %v3822 = vrot.slane %v3762, %v3821
    %v3823 = vlaneseq
    %v3824 = vshrl.u32 %v3823, 7
    %v3825 = vsub.s32 6, %v3824
    %v3826 = vrot.slane %v3762, %v3825
    %v3829 = vlaneseq
    %v3830 = vshrl.u32 %v3829, 7
    %v3831 = vsub.s32 2, %v3830
    %v3832 = vrot.slane %v3822, %v3831
    %v3833 = vlaneseq
    %v3834 = vshrl.u32 %v3833, 7
    %v3835 = vsub.s32 2, %v3834
    %v3836 = vrot.slane %v3826, %v3835
    %v3837 = vmul.f32 %v3817, %v3832
    %v3838 = vmul.f32 %v3817, %v3836
    %v3839 = vadd.f32 %v3813, %v3837
    %v3840 = vadd.f32 %v3814, %v3838
    %3841 = vset.pattern.permute.xlu0 3
    %3842 = vperm.xlu0 %3841, %v3761
    %v3843 = vpop.permute.xlu0 %3842
    %v3845 = vlaneseq
    %v3846 = vshrl.u32 %v3845, 7
    %v3847 = vsub.s32 3, %v3846
    %v3848 = vrot.slane %v3762, %v3847
    %v3849 = vlaneseq
    %v3850 = vshrl.u32 %v3849, 7
    %v3851 = vsub.s32 7, %v3850
    %v3852 = vrot.slane %v3762, %v3851
    %v3855 = vlaneseq
    %v3856 = vshrl.u32 %v3855, 7
    %v3857 = vsub.s32 3, %v3856
    %v3858 = vrot.slane %v3848, %v3857
    %v3859 = vlaneseq
    %v3860 = vshrl.u32 %v3859, 7
    %v3861 = vsub.s32 3, %v3860
    %v3862 = vrot.slane %v3852, %v3861
    %v3863 = vmul.f32 %v3843, %v3858
    %v3864 = vmul.f32 %v3843, %v3862
    %v3865 = vadd.f32 %v3839, %v3863
    %v3866 = vadd.f32 %v3840, %v3864
    %v3867 = vld [vmem:[%s8] sm:$0x3]
    %v3869 = vlaneseq
    %v3870 = vshrl.u32 %v3869, 7
    %v3871 = vsub.s32 0, %v3870
    %v3872 = vrot.slane %v3867, %v3871
    %v3873 = vlaneseq
    %v3874 = vshrl.u32 %v3873, 7
    %v3875 = vsub.s32 1, %v3874
    %v3876 = vrot.slane %v3867, %v3875
    %v3879 = vmul.f32 %v3865, %v3872
    %v3880 = vmul.f32 %v3866, %v3876
    %v3881 = vld [vmem:[%s9] sm:$0x3]
    %v3883 = vlaneseq
    %v3884 = vshrl.u32 %v3883, 7
    %v3885 = vsub.s32 0, %v3884
    %v3886 = vrot.slane %v3881, %v3885
    %v3887 = vlaneseq
    %v3888 = vshrl.u32 %v3887, 7
    %v3889 = vsub.s32 1, %v3888
    %v3890 = vrot.slane %v3881, %v3889
    %v3893 = vadd.f32 %v3879, %v3886
    %v3894 = vadd.f32 %v3880, %v3890
    %v3895 = vmax.f32 %v3893, 0.0
    %v3896 = vmax.f32 %v3894, 0.0
    %v3897 = vpack.c.bf16 %v3895, %v3895
    %v3898 = vpack.c.bf16 %v3896, %v3896
    %v3899 = vld [vmem:[%s10] sm:$0xff]
    %v3900 = vld [vmem:[%s10 + $0x8] sm:$0xff]
    %v3901 = vld [vmem:[%s10 + $0x10] sm:$0xff]
    %v3902 = vld [vmem:[%s10 + $0x18] sm:$0xff]
    %v3903 = vld [vmem:[%s10 + $0x20] sm:$0xff]
    %v3904 = vld [vmem:[%s10 + $0x28] sm:$0xff]
    %v3905 = vld [vmem:[%s10 + $0x30] sm:$0xff]
    %v3906 = vld [vmem:[%s10 + $0x38] sm:$0xff]
    %v3907 = vld [vmem:[%s10 + $0x40] sm:$0xff]
    %v3908 = vld [vmem:[%s10 + $0x48] sm:$0xff]
    %v3909 = vld [vmem:[%s10 + $0x50] sm:$0xff]
    %v3910 = vld [vmem:[%s10 + $0x58] sm:$0xff]
    %v3911 = vld [vmem:[%s10 + $0x60] sm:$0xff]
    %v3912 = vld [vmem:[%s10 + $0x68] sm:$0xff]
    %v3913 = vld [vmem:[%s10 + $0x70] sm:$0xff]
    %v3914 = vld [vmem:[%s10 + $0x78] sm:$0xff]
    %v3915 = vld [vmem:[%s10 + $0x80] sm:$0xff]
    %v3916 = vld [vmem:[%s10 + $0x88] sm:$0xff]
    %v3917 = vld [vmem:[%s10 + $0x90] sm:$0xff]
    %v3918 = vld [vmem:[%s10 + $0x98] sm:$0xff]
    %v3919 = vld [vmem:[%s10 + $0xa0] sm:$0xff]
    %v3920 = vld [vmem:[%s10 + $0xa8] sm:$0xff]
    %v3921 = vld [vmem:[%s10 + $0xb0] sm:$0xff]
    %v3922 = vld [vmem:[%s10 + $0xb8] sm:$0xff]
    %v3923 = vld [vmem:[%s10 + $0xc0] sm:$0xff]
    %v3924 = vld [vmem:[%s10 + $0xc8] sm:$0xff]
    %v3925 = vld [vmem:[%s10 + $0xd0] sm:$0xff]
    %v3926 = vld [vmem:[%s10 + $0xd8] sm:$0xff]
    %v3927 = vld [vmem:[%s10 + $0xe0] sm:$0xff]
    %v3928 = vld [vmem:[%s10 + $0xe8] sm:$0xff]
    %v3929 = vld [vmem:[%s10 + $0xf0] sm:$0xff]
    %v3930 = vld [vmem:[%s10 + $0xf8] sm:$0xff]
    %v3963 = vunpack.c.l.b16 %v3899
    %v3964 = vunpack.c.h.b16 %v3899
    %v3965 = vunpack.c.l.b16 %v3900
    %v3966 = vunpack.c.h.b16 %v3900
    %v3967 = vunpack.c.l.b16 %v3901
    %v3968 = vunpack.c.h.b16 %v3901
    %v3969 = vunpack.c.l.b16 %v3902
    %v3970 = vunpack.c.h.b16 %v3902
    %v3971 = vunpack.c.l.b16 %v3903
    %v3972 = vunpack.c.h.b16 %v3903
    %v3973 = vunpack.c.l.b16 %v3904
    %v3974 = vunpack.c.h.b16 %v3904
    %v3975 = vunpack.c.l.b16 %v3905
    %v3976 = vunpack.c.h.b16 %v3905
    %v3977 = vunpack.c.l.b16 %v3906
    %v3978 = vunpack.c.h.b16 %v3906
    %v3979 = vunpack.c.l.b16 %v3907
    %v3980 = vunpack.c.h.b16 %v3907
    %v3981 = vunpack.c.l.b16 %v3908
    %v3982 = vunpack.c.h.b16 %v3908
    %v3983 = vunpack.c.l.b16 %v3909
    %v3984 = vunpack.c.h.b16 %v3909
    %v3985 = vunpack.c.l.b16 %v3910
    %v3986 = vunpack.c.h.b16 %v3910
    %v3987 = vunpack.c.l.b16 %v3911
    %v3988 = vunpack.c.h.b16 %v3911
    %v3989 = vunpack.c.l.b16 %v3912
    %v3990 = vunpack.c.h.b16 %v3912
    %v3991 = vunpack.c.l.b16 %v3913
    %v3992 = vunpack.c.h.b16 %v3913
    %v3993 = vunpack.c.l.b16 %v3914
    %v3994 = vunpack.c.h.b16 %v3914
    %v3995 = vunpack.c.l.b16 %v3915
    %v3996 = vunpack.c.h.b16 %v3915
    %v3997 = vunpack.c.l.b16 %v3916
    %v3998 = vunpack.c.h.b16 %v3916
    %v3999 = vunpack.c.l.b16 %v3917
    %v4000 = vunpack.c.h.b16 %v3917
    %v4001 = vunpack.c.l.b16 %v3918
    %v4002 = vunpack.c.h.b16 %v3918
    %v4003 = vunpack.c.l.b16 %v3919
    %v4004 = vunpack.c.h.b16 %v3919
    %v4005 = vunpack.c.l.b16 %v3920
    %v4006 = vunpack.c.h.b16 %v3920
    %v4007 = vunpack.c.l.b16 %v3921
    %v4008 = vunpack.c.h.b16 %v3921
    %v4009 = vunpack.c.l.b16 %v3922
    %v4010 = vunpack.c.h.b16 %v3922
    %v4011 = vunpack.c.l.b16 %v3923
    %v4012 = vunpack.c.h.b16 %v3923
    %v4013 = vunpack.c.l.b16 %v3924
    %v4014 = vunpack.c.h.b16 %v3924
    %v4015 = vunpack.c.l.b16 %v3925
    %v4016 = vunpack.c.h.b16 %v3925
    %v4017 = vunpack.c.l.b16 %v3926
    %v4018 = vunpack.c.h.b16 %v3926
    %v4019 = vunpack.c.l.b16 %v3927
    %v4020 = vunpack.c.h.b16 %v3927
    %v4021 = vunpack.c.l.b16 %v3928
    %v4022 = vunpack.c.h.b16 %v3928
    %v4023 = vunpack.c.l.b16 %v3929
    %v4024 = vunpack.c.h.b16 %v3929
    %v4025 = vunpack.c.l.b16 %v3930
    %v4026 = vunpack.c.h.b16 %v3930
    %v4027 = vpack.c.b16 %v3965, %v3963
    %v4028 = vpack.c.b16 %v3966, %v3964
    %v4029 = vpack.c.b16 %v3969, %v3967
    %v4030 = vpack.c.b16 %v3970, %v3968
    %v4031 = vpack.c.b16 %v3973, %v3971
    %v4032 = vpack.c.b16 %v3974, %v3972
    %v4033 = vpack.c.b16 %v3977, %v3975
    %v4034 = vpack.c.b16 %v3978, %v3976
    %v4035 = vpack.c.b16 %v3981, %v3979
    %v4036 = vpack.c.b16 %v3982, %v3980
    %v4037 = vpack.c.b16 %v3985, %v3983
    %v4038 = vpack.c.b16 %v3986, %v3984
    %v4039 = vpack.c.b16 %v3989, %v3987
    %v4040 = vpack.c.b16 %v3990, %v3988
    %v4041 = vpack.c.b16 %v3993, %v3991
    %v4042 = vpack.c.b16 %v3994, %v3992
    %v4043 = vpack.c.b16 %v3997, %v3995
    %v4044 = vpack.c.b16 %v3998, %v3996
    %v4045 = vpack.c.b16 %v4001, %v3999
    %v4046 = vpack.c.b16 %v4002, %v4000
    %v4047 = vpack.c.b16 %v4005, %v4003
    %v4048 = vpack.c.b16 %v4006, %v4004
    %v4049 = vpack.c.b16 %v4009, %v4007
    %v4050 = vpack.c.b16 %v4010, %v4008
    %v4051 = vpack.c.b16 %v4013, %v4011
    %v4052 = vpack.c.b16 %v4014, %v4012
    %v4053 = vpack.c.b16 %v4017, %v4015
    %v4054 = vpack.c.b16 %v4018, %v4016
    %v4055 = vpack.c.b16 %v4021, %v4019
    %v4056 = vpack.c.b16 %v4022, %v4020
    %v4057 = vpack.c.b16 %v4025, %v4023
    %v4058 = vpack.c.b16 %v4026, %v4024
    %4091 = vmatprep.subr.bf16.mxu0 %v4042
    %4092 = vmatpush1.bf16.msra.mxu0 %v4041
    %4093 = vmatprep.subr.bf16.mxu0 %v4040
    %4094 = vmatpush1.bf16.msra.mxu0 %v4039
    %4095 = vmatprep.subr.bf16.mxu0 %v4038
    %4096 = vmatpush1.bf16.msra.mxu0 %v4037
    %4097 = vmatprep.subr.bf16.mxu0 %v4036
    %4098 = vmatpush1.bf16.msra.mxu0 %v4035
    %4099 = vmatprep.subr.bf16.mxu0 %v4034
    %4100 = vmatpush1.bf16.msra.mxu0 %v4033
    %4101 = vmatprep.subr.bf16.mxu0 %v4032
    %4102 = vmatpush1.bf16.msra.mxu0 %v4031
    %4103 = vmatprep.subr.bf16.mxu0 %v4030
    %4104 = vmatpush1.bf16.msra.mxu0 %v4029
    %4105 = vmatprep.subr.bf16.mxu0 %v4028
    %4106 = vmatpush1.bf16.msra.mxu0 %v4027
    %4107 = vmatprep.subr.bf16.mxu0 %v4058
    %4108 = vmatpush2.bf16.msra.mxu0 %v4057
    %4109 = vmatprep.subr.bf16.mxu0 %v4056
    %4110 = vmatpush2.bf16.msra.mxu0 %v4055
    %4111 = vmatprep.subr.bf16.mxu0 %v4054
    %4112 = vmatpush2.bf16.msra.mxu0 %v4053
    %4113 = vmatprep.subr.bf16.mxu0 %v4052
    %4114 = vmatpush2.bf16.msra.mxu0 %v4051
    %4115 = vmatprep.subr.bf16.mxu0 %v4050
    %4116 = vmatpush2.bf16.msra.mxu0 %v4049
    %4117 = vmatprep.subr.bf16.mxu0 %v4048
    %4118 = vmatpush2.bf16.msra.mxu0 %v4047
    %4119 = vmatprep.subr.bf16.mxu0 %v4046
    %4120 = vmatpush2.bf16.msra.mxu0 %v4045
    %4121 = vmatprep.subr.bf16.mxu0 %v4044
    %4122 = vmatpush2.bf16.msra.mxu0 %v4043
    %4123 = vmatprep.mubr.bf16.mxu0 %v3898
    %4124 = vmatmul.mubr.bf16.gmra.mxu0 %v3897
    %v4125 = vpop.f32.mrf.mxu0
    %v4126 = vadd.f32 0.0, %v4125
    %v4127 = vpop.f32.mrf.mxu0
    %v4128 = vadd.f32 0.0, %v4127
    %v4129 = vpop.f32.mrf.mxu0
    %v4130 = vpop.f32.mrf.mxu0
    %4131 = vdwg.mxu0
    %v4132 = vld [vmem:[%s11] sm:$0x3]
    %v4134 = vlaneseq
    %v4135 = vshrl.u32 %v4134, 7
    %v4136 = vsub.s32 0, %v4135
    %v4137 = vrot.slane %v4132, %v4136
    %v4138 = vlaneseq
    %v4139 = vshrl.u32 %v4138, 7
    %v4140 = vsub.s32 1, %v4139
    %v4141 = vrot.slane %v4132, %v4140
    %v4144 = vmul.f32 %v4126, %v4137
    %v4145 = vmul.f32 %v4128, %v4141
    %v4146 = vld [vmem:[%s12] sm:$0x3]
    %v4148 = vlaneseq
    %v4149 = vshrl.u32 %v4148, 7
    %v4150 = vsub.s32 0, %v4149
    %v4151 = vrot.slane %v4146, %v4150
    %v4152 = vlaneseq
    %v4153 = vshrl.u32 %v4152, 7
    %v4154 = vsub.s32 1, %v4153
    %v4155 = vrot.slane %v4146, %v4154
    %v4158 = vadd.f32 %v4144, %v4151
    %v4159 = vadd.f32 %v4145, %v4155
    %v4160 = vmax.f32 %v4158, 0.0
    %v4161 = vmax.f32 %v4159, 0.0
    %v4162 = vpack.c.bf16 %v3550, %v3550
    %v4163 = vpack.c.bf16 %v3552, %v3552
    %v4164 = vpack.c.bf16 %v3755, %v3755
    %v4165 = vpack.c.bf16 %v3757, %v3757
    %v4166 = vld [vmem:[#allocation3] sm:$0xff]
    %v4167 = vld [vmem:[#allocation3 + $0x8] sm:$0xff]
    %v4168 = vld [vmem:[#allocation3 + $0x10] sm:$0xff]
    %v4169 = vld [vmem:[#allocation3 + $0x18] sm:$0xff]
    %v4170 = vld [vmem:[#allocation3 + $0x20] sm:$0xff]
    %v4171 = vld [vmem:[#allocation3 + $0x28] sm:$0xff]
    %v4172 = vld [vmem:[#allocation3 + $0x30] sm:$0xff]
    %v4173 = vld [vmem:[#allocation3 + $0x38] sm:$0xff]
    %v4174 = vld [vmem:[#allocation3 + $0x40] sm:$0xff]
    %v4175 = vld [vmem:[#allocation3 + $0x48] sm:$0xff]
    %v4176 = vld [vmem:[#allocation3 + $0x50] sm:$0xff]
    %v4177 = vld [vmem:[#allocation3 + $0x58] sm:$0xff]
    %v4178 = vld [vmem:[#allocation3 + $0x60] sm:$0xff]
    %v4179 = vld [vmem:[#allocation3 + $0x68] sm:$0xff]
    %v4180 = vld [vmem:[#allocation3 + $0x70] sm:$0xff]
    %v4181 = vld [vmem:[#allocation3 + $0x78] sm:$0xff]
    %v4182 = vld [vmem:[#allocation3 + $0x80] sm:$0xff]
    %v4183 = vld [vmem:[#allocation3 + $0x88] sm:$0xff]
    %v4184 = vld [vmem:[#allocation3 + $0x90] sm:$0xff]
    %v4185 = vld [vmem:[#allocation3 + $0x98] sm:$0xff]
    %v4186 = vld [vmem:[#allocation3 + $0xa0] sm:$0xff]
    %v4187 = vld [vmem:[#allocation3 + $0xa8] sm:$0xff]
    %v4188 = vld [vmem:[#allocation3 + $0xb0] sm:$0xff]
    %v4189 = vld [vmem:[#allocation3 + $0xb8] sm:$0xff]
    %v4190 = vld [vmem:[#allocation3 + $0xc0] sm:$0xff]
    %v4191 = vld [vmem:[#allocation3 + $0xc8] sm:$0xff]
    %v4192 = vld [vmem:[#allocation3 + $0xd0] sm:$0xff]
    %v4193 = vld [vmem:[#allocation3 + $0xd8] sm:$0xff]
    %v4194 = vld [vmem:[#allocation3 + $0xe0] sm:$0xff]
    %v4195 = vld [vmem:[#allocation3 + $0xe8] sm:$0xff]
    %v4196 = vld [vmem:[#allocation3 + $0xf0] sm:$0xff]
    %v4197 = vld [vmem:[#allocation3 + $0xf8] sm:$0xff]
    %v4198 = vld [vmem:[#allocation3 + $0x100] sm:$0xff]
    %v4199 = vld [vmem:[#allocation3 + $0x108] sm:$0xff]
    %v4200 = vld [vmem:[#allocation3 + $0x110] sm:$0xff]
    %v4201 = vld [vmem:[#allocation3 + $0x118] sm:$0xff]
    %v4202 = vld [vmem:[#allocation3 + $0x120] sm:$0xff]
    %v4203 = vld [vmem:[#allocation3 + $0x128] sm:$0xff]
    %v4204 = vld [vmem:[#allocation3 + $0x130] sm:$0xff]
    %v4205 = vld [vmem:[#allocation3 + $0x138] sm:$0xff]
    %v4206 = vld [vmem:[#allocation3 + $0x140] sm:$0xff]
    %v4207 = vld [vmem:[#allocation3 + $0x148] sm:$0xff]
    %v4208 = vld [vmem:[#allocation3 + $0x150] sm:$0xff]
    %v4209 = vld [vmem:[#allocation3 + $0x158] sm:$0xff]
    %v4210 = vld [vmem:[#allocation3 + $0x160] sm:$0xff]
    %v4211 = vld [vmem:[#allocation3 + $0x168] sm:$0xff]
    %v4212 = vld [vmem:[#allocation3 + $0x170] sm:$0xff]
    %v4213 = vld [vmem:[#allocation3 + $0x178] sm:$0xff]
    %v4214 = vld [vmem:[#allocation3 + $0x180] sm:$0xff]
    %v4215 = vld [vmem:[#allocation3 + $0x188] sm:$0xff]
    %v4216 = vld [vmem:[#allocation3 + $0x190] sm:$0xff]
    %v4217 = vld [vmem:[#allocation3 + $0x198] sm:$0xff]
    %v4218 = vld [vmem:[#allocation3 + $0x1a0] sm:$0xff]
    %v4219 = vld [vmem:[#allocation3 + $0x1a8] sm:$0xff]
    %v4220 = vld [vmem:[#allocation3 + $0x1b0] sm:$0xff]
    %v4221 = vld [vmem:[#allocation3 + $0x1b8] sm:$0xff]
    %v4222 = vld [vmem:[#allocation3 + $0x1c0] sm:$0xff]
    %v4223 = vld [vmem:[#allocation3 + $0x1c8] sm:$0xff]
    %v4224 = vld [vmem:[#allocation3 + $0x1d0] sm:$0xff]
    %v4225 = vld [vmem:[#allocation3 + $0x1d8] sm:$0xff]
    %v4226 = vld [vmem:[#allocation3 + $0x1e0] sm:$0xff]
    %v4227 = vld [vmem:[#allocation3 + $0x1e8] sm:$0xff]
    %v4228 = vld [vmem:[#allocation3 + $0x1f0] sm:$0xff]
    %v4229 = vld [vmem:[#allocation3 + $0x1f8] sm:$0xff]
    %v4230 = vld [vmem:[#allocation3 + $0x200] sm:$0xff]
    %v4231 = vld [vmem:[#allocation3 + $0x208] sm:$0xff]
    %v4232 = vld [vmem:[#allocation3 + $0x210] sm:$0xff]
    %v4233 = vld [vmem:[#allocation3 + $0x218] sm:$0xff]
    %v4234 = vld [vmem:[#allocation3 + $0x220] sm:$0xff]
    %v4235 = vld [vmem:[#allocation3 + $0x228] sm:$0xff]
    %v4236 = vld [vmem:[#allocation3 + $0x230] sm:$0xff]
    %v4237 = vld [vmem:[#allocation3 + $0x238] sm:$0xff]
    %v4238 = vld [vmem:[#allocation3 + $0x240] sm:$0xff]
    %v4239 = vld [vmem:[#allocation3 + $0x248] sm:$0xff]
    %v4240 = vld [vmem:[#allocation3 + $0x250] sm:$0xff]
    %v4241 = vld [vmem:[#allocation3 + $0x258] sm:$0xff]
    %v4242 = vld [vmem:[#allocation3 + $0x260] sm:$0xff]
    %v4243 = vld [vmem:[#allocation3 + $0x268] sm:$0xff]
    %v4244 = vld [vmem:[#allocation3 + $0x270] sm:$0xff]
    %v4245 = vld [vmem:[#allocation3 + $0x278] sm:$0xff]
    %v4246 = vld [vmem:[#allocation3 + $0x280] sm:$0xff]
    %v4247 = vld [vmem:[#allocation3 + $0x288] sm:$0xff]
    %v4248 = vld [vmem:[#allocation3 + $0x290] sm:$0xff]
    %v4249 = vld [vmem:[#allocation3 + $0x298] sm:$0xff]
    %v4250 = vld [vmem:[#allocation3 + $0x2a0] sm:$0xff]
    %v4251 = vld [vmem:[#allocation3 + $0x2a8] sm:$0xff]
    %v4252 = vld [vmem:[#allocation3 + $0x2b0] sm:$0xff]
    %v4253 = vld [vmem:[#allocation3 + $0x2b8] sm:$0xff]
    %v4254 = vld [vmem:[#allocation3 + $0x2c0] sm:$0xff]
    %v4255 = vld [vmem:[#allocation3 + $0x2c8] sm:$0xff]
    %v4256 = vld [vmem:[#allocation3 + $0x2d0] sm:$0xff]
    %v4257 = vld [vmem:[#allocation3 + $0x2d8] sm:$0xff]
    %v4258 = vld [vmem:[#allocation3 + $0x2e0] sm:$0xff]
    %v4259 = vld [vmem:[#allocation3 + $0x2e8] sm:$0xff]
    %v4260 = vld [vmem:[#allocation3 + $0x2f0] sm:$0xff]
    %v4261 = vld [vmem:[#allocation3 + $0x2f8] sm:$0xff]
    %v4262 = vld [vmem:[#allocation3 + $0x300] sm:$0xff]
    %v4263 = vld [vmem:[#allocation3 + $0x308] sm:$0xff]
    %v4264 = vld [vmem:[#allocation3 + $0x310] sm:$0xff]
    %v4265 = vld [vmem:[#allocation3 + $0x318] sm:$0xff]
    %v4266 = vld [vmem:[#allocation3 + $0x320] sm:$0xff]
    %v4267 = vld [vmem:[#allocation3 + $0x328] sm:$0xff]
    %v4268 = vld [vmem:[#allocation3 + $0x330] sm:$0xff]
    %v4269 = vld [vmem:[#allocation3 + $0x338] sm:$0xff]
    %v4270 = vld [vmem:[#allocation3 + $0x340] sm:$0xff]
    %v4271 = vld [vmem:[#allocation3 + $0x348] sm:$0xff]
    %v4272 = vld [vmem:[#allocation3 + $0x350] sm:$0xff]
    %v4273 = vld [vmem:[#allocation3 + $0x358] sm:$0xff]
    %v4274 = vld [vmem:[#allocation3 + $0x360] sm:$0xff]
    %v4275 = vld [vmem:[#allocation3 + $0x368] sm:$0xff]
    %v4276 = vld [vmem:[#allocation3 + $0x370] sm:$0xff]
    %v4277 = vld [vmem:[#allocation3 + $0x378] sm:$0xff]
    %v4278 = vld [vmem:[#allocation3 + $0x380] sm:$0xff]
    %v4279 = vld [vmem:[#allocation3 + $0x388] sm:$0xff]
    %v4280 = vld [vmem:[#allocation3 + $0x390] sm:$0xff]
    %v4281 = vld [vmem:[#allocation3 + $0x398] sm:$0xff]
    %v4282 = vld [vmem:[#allocation3 + $0x3a0] sm:$0xff]
    %v4283 = vld [vmem:[#allocation3 + $0x3a8] sm:$0xff]
    %v4284 = vld [vmem:[#allocation3 + $0x3b0] sm:$0xff]
    %v4285 = vld [vmem:[#allocation3 + $0x3b8] sm:$0xff]
    %v4286 = vld [vmem:[#allocation3 + $0x3c0] sm:$0xff]
    %v4287 = vld [vmem:[#allocation3 + $0x3c8] sm:$0xff]
    %v4288 = vld [vmem:[#allocation3 + $0x3d0] sm:$0xff]
    %v4289 = vld [vmem:[#allocation3 + $0x3d8] sm:$0xff]
    %v4290 = vld [vmem:[#allocation3 + $0x3e0] sm:$0xff]
    %v4291 = vld [vmem:[#allocation3 + $0x3e8] sm:$0xff]
    %v4292 = vld [vmem:[#allocation3 + $0x3f0] sm:$0xff]
    %v4293 = vld [vmem:[#allocation3 + $0x3f8] sm:$0xff]
    %v4294 = vld [vmem:[#allocation3 + $0x400] sm:$0xff]
    %v4295 = vld [vmem:[#allocation3 + $0x408] sm:$0xff]
    %v4296 = vld [vmem:[#allocation3 + $0x410] sm:$0xff]
    %v4297 = vld [vmem:[#allocation3 + $0x418] sm:$0xff]
    %v4298 = vld [vmem:[#allocation3 + $0x420] sm:$0xff]
    %v4299 = vld [vmem:[#allocation3 + $0x428] sm:$0xff]
    %v4300 = vld [vmem:[#allocation3 + $0x430] sm:$0xff]
    %v4301 = vld [vmem:[#allocation3 + $0x438] sm:$0xff]
    %v4302 = vld [vmem:[#allocation3 + $0x440] sm:$0xff]
    %v4303 = vld [vmem:[#allocation3 + $0x448] sm:$0xff]
    %v4304 = vld [vmem:[#allocation3 + $0x450] sm:$0xff]
    %v4305 = vld [vmem:[#allocation3 + $0x458] sm:$0xff]
    %v4306 = vld [vmem:[#allocation3 + $0x460] sm:$0xff]
    %v4307 = vld [vmem:[#allocation3 + $0x468] sm:$0xff]
    %v4308 = vld [vmem:[#allocation3 + $0x470] sm:$0xff]
    %v4309 = vld [vmem:[#allocation3 + $0x478] sm:$0xff]
    %v4310 = vld [vmem:[#allocation3 + $0x480] sm:$0xff]
    %v4311 = vld [vmem:[#allocation3 + $0x488] sm:$0xff]
    %v4312 = vld [vmem:[#allocation3 + $0x490] sm:$0xff]
    %v4313 = vld [vmem:[#allocation3 + $0x498] sm:$0xff]
    %v4314 = vld [vmem:[#allocation3 + $0x4a0] sm:$0xff]
    %v4315 = vld [vmem:[#allocation3 + $0x4a8] sm:$0xff]
    %v4316 = vld [vmem:[#allocation3 + $0x4b0] sm:$0xff]
    %v4317 = vld [vmem:[#allocation3 + $0x4b8] sm:$0xff]
    %v4318 = vld [vmem:[#allocation3 + $0x4c0] sm:$0xff]
    %v4319 = vld [vmem:[#allocation3 + $0x4c8] sm:$0xff]
    %v4320 = vld [vmem:[#allocation3 + $0x4d0] sm:$0xff]
    %v4321 = vld [vmem:[#allocation3 + $0x4d8] sm:$0xff]
    %v4322 = vld [vmem:[#allocation3 + $0x4e0] sm:$0xff]
    %v4323 = vld [vmem:[#allocation3 + $0x4e8] sm:$0xff]
    %v4324 = vld [vmem:[#allocation3 + $0x4f0] sm:$0xff]
    %v4325 = vld [vmem:[#allocation3 + $0x4f8] sm:$0xff]
    %v4326 = vld [vmem:[#allocation3 + $0x500] sm:$0xff]
    %v4327 = vld [vmem:[#allocation3 + $0x508] sm:$0xff]
    %v4328 = vld [vmem:[#allocation3 + $0x510] sm:$0xff]
    %v4329 = vld [vmem:[#allocation3 + $0x518] sm:$0xff]
    %v4330 = vld [vmem:[#allocation3 + $0x520] sm:$0xff]
    %v4331 = vld [vmem:[#allocation3 + $0x528] sm:$0xff]
    %v4332 = vld [vmem:[#allocation3 + $0x530] sm:$0xff]
    %v4333 = vld [vmem:[#allocation3 + $0x538] sm:$0xff]
    %v4334 = vld [vmem:[#allocation3 + $0x540] sm:$0xff]
    %v4335 = vld [vmem:[#allocation3 + $0x548] sm:$0xff]
    %v4336 = vld [vmem:[#allocation3 + $0x550] sm:$0xff]
    %v4337 = vld [vmem:[#allocation3 + $0x558] sm:$0xff]
    %v4338 = vld [vmem:[#allocation3 + $0x560] sm:$0xff]
    %v4339 = vld [vmem:[#allocation3 + $0x568] sm:$0xff]
    %v4340 = vld [vmem:[#allocation3 + $0x570] sm:$0xff]
    %v4341 = vld [vmem:[#allocation3 + $0x578] sm:$0xff]
    %v4342 = vld [vmem:[#allocation3 + $0x580] sm:$0xff]
    %v4343 = vld [vmem:[#allocation3 + $0x588] sm:$0xff]
    %v4344 = vld [vmem:[#allocation3 + $0x590] sm:$0xff]
    %v4345 = vld [vmem:[#allocation3 + $0x598] sm:$0xff]
    %v4346 = vld [vmem:[#allocation3 + $0x5a0] sm:$0xff]
    %v4347 = vld [vmem:[#allocation3 + $0x5a8] sm:$0xff]
    %v4348 = vld [vmem:[#allocation3 + $0x5b0] sm:$0xff]
    %v4349 = vld [vmem:[#allocation3 + $0x5b8] sm:$0xff]
    %v4350 = vld [vmem:[#allocation3 + $0x5c0] sm:$0xff]
    %v4351 = vld [vmem:[#allocation3 + $0x5c8] sm:$0xff]
    %v4352 = vld [vmem:[#allocation3 + $0x5d0] sm:$0xff]
    %v4353 = vld [vmem:[#allocation3 + $0x5d8] sm:$0xff]
    %v4354 = vld [vmem:[#allocation3 + $0x5e0] sm:$0xff]
    %v4355 = vld [vmem:[#allocation3 + $0x5e8] sm:$0xff]
    %v4356 = vld [vmem:[#allocation3 + $0x5f0] sm:$0xff]
    %v4357 = vld [vmem:[#allocation3 + $0x5f8] sm:$0xff]
    %v4358 = vld [vmem:[#allocation3 + $0x600] sm:$0xff]
    %v4359 = vld [vmem:[#allocation3 + $0x608] sm:$0xff]
    %v4360 = vld [vmem:[#allocation3 + $0x610] sm:$0xff]
    %v4361 = vld [vmem:[#allocation3 + $0x618] sm:$0xff]
    %v4362 = vld [vmem:[#allocation3 + $0x620] sm:$0xff]
    %v4363 = vld [vmem:[#allocation3 + $0x628] sm:$0xff]
    %v4364 = vld [vmem:[#allocation3 + $0x630] sm:$0xff]
    %v4365 = vld [vmem:[#allocation3 + $0x638] sm:$0xff]
    %v4366 = vld [vmem:[#allocation3 + $0x640] sm:$0xff]
    %v4367 = vld [vmem:[#allocation3 + $0x648] sm:$0xff]
    %v4368 = vld [vmem:[#allocation3 + $0x650] sm:$0xff]
    %v4369 = vld [vmem:[#allocation3 + $0x658] sm:$0xff]
    %v4370 = vld [vmem:[#allocation3 + $0x660] sm:$0xff]
    %v4371 = vld [vmem:[#allocation3 + $0x668] sm:$0xff]
    %v4372 = vld [vmem:[#allocation3 + $0x670] sm:$0xff]
    %v4373 = vld [vmem:[#allocation3 + $0x678] sm:$0xff]
    %v4374 = vld [vmem:[#allocation3 + $0x680] sm:$0xff]
    %v4375 = vld [vmem:[#allocation3 + $0x688] sm:$0xff]
    %v4376 = vld [vmem:[#allocation3 + $0x690] sm:$0xff]
    %v4377 = vld [vmem:[#allocation3 + $0x698] sm:$0xff]
    %v4378 = vld [vmem:[#allocation3 + $0x6a0] sm:$0xff]
    %v4379 = vld [vmem:[#allocation3 + $0x6a8] sm:$0xff]
    %v4380 = vld [vmem:[#allocation3 + $0x6b0] sm:$0xff]
    %v4381 = vld [vmem:[#allocation3 + $0x6b8] sm:$0xff]
    %v4382 = vld [vmem:[#allocation3 + $0x6c0] sm:$0xff]
    %v4383 = vld [vmem:[#allocation3 + $0x6c8] sm:$0xff]
    %v4384 = vld [vmem:[#allocation3 + $0x6d0] sm:$0xff]
    %v4385 = vld [vmem:[#allocation3 + $0x6d8] sm:$0xff]
    %v4386 = vld [vmem:[#allocation3 + $0x6e0] sm:$0xff]
    %v4387 = vld [vmem:[#allocation3 + $0x6e8] sm:$0xff]
    %v4388 = vld [vmem:[#allocation3 + $0x6f0] sm:$0xff]
    %v4389 = vld [vmem:[#allocation3 + $0x6f8] sm:$0xff]
    %v4390 = vld [vmem:[#allocation3 + $0x700] sm:$0xff]
    %v4391 = vld [vmem:[#allocation3 + $0x708] sm:$0xff]
    %v4392 = vld [vmem:[#allocation3 + $0x710] sm:$0xff]
    %v4393 = vld [vmem:[#allocation3 + $0x718] sm:$0xff]
    %v4394 = vld [vmem:[#allocation3 + $0x720] sm:$0xff]
    %v4395 = vld [vmem:[#allocation3 + $0x728] sm:$0xff]
    %v4396 = vld [vmem:[#allocation3 + $0x730] sm:$0xff]
    %v4397 = vld [vmem:[#allocation3 + $0x738] sm:$0xff]
    %v4398 = vld [vmem:[#allocation3 + $0x740] sm:$0xff]
    %v4399 = vld [vmem:[#allocation3 + $0x748] sm:$0xff]
    %v4400 = vld [vmem:[#allocation3 + $0x750] sm:$0xff]
    %v4401 = vld [vmem:[#allocation3 + $0x758] sm:$0xff]
    %v4402 = vld [vmem:[#allocation3 + $0x760] sm:$0xff]
    %v4403 = vld [vmem:[#allocation3 + $0x768] sm:$0xff]
    %v4404 = vld [vmem:[#allocation3 + $0x770] sm:$0xff]
    %v4405 = vld [vmem:[#allocation3 + $0x778] sm:$0xff]
    %v4406 = vld [vmem:[#allocation3 + $0x780] sm:$0xff]
    %v4407 = vld [vmem:[#allocation3 + $0x788] sm:$0xff]
    %v4408 = vld [vmem:[#allocation3 + $0x790] sm:$0xff]
    %v4409 = vld [vmem:[#allocation3 + $0x798] sm:$0xff]
    %v4410 = vld [vmem:[#allocation3 + $0x7a0] sm:$0xff]
    %v4411 = vld [vmem:[#allocation3 + $0x7a8] sm:$0xff]
    %v4412 = vld [vmem:[#allocation3 + $0x7b0] sm:$0xff]
    %v4413 = vld [vmem:[#allocation3 + $0x7b8] sm:$0xff]
    %v4414 = vld [vmem:[#allocation3 + $0x7c0] sm:$0xff]
    %v4415 = vld [vmem:[#allocation3 + $0x7c8] sm:$0xff]
    %v4416 = vld [vmem:[#allocation3 + $0x7d0] sm:$0xff]
    %v4417 = vld [vmem:[#allocation3 + $0x7d8] sm:$0xff]
    %v4418 = vld [vmem:[#allocation3 + $0x7e0] sm:$0xff]
    %v4419 = vld [vmem:[#allocation3 + $0x7e8] sm:$0xff]
    %v4420 = vld [vmem:[#allocation3 + $0x7f0] sm:$0xff]
    %v4421 = vld [vmem:[#allocation3 + $0x7f8] sm:$0xff]
    %v4422 = vpack.c.bf16 %v4160, %v4160
    %v4423 = vpack.c.bf16 %v4161, %v4161
    %v4424 = vld [vmem:[#allocation5] sm:$0xff]
    %v4425 = vld [vmem:[#allocation5 + $0x8] sm:$0xff]
    %v4426 = vld [vmem:[#allocation5 + $0x10] sm:$0xff]
    %v4427 = vld [vmem:[#allocation5 + $0x18] sm:$0xff]
    %v4428 = vld [vmem:[#allocation5 + $0x20] sm:$0xff]
    %v4429 = vld [vmem:[#allocation5 + $0x28] sm:$0xff]
    %v4430 = vld [vmem:[#allocation5 + $0x30] sm:$0xff]
    %v4431 = vld [vmem:[#allocation5 + $0x38] sm:$0xff]
    %v4432 = vld [vmem:[#allocation5 + $0x40] sm:$0xff]
    %v4433 = vld [vmem:[#allocation5 + $0x48] sm:$0xff]
    %v4434 = vld [vmem:[#allocation5 + $0x50] sm:$0xff]
    %v4435 = vld [vmem:[#allocation5 + $0x58] sm:$0xff]
    %v4436 = vld [vmem:[#allocation5 + $0x60] sm:$0xff]
    %v4437 = vld [vmem:[#allocation5 + $0x68] sm:$0xff]
    %v4438 = vld [vmem:[#allocation5 + $0x70] sm:$0xff]
    %v4439 = vld [vmem:[#allocation5 + $0x78] sm:$0xff]
    %v4440 = vld [vmem:[#allocation5 + $0x80] sm:$0xff]
    %v4441 = vld [vmem:[#allocation5 + $0x88] sm:$0xff]
    %v4442 = vld [vmem:[#allocation5 + $0x90] sm:$0xff]
    %v4443 = vld [vmem:[#allocation5 + $0x98] sm:$0xff]
    %v4444 = vld [vmem:[#allocation5 + $0xa0] sm:$0xff]
    %v4445 = vld [vmem:[#allocation5 + $0xa8] sm:$0xff]
    %v4446 = vld [vmem:[#allocation5 + $0xb0] sm:$0xff]
    %v4447 = vld [vmem:[#allocation5 + $0xb8] sm:$0xff]
    %v4448 = vld [vmem:[#allocation5 + $0xc0] sm:$0xff]
    %v4449 = vld [vmem:[#allocation5 + $0xc8] sm:$0xff]
    %v4450 = vld [vmem:[#allocation5 + $0xd0] sm:$0xff]
    %v4451 = vld [vmem:[#allocation5 + $0xd8] sm:$0xff]
    %v4452 = vld [vmem:[#allocation5 + $0xe0] sm:$0xff]
    %v4453 = vld [vmem:[#allocation5 + $0xe8] sm:$0xff]
    %v4454 = vld [vmem:[#allocation5 + $0xf0] sm:$0xff]
    %v4455 = vld [vmem:[#allocation5 + $0xf8] sm:$0xff]
    %v4456 = vld [vmem:[#allocation5 + $0x100] sm:$0xff]
    %v4457 = vld [vmem:[#allocation5 + $0x108] sm:$0xff]
    %v4458 = vld [vmem:[#allocation5 + $0x110] sm:$0xff]
    %v4459 = vld [vmem:[#allocation5 + $0x118] sm:$0xff]
    %v4460 = vld [vmem:[#allocation5 + $0x120] sm:$0xff]
    %v4461 = vld [vmem:[#allocation5 + $0x128] sm:$0xff]
    %v4462 = vld [vmem:[#allocation5 + $0x130] sm:$0xff]
    %v4463 = vld [vmem:[#allocation5 + $0x138] sm:$0xff]
    %v4464 = vld [vmem:[#allocation5 + $0x140] sm:$0xff]
    %v4465 = vld [vmem:[#allocation5 + $0x148] sm:$0xff]
    %v4466 = vld [vmem:[#allocation5 + $0x150] sm:$0xff]
    %v4467 = vld [vmem:[#allocation5 + $0x158] sm:$0xff]
    %v4468 = vld [vmem:[#allocation5 + $0x160] sm:$0xff]
    %v4469 = vld [vmem:[#allocation5 + $0x168] sm:$0xff]
    %v4470 = vld [vmem:[#allocation5 + $0x170] sm:$0xff]
    %v4471 = vld [vmem:[#allocation5 + $0x178] sm:$0xff]
    %v4472 = vld [vmem:[#allocation5 + $0x180] sm:$0xff]
    %v4473 = vld [vmem:[#allocation5 + $0x188] sm:$0xff]
    %v4474 = vld [vmem:[#allocation5 + $0x190] sm:$0xff]
    %v4475 = vld [vmem:[#allocation5 + $0x198] sm:$0xff]
    %v4476 = vld [vmem:[#allocation5 + $0x1a0] sm:$0xff]
    %v4477 = vld [vmem:[#allocation5 + $0x1a8] sm:$0xff]
    %v4478 = vld [vmem:[#allocation5 + $0x1b0] sm:$0xff]
    %v4479 = vld [vmem:[#allocation5 + $0x1b8] sm:$0xff]
    %v4480 = vld [vmem:[#allocation5 + $0x1c0] sm:$0xff]
    %v4481 = vld [vmem:[#allocation5 + $0x1c8] sm:$0xff]
    %v4482 = vld [vmem:[#allocation5 + $0x1d0] sm:$0xff]
    %v4483 = vld [vmem:[#allocation5 + $0x1d8] sm:$0xff]
    %v4484 = vld [vmem:[#allocation5 + $0x1e0] sm:$0xff]
    %v4485 = vld [vmem:[#allocation5 + $0x1e8] sm:$0xff]
    %v4486 = vld [vmem:[#allocation5 + $0x1f0] sm:$0xff]
    %v4487 = vld [vmem:[#allocation5 + $0x1f8] sm:$0xff]
    %v4488 = vld [vmem:[#allocation5 + $0x200] sm:$0xff]
    %v4489 = vld [vmem:[#allocation5 + $0x208] sm:$0xff]
    %v4490 = vld [vmem:[#allocation5 + $0x210] sm:$0xff]
    %v4491 = vld [vmem:[#allocation5 + $0x218] sm:$0xff]
    %v4492 = vld [vmem:[#allocation5 + $0x220] sm:$0xff]
    %v4493 = vld [vmem:[#allocation5 + $0x228] sm:$0xff]
    %v4494 = vld [vmem:[#allocation5 + $0x230] sm:$0xff]
    %v4495 = vld [vmem:[#allocation5 + $0x238] sm:$0xff]
    %v4496 = vld [vmem:[#allocation5 + $0x240] sm:$0xff]
    %v4497 = vld [vmem:[#allocation5 + $0x248] sm:$0xff]
    %v4498 = vld [vmem:[#allocation5 + $0x250] sm:$0xff]
    %v4499 = vld [vmem:[#allocation5 + $0x258] sm:$0xff]
    %v4500 = vld [vmem:[#allocation5 + $0x260] sm:$0xff]
    %v4501 = vld [vmem:[#allocation5 + $0x268] sm:$0xff]
    %v4502 = vld [vmem:[#allocation5 + $0x270] sm:$0xff]
    %v4503 = vld [vmem:[#allocation5 + $0x278] sm:$0xff]
    %v4504 = vld [vmem:[#allocation5 + $0x280] sm:$0xff]
    %v4505 = vld [vmem:[#allocation5 + $0x288] sm:$0xff]
    %v4506 = vld [vmem:[#allocation5 + $0x290] sm:$0xff]
    %v4507 = vld [vmem:[#allocation5 + $0x298] sm:$0xff]
    %v4508 = vld [vmem:[#allocation5 + $0x2a0] sm:$0xff]
    %v4509 = vld [vmem:[#allocation5 + $0x2a8] sm:$0xff]
    %v4510 = vld [vmem:[#allocation5 + $0x2b0] sm:$0xff]
    %v4511 = vld [vmem:[#allocation5 + $0x2b8] sm:$0xff]
    %v4512 = vld [vmem:[#allocation5 + $0x2c0] sm:$0xff]
    %v4513 = vld [vmem:[#allocation5 + $0x2c8] sm:$0xff]
    %v4514 = vld [vmem:[#allocation5 + $0x2d0] sm:$0xff]
    %v4515 = vld [vmem:[#allocation5 + $0x2d8] sm:$0xff]
    %v4516 = vld [vmem:[#allocation5 + $0x2e0] sm:$0xff]
    %v4517 = vld [vmem:[#allocation5 + $0x2e8] sm:$0xff]
    %v4518 = vld [vmem:[#allocation5 + $0x2f0] sm:$0xff]
    %v4519 = vld [vmem:[#allocation5 + $0x2f8] sm:$0xff]
    %v4520 = vld [vmem:[#allocation5 + $0x300] sm:$0xff]
    %v4521 = vld [vmem:[#allocation5 + $0x308] sm:$0xff]
    %v4522 = vld [vmem:[#allocation5 + $0x310] sm:$0xff]
    %v4523 = vld [vmem:[#allocation5 + $0x318] sm:$0xff]
    %v4524 = vld [vmem:[#allocation5 + $0x320] sm:$0xff]
    %v4525 = vld [vmem:[#allocation5 + $0x328] sm:$0xff]
    %v4526 = vld [vmem:[#allocation5 + $0x330] sm:$0xff]
    %v4527 = vld [vmem:[#allocation5 + $0x338] sm:$0xff]
    %v4528 = vld [vmem:[#allocation5 + $0x340] sm:$0xff]
    %v4529 = vld [vmem:[#allocation5 + $0x348] sm:$0xff]
    %v4530 = vld [vmem:[#allocation5 + $0x350] sm:$0xff]
    %v4531 = vld [vmem:[#allocation5 + $0x358] sm:$0xff]
    %v4532 = vld [vmem:[#allocation5 + $0x360] sm:$0xff]
    %v4533 = vld [vmem:[#allocation5 + $0x368] sm:$0xff]
    %v4534 = vld [vmem:[#allocation5 + $0x370] sm:$0xff]
    %v4535 = vld [vmem:[#allocation5 + $0x378] sm:$0xff]
    %v4536 = vld [vmem:[#allocation5 + $0x380] sm:$0xff]
    %v4537 = vld [vmem:[#allocation5 + $0x388] sm:$0xff]
    %v4538 = vld [vmem:[#allocation5 + $0x390] sm:$0xff]
    %v4539 = vld [vmem:[#allocation5 + $0x398] sm:$0xff]
    %v4540 = vld [vmem:[#allocation5 + $0x3a0] sm:$0xff]
    %v4541 = vld [vmem:[#allocation5 + $0x3a8] sm:$0xff]
    %v4542 = vld [vmem:[#allocation5 + $0x3b0] sm:$0xff]
    %v4543 = vld [vmem:[#allocation5 + $0x3b8] sm:$0xff]
    %v4544 = vld [vmem:[#allocation5 + $0x3c0] sm:$0xff]
    %v4545 = vld [vmem:[#allocation5 + $0x3c8] sm:$0xff]
    %v4546 = vld [vmem:[#allocation5 + $0x3d0] sm:$0xff]
    %v4547 = vld [vmem:[#allocation5 + $0x3d8] sm:$0xff]
    %v4548 = vld [vmem:[#allocation5 + $0x3e0] sm:$0xff]
    %v4549 = vld [vmem:[#allocation5 + $0x3e8] sm:$0xff]
    %v4550 = vld [vmem:[#allocation5 + $0x3f0] sm:$0xff]
    %v4551 = vld [vmem:[#allocation5 + $0x3f8] sm:$0xff]
    %v4680 = vunpack.c.l.b16 %v4424
    %v4681 = vunpack.c.h.b16 %v4424
    %v4682 = vunpack.c.l.b16 %v4425
    %v4683 = vunpack.c.h.b16 %v4425
    %v4684 = vunpack.c.l.b16 %v4426
    %v4685 = vunpack.c.h.b16 %v4426
    %v4686 = vunpack.c.l.b16 %v4427
    %v4687 = vunpack.c.h.b16 %v4427
    %v4688 = vunpack.c.l.b16 %v4428
    %v4689 = vunpack.c.h.b16 %v4428
    %v4690 = vunpack.c.l.b16 %v4429
    %v4691 = vunpack.c.h.b16 %v4429
    %v4692 = vunpack.c.l.b16 %v4430
    %v4693 = vunpack.c.h.b16 %v4430
    %v4694 = vunpack.c.l.b16 %v4431
    %v4695 = vunpack.c.h.b16 %v4431
    %v4696 = vunpack.c.l.b16 %v4432
    %v4697 = vunpack.c.h.b16 %v4432
    %v4698 = vunpack.c.l.b16 %v4433
    %v4699 = vunpack.c.h.b16 %v4433
    %v4700 = vunpack.c.l.b16 %v4434
    %v4701 = vunpack.c.h.b16 %v4434
    %v4702 = vunpack.c.l.b16 %v4435
    %v4703 = vunpack.c.h.b16 %v4435
    %v4704 = vunpack.c.l.b16 %v4436
    %v4705 = vunpack.c.h.b16 %v4436
    %v4706 = vunpack.c.l.b16 %v4437
    %v4707 = vunpack.c.h.b16 %v4437
    %v4708 = vunpack.c.l.b16 %v4438
    %v4709 = vunpack.c.h.b16 %v4438
    %v4710 = vunpack.c.l.b16 %v4439
    %v4711 = vunpack.c.h.b16 %v4439
    %v4712 = vunpack.c.l.b16 %v4440
    %v4713 = vunpack.c.h.b16 %v4440
    %v4714 = vunpack.c.l.b16 %v4441
    %v4715 = vunpack.c.h.b16 %v4441
    %v4716 = vunpack.c.l.b16 %v4442
    %v4717 = vunpack.c.h.b16 %v4442
    %v4718 = vunpack.c.l.b16 %v4443
    %v4719 = vunpack.c.h.b16 %v4443
    %v4720 = vunpack.c.l.b16 %v4444
    %v4721 = vunpack.c.h.b16 %v4444
    %v4722 = vunpack.c.l.b16 %v4445
    %v4723 = vunpack.c.h.b16 %v4445
    %v4724 = vunpack.c.l.b16 %v4446
    %v4725 = vunpack.c.h.b16 %v4446
    %v4726 = vunpack.c.l.b16 %v4447
    %v4727 = vunpack.c.h.b16 %v4447
    %v4728 = vunpack.c.l.b16 %v4448
    %v4729 = vunpack.c.h.b16 %v4448
    %v4730 = vunpack.c.l.b16 %v4449
    %v4731 = vunpack.c.h.b16 %v4449
    %v4732 = vunpack.c.l.b16 %v4450
    %v4733 = vunpack.c.h.b16 %v4450
    %v4734 = vunpack.c.l.b16 %v4451
    %v4735 = vunpack.c.h.b16 %v4451
    %v4736 = vunpack.c.l.b16 %v4452
    %v4737 = vunpack.c.h.b16 %v4452
    %v4738 = vunpack.c.l.b16 %v4453
    %v4739 = vunpack.c.h.b16 %v4453
    %v4740 = vunpack.c.l.b16 %v4454
    %v4741 = vunpack.c.h.b16 %v4454
    %v4742 = vunpack.c.l.b16 %v4455
    %v4743 = vunpack.c.h.b16 %v4455
    %v4744 = vunpack.c.l.b16 %v4456
    %v4745 = vunpack.c.h.b16 %v4456
    %v4746 = vunpack.c.l.b16 %v4457
    %v4747 = vunpack.c.h.b16 %v4457
    %v4748 = vunpack.c.l.b16 %v4458
    %v4749 = vunpack.c.h.b16 %v4458
    %v4750 = vunpack.c.l.b16 %v4459
    %v4751 = vunpack.c.h.b16 %v4459
    %v4752 = vunpack.c.l.b16 %v4460
    %v4753 = vunpack.c.h.b16 %v4460
    %v4754 = vunpack.c.l.b16 %v4461
    %v4755 = vunpack.c.h.b16 %v4461
    %v4756 = vunpack.c.l.b16 %v4462
    %v4757 = vunpack.c.h.b16 %v4462
    %v4758 = vunpack.c.l.b16 %v4463
    %v4759 = vunpack.c.h.b16 %v4463
    %v4760 = vunpack.c.l.b16 %v4464
    %v4761 = vunpack.c.h.b16 %v4464
    %v4762 = vunpack.c.l.b16 %v4465
    %v4763 = vunpack.c.h.b16 %v4465
    %v4764 = vunpack.c.l.b16 %v4466
    %v4765 = vunpack.c.h.b16 %v4466
    %v4766 = vunpack.c.l.b16 %v4467
    %v4767 = vunpack.c.h.b16 %v4467
    %v4768 = vunpack.c.l.b16 %v4468
    %v4769 = vunpack.c.h.b16 %v4468
    %v4770 = vunpack.c.l.b16 %v4469
    %v4771 = vunpack.c.h.b16 %v4469
    %v4772 = vunpack.c.l.b16 %v4470
    %v4773 = vunpack.c.h.b16 %v4470
    %v4774 = vunpack.c.l.b16 %v4471
    %v4775 = vunpack.c.h.b16 %v4471
    %v4776 = vunpack.c.l.b16 %v4472
    %v4777 = vunpack.c.h.b16 %v4472
    %v4778 = vunpack.c.l.b16 %v4473
    %v4779 = vunpack.c.h.b16 %v4473
    %v4780 = vunpack.c.l.b16 %v4474
    %v4781 = vunpack.c.h.b16 %v4474
    %v4782 = vunpack.c.l.b16 %v4475
    %v4783 = vunpack.c.h.b16 %v4475
    %v4784 = vunpack.c.l.b16 %v4476
    %v4785 = vunpack.c.h.b16 %v4476
    %v4786 = vunpack.c.l.b16 %v4477
    %v4787 = vunpack.c.h.b16 %v4477
    %v4788 = vunpack.c.l.b16 %v4478
    %v4789 = vunpack.c.h.b16 %v4478
    %v4790 = vunpack.c.l.b16 %v4479
    %v4791 = vunpack.c.h.b16 %v4479
    %v4792 = vunpack.c.l.b16 %v4480
    %v4793 = vunpack.c.h.b16 %v4480
    %v4794 = vunpack.c.l.b16 %v4481
    %v4795 = vunpack.c.h.b16 %v4481
    %v4796 = vunpack.c.l.b16 %v4482
    %v4797 = vunpack.c.h.b16 %v4482
    %v4798 = vunpack.c.l.b16 %v4483
    %v4799 = vunpack.c.h.b16 %v4483
    %v4800 = vunpack.c.l.b16 %v4484
    %v4801 = vunpack.c.h.b16 %v4484
    %v4802 = vunpack.c.l.b16 %v4485
    %v4803 = vunpack.c.h.b16 %v4485
    %v4804 = vunpack.c.l.b16 %v4486
    %v4805 = vunpack.c.h.b16 %v4486
    %v4806 = vunpack.c.l.b16 %v4487
    %v4807 = vunpack.c.h.b16 %v4487
    %v4808 = vunpack.c.l.b16 %v4488
    %v4809 = vunpack.c.h.b16 %v4488
    %v4810 = vunpack.c.l.b16 %v4489
    %v4811 = vunpack.c.h.b16 %v4489
    %v4812 = vunpack.c.l.b16 %v4490
    %v4813 = vunpack.c.h.b16 %v4490
    %v4814 = vunpack.c.l.b16 %v4491
    %v4815 = vunpack.c.h.b16 %v4491
    %v4816 = vunpack.c.l.b16 %v4492
    %v4817 = vunpack.c.h.b16 %v4492
    %v4818 = vunpack.c.l.b16 %v4493
    %v4819 = vunpack.c.h.b16 %v4493
    %v4820 = vunpack.c.l.b16 %v4494
    %v4821 = vunpack.c.h.b16 %v4494
    %v4822 = vunpack.c.l.b16 %v4495
    %v4823 = vunpack.c.h.b16 %v4495
    %v4824 = vunpack.c.l.b16 %v4496
    %v4825 = vunpack.c.h.b16 %v4496
    %v4826 = vunpack.c.l.b16 %v4497
    %v4827 = vunpack.c.h.b16 %v4497
    %v4828 = vunpack.c.l.b16 %v4498
    %v4829 = vunpack.c.h.b16 %v4498
    %v4830 = vunpack.c.l.b16 %v4499
    %v4831 = vunpack.c.h.b16 %v4499
    %v4832 = vunpack.c.l.b16 %v4500
    %v4833 = vunpack.c.h.b16 %v4500
    %v4834 = vunpack.c.l.b16 %v4501
    %v4835 = vunpack.c.h.b16 %v4501
    %v4836 = vunpack.c.l.b16 %v4502
    %v4837 = vunpack.c.h.b16 %v4502
    %v4838 = vunpack.c.l.b16 %v4503
    %v4839 = vunpack.c.h.b16 %v4503
    %v4840 = vunpack.c.l.b16 %v4504
    %v4841 = vunpack.c.h.b16 %v4504
    %v4842 = vunpack.c.l.b16 %v4505
    %v4843 = vunpack.c.h.b16 %v4505
    %v4844 = vunpack.c.l.b16 %v4506
    %v4845 = vunpack.c.h.b16 %v4506
    %v4846 = vunpack.c.l.b16 %v4507
    %v4847 = vunpack.c.h.b16 %v4507
    %v4848 = vunpack.c.l.b16 %v4508
    %v4849 = vunpack.c.h.b16 %v4508
    %v4850 = vunpack.c.l.b16 %v4509
    %v4851 = vunpack.c.h.b16 %v4509
    %v4852 = vunpack.c.l.b16 %v4510
    %v4853 = vunpack.c.h.b16 %v4510
    %v4854 = vunpack.c.l.b16 %v4511
    %v4855 = vunpack.c.h.b16 %v4511
    %v4856 = vunpack.c.l.b16 %v4512
    %v4857 = vunpack.c.h.b16 %v4512
    %v4858 = vunpack.c.l.b16 %v4513
    %v4859 = vunpack.c.h.b16 %v4513
    %v4860 = vunpack.c.l.b16 %v4514
    %v4861 = vunpack.c.h.b16 %v4514
    %v4862 = vunpack.c.l.b16 %v4515
    %v4863 = vunpack.c.h.b16 %v4515
    %v4864 = vunpack.c.l.b16 %v4516
    %v4865 = vunpack.c.h.b16 %v4516
    %v4866 = vunpack.c.l.b16 %v4517
    %v4867 = vunpack.c.h.b16 %v4517
    %v4868 = vunpack.c.l.b16 %v4518
    %v4869 = vunpack.c.h.b16 %v4518
    %v4870 = vunpack.c.l.b16 %v4519
    %v4871 = vunpack.c.h.b16 %v4519
    %v4872 = vunpack.c.l.b16 %v4520
    %v4873 = vunpack.c.h.b16 %v4520
    %v4874 = vunpack.c.l.b16 %v4521
    %v4875 = vunpack.c.h.b16 %v4521
    %v4876 = vunpack.c.l.b16 %v4522
    %v4877 = vunpack.c.h.b16 %v4522
    %v4878 = vunpack.c.l.b16 %v4523
    %v4879 = vunpack.c.h.b16 %v4523
    %v4880 = vunpack.c.l.b16 %v4524
    %v4881 = vunpack.c.h.b16 %v4524
    %v4882 = vunpack.c.l.b16 %v4525
    %v4883 = vunpack.c.h.b16 %v4525
    %v4884 = vunpack.c.l.b16 %v4526
    %v4885 = vunpack.c.h.b16 %v4526
    %v4886 = vunpack.c.l.b16 %v4527
    %v4887 = vunpack.c.h.b16 %v4527
    %v4888 = vunpack.c.l.b16 %v4528
    %v4889 = vunpack.c.h.b16 %v4528
    %v4890 = vunpack.c.l.b16 %v4529
    %v4891 = vunpack.c.h.b16 %v4529
    %v4892 = vunpack.c.l.b16 %v4530
    %v4893 = vunpack.c.h.b16 %v4530
    %v4894 = vunpack.c.l.b16 %v4531
    %v4895 = vunpack.c.h.b16 %v4531
    %v4896 = vunpack.c.l.b16 %v4532
    %v4897 = vunpack.c.h.b16 %v4532
    %v4898 = vunpack.c.l.b16 %v4533
    %v4899 = vunpack.c.h.b16 %v4533
    %v4900 = vunpack.c.l.b16 %v4534
    %v4901 = vunpack.c.h.b16 %v4534
    %v4902 = vunpack.c.l.b16 %v4535
    %v4903 = vunpack.c.h.b16 %v4535
    %v4904 = vunpack.c.l.b16 %v4536
    %v4905 = vunpack.c.h.b16 %v4536
    %v4906 = vunpack.c.l.b16 %v4537
    %v4907 = vunpack.c.h.b16 %v4537
    %v4908 = vunpack.c.l.b16 %v4538
    %v4909 = vunpack.c.h.b16 %v4538
    %v4910 = vunpack.c.l.b16 %v4539
    %v4911 = vunpack.c.h.b16 %v4539
    %v4912 = vunpack.c.l.b16 %v4540
    %v4913 = vunpack.c.h.b16 %v4540
    %v4914 = vunpack.c.l.b16 %v4541
    %v4915 = vunpack.c.h.b16 %v4541
    %v4916 = vunpack.c.l.b16 %v4542
    %v4917 = vunpack.c.h.b16 %v4542
    %v4918 = vunpack.c.l.b16 %v4543
    %v4919 = vunpack.c.h.b16 %v4543
    %v4920 = vunpack.c.l.b16 %v4544
    %v4921 = vunpack.c.h.b16 %v4544
    %v4922 = vunpack.c.l.b16 %v4545
    %v4923 = vunpack.c.h.b16 %v4545
    %v4924 = vunpack.c.l.b16 %v4546
    %v4925 = vunpack.c.h.b16 %v4546
    %v4926 = vunpack.c.l.b16 %v4547
    %v4927 = vunpack.c.h.b16 %v4547
    %v4928 = vunpack.c.l.b16 %v4548
    %v4929 = vunpack.c.h.b16 %v4548
    %v4930 = vunpack.c.l.b16 %v4549
    %v4931 = vunpack.c.h.b16 %v4549
    %v4932 = vunpack.c.l.b16 %v4550
    %v4933 = vunpack.c.h.b16 %v4550
    %v4934 = vunpack.c.l.b16 %v4551
    %v4935 = vunpack.c.h.b16 %v4551
    %v4936 = vpack.c.b16 %v4688, %v4680
    %v4937 = vpack.c.b16 %v4689, %v4681
    %v4938 = vpack.c.b16 %v4690, %v4682
    %v4939 = vpack.c.b16 %v4691, %v4683
    %v4940 = vpack.c.b16 %v4692, %v4684
    %v4941 = vpack.c.b16 %v4693, %v4685
    %v4942 = vpack.c.b16 %v4694, %v4686
    %v4943 = vpack.c.b16 %v4695, %v4687
    %v4944 = vpack.c.b16 %v4704, %v4696
    %v4945 = vpack.c.b16 %v4705, %v4697
    %v4946 = vpack.c.b16 %v4706, %v4698
    %v4947 = vpack.c.b16 %v4707, %v4699
    %v4948 = vpack.c.b16 %v4708, %v4700
    %v4949 = vpack.c.b16 %v4709, %v4701
    %v4950 = vpack.c.b16 %v4710, %v4702
    %v4951 = vpack.c.b16 %v4711, %v4703
    %v4952 = vpack.c.b16 %v4720, %v4712
    %v4953 = vpack.c.b16 %v4721, %v4713
    %v4954 = vpack.c.b16 %v4722, %v4714
    %v4955 = vpack.c.b16 %v4723, %v4715
    %v4956 = vpack.c.b16 %v4724, %v4716
    %v4957 = vpack.c.b16 %v4725, %v4717
    %v4958 = vpack.c.b16 %v4726, %v4718
    %v4959 = vpack.c.b16 %v4727, %v4719
    %v4960 = vpack.c.b16 %v4736, %v4728
    %v4961 = vpack.c.b16 %v4737, %v4729
    %v4962 = vpack.c.b16 %v4738, %v4730
    %v4963 = vpack.c.b16 %v4739, %v4731
    %v4964 = vpack.c.b16 %v4740, %v4732
    %v4965 = vpack.c.b16 %v4741, %v4733
    %v4966 = vpack.c.b16 %v4742, %v4734
    %v4967 = vpack.c.b16 %v4743, %v4735
    %v4968 = vpack.c.b16 %v4752, %v4744
    %v4969 = vpack.c.b16 %v4753, %v4745
    %v4970 = vpack.c.b16 %v4754, %v4746
    %v4971 = vpack.c.b16 %v4755, %v4747
    %v4972 = vpack.c.b16 %v4756, %v4748
    %v4973 = vpack.c.b16 %v4757, %v4749
    %v4974 = vpack.c.b16 %v4758, %v4750
    %v4975 = vpack.c.b16 %v4759, %v4751
    %v4976 = vpack.c.b16 %v4768, %v4760
    %v4977 = vpack.c.b16 %v4769, %v4761
    %v4978 = vpack.c.b16 %v4770, %v4762
    %v4979 = vpack.c.b16 %v4771, %v4763
    %v4980 = vpack.c.b16 %v4772, %v4764
    %v4981 = vpack.c.b16 %v4773, %v4765
    %v4982 = vpack.c.b16 %v4774, %v4766
    %v4983 = vpack.c.b16 %v4775, %v4767
    %v4984 = vpack.c.b16 %v4784, %v4776
    %v4985 = vpack.c.b16 %v4785, %v4777
    %v4986 = vpack.c.b16 %v4786, %v4778
    %v4987 = vpack.c.b16 %v4787, %v4779
    %v4988 = vpack.c.b16 %v4788, %v4780
    %v4989 = vpack.c.b16 %v4789, %v4781
    %v4990 = vpack.c.b16 %v4790, %v4782
    %v4991 = vpack.c.b16 %v4791, %v4783
    %v4992 = vpack.c.b16 %v4800, %v4792
    %v4993 = vpack.c.b16 %v4801, %v4793
    %v4994 = vpack.c.b16 %v4802, %v4794
    %v4995 = vpack.c.b16 %v4803, %v4795
    %v4996 = vpack.c.b16 %v4804, %v4796
    %v4997 = vpack.c.b16 %v4805, %v4797
    %v4998 = vpack.c.b16 %v4806, %v4798
    %v4999 = vpack.c.b16 %v4807, %v4799
    %v5000 = vpack.c.b16 %v4816, %v4808
    %v5001 = vpack.c.b16 %v4817, %v4809
    %v5002 = vpack.c.b16 %v4818, %v4810
    %v5003 = vpack.c.b16 %v4819, %v4811
    %v5004 = vpack.c.b16 %v4820, %v4812
    %v5005 = vpack.c.b16 %v4821, %v4813
    %v5006 = vpack.c.b16 %v4822, %v4814
    %v5007 = vpack.c.b16 %v4823, %v4815
    %v5008 = vpack.c.b16 %v4832, %v4824
    %v5009 = vpack.c.b16 %v4833, %v4825
    %v5010 = vpack.c.b16 %v4834, %v4826
    %v5011 = vpack.c.b16 %v4835, %v4827
    %v5012 = vpack.c.b16 %v4836, %v4828
    %v5013 = vpack.c.b16 %v4837, %v4829
    %v5014 = vpack.c.b16 %v4838, %v4830
    %v5015 = vpack.c.b16 %v4839, %v4831
    %v5016 = vpack.c.b16 %v4848, %v4840
    %v5017 = vpack.c.b16 %v4849, %v4841
    %v5018 = vpack.c.b16 %v4850, %v4842
    %v5019 = vpack.c.b16 %v4851, %v4843
    %v5020 = vpack.c.b16 %v4852, %v4844
    %v5021 = vpack.c.b16 %v4853, %v4845
    %v5022 = vpack.c.b16 %v4854, %v4846
    %v5023 = vpack.c.b16 %v4855, %v4847
    %v5024 = vpack.c.b16 %v4864, %v4856
    %v5025 = vpack.c.b16 %v4865, %v4857
    %v5026 = vpack.c.b16 %v4866, %v4858
    %v5027 = vpack.c.b16 %v4867, %v4859
    %v5028 = vpack.c.b16 %v4868, %v4860
    %v5029 = vpack.c.b16 %v4869, %v4861
    %v5030 = vpack.c.b16 %v4870, %v4862
    %v5031 = vpack.c.b16 %v4871, %v4863
    %v5032 = vpack.c.b16 %v4880, %v4872
    %v5033 = vpack.c.b16 %v4881, %v4873
    %v5034 = vpack.c.b16 %v4882, %v4874
    %v5035 = vpack.c.b16 %v4883, %v4875
    %v5036 = vpack.c.b16 %v4884, %v4876
    %v5037 = vpack.c.b16 %v4885, %v4877
    %v5038 = vpack.c.b16 %v4886, %v4878
    %v5039 = vpack.c.b16 %v4887, %v4879
    %v5040 = vpack.c.b16 %v4896, %v4888
    %v5041 = vpack.c.b16 %v4897, %v4889
    %v5042 = vpack.c.b16 %v4898, %v4890
    %v5043 = vpack.c.b16 %v4899, %v4891
    %v5044 = vpack.c.b16 %v4900, %v4892
    %v5045 = vpack.c.b16 %v4901, %v4893
    %v5046 = vpack.c.b16 %v4902, %v4894
    %v5047 = vpack.c.b16 %v4903, %v4895
    %v5048 = vpack.c.b16 %v4912, %v4904
    %v5049 = vpack.c.b16 %v4913, %v4905
    %v5050 = vpack.c.b16 %v4914, %v4906
    %v5051 = vpack.c.b16 %v4915, %v4907
    %v5052 = vpack.c.b16 %v4916, %v4908
    %v5053 = vpack.c.b16 %v4917, %v4909
    %v5054 = vpack.c.b16 %v4918, %v4910
    %v5055 = vpack.c.b16 %v4919, %v4911
    %v5056 = vpack.c.b16 %v4928, %v4920
    %v5057 = vpack.c.b16 %v4929, %v4921
    %v5058 = vpack.c.b16 %v4930, %v4922
    %v5059 = vpack.c.b16 %v4931, %v4923
    %v5060 = vpack.c.b16 %v4932, %v4924
    %v5061 = vpack.c.b16 %v4933, %v4925
    %v5062 = vpack.c.b16 %v4934, %v4926
    %v5063 = vpack.c.b16 %v4935, %v4927
    %5192 = vmatprep.subr.bf16.mxu0 %v4993
    %5193 = vmatpush1.bf16.msra.mxu0 %v4992
    %5194 = vmatprep.subr.bf16.mxu0 %v4985
    %5195 = vmatpush1.bf16.msra.mxu0 %v4984
    %5196 = vmatprep.subr.bf16.mxu0 %v4977
    %5197 = vmatpush1.bf16.msra.mxu0 %v4976
    %5198 = vmatprep.subr.bf16.mxu0 %v4969
    %5199 = vmatpush1.bf16.msra.mxu0 %v4968
    %5200 = vmatprep.subr.bf16.mxu0 %v4961
    %5201 = vmatpush1.bf16.msra.mxu0 %v4960
    %5202 = vmatprep.subr.bf16.mxu0 %v4953
    %5203 = vmatpush1.bf16.msra.mxu0 %v4952
    %5204 = vmatprep.subr.bf16.mxu0 %v4945
    %5205 = vmatpush1.bf16.msra.mxu0 %v4944
    %5206 = vmatprep.subr.bf16.mxu0 %v4937
    %5207 = vmatpush1.bf16.msra.mxu0 %v4936
    %5208 = vmatprep.subr.bf16.mxu0 %v5057
    %5209 = vmatpush2.bf16.msra.mxu0 %v5056
    %5210 = vmatprep.subr.bf16.mxu0 %v5049
    %5211 = vmatpush2.bf16.msra.mxu0 %v5048
    %5212 = vmatprep.subr.bf16.mxu0 %v5041
    %5213 = vmatpush2.bf16.msra.mxu0 %v5040
    %5214 = vmatprep.subr.bf16.mxu0 %v5033
    %5215 = vmatpush2.bf16.msra.mxu0 %v5032
    %5216 = vmatprep.subr.bf16.mxu0 %v5025
    %5217 = vmatpush2.bf16.msra.mxu0 %v5024
    %5218 = vmatprep.subr.bf16.mxu0 %v5017
    %5219 = vmatpush2.bf16.msra.mxu0 %v5016
    %5220 = vmatprep.subr.bf16.mxu0 %v5009
    %5221 = vmatpush2.bf16.msra.mxu0 %v5008
    %5222 = vmatprep.subr.bf16.mxu0 %v5001
    %5223 = vmatpush2.bf16.msra.mxu0 %v5000
    %5224 = vmatprep.mubr.bf16.mxu0 %v4423
    %5225 = vmatmul.mubr.bf16.gmra.mxu0 %v4422
    %v5226 = vpop.f32.mrf.mxu0
    %v5227 = vadd.f32 0.0, %v5226
    %v5228 = vpop.f32.mrf.mxu0
    %v5229 = vadd.f32 0.0, %v5228
    %v5230 = vpop.f32.mrf.mxu0
    %v5231 = vpop.f32.mrf.mxu0
    %5232 = vdwg.mxu0
    %5233 = vmatprep.subr.bf16.mxu0 %v4995
    %5234 = vmatpush1.bf16.msra.mxu0 %v4994
    %5235 = vmatprep.subr.bf16.mxu0 %v4987
    %5236 = vmatpush1.bf16.msra.mxu0 %v4986
    %5237 = vmatprep.subr.bf16.mxu0 %v4979
    %5238 = vmatpush1.bf16.msra.mxu0 %v4978
    %5239 = vmatprep.subr.bf16.mxu0 %v4971
    %5240 = vmatpush1.bf16.msra.mxu0 %v4970
    %5241 = vmatprep.subr.bf16.mxu0 %v4963
    %5242 = vmatpush1.bf16.msra.mxu0 %v4962
    %5243 = vmatprep.subr.bf16.mxu0 %v4955
    %5244 = vmatpush1.bf16.msra.mxu0 %v4954
    %5245 = vmatprep.subr.bf16.mxu0 %v4947
    %5246 = vmatpush1.bf16.msra.mxu0 %v4946
    %5247 = vmatprep.subr.bf16.mxu0 %v4939
    %5248 = vmatpush1.bf16.msra.mxu0 %v4938
    %5249 = vmatprep.subr.bf16.mxu0 %v5059
    %5250 = vmatpush2.bf16.msra.mxu0 %v5058
    %5251 = vmatprep.subr.bf16.mxu0 %v5051
    %5252 = vmatpush2.bf16.msra.mxu0 %v5050
    %5253 = vmatprep.subr.bf16.mxu0 %v5043
    %5254 = vmatpush2.bf16.msra.mxu0 %v5042
    %5255 = vmatprep.subr.bf16.mxu0 %v5035
    %5256 = vmatpush2.bf16.msra.mxu0 %v5034
    %5257 = vmatprep.subr.bf16.mxu0 %v5027
    %5258 = vmatpush2.bf16.msra.mxu0 %v5026
    %5259 = vmatprep.subr.bf16.mxu0 %v5019
    %5260 = vmatpush2.bf16.msra.mxu0 %v5018
    %5261 = vmatprep.subr.bf16.mxu0 %v5011
    %5262 = vmatpush2.bf16.msra.mxu0 %v5010
    %5263 = vmatprep.subr.bf16.mxu0 %v5003
    %5264 = vmatpush2.bf16.msra.mxu0 %v5002
    %5265 = vmatprep.mubr.bf16.mxu0 %v4423
    %5266 = vmatmul.mubr.bf16.gmra.mxu0 %v4422
    %v5267 = vpop.f32.mrf.mxu0
    %v5268 = vadd.f32 0.0, %v5267
    %v5269 = vpop.f32.mrf.mxu0
    %v5270 = vadd.f32 0.0, %v5269
    %v5271 = vpop.f32.mrf.mxu0
    %v5272 = vpop.f32.mrf.mxu0
    %5273 = vdwg.mxu0
    %5274 = vmatprep.subr.bf16.mxu0 %v4997
    %5275 = vmatpush1.bf16.msra.mxu0 %v4996
    %5276 = vmatprep.subr.bf16.mxu0 %v4989
    %5277 = vmatpush1.bf16.msra.mxu0 %v4988
    %5278 = vmatprep.subr.bf16.mxu0 %v4981
    %5279 = vmatpush1.bf16.msra.mxu0 %v4980
    %5280 = vmatprep.subr.bf16.mxu0 %v4973
    %5281 = vmatpush1.bf16.msra.mxu0 %v4972
    %5282 = vmatprep.subr.bf16.mxu0 %v4965
    %5283 = vmatpush1.bf16.msra.mxu0 %v4964
    %5284 = vmatprep.subr.bf16.mxu0 %v4957
    %5285 = vmatpush1.bf16.msra.mxu0 %v4956
    %5286 = vmatprep.subr.bf16.mxu0 %v4949
    %5287 = vmatpush1.bf16.msra.mxu0 %v4948
    %5288 = vmatprep.subr.bf16.mxu0 %v4941
    %5289 = vmatpush1.bf16.msra.mxu0 %v4940
    %5290 = vmatprep.subr.bf16.mxu0 %v5061
    %5291 = vmatpush2.bf16.msra.mxu0 %v5060
    %5292 = vmatprep.subr.bf16.mxu0 %v5053
    %5293 = vmatpush2.bf16.msra.mxu0 %v5052
    %5294 = vmatprep.subr.bf16.mxu0 %v5045
    %5295 = vmatpush2.bf16.msra.mxu0 %v5044
    %5296 = vmatprep.subr.bf16.mxu0 %v5037
    %5297 = vmatpush2.bf16.msra.mxu0 %v5036
    %5298 = vmatprep.subr.bf16.mxu0 %v5029
    %5299 = vmatpush2.bf16.msra.mxu0 %v5028
    %5300 = vmatprep.subr.bf16.mxu0 %v5021
    %5301 = vmatpush2.bf16.msra.mxu0 %v5020
    %5302 = vmatprep.subr.bf16.mxu0 %v5013
    %5303 = vmatpush2.bf16.msra.mxu0 %v5012
    %5304 = vmatprep.subr.bf16.mxu0 %v5005
    %5305 = vmatpush2.bf16.msra.mxu0 %v5004
    %5306 = vmatprep.mubr.bf16.mxu0 %v4423
    %5307 = vmatmul.mubr.bf16.gmra.mxu0 %v4422
    %v5308 = vpop.f32.mrf.mxu0
    %v5309 = vadd.f32 0.0, %v5308
    %v5310 = vpop.f32.mrf.mxu0
    %v5311 = vadd.f32 0.0, %v5310
    %v5312 = vpop.f32.mrf.mxu0
    %v5313 = vpop.f32.mrf.mxu0
    %5314 = vdwg.mxu0
    %5315 = vmatprep.subr.bf16.mxu0 %v4999
    %5316 = vmatpush1.bf16.msra.mxu0 %v4998
    %5317 = vmatprep.subr.bf16.mxu0 %v4991
    %5318 = vmatpush1.bf16.msra.mxu0 %v4990
    %5319 = vmatprep.subr.bf16.mxu0 %v4983
    %5320 = vmatpush1.bf16.msra.mxu0 %v4982
    %5321 = vmatprep.subr.bf16.mxu0 %v4975
    %5322 = vmatpush1.bf16.msra.mxu0 %v4974
    %5323 = vmatprep.subr.bf16.mxu0 %v4967
    %5324 = vmatpush1.bf16.msra.mxu0 %v4966
    %5325 = vmatprep.subr.bf16.mxu0 %v4959
    %5326 = vmatpush1.bf16.msra.mxu0 %v4958
    %5327 = vmatprep.subr.bf16.mxu0 %v4951
    %5328 = vmatpush1.bf16.msra.mxu0 %v4950
    %5329 = vmatprep.subr.bf16.mxu0 %v4943
    %5330 = vmatpush1.bf16.msra.mxu0 %v4942
    %5331 = vmatprep.subr.bf16.mxu0 %v5063
    %5332 = vmatpush2.bf16.msra.mxu0 %v5062
    %5333 = vmatprep.subr.bf16.mxu0 %v5055
    %5334 = vmatpush2.bf16.msra.mxu0 %v5054
    %5335 = vmatprep.subr.bf16.mxu0 %v5047
    %5336 = vmatpush2.bf16.msra.mxu0 %v5046
    %5337 = vmatprep.subr.bf16.mxu0 %v5039
    %5338 = vmatpush2.bf16.msra.mxu0 %v5038
    %5339 = vmatprep.subr.bf16.mxu0 %v5031
    %5340 = vmatpush2.bf16.msra.mxu0 %v5030
    %5341 = vmatprep.subr.bf16.mxu0 %v5023
    %5342 = vmatpush2.bf16.msra.mxu0 %v5022
    %5343 = vmatprep.subr.bf16.mxu0 %v5015
    %5344 = vmatpush2.bf16.msra.mxu0 %v5014
    %5345 = vmatprep.subr.bf16.mxu0 %v5007
    %5346 = vmatpush2.bf16.msra.mxu0 %v5006
    %5347 = vmatprep.mubr.bf16.mxu0 %v4423
    %5348 = vmatmul.mubr.bf16.gmra.mxu0 %v4422
    %v5349 = vpop.f32.mrf.mxu0
    %v5350 = vadd.f32 0.0, %v5349
    %v5351 = vpop.f32.mrf.mxu0
    %v5352 = vadd.f32 0.0, %v5351
    %v5353 = vpop.f32.mrf.mxu0
    %v5354 = vpop.f32.mrf.mxu0
    %5355 = vdwg.mxu0
    %v5612 = vunpack.c.l.b16 %v4166
    %v5613 = vunpack.c.h.b16 %v4166
    %v5614 = vunpack.c.l.b16 %v4167
    %v5615 = vunpack.c.h.b16 %v4167
    %v5616 = vunpack.c.l.b16 %v4168
    %v5617 = vunpack.c.h.b16 %v4168
    %v5618 = vunpack.c.l.b16 %v4169
    %v5619 = vunpack.c.h.b16 %v4169
    %v5620 = vunpack.c.l.b16 %v4170
    %v5621 = vunpack.c.h.b16 %v4170
    %v5622 = vunpack.c.l.b16 %v4171
    %v5623 = vunpack.c.h.b16 %v4171
    %v5624 = vunpack.c.l.b16 %v4172
    %v5625 = vunpack.c.h.b16 %v4172
    %v5626 = vunpack.c.l.b16 %v4173
    %v5627 = vunpack.c.h.b16 %v4173
    %v5628 = vunpack.c.l.b16 %v4174
    %v5629 = vunpack.c.h.b16 %v4174
    %v5630 = vunpack.c.l.b16 %v4175
    %v5631 = vunpack.c.h.b16 %v4175
    %v5632 = vunpack.c.l.b16 %v4176
    %v5633 = vunpack.c.h.b16 %v4176
    %v5634 = vunpack.c.l.b16 %v4177
    %v5635 = vunpack.c.h.b16 %v4177
    %v5636 = vunpack.c.l.b16 %v4178
    %v5637 = vunpack.c.h.b16 %v4178
    %v5638 = vunpack.c.l.b16 %v4179
    %v5639 = vunpack.c.h.b16 %v4179
    %v5640 = vunpack.c.l.b16 %v4180
    %v5641 = vunpack.c.h.b16 %v4180
    %v5642 = vunpack.c.l.b16 %v4181
    %v5643 = vunpack.c.h.b16 %v4181
    %v5644 = vunpack.c.l.b16 %v4182
    %v5645 = vunpack.c.h.b16 %v4182
    %v5646 = vunpack.c.l.b16 %v4183
    %v5647 = vunpack.c.h.b16 %v4183
    %v5648 = vunpack.c.l.b16 %v4184
    %v5649 = vunpack.c.h.b16 %v4184
    %v5650 = vunpack.c.l.b16 %v4185
    %v5651 = vunpack.c.h.b16 %v4185
    %v5652 = vunpack.c.l.b16 %v4186
    %v5653 = vunpack.c.h.b16 %v4186
    %v5654 = vunpack.c.l.b16 %v4187
    %v5655 = vunpack.c.h.b16 %v4187
    %v5656 = vunpack.c.l.b16 %v4188
    %v5657 = vunpack.c.h.b16 %v4188
    %v5658 = vunpack.c.l.b16 %v4189
    %v5659 = vunpack.c.h.b16 %v4189
    %v5660 = vunpack.c.l.b16 %v4190
    %v5661 = vunpack.c.h.b16 %v4190
    %v5662 = vunpack.c.l.b16 %v4191
    %v5663 = vunpack.c.h.b16 %v4191
    %v5664 = vunpack.c.l.b16 %v4192
    %v5665 = vunpack.c.h.b16 %v4192
    %v5666 = vunpack.c.l.b16 %v4193
    %v5667 = vunpack.c.h.b16 %v4193
    %v5668 = vunpack.c.l.b16 %v4194
    %v5669 = vunpack.c.h.b16 %v4194
    %v5670 = vunpack.c.l.b16 %v4195
    %v5671 = vunpack.c.h.b16 %v4195
    %v5672 = vunpack.c.l.b16 %v4196
    %v5673 = vunpack.c.h.b16 %v4196
    %v5674 = vunpack.c.l.b16 %v4197
    %v5675 = vunpack.c.h.b16 %v4197
    %v5676 = vunpack.c.l.b16 %v4198
    %v5677 = vunpack.c.h.b16 %v4198
    %v5678 = vunpack.c.l.b16 %v4199
    %v5679 = vunpack.c.h.b16 %v4199
    %v5680 = vunpack.c.l.b16 %v4200
    %v5681 = vunpack.c.h.b16 %v4200
    %v5682 = vunpack.c.l.b16 %v4201
    %v5683 = vunpack.c.h.b16 %v4201
    %v5684 = vunpack.c.l.b16 %v4202
    %v5685 = vunpack.c.h.b16 %v4202
    %v5686 = vunpack.c.l.b16 %v4203
    %v5687 = vunpack.c.h.b16 %v4203
    %v5688 = vunpack.c.l.b16 %v4204
    %v5689 = vunpack.c.h.b16 %v4204
    %v5690 = vunpack.c.l.b16 %v4205
    %v5691 = vunpack.c.h.b16 %v4205
    %v5692 = vunpack.c.l.b16 %v4206
    %v5693 = vunpack.c.h.b16 %v4206
    %v5694 = vunpack.c.l.b16 %v4207
    %v5695 = vunpack.c.h.b16 %v4207
    %v5696 = vunpack.c.l.b16 %v4208
    %v5697 = vunpack.c.h.b16 %v4208
    %v5698 = vunpack.c.l.b16 %v4209
    %v5699 = vunpack.c.h.b16 %v4209
    %v5700 = vunpack.c.l.b16 %v4210
    %v5701 = vunpack.c.h.b16 %v4210
    %v5702 = vunpack.c.l.b16 %v4211
    %v5703 = vunpack.c.h.b16 %v4211
    %v5704 = vunpack.c.l.b16 %v4212
    %v5705 = vunpack.c.h.b16 %v4212
    %v5706 = vunpack.c.l.b16 %v4213
    %v5707 = vunpack.c.h.b16 %v4213
    %v5708 = vunpack.c.l.b16 %v4214
    %v5709 = vunpack.c.h.b16 %v4214
    %v5710 = vunpack.c.l.b16 %v4215
    %v5711 = vunpack.c.h.b16 %v4215
    %v5712 = vunpack.c.l.b16 %v4216
    %v5713 = vunpack.c.h.b16 %v4216
    %v5714 = vunpack.c.l.b16 %v4217
    %v5715 = vunpack.c.h.b16 %v4217
    %v5716 = vunpack.c.l.b16 %v4218
    %v5717 = vunpack.c.h.b16 %v4218
    %v5718 = vunpack.c.l.b16 %v4219
    %v5719 = vunpack.c.h.b16 %v4219
    %v5720 = vunpack.c.l.b16 %v4220
    %v5721 = vunpack.c.h.b16 %v4220
    %v5722 = vunpack.c.l.b16 %v4221
    %v5723 = vunpack.c.h.b16 %v4221
    %v5724 = vunpack.c.l.b16 %v4222
    %v5725 = vunpack.c.h.b16 %v4222
    %v5726 = vunpack.c.l.b16 %v4223
    %v5727 = vunpack.c.h.b16 %v4223
    %v5728 = vunpack.c.l.b16 %v4224
    %v5729 = vunpack.c.h.b16 %v4224
    %v5730 = vunpack.c.l.b16 %v4225
    %v5731 = vunpack.c.h.b16 %v4225
    %v5732 = vunpack.c.l.b16 %v4226
    %v5733 = vunpack.c.h.b16 %v4226
    %v5734 = vunpack.c.l.b16 %v4227
    %v5735 = vunpack.c.h.b16 %v4227
    %v5736 = vunpack.c.l.b16 %v4228
    %v5737 = vunpack.c.h.b16 %v4228
    %v5738 = vunpack.c.l.b16 %v4229
    %v5739 = vunpack.c.h.b16 %v4229
    %v5740 = vunpack.c.l.b16 %v4230
    %v5741 = vunpack.c.h.b16 %v4230
    %v5742 = vunpack.c.l.b16 %v4231
    %v5743 = vunpack.c.h.b16 %v4231
    %v5744 = vunpack.c.l.b16 %v4232
    %v5745 = vunpack.c.h.b16 %v4232
    %v5746 = vunpack.c.l.b16 %v4233
    %v5747 = vunpack.c.h.b16 %v4233
    %v5748 = vunpack.c.l.b16 %v4234
    %v5749 = vunpack.c.h.b16 %v4234
    %v5750 = vunpack.c.l.b16 %v4235
    %v5751 = vunpack.c.h.b16 %v4235
    %v5752 = vunpack.c.l.b16 %v4236
    %v5753 = vunpack.c.h.b16 %v4236
    %v5754 = vunpack.c.l.b16 %v4237
    %v5755 = vunpack.c.h.b16 %v4237
    %v5756 = vunpack.c.l.b16 %v4238
    %v5757 = vunpack.c.h.b16 %v4238
    %v5758 = vunpack.c.l.b16 %v4239
    %v5759 = vunpack.c.h.b16 %v4239
    %v5760 = vunpack.c.l.b16 %v4240
    %v5761 = vunpack.c.h.b16 %v4240
    %v5762 = vunpack.c.l.b16 %v4241
    %v5763 = vunpack.c.h.b16 %v4241
    %v5764 = vunpack.c.l.b16 %v4242
    %v5765 = vunpack.c.h.b16 %v4242
    %v5766 = vunpack.c.l.b16 %v4243
    %v5767 = vunpack.c.h.b16 %v4243
    %v5768 = vunpack.c.l.b16 %v4244
    %v5769 = vunpack.c.h.b16 %v4244
    %v5770 = vunpack.c.l.b16 %v4245
    %v5771 = vunpack.c.h.b16 %v4245
    %v5772 = vunpack.c.l.b16 %v4246
    %v5773 = vunpack.c.h.b16 %v4246
    %v5774 = vunpack.c.l.b16 %v4247
    %v5775 = vunpack.c.h.b16 %v4247
    %v5776 = vunpack.c.l.b16 %v4248
    %v5777 = vunpack.c.h.b16 %v4248
    %v5778 = vunpack.c.l.b16 %v4249
    %v5779 = vunpack.c.h.b16 %v4249
    %v5780 = vunpack.c.l.b16 %v4250
    %v5781 = vunpack.c.h.b16 %v4250
    %v5782 = vunpack.c.l.b16 %v4251
    %v5783 = vunpack.c.h.b16 %v4251
    %v5784 = vunpack.c.l.b16 %v4252
    %v5785 = vunpack.c.h.b16 %v4252
    %v5786 = vunpack.c.l.b16 %v4253
    %v5787 = vunpack.c.h.b16 %v4253
    %v5788 = vunpack.c.l.b16 %v4254
    %v5789 = vunpack.c.h.b16 %v4254
    %v5790 = vunpack.c.l.b16 %v4255
    %v5791 = vunpack.c.h.b16 %v4255
    %v5792 = vunpack.c.l.b16 %v4256
    %v5793 = vunpack.c.h.b16 %v4256
    %v5794 = vunpack.c.l.b16 %v4257
    %v5795 = vunpack.c.h.b16 %v4257
    %v5796 = vunpack.c.l.b16 %v4258
    %v5797 = vunpack.c.h.b16 %v4258
    %v5798 = vunpack.c.l.b16 %v4259
    %v5799 = vunpack.c.h.b16 %v4259
    %v5800 = vunpack.c.l.b16 %v4260
    %v5801 = vunpack.c.h.b16 %v4260
    %v5802 = vunpack.c.l.b16 %v4261
    %v5803 = vunpack.c.h.b16 %v4261
    %v5804 = vunpack.c.l.b16 %v4262
    %v5805 = vunpack.c.h.b16 %v4262
    %v5806 = vunpack.c.l.b16 %v4263
    %v5807 = vunpack.c.h.b16 %v4263
    %v5808 = vunpack.c.l.b16 %v4264
    %v5809 = vunpack.c.h.b16 %v4264
    %v5810 = vunpack.c.l.b16 %v4265
    %v5811 = vunpack.c.h.b16 %v4265
    %v5812 = vunpack.c.l.b16 %v4266
    %v5813 = vunpack.c.h.b16 %v4266
    %v5814 = vunpack.c.l.b16 %v4267
    %v5815 = vunpack.c.h.b16 %v4267
    %v5816 = vunpack.c.l.b16 %v4268
    %v5817 = vunpack.c.h.b16 %v4268
    %v5818 = vunpack.c.l.b16 %v4269
    %v5819 = vunpack.c.h.b16 %v4269
    %v5820 = vunpack.c.l.b16 %v4270
    %v5821 = vunpack.c.h.b16 %v4270
    %v5822 = vunpack.c.l.b16 %v4271
    %v5823 = vunpack.c.h.b16 %v4271
    %v5824 = vunpack.c.l.b16 %v4272
    %v5825 = vunpack.c.h.b16 %v4272
    %v5826 = vunpack.c.l.b16 %v4273
    %v5827 = vunpack.c.h.b16 %v4273
    %v5828 = vunpack.c.l.b16 %v4274
    %v5829 = vunpack.c.h.b16 %v4274
    %v5830 = vunpack.c.l.b16 %v4275
    %v5831 = vunpack.c.h.b16 %v4275
    %v5832 = vunpack.c.l.b16 %v4276
    %v5833 = vunpack.c.h.b16 %v4276
    %v5834 = vunpack.c.l.b16 %v4277
    %v5835 = vunpack.c.h.b16 %v4277
    %v5836 = vunpack.c.l.b16 %v4278
    %v5837 = vunpack.c.h.b16 %v4278
    %v5838 = vunpack.c.l.b16 %v4279
    %v5839 = vunpack.c.h.b16 %v4279
    %v5840 = vunpack.c.l.b16 %v4280
    %v5841 = vunpack.c.h.b16 %v4280
    %v5842 = vunpack.c.l.b16 %v4281
    %v5843 = vunpack.c.h.b16 %v4281
    %v5844 = vunpack.c.l.b16 %v4282
    %v5845 = vunpack.c.h.b16 %v4282
    %v5846 = vunpack.c.l.b16 %v4283
    %v5847 = vunpack.c.h.b16 %v4283
    %v5848 = vunpack.c.l.b16 %v4284
    %v5849 = vunpack.c.h.b16 %v4284
    %v5850 = vunpack.c.l.b16 %v4285
    %v5851 = vunpack.c.h.b16 %v4285
    %v5852 = vunpack.c.l.b16 %v4286
    %v5853 = vunpack.c.h.b16 %v4286
    %v5854 = vunpack.c.l.b16 %v4287
    %v5855 = vunpack.c.h.b16 %v4287
    %v5856 = vunpack.c.l.b16 %v4288
    %v5857 = vunpack.c.h.b16 %v4288
    %v5858 = vunpack.c.l.b16 %v4289
    %v5859 = vunpack.c.h.b16 %v4289
    %v5860 = vunpack.c.l.b16 %v4290
    %v5861 = vunpack.c.h.b16 %v4290
    %v5862 = vunpack.c.l.b16 %v4291
    %v5863 = vunpack.c.h.b16 %v4291
    %v5864 = vunpack.c.l.b16 %v4292
    %v5865 = vunpack.c.h.b16 %v4292
    %v5866 = vunpack.c.l.b16 %v4293
    %v5867 = vunpack.c.h.b16 %v4293
    %v5868 = vunpack.c.l.b16 %v4294
    %v5869 = vunpack.c.h.b16 %v4294
    %v5870 = vunpack.c.l.b16 %v4295
    %v5871 = vunpack.c.h.b16 %v4295
    %v5872 = vunpack.c.l.b16 %v4296
    %v5873 = vunpack.c.h.b16 %v4296
    %v5874 = vunpack.c.l.b16 %v4297
    %v5875 = vunpack.c.h.b16 %v4297
    %v5876 = vunpack.c.l.b16 %v4298
    %v5877 = vunpack.c.h.b16 %v4298
    %v5878 = vunpack.c.l.b16 %v4299
    %v5879 = vunpack.c.h.b16 %v4299
    %v5880 = vunpack.c.l.b16 %v4300
    %v5881 = vunpack.c.h.b16 %v4300
    %v5882 = vunpack.c.l.b16 %v4301
    %v5883 = vunpack.c.h.b16 %v4301
    %v5884 = vunpack.c.l.b16 %v4302
    %v5885 = vunpack.c.h.b16 %v4302
    %v5886 = vunpack.c.l.b16 %v4303
    %v5887 = vunpack.c.h.b16 %v4303
    %v5888 = vunpack.c.l.b16 %v4304
    %v5889 = vunpack.c.h.b16 %v4304
    %v5890 = vunpack.c.l.b16 %v4305
    %v5891 = vunpack.c.h.b16 %v4305
    %v5892 = vunpack.c.l.b16 %v4306
    %v5893 = vunpack.c.h.b16 %v4306
    %v5894 = vunpack.c.l.b16 %v4307
    %v5895 = vunpack.c.h.b16 %v4307
    %v5896 = vunpack.c.l.b16 %v4308
    %v5897 = vunpack.c.h.b16 %v4308
    %v5898 = vunpack.c.l.b16 %v4309
    %v5899 = vunpack.c.h.b16 %v4309
    %v5900 = vunpack.c.l.b16 %v4310
    %v5901 = vunpack.c.h.b16 %v4310
    %v5902 = vunpack.c.l.b16 %v4311
    %v5903 = vunpack.c.h.b16 %v4311
    %v5904 = vunpack.c.l.b16 %v4312
    %v5905 = vunpack.c.h.b16 %v4312
    %v5906 = vunpack.c.l.b16 %v4313
    %v5907 = vunpack.c.h.b16 %v4313
    %v5908 = vunpack.c.l.b16 %v4314
    %v5909 = vunpack.c.h.b16 %v4314
    %v5910 = vunpack.c.l.b16 %v4315
    %v5911 = vunpack.c.h.b16 %v4315
    %v5912 = vunpack.c.l.b16 %v4316
    %v5913 = vunpack.c.h.b16 %v4316
    %v5914 = vunpack.c.l.b16 %v4317
    %v5915 = vunpack.c.h.b16 %v4317
    %v5916 = vunpack.c.l.b16 %v4318
    %v5917 = vunpack.c.h.b16 %v4318
    %v5918 = vunpack.c.l.b16 %v4319
    %v5919 = vunpack.c.h.b16 %v4319
    %v5920 = vunpack.c.l.b16 %v4320
    %v5921 = vunpack.c.h.b16 %v4320
    %v5922 = vunpack.c.l.b16 %v4321
    %v5923 = vunpack.c.h.b16 %v4321
    %v5924 = vunpack.c.l.b16 %v4322
    %v5925 = vunpack.c.h.b16 %v4322
    %v5926 = vunpack.c.l.b16 %v4323
    %v5927 = vunpack.c.h.b16 %v4323
    %v5928 = vunpack.c.l.b16 %v4324
    %v5929 = vunpack.c.h.b16 %v4324
    %v5930 = vunpack.c.l.b16 %v4325
    %v5931 = vunpack.c.h.b16 %v4325
    %v5932 = vunpack.c.l.b16 %v4326
    %v5933 = vunpack.c.h.b16 %v4326
    %v5934 = vunpack.c.l.b16 %v4327
    %v5935 = vunpack.c.h.b16 %v4327
    %v5936 = vunpack.c.l.b16 %v4328
    %v5937 = vunpack.c.h.b16 %v4328
    %v5938 = vunpack.c.l.b16 %v4329
    %v5939 = vunpack.c.h.b16 %v4329
    %v5940 = vunpack.c.l.b16 %v4330
    %v5941 = vunpack.c.h.b16 %v4330
    %v5942 = vunpack.c.l.b16 %v4331
    %v5943 = vunpack.c.h.b16 %v4331
    %v5944 = vunpack.c.l.b16 %v4332
    %v5945 = vunpack.c.h.b16 %v4332
    %v5946 = vunpack.c.l.b16 %v4333
    %v5947 = vunpack.c.h.b16 %v4333
    %v5948 = vunpack.c.l.b16 %v4334
    %v5949 = vunpack.c.h.b16 %v4334
    %v5950 = vunpack.c.l.b16 %v4335
    %v5951 = vunpack.c.h.b16 %v4335
    %v5952 = vunpack.c.l.b16 %v4336
    %v5953 = vunpack.c.h.b16 %v4336
    %v5954 = vunpack.c.l.b16 %v4337
    %v5955 = vunpack.c.h.b16 %v4337
    %v5956 = vunpack.c.l.b16 %v4338
    %v5957 = vunpack.c.h.b16 %v4338
    %v5958 = vunpack.c.l.b16 %v4339
    %v5959 = vunpack.c.h.b16 %v4339
    %v5960 = vunpack.c.l.b16 %v4340
    %v5961 = vunpack.c.h.b16 %v4340
    %v5962 = vunpack.c.l.b16 %v4341
    %v5963 = vunpack.c.h.b16 %v4341
    %v5964 = vunpack.c.l.b16 %v4342
    %v5965 = vunpack.c.h.b16 %v4342
    %v5966 = vunpack.c.l.b16 %v4343
    %v5967 = vunpack.c.h.b16 %v4343
    %v5968 = vunpack.c.l.b16 %v4344
    %v5969 = vunpack.c.h.b16 %v4344
    %v5970 = vunpack.c.l.b16 %v4345
    %v5971 = vunpack.c.h.b16 %v4345
    %v5972 = vunpack.c.l.b16 %v4346
    %v5973 = vunpack.c.h.b16 %v4346
    %v5974 = vunpack.c.l.b16 %v4347
    %v5975 = vunpack.c.h.b16 %v4347
    %v5976 = vunpack.c.l.b16 %v4348
    %v5977 = vunpack.c.h.b16 %v4348
    %v5978 = vunpack.c.l.b16 %v4349
    %v5979 = vunpack.c.h.b16 %v4349
    %v5980 = vunpack.c.l.b16 %v4350
    %v5981 = vunpack.c.h.b16 %v4350
    %v5982 = vunpack.c.l.b16 %v4351
    %v5983 = vunpack.c.h.b16 %v4351
    %v5984 = vunpack.c.l.b16 %v4352
    %v5985 = vunpack.c.h.b16 %v4352
    %v5986 = vunpack.c.l.b16 %v4353
    %v5987 = vunpack.c.h.b16 %v4353
    %v5988 = vunpack.c.l.b16 %v4354
    %v5989 = vunpack.c.h.b16 %v4354
    %v5990 = vunpack.c.l.b16 %v4355
    %v5991 = vunpack.c.h.b16 %v4355
    %v5992 = vunpack.c.l.b16 %v4356
    %v5993 = vunpack.c.h.b16 %v4356
    %v5994 = vunpack.c.l.b16 %v4357
    %v5995 = vunpack.c.h.b16 %v4357
    %v5996 = vunpack.c.l.b16 %v4358
    %v5997 = vunpack.c.h.b16 %v4358
    %v5998 = vunpack.c.l.b16 %v4359
    %v5999 = vunpack.c.h.b16 %v4359
    %v6000 = vunpack.c.l.b16 %v4360
    %v6001 = vunpack.c.h.b16 %v4360
    %v6002 = vunpack.c.l.b16 %v4361
    %v6003 = vunpack.c.h.b16 %v4361
    %v6004 = vunpack.c.l.b16 %v4362
    %v6005 = vunpack.c.h.b16 %v4362
    %v6006 = vunpack.c.l.b16 %v4363
    %v6007 = vunpack.c.h.b16 %v4363
    %v6008 = vunpack.c.l.b16 %v4364
    %v6009 = vunpack.c.h.b16 %v4364
    %v6010 = vunpack.c.l.b16 %v4365
    %v6011 = vunpack.c.h.b16 %v4365
    %v6012 = vunpack.c.l.b16 %v4366
    %v6013 = vunpack.c.h.b16 %v4366
    %v6014 = vunpack.c.l.b16 %v4367
    %v6015 = vunpack.c.h.b16 %v4367
    %v6016 = vunpack.c.l.b16 %v4368
    %v6017 = vunpack.c.h.b16 %v4368
    %v6018 = vunpack.c.l.b16 %v4369
    %v6019 = vunpack.c.h.b16 %v4369
    %v6020 = vunpack.c.l.b16 %v4370
    %v6021 = vunpack.c.h.b16 %v4370
    %v6022 = vunpack.c.l.b16 %v4371
    %v6023 = vunpack.c.h.b16 %v4371
    %v6024 = vunpack.c.l.b16 %v4372
    %v6025 = vunpack.c.h.b16 %v4372
    %v6026 = vunpack.c.l.b16 %v4373
    %v6027 = vunpack.c.h.b16 %v4373
    %v6028 = vunpack.c.l.b16 %v4374
    %v6029 = vunpack.c.h.b16 %v4374
    %v6030 = vunpack.c.l.b16 %v4375
    %v6031 = vunpack.c.h.b16 %v4375
    %v6032 = vunpack.c.l.b16 %v4376
    %v6033 = vunpack.c.h.b16 %v4376
    %v6034 = vunpack.c.l.b16 %v4377
    %v6035 = vunpack.c.h.b16 %v4377
    %v6036 = vunpack.c.l.b16 %v4378
    %v6037 = vunpack.c.h.b16 %v4378
    %v6038 = vunpack.c.l.b16 %v4379
    %v6039 = vunpack.c.h.b16 %v4379
    %v6040 = vunpack.c.l.b16 %v4380
    %v6041 = vunpack.c.h.b16 %v4380
    %v6042 = vunpack.c.l.b16 %v4381
    %v6043 = vunpack.c.h.b16 %v4381
    %v6044 = vunpack.c.l.b16 %v4382
    %v6045 = vunpack.c.h.b16 %v4382
    %v6046 = vunpack.c.l.b16 %v4383
    %v6047 = vunpack.c.h.b16 %v4383
    %v6048 = vunpack.c.l.b16 %v4384
    %v6049 = vunpack.c.h.b16 %v4384
    %v6050 = vunpack.c.l.b16 %v4385
    %v6051 = vunpack.c.h.b16 %v4385
    %v6052 = vunpack.c.l.b16 %v4386
    %v6053 = vunpack.c.h.b16 %v4386
    %v6054 = vunpack.c.l.b16 %v4387
    %v6055 = vunpack.c.h.b16 %v4387
    %v6056 = vunpack.c.l.b16 %v4388
    %v6057 = vunpack.c.h.b16 %v4388
    %v6058 = vunpack.c.l.b16 %v4389
    %v6059 = vunpack.c.h.b16 %v4389
    %v6060 = vunpack.c.l.b16 %v4390
    %v6061 = vunpack.c.h.b16 %v4390
    %v6062 = vunpack.c.l.b16 %v4391
    %v6063 = vunpack.c.h.b16 %v4391
    %v6064 = vunpack.c.l.b16 %v4392
    %v6065 = vunpack.c.h.b16 %v4392
    %v6066 = vunpack.c.l.b16 %v4393
    %v6067 = vunpack.c.h.b16 %v4393
    %v6068 = vunpack.c.l.b16 %v4394
    %v6069 = vunpack.c.h.b16 %v4394
    %v6070 = vunpack.c.l.b16 %v4395
    %v6071 = vunpack.c.h.b16 %v4395
    %v6072 = vunpack.c.l.b16 %v4396
    %v6073 = vunpack.c.h.b16 %v4396
    %v6074 = vunpack.c.l.b16 %v4397
    %v6075 = vunpack.c.h.b16 %v4397
    %v6076 = vunpack.c.l.b16 %v4398
    %v6077 = vunpack.c.h.b16 %v4398
    %v6078 = vunpack.c.l.b16 %v4399
    %v6079 = vunpack.c.h.b16 %v4399
    %v6080 = vunpack.c.l.b16 %v4400
    %v6081 = vunpack.c.h.b16 %v4400
    %v6082 = vunpack.c.l.b16 %v4401
    %v6083 = vunpack.c.h.b16 %v4401
    %v6084 = vunpack.c.l.b16 %v4402
    %v6085 = vunpack.c.h.b16 %v4402
    %v6086 = vunpack.c.l.b16 %v4403
    %v6087 = vunpack.c.h.b16 %v4403
    %v6088 = vunpack.c.l.b16 %v4404
    %v6089 = vunpack.c.h.b16 %v4404
    %v6090 = vunpack.c.l.b16 %v4405
    %v6091 = vunpack.c.h.b16 %v4405
    %v6092 = vunpack.c.l.b16 %v4406
    %v6093 = vunpack.c.h.b16 %v4406
    %v6094 = vunpack.c.l.b16 %v4407
    %v6095 = vunpack.c.h.b16 %v4407
    %v6096 = vunpack.c.l.b16 %v4408
    %v6097 = vunpack.c.h.b16 %v4408
    %v6098 = vunpack.c.l.b16 %v4409
    %v6099 = vunpack.c.h.b16 %v4409
    %v6100 = vunpack.c.l.b16 %v4410
    %v6101 = vunpack.c.h.b16 %v4410
    %v6102 = vunpack.c.l.b16 %v4411
    %v6103 = vunpack.c.h.b16 %v4411
    %v6104 = vunpack.c.l.b16 %v4412
    %v6105 = vunpack.c.h.b16 %v4412
    %v6106 = vunpack.c.l.b16 %v4413
    %v6107 = vunpack.c.h.b16 %v4413
    %v6108 = vunpack.c.l.b16 %v4414
    %v6109 = vunpack.c.h.b16 %v4414
    %v6110 = vunpack.c.l.b16 %v4415
    %v6111 = vunpack.c.h.b16 %v4415
    %v6112 = vunpack.c.l.b16 %v4416
    %v6113 = vunpack.c.h.b16 %v4416
    %v6114 = vunpack.c.l.b16 %v4417
    %v6115 = vunpack.c.h.b16 %v4417
    %v6116 = vunpack.c.l.b16 %v4418
    %v6117 = vunpack.c.h.b16 %v4418
    %v6118 = vunpack.c.l.b16 %v4419
    %v6119 = vunpack.c.h.b16 %v4419
    %v6120 = vunpack.c.l.b16 %v4420
    %v6121 = vunpack.c.h.b16 %v4420
    %v6122 = vunpack.c.l.b16 %v4421
    %v6123 = vunpack.c.h.b16 %v4421
    %v6124 = vpack.c.b16 %v5620, %v5612
    %v6125 = vpack.c.b16 %v5621, %v5613
    %v6126 = vpack.c.b16 %v5622, %v5614
    %v6127 = vpack.c.b16 %v5623, %v5615
    %v6128 = vpack.c.b16 %v5624, %v5616
    %v6129 = vpack.c.b16 %v5625, %v5617
    %v6130 = vpack.c.b16 %v5626, %v5618
    %v6131 = vpack.c.b16 %v5627, %v5619
    %v6132 = vpack.c.b16 %v5636, %v5628
    %v6133 = vpack.c.b16 %v5637, %v5629
    %v6134 = vpack.c.b16 %v5638, %v5630
    %v6135 = vpack.c.b16 %v5639, %v5631
    %v6136 = vpack.c.b16 %v5640, %v5632
    %v6137 = vpack.c.b16 %v5641, %v5633
    %v6138 = vpack.c.b16 %v5642, %v5634
    %v6139 = vpack.c.b16 %v5643, %v5635
    %v6140 = vpack.c.b16 %v5652, %v5644
    %v6141 = vpack.c.b16 %v5653, %v5645
    %v6142 = vpack.c.b16 %v5654, %v5646
    %v6143 = vpack.c.b16 %v5655, %v5647
    %v6144 = vpack.c.b16 %v5656, %v5648
    %v6145 = vpack.c.b16 %v5657, %v5649
    %v6146 = vpack.c.b16 %v5658, %v5650
    %v6147 = vpack.c.b16 %v5659, %v5651
    %v6148 = vpack.c.b16 %v5668, %v5660
    %v6149 = vpack.c.b16 %v5669, %v5661
    %v6150 = vpack.c.b16 %v5670, %v5662
    %v6151 = vpack.c.b16 %v5671, %v5663
    %v6152 = vpack.c.b16 %v5672, %v5664
    %v6153 = vpack.c.b16 %v5673, %v5665
    %v6154 = vpack.c.b16 %v5674, %v5666
    %v6155 = vpack.c.b16 %v5675, %v5667
    %v6156 = vpack.c.b16 %v5684, %v5676
    %v6157 = vpack.c.b16 %v5685, %v5677
    %v6158 = vpack.c.b16 %v5686, %v5678
    %v6159 = vpack.c.b16 %v5687, %v5679
    %v6160 = vpack.c.b16 %v5688, %v5680
    %v6161 = vpack.c.b16 %v5689, %v5681
    %v6162 = vpack.c.b16 %v5690, %v5682
    %v6163 = vpack.c.b16 %v5691, %v5683
    %v6164 = vpack.c.b16 %v5700, %v5692
    %v6165 = vpack.c.b16 %v5701, %v5693
    %v6166 = vpack.c.b16 %v5702, %v5694
    %v6167 = vpack.c.b16 %v5703, %v5695
    %v6168 = vpack.c.b16 %v5704, %v5696
    %v6169 = vpack.c.b16 %v5705, %v5697
    %v6170 = vpack.c.b16 %v5706, %v5698
    %v6171 = vpack.c.b16 %v5707, %v5699
    %v6172 = vpack.c.b16 %v5716, %v5708
    %v6173 = vpack.c.b16 %v5717, %v5709
    %v6174 = vpack.c.b16 %v5718, %v5710
    %v6175 = vpack.c.b16 %v5719, %v5711
    %v6176 = vpack.c.b16 %v5720, %v5712
    %v6177 = vpack.c.b16 %v5721, %v5713
    %v6178 = vpack.c.b16 %v5722, %v5714
    %v6179 = vpack.c.b16 %v5723, %v5715
    %v6180 = vpack.c.b16 %v5732, %v5724
    %v6181 = vpack.c.b16 %v5733, %v5725
    %v6182 = vpack.c.b16 %v5734, %v5726
    %v6183 = vpack.c.b16 %v5735, %v5727
    %v6184 = vpack.c.b16 %v5736, %v5728
    %v6185 = vpack.c.b16 %v5737, %v5729
    %v6186 = vpack.c.b16 %v5738, %v5730
    %v6187 = vpack.c.b16 %v5739, %v5731
    %v6188 = vpack.c.b16 %v5748, %v5740
    %v6189 = vpack.c.b16 %v5749, %v5741
    %v6190 = vpack.c.b16 %v5750, %v5742
    %v6191 = vpack.c.b16 %v5751, %v5743
    %v6192 = vpack.c.b16 %v5752, %v5744
    %v6193 = vpack.c.b16 %v5753, %v5745
    %v6194 = vpack.c.b16 %v5754, %v5746
    %v6195 = vpack.c.b16 %v5755, %v5747
    %v6196 = vpack.c.b16 %v5764, %v5756
    %v6197 = vpack.c.b16 %v5765, %v5757
    %v6198 = vpack.c.b16 %v5766, %v5758
    %v6199 = vpack.c.b16 %v5767, %v5759
    %v6200 = vpack.c.b16 %v5768, %v5760
    %v6201 = vpack.c.b16 %v5769, %v5761
    %v6202 = vpack.c.b16 %v5770, %v5762
    %v6203 = vpack.c.b16 %v5771, %v5763
    %v6204 = vpack.c.b16 %v5780, %v5772
    %v6205 = vpack.c.b16 %v5781, %v5773
    %v6206 = vpack.c.b16 %v5782, %v5774
    %v6207 = vpack.c.b16 %v5783, %v5775
    %v6208 = vpack.c.b16 %v5784, %v5776
    %v6209 = vpack.c.b16 %v5785, %v5777
    %v6210 = vpack.c.b16 %v5786, %v5778
    %v6211 = vpack.c.b16 %v5787, %v5779
    %v6212 = vpack.c.b16 %v5796, %v5788
    %v6213 = vpack.c.b16 %v5797, %v5789
    %v6214 = vpack.c.b16 %v5798, %v5790
    %v6215 = vpack.c.b16 %v5799, %v5791
    %v6216 = vpack.c.b16 %v5800, %v5792
    %v6217 = vpack.c.b16 %v5801, %v5793
    %v6218 = vpack.c.b16 %v5802, %v5794
    %v6219 = vpack.c.b16 %v5803, %v5795
    %v6220 = vpack.c.b16 %v5812, %v5804
    %v6221 = vpack.c.b16 %v5813, %v5805
    %v6222 = vpack.c.b16 %v5814, %v5806
    %v6223 = vpack.c.b16 %v5815, %v5807
    %v6224 = vpack.c.b16 %v5816, %v5808
    %v6225 = vpack.c.b16 %v5817, %v5809
    %v6226 = vpack.c.b16 %v5818, %v5810
    %v6227 = vpack.c.b16 %v5819, %v5811
    %v6228 = vpack.c.b16 %v5828, %v5820
    %v6229 = vpack.c.b16 %v5829, %v5821
    %v6230 = vpack.c.b16 %v5830, %v5822
    %v6231 = vpack.c.b16 %v5831, %v5823
    %v6232 = vpack.c.b16 %v5832, %v5824
    %v6233 = vpack.c.b16 %v5833, %v5825
    %v6234 = vpack.c.b16 %v5834, %v5826
    %v6235 = vpack.c.b16 %v5835, %v5827
    %v6236 = vpack.c.b16 %v5844, %v5836
    %v6237 = vpack.c.b16 %v5845, %v5837
    %v6238 = vpack.c.b16 %v5846, %v5838
    %v6239 = vpack.c.b16 %v5847, %v5839
    %v6240 = vpack.c.b16 %v5848, %v5840
    %v6241 = vpack.c.b16 %v5849, %v5841
    %v6242 = vpack.c.b16 %v5850, %v5842
    %v6243 = vpack.c.b16 %v5851, %v5843
    %v6244 = vpack.c.b16 %v5860, %v5852
    %v6245 = vpack.c.b16 %v5861, %v5853
    %v6246 = vpack.c.b16 %v5862, %v5854
    %v6247 = vpack.c.b16 %v5863, %v5855
    %v6248 = vpack.c.b16 %v5864, %v5856
    %v6249 = vpack.c.b16 %v5865, %v5857
    %v6250 = vpack.c.b16 %v5866, %v5858
    %v6251 = vpack.c.b16 %v5867, %v5859
    %v6252 = vpack.c.b16 %v5876, %v5868
    %v6253 = vpack.c.b16 %v5877, %v5869
    %v6254 = vpack.c.b16 %v5878, %v5870
    %v6255 = vpack.c.b16 %v5879, %v5871
    %v6256 = vpack.c.b16 %v5880, %v5872
    %v6257 = vpack.c.b16 %v5881, %v5873
    %v6258 = vpack.c.b16 %v5882, %v5874
    %v6259 = vpack.c.b16 %v5883, %v5875
    %v6260 = vpack.c.b16 %v5892, %v5884
    %v6261 = vpack.c.b16 %v5893, %v5885
    %v6262 = vpack.c.b16 %v5894, %v5886
    %v6263 = vpack.c.b16 %v5895, %v5887
    %v6264 = vpack.c.b16 %v5896, %v5888
    %v6265 = vpack.c.b16 %v5897, %v5889
    %v6266 = vpack.c.b16 %v5898, %v5890
    %v6267 = vpack.c.b16 %v5899, %v5891
    %v6268 = vpack.c.b16 %v5908, %v5900
    %v6269 = vpack.c.b16 %v5909, %v5901
    %v6270 = vpack.c.b16 %v5910, %v5902
    %v6271 = vpack.c.b16 %v5911, %v5903
    %v6272 = vpack.c.b16 %v5912, %v5904
    %v6273 = vpack.c.b16 %v5913, %v5905
    %v6274 = vpack.c.b16 %v5914, %v5906
    %v6275 = vpack.c.b16 %v5915, %v5907
    %v6276 = vpack.c.b16 %v5924, %v5916
    %v6277 = vpack.c.b16 %v5925, %v5917
    %v6278 = vpack.c.b16 %v5926, %v5918
    %v6279 = vpack.c.b16 %v5927, %v5919
    %v6280 = vpack.c.b16 %v5928, %v5920
    %v6281 = vpack.c.b16 %v5929, %v5921
    %v6282 = vpack.c.b16 %v5930, %v5922
    %v6283 = vpack.c.b16 %v5931, %v5923
    %v6284 = vpack.c.b16 %v5940, %v5932
    %v6285 = vpack.c.b16 %v5941, %v5933
    %v6286 = vpack.c.b16 %v5942, %v5934
    %v6287 = vpack.c.b16 %v5943, %v5935
    %v6288 = vpack.c.b16 %v5944, %v5936
    %v6289 = vpack.c.b16 %v5945, %v5937
    %v6290 = vpack.c.b16 %v5946, %v5938
    %v6291 = vpack.c.b16 %v5947, %v5939
    %v6292 = vpack.c.b16 %v5956, %v5948
    %v6293 = vpack.c.b16 %v5957, %v5949
    %v6294 = vpack.c.b16 %v5958, %v5950
    %v6295 = vpack.c.b16 %v5959, %v5951
    %v6296 = vpack.c.b16 %v5960, %v5952
    %v6297 = vpack.c.b16 %v5961, %v5953
    %v6298 = vpack.c.b16 %v5962, %v5954
    %v6299 = vpack.c.b16 %v5963, %v5955
    %v6300 = vpack.c.b16 %v5972, %v5964
    %v6301 = vpack.c.b16 %v5973, %v5965
    %v6302 = vpack.c.b16 %v5974, %v5966
    %v6303 = vpack.c.b16 %v5975, %v5967
    %v6304 = vpack.c.b16 %v5976, %v5968
    %v6305 = vpack.c.b16 %v5977, %v5969
    %v6306 = vpack.c.b16 %v5978, %v5970
    %v6307 = vpack.c.b16 %v5979, %v5971
    %v6308 = vpack.c.b16 %v5988, %v5980
    %v6309 = vpack.c.b16 %v5989, %v5981
    %v6310 = vpack.c.b16 %v5990, %v5982
    %v6311 = vpack.c.b16 %v5991, %v5983
    %v6312 = vpack.c.b16 %v5992, %v5984
    %v6313 = vpack.c.b16 %v5993, %v5985
    %v6314 = vpack.c.b16 %v5994, %v5986
    %v6315 = vpack.c.b16 %v5995, %v5987
    %v6316 = vpack.c.b16 %v6004, %v5996
    %v6317 = vpack.c.b16 %v6005, %v5997
    %v6318 = vpack.c.b16 %v6006, %v5998
    %v6319 = vpack.c.b16 %v6007, %v5999
    %v6320 = vpack.c.b16 %v6008, %v6000
    %v6321 = vpack.c.b16 %v6009, %v6001
    %v6322 = vpack.c.b16 %v6010, %v6002
    %v6323 = vpack.c.b16 %v6011, %v6003
    %v6324 = vpack.c.b16 %v6020, %v6012
    %v6325 = vpack.c.b16 %v6021, %v6013
    %v6326 = vpack.c.b16 %v6022, %v6014
    %v6327 = vpack.c.b16 %v6023, %v6015
    %v6328 = vpack.c.b16 %v6024, %v6016
    %v6329 = vpack.c.b16 %v6025, %v6017
    %v6330 = vpack.c.b16 %v6026, %v6018
    %v6331 = vpack.c.b16 %v6027, %v6019
    %v6332 = vpack.c.b16 %v6036, %v6028
    %v6333 = vpack.c.b16 %v6037, %v6029
    %v6334 = vpack.c.b16 %v6038, %v6030
    %v6335 = vpack.c.b16 %v6039, %v6031
    %v6336 = vpack.c.b16 %v6040, %v6032
    %v6337 = vpack.c.b16 %v6041, %v6033
    %v6338 = vpack.c.b16 %v6042, %v6034
    %v6339 = vpack.c.b16 %v6043, %v6035
    %v6340 = vpack.c.b16 %v6052, %v6044
    %v6341 = vpack.c.b16 %v6053, %v6045
    %v6342 = vpack.c.b16 %v6054, %v6046
    %v6343 = vpack.c.b16 %v6055, %v6047
    %v6344 = vpack.c.b16 %v6056, %v6048
    %v6345 = vpack.c.b16 %v6057, %v6049
    %v6346 = vpack.c.b16 %v6058, %v6050
    %v6347 = vpack.c.b16 %v6059, %v6051
    %v6348 = vpack.c.b16 %v6068, %v6060
    %v6349 = vpack.c.b16 %v6069, %v6061
    %v6350 = vpack.c.b16 %v6070, %v6062
    %v6351 = vpack.c.b16 %v6071, %v6063
    %v6352 = vpack.c.b16 %v6072, %v6064
    %v6353 = vpack.c.b16 %v6073, %v6065
    %v6354 = vpack.c.b16 %v6074, %v6066
    %v6355 = vpack.c.b16 %v6075, %v6067
    %v6356 = vpack.c.b16 %v6084, %v6076
    %v6357 = vpack.c.b16 %v6085, %v6077
    %v6358 = vpack.c.b16 %v6086, %v6078
    %v6359 = vpack.c.b16 %v6087, %v6079
    %v6360 = vpack.c.b16 %v6088, %v6080
    %v6361 = vpack.c.b16 %v6089, %v6081
    %v6362 = vpack.c.b16 %v6090, %v6082
    %v6363 = vpack.c.b16 %v6091, %v6083
    %v6364 = vpack.c.b16 %v6100, %v6092
    %v6365 = vpack.c.b16 %v6101, %v6093
    %v6366 = vpack.c.b16 %v6102, %v6094
    %v6367 = vpack.c.b16 %v6103, %v6095
    %v6368 = vpack.c.b16 %v6104, %v6096
    %v6369 = vpack.c.b16 %v6105, %v6097
    %v6370 = vpack.c.b16 %v6106, %v6098
    %v6371 = vpack.c.b16 %v6107, %v6099
    %v6372 = vpack.c.b16 %v6116, %v6108
    %v6373 = vpack.c.b16 %v6117, %v6109
    %v6374 = vpack.c.b16 %v6118, %v6110
    %v6375 = vpack.c.b16 %v6119, %v6111
    %v6376 = vpack.c.b16 %v6120, %v6112
    %v6377 = vpack.c.b16 %v6121, %v6113
    %v6378 = vpack.c.b16 %v6122, %v6114
    %v6379 = vpack.c.b16 %v6123, %v6115
    %6636 = vmatprep.subr.bf16.mxu0 %v6181
    %6637 = vmatpush1.bf16.msra.mxu0 %v6180
    %6638 = vmatprep.subr.bf16.mxu0 %v6173
    %6639 = vmatpush1.bf16.msra.mxu0 %v6172
    %6640 = vmatprep.subr.bf16.mxu0 %v6165
    %6641 = vmatpush1.bf16.msra.mxu0 %v6164
    %6642 = vmatprep.subr.bf16.mxu0 %v6157
    %6643 = vmatpush1.bf16.msra.mxu0 %v6156
    %6644 = vmatprep.subr.bf16.mxu0 %v6149
    %6645 = vmatpush1.bf16.msra.mxu0 %v6148
    %6646 = vmatprep.subr.bf16.mxu0 %v6141
    %6647 = vmatpush1.bf16.msra.mxu0 %v6140
    %6648 = vmatprep.subr.bf16.mxu0 %v6133
    %6649 = vmatpush1.bf16.msra.mxu0 %v6132
    %6650 = vmatprep.subr.bf16.mxu0 %v6125
    %6651 = vmatpush1.bf16.msra.mxu0 %v6124
    %6652 = vmatprep.subr.bf16.mxu0 %v6245
    %6653 = vmatpush2.bf16.msra.mxu0 %v6244
    %6654 = vmatprep.subr.bf16.mxu0 %v6237
    %6655 = vmatpush2.bf16.msra.mxu0 %v6236
    %6656 = vmatprep.subr.bf16.mxu0 %v6229
    %6657 = vmatpush2.bf16.msra.mxu0 %v6228
    %6658 = vmatprep.subr.bf16.mxu0 %v6221
    %6659 = vmatpush2.bf16.msra.mxu0 %v6220
    %6660 = vmatprep.subr.bf16.mxu0 %v6213
    %6661 = vmatpush2.bf16.msra.mxu0 %v6212
    %6662 = vmatprep.subr.bf16.mxu0 %v6205
    %6663 = vmatpush2.bf16.msra.mxu0 %v6204
    %6664 = vmatprep.subr.bf16.mxu0 %v6197
    %6665 = vmatpush2.bf16.msra.mxu0 %v6196
    %6666 = vmatprep.subr.bf16.mxu0 %v6189
    %6667 = vmatpush2.bf16.msra.mxu0 %v6188
    %6668 = vmatprep.mubr.bf16.mxu0 %v4163
    %6669 = vmatmul.mubr.bf16.gmra.mxu0 %v4162
    %v6670 = vpop.f32.mrf.mxu0
    %v6671 = vadd.f32 %v5227, %v6670
    %v6672 = vpop.f32.mrf.mxu0
    %v6673 = vadd.f32 %v5229, %v6672
    %v6674 = vpop.f32.mrf.mxu0
    %v6675 = vpop.f32.mrf.mxu0
    %6676 = vdwg.mxu0
    %6677 = vmatprep.subr.bf16.mxu0 %v6309
    %6678 = vmatpush1.bf16.msra.mxu0 %v6308
    %6679 = vmatprep.subr.bf16.mxu0 %v6301
    %6680 = vmatpush1.bf16.msra.mxu0 %v6300
    %6681 = vmatprep.subr.bf16.mxu0 %v6293
    %6682 = vmatpush1.bf16.msra.mxu0 %v6292
    %6683 = vmatprep.subr.bf16.mxu0 %v6285
    %6684 = vmatpush1.bf16.msra.mxu0 %v6284
    %6685 = vmatprep.subr.bf16.mxu0 %v6277
    %6686 = vmatpush1.bf16.msra.mxu0 %v6276
    %6687 = vmatprep.subr.bf16.mxu0 %v6269
    %6688 = vmatpush1.bf16.msra.mxu0 %v6268
    %6689 = vmatprep.subr.bf16.mxu0 %v6261
    %6690 = vmatpush1.bf16.msra.mxu0 %v6260
    %6691 = vmatprep.subr.bf16.mxu0 %v6253
    %6692 = vmatpush1.bf16.msra.mxu0 %v6252
    %6693 = vmatprep.subr.bf16.mxu0 %v6373
    %6694 = vmatpush2.bf16.msra.mxu0 %v6372
    %6695 = vmatprep.subr.bf16.mxu0 %v6365
    %6696 = vmatpush2.bf16.msra.mxu0 %v6364
    %6697 = vmatprep.subr.bf16.mxu0 %v6357
    %6698 = vmatpush2.bf16.msra.mxu0 %v6356
    %6699 = vmatprep.subr.bf16.mxu0 %v6349
    %6700 = vmatpush2.bf16.msra.mxu0 %v6348
    %6701 = vmatprep.subr.bf16.mxu0 %v6341
    %6702 = vmatpush2.bf16.msra.mxu0 %v6340
    %6703 = vmatprep.subr.bf16.mxu0 %v6333
    %6704 = vmatpush2.bf16.msra.mxu0 %v6332
    %6705 = vmatprep.subr.bf16.mxu0 %v6325
    %6706 = vmatpush2.bf16.msra.mxu0 %v6324
    %6707 = vmatprep.subr.bf16.mxu0 %v6317
    %6708 = vmatpush2.bf16.msra.mxu0 %v6316
    %6709 = vmatprep.mubr.bf16.mxu0 %v4165
    %6710 = vmatmul.mubr.bf16.gmra.mxu0 %v4164
    %v6711 = vpop.f32.mrf.mxu0
    %v6712 = vadd.f32 %v6671, %v6711
    %v6713 = vpop.f32.mrf.mxu0
    %v6714 = vadd.f32 %v6673, %v6713
    %v6715 = vpop.f32.mrf.mxu0
    %v6716 = vpop.f32.mrf.mxu0
    %6717 = vdwg.mxu0
    %6718 = vmatprep.subr.bf16.mxu0 %v6183
    %6719 = vmatpush1.bf16.msra.mxu0 %v6182
    %6720 = vmatprep.subr.bf16.mxu0 %v6175
    %6721 = vmatpush1.bf16.msra.mxu0 %v6174
    %6722 = vmatprep.subr.bf16.mxu0 %v6167
    %6723 = vmatpush1.bf16.msra.mxu0 %v6166
    %6724 = vmatprep.subr.bf16.mxu0 %v6159
    %6725 = vmatpush1.bf16.msra.mxu0 %v6158
    %6726 = vmatprep.subr.bf16.mxu0 %v6151
    %6727 = vmatpush1.bf16.msra.mxu0 %v6150
    %6728 = vmatprep.subr.bf16.mxu0 %v6143
    %6729 = vmatpush1.bf16.msra.mxu0 %v6142
    %6730 = vmatprep.subr.bf16.mxu0 %v6135
    %6731 = vmatpush1.bf16.msra.mxu0 %v6134
    %6732 = vmatprep.subr.bf16.mxu0 %v6127
    %6733 = vmatpush1.bf16.msra.mxu0 %v6126
    %6734 = vmatprep.subr.bf16.mxu0 %v6247
    %6735 = vmatpush2.bf16.msra.mxu0 %v6246
    %6736 = vmatprep.subr.bf16.mxu0 %v6239
    %6737 = vmatpush2.bf16.msra.mxu0 %v6238
    %6738 = vmatprep.subr.bf16.mxu0 %v6231
    %6739 = vmatpush2.bf16.msra.mxu0 %v6230
    %6740 = vmatprep.subr.bf16.mxu0 %v6223
    %6741 = vmatpush2.bf16.msra.mxu0 %v6222
    %6742 = vmatprep.subr.bf16.mxu0 %v6215
    %6743 = vmatpush2.bf16.msra.mxu0 %v6214
    %6744 = vmatprep.subr.bf16.mxu0 %v6207
    %6745 = vmatpush2.bf16.msra.mxu0 %v6206
    %6746 = vmatprep.subr.bf16.mxu0 %v6199
    %6747 = vmatpush2.bf16.msra.mxu0 %v6198
    %6748 = vmatprep.subr.bf16.mxu0 %v6191
    %6749 = vmatpush2.bf16.msra.mxu0 %v6190
    %6750 = vmatprep.mubr.bf16.mxu0 %v4163
    %6751 = vmatmul.mubr.bf16.gmra.mxu0 %v4162
    %v6752 = vpop.f32.mrf.mxu0
    %v6753 = vadd.f32 %v5268, %v6752
    %v6754 = vpop.f32.mrf.mxu0
    %v6755 = vadd.f32 %v5270, %v6754
    %v6756 = vpop.f32.mrf.mxu0
    %v6757 = vpop.f32.mrf.mxu0
    %6758 = vdwg.mxu0
    %6759 = vmatprep.subr.bf16.mxu0 %v6311
    %6760 = vmatpush1.bf16.msra.mxu0 %v6310
    %6761 = vmatprep.subr.bf16.mxu0 %v6303
    %6762 = vmatpush1.bf16.msra.mxu0 %v6302
    %6763 = vmatprep.subr.bf16.mxu0 %v6295
    %6764 = vmatpush1.bf16.msra.mxu0 %v6294
    %6765 = vmatprep.subr.bf16.mxu0 %v6287
    %6766 = vmatpush1.bf16.msra.mxu0 %v6286
    %6767 = vmatprep.subr.bf16.mxu0 %v6279
    %6768 = vmatpush1.bf16.msra.mxu0 %v6278
    %6769 = vmatprep.subr.bf16.mxu0 %v6271
    %6770 = vmatpush1.bf16.msra.mxu0 %v6270
    %6771 = vmatprep.subr.bf16.mxu0 %v6263
    %6772 = vmatpush1.bf16.msra.mxu0 %v6262
    %6773 = vmatprep.subr.bf16.mxu0 %v6255
    %6774 = vmatpush1.bf16.msra.mxu0 %v6254
    %6775 = vmatprep.subr.bf16.mxu0 %v6375
    %6776 = vmatpush2.bf16.msra.mxu0 %v6374
    %6777 = vmatprep.subr.bf16.mxu0 %v6367
    %6778 = vmatpush2.bf16.msra.mxu0 %v6366
    %6779 = vmatprep.subr.bf16.mxu0 %v6359
    %6780 = vmatpush2.bf16.msra.mxu0 %v6358
    %6781 = vmatprep.subr.bf16.mxu0 %v6351
    %6782 = vmatpush2.bf16.msra.mxu0 %v6350
    %6783 = vmatprep.subr.bf16.mxu0 %v6343
    %6784 = vmatpush2.bf16.msra.mxu0 %v6342
    %6785 = vmatprep.subr.bf16.mxu0 %v6335
    %6786 = vmatpush2.bf16.msra.mxu0 %v6334
    %6787 = vmatprep.subr.bf16.mxu0 %v6327
    %6788 = vmatpush2.bf16.msra.mxu0 %v6326
    %6789 = vmatprep.subr.bf16.mxu0 %v6319
    %6790 = vmatpush2.bf16.msra.mxu0 %v6318
    %6791 = vmatprep.mubr.bf16.mxu0 %v4165
    %6792 = vmatmul.mubr.bf16.gmra.mxu0 %v4164
    %v6793 = vpop.f32.mrf.mxu0
    %v6794 = vadd.f32 %v6753, %v6793
    %v6795 = vpop.f32.mrf.mxu0
    %v6796 = vadd.f32 %v6755, %v6795
    %v6797 = vpop.f32.mrf.mxu0
    %v6798 = vpop.f32.mrf.mxu0
    %6799 = vdwg.mxu0
    %6800 = vmatprep.subr.bf16.mxu0 %v6185
    %6801 = vmatpush1.bf16.msra.mxu0 %v6184
    %6802 = vmatprep.subr.bf16.mxu0 %v6177
    %6803 = vmatpush1.bf16.msra.mxu0 %v6176
    %6804 = vmatprep.subr.bf16.mxu0 %v6169
    %6805 = vmatpush1.bf16.msra.mxu0 %v6168
    %6806 = vmatprep.subr.bf16.mxu0 %v6161
    %6807 = vmatpush1.bf16.msra.mxu0 %v6160
    %6808 = vmatprep.subr.bf16.mxu0 %v6153
    %6809 = vmatpush1.bf16.msra.mxu0 %v6152
    %6810 = vmatprep.subr.bf16.mxu0 %v6145
    %6811 = vmatpush1.bf16.msra.mxu0 %v6144
    %6812 = vmatprep.subr.bf16.mxu0 %v6137
    %6813 = vmatpush1.bf16.msra.mxu0 %v6136
    %6814 = vmatprep.subr.bf16.mxu0 %v6129
    %6815 = vmatpush1.bf16.msra.mxu0 %v6128
    %6816 = vmatprep.subr.bf16.mxu0 %v6249
    %6817 = vmatpush2.bf16.msra.mxu0 %v6248
    %6818 = vmatprep.subr.bf16.mxu0 %v6241
    %6819 = vmatpush2.bf16.msra.mxu0 %v6240
    %6820 = vmatprep.subr.bf16.mxu0 %v6233
    %6821 = vmatpush2.bf16.msra.mxu0 %v6232
    %6822 = vmatprep.subr.bf16.mxu0 %v6225
    %6823 = vmatpush2.bf16.msra.mxu0 %v6224
    %6824 = vmatprep.subr.bf16.mxu0 %v6217
    %6825 = vmatpush2.bf16.msra.mxu0 %v6216
    %6826 = vmatprep.subr.bf16.mxu0 %v6209
    %6827 = vmatpush2.bf16.msra.mxu0 %v6208
    %6828 = vmatprep.subr.bf16.mxu0 %v6201
    %6829 = vmatpush2.bf16.msra.mxu0 %v6200
    %6830 = vmatprep.subr.bf16.mxu0 %v6193
    %6831 = vmatpush2.bf16.msra.mxu0 %v6192
    %6832 = vmatprep.mubr.bf16.mxu0 %v4163
    %6833 = vmatmul.mubr.bf16.gmra.mxu0 %v4162
    %v6834 = vpop.f32.mrf.mxu0
    %v6835 = vadd.f32 %v5309, %v6834
    %v6836 = vpop.f32.mrf.mxu0
    %v6837 = vadd.f32 %v5311, %v6836
    %v6838 = vpop.f32.mrf.mxu0
    %v6839 = vpop.f32.mrf.mxu0
    %6840 = vdwg.mxu0
    %6841 = vmatprep.subr.bf16.mxu0 %v6313
    %6842 = vmatpush1.bf16.msra.mxu0 %v6312
    %6843 = vmatprep.subr.bf16.mxu0 %v6305
    %6844 = vmatpush1.bf16.msra.mxu0 %v6304
    %6845 = vmatprep.subr.bf16.mxu0 %v6297
    %6846 = vmatpush1.bf16.msra.mxu0 %v6296
    %6847 = vmatprep.subr.bf16.mxu0 %v6289
    %6848 = vmatpush1.bf16.msra.mxu0 %v6288
    %6849 = vmatprep.subr.bf16.mxu0 %v6281
    %6850 = vmatpush1.bf16.msra.mxu0 %v6280
    %6851 = vmatprep.subr.bf16.mxu0 %v6273
    %6852 = vmatpush1.bf16.msra.mxu0 %v6272
    %6853 = vmatprep.subr.bf16.mxu0 %v6265
    %6854 = vmatpush1.bf16.msra.mxu0 %v6264
    %6855 = vmatprep.subr.bf16.mxu0 %v6257
    %6856 = vmatpush1.bf16.msra.mxu0 %v6256
    %6857 = vmatprep.subr.bf16.mxu0 %v6377
    %6858 = vmatpush2.bf16.msra.mxu0 %v6376
    %6859 = vmatprep.subr.bf16.mxu0 %v6369
    %6860 = vmatpush2.bf16.msra.mxu0 %v6368
    %6861 = vmatprep.subr.bf16.mxu0 %v6361
    %6862 = vmatpush2.bf16.msra.mxu0 %v6360
    %6863 = vmatprep.subr.bf16.mxu0 %v6353
    %6864 = vmatpush2.bf16.msra.mxu0 %v6352
    %6865 = vmatprep.subr.bf16.mxu0 %v6345
    %6866 = vmatpush2.bf16.msra.mxu0 %v6344
    %6867 = vmatprep.subr.bf16.mxu0 %v6337
    %6868 = vmatpush2.bf16.msra.mxu0 %v6336
    %6869 = vmatprep.subr.bf16.mxu0 %v6329
    %6870 = vmatpush2.bf16.msra.mxu0 %v6328
    %6871 = vmatprep.subr.bf16.mxu0 %v6321
    %6872 = vmatpush2.bf16.msra.mxu0 %v6320
    %6873 = vmatprep.mubr.bf16.mxu0 %v4165
    %6874 = vmatmul.mubr.bf16.gmra.mxu0 %v4164
    %v6875 = vpop.f32.mrf.mxu0
    %v6876 = vadd.f32 %v6835, %v6875
    %v6877 = vpop.f32.mrf.mxu0
    %v6878 = vadd.f32 %v6837, %v6877
    %v6879 = vpop.f32.mrf.mxu0
    %v6880 = vpop.f32.mrf.mxu0
    %6881 = vdwg.mxu0
    %6882 = vmatprep.subr.bf16.mxu0 %v6187
    %6883 = vmatpush1.bf16.msra.mxu0 %v6186
    %6884 = vmatprep.subr.bf16.mxu0 %v6179
    %6885 = vmatpush1.bf16.msra.mxu0 %v6178
    %6886 = vmatprep.subr.bf16.mxu0 %v6171
    %6887 = vmatpush1.bf16.msra.mxu0 %v6170
    %6888 = vmatprep.subr.bf16.mxu0 %v6163
    %6889 = vmatpush1.bf16.msra.mxu0 %v6162
    %6890 = vmatprep.subr.bf16.mxu0 %v6155
    %6891 = vmatpush1.bf16.msra.mxu0 %v6154
    %6892 = vmatprep.subr.bf16.mxu0 %v6147
    %6893 = vmatpush1.bf16.msra.mxu0 %v6146
    %6894 = vmatprep.subr.bf16.mxu0 %v6139
    %6895 = vmatpush1.bf16.msra.mxu0 %v6138
    %6896 = vmatprep.subr.bf16.mxu0 %v6131
    %6897 = vmatpush1.bf16.msra.mxu0 %v6130
    %6898 = vmatprep.subr.bf16.mxu0 %v6251
    %6899 = vmatpush2.bf16.msra.mxu0 %v6250
    %6900 = vmatprep.subr.bf16.mxu0 %v6243
    %6901 = vmatpush2.bf16.msra.mxu0 %v6242
    %6902 = vmatprep.subr.bf16.mxu0 %v6235
    %6903 = vmatpush2.bf16.msra.mxu0 %v6234
    %6904 = vmatprep.subr.bf16.mxu0 %v6227
    %6905 = vmatpush2.bf16.msra.mxu0 %v6226
    %6906 = vmatprep.subr.bf16.mxu0 %v6219
    %6907 = vmatpush2.bf16.msra.mxu0 %v6218
    %6908 = vmatprep.subr.bf16.mxu0 %v6211
    %6909 = vmatpush2.bf16.msra.mxu0 %v6210
    %6910 = vmatprep.subr.bf16.mxu0 %v6203
    %6911 = vmatpush2.bf16.msra.mxu0 %v6202
    %6912 = vmatprep.subr.bf16.mxu0 %v6195
    %6913 = vmatpush2.bf16.msra.mxu0 %v6194
    %6914 = vmatprep.mubr.bf16.mxu0 %v4163
    %6915 = vmatmul.mubr.bf16.gmra.mxu0 %v4162
    %v6916 = vpop.f32.mrf.mxu0
    %v6917 = vadd.f32 %v5350, %v6916
    %v6918 = vpop.f32.mrf.mxu0
    %v6919 = vadd.f32 %v5352, %v6918
    %v6920 = vpop.f32.mrf.mxu0
    %v6921 = vpop.f32.mrf.mxu0
    %6922 = vdwg.mxu0
    %6923 = vmatprep.subr.bf16.mxu0 %v6315
    %6924 = vmatpush1.bf16.msra.mxu0 %v6314
    %6925 = vmatprep.subr.bf16.mxu0 %v6307
    %6926 = vmatpush1.bf16.msra.mxu0 %v6306
    %6927 = vmatprep.subr.bf16.mxu0 %v6299
    %6928 = vmatpush1.bf16.msra.mxu0 %v6298
    %6929 = vmatprep.subr.bf16.mxu0 %v6291
    %6930 = vmatpush1.bf16.msra.mxu0 %v6290
    %6931 = vmatprep.subr.bf16.mxu0 %v6283
    %6932 = vmatpush1.bf16.msra.mxu0 %v6282
    %6933 = vmatprep.subr.bf16.mxu0 %v6275
    %6934 = vmatpush1.bf16.msra.mxu0 %v6274
    %6935 = vmatprep.subr.bf16.mxu0 %v6267
    %6936 = vmatpush1.bf16.msra.mxu0 %v6266
    %6937 = vmatprep.subr.bf16.mxu0 %v6259
    %6938 = vmatpush1.bf16.msra.mxu0 %v6258
    %6939 = vmatprep.subr.bf16.mxu0 %v6379
    %6940 = vmatpush2.bf16.msra.mxu0 %v6378
    %6941 = vmatprep.subr.bf16.mxu0 %v6371
    %6942 = vmatpush2.bf16.msra.mxu0 %v6370
    %6943 = vmatprep.subr.bf16.mxu0 %v6363
    %6944 = vmatpush2.bf16.msra.mxu0 %v6362
    %6945 = vmatprep.subr.bf16.mxu0 %v6355
    %6946 = vmatpush2.bf16.msra.mxu0 %v6354
    %6947 = vmatprep.subr.bf16.mxu0 %v6347
    %6948 = vmatpush2.bf16.msra.mxu0 %v6346
    %6949 = vmatprep.subr.bf16.mxu0 %v6339
    %6950 = vmatpush2.bf16.msra.mxu0 %v6338
    %6951 = vmatprep.subr.bf16.mxu0 %v6331
    %6952 = vmatpush2.bf16.msra.mxu0 %v6330
    %6953 = vmatprep.subr.bf16.mxu0 %v6323
    %6954 = vmatpush2.bf16.msra.mxu0 %v6322
    %6955 = vmatprep.mubr.bf16.mxu0 %v4165
    %6956 = vmatmul.mubr.bf16.gmra.mxu0 %v4164
    %v6957 = vpop.f32.mrf.mxu0
    %v6958 = vadd.f32 %v6917, %v6957
    %v6959 = vpop.f32.mrf.mxu0
    %v6960 = vadd.f32 %v6919, %v6959
    %v6961 = vpop.f32.mrf.mxu0
    %v6962 = vpop.f32.mrf.mxu0
    %6963 = vdwg.mxu0
    %v6964 = vld [vmem:[%s15] sm:$0xff]
    %v6966 = vlaneseq
    %v6967 = vshrl.u32 %v6966, 7
    %v6968 = vsub.s32 0, %v6967
    %v6969 = vrot.slane %v6964, %v6968
    %v6970 = vlaneseq
    %v6971 = vshrl.u32 %v6970, 7
    %v6972 = vsub.s32 1, %v6971
    %v6973 = vrot.slane %v6964, %v6972
    %v6974 = vlaneseq
    %v6975 = vshrl.u32 %v6974, 7
    %v6976 = vsub.s32 2, %v6975
    %v6977 = vrot.slane %v6964, %v6976
    %v6978 = vlaneseq
    %v6979 = vshrl.u32 %v6978, 7
    %v6980 = vsub.s32 3, %v6979
    %v6981 = vrot.slane %v6964, %v6980
    %v6982 = vlaneseq
    %v6983 = vshrl.u32 %v6982, 7
    %v6984 = vsub.s32 4, %v6983
    %v6985 = vrot.slane %v6964, %v6984
    %v6986 = vlaneseq
    %v6987 = vshrl.u32 %v6986, 7
    %v6988 = vsub.s32 5, %v6987
    %v6989 = vrot.slane %v6964, %v6988
    %v6990 = vlaneseq
    %v6991 = vshrl.u32 %v6990, 7
    %v6992 = vsub.s32 6, %v6991
    %v6993 = vrot.slane %v6964, %v6992
    %v6994 = vlaneseq
    %v6995 = vshrl.u32 %v6994, 7
    %v6996 = vsub.s32 7, %v6995
    %v6997 = vrot.slane %v6964, %v6996
    %v7006 = vmul.f32 %v6712, %v6969
    %v7007 = vmul.f32 %v6714, %v6973
    %v7008 = vmul.f32 %v6794, %v6977
    %v7009 = vmul.f32 %v6796, %v6981
    %v7010 = vmul.f32 %v6876, %v6985
    %v7011 = vmul.f32 %v6878, %v6989
    %v7012 = vmul.f32 %v6958, %v6993
    %v7013 = vmul.f32 %v6960, %v6997
    %v7014 = vld [vmem:[%s16] sm:$0xff]
    %v7016 = vlaneseq
    %v7017 = vshrl.u32 %v7016, 7
    %v7018 = vsub.s32 0, %v7017
    %v7019 = vrot.slane %v7014, %v7018
    %v7020 = vlaneseq
    %v7021 = vshrl.u32 %v7020, 7
    %v7022 = vsub.s32 1, %v7021
    %v7023 = vrot.slane %v7014, %v7022
    %v7024 = vlaneseq
    %v7025 = vshrl.u32 %v7024, 7
    %v7026 = vsub.s32 2, %v7025
    %v7027 = vrot.slane %v7014, %v7026
    %v7028 = vlaneseq
    %v7029 = vshrl.u32 %v7028, 7
    %v7030 = vsub.s32 3, %v7029
    %v7031 = vrot.slane %v7014, %v7030
    %v7032 = vlaneseq
    %v7033 = vshrl.u32 %v7032, 7
    %v7034 = vsub.s32 4, %v7033
    %v7035 = vrot.slane %v7014, %v7034
    %v7036 = vlaneseq
    %v7037 = vshrl.u32 %v7036, 7
    %v7038 = vsub.s32 5, %v7037
    %v7039 = vrot.slane %v7014, %v7038
    %v7040 = vlaneseq
    %v7041 = vshrl.u32 %v7040, 7
    %v7042 = vsub.s32 6, %v7041
    %v7043 = vrot.slane %v7014, %v7042
    %v7044 = vlaneseq
    %v7045 = vshrl.u32 %v7044, 7
    %v7046 = vsub.s32 7, %v7045
    %v7047 = vrot.slane %v7014, %v7046
    %v7056 = vadd.f32 %v7006, %v7019
    %v7057 = vadd.f32 %v7007, %v7023
    %v7058 = vadd.f32 %v7008, %v7027
    %v7059 = vadd.f32 %v7009, %v7031
    %v7060 = vadd.f32 %v7010, %v7035
    %v7061 = vadd.f32 %v7011, %v7039
    %v7062 = vadd.f32 %v7012, %v7043
    %v7063 = vadd.f32 %v7013, %v7047
    %v7064 = vmax.f32 %v7056, 0.0
    %v7065 = vmax.f32 %v7057, 0.0
    %v7066 = vmax.f32 %v7058, 0.0
    %v7067 = vmax.f32 %v7059, 0.0
    %v7068 = vmax.f32 %v7060, 0.0
    %v7069 = vmax.f32 %v7061, 0.0
    %v7070 = vmax.f32 %v7062, 0.0
    %v7071 = vmax.f32 %v7063, 0.0
    %v7072 = vld [vmem:[%s17] sm:$0xff]
    %v7074 = vlaneseq
    %v7075 = vshrl.u32 %v7074, 7
    %v7076 = vsub.s32 0, %v7075
    %v7077 = vrot.slane %v7072, %v7076
    %v7078 = vlaneseq
    %v7079 = vshrl.u32 %v7078, 7
    %v7080 = vsub.s32 1, %v7079
    %v7081 = vrot.slane %v7072, %v7080
    %v7082 = vlaneseq
    %v7083 = vshrl.u32 %v7082, 7
    %v7084 = vsub.s32 2, %v7083
    %v7085 = vrot.slane %v7072, %v7084
    %v7086 = vlaneseq
    %v7087 = vshrl.u32 %v7086, 7
    %v7088 = vsub.s32 3, %v7087
    %v7089 = vrot.slane %v7072, %v7088
    %v7090 = vlaneseq
    %v7091 = vshrl.u32 %v7090, 7
    %v7092 = vsub.s32 4, %v7091
    %v7093 = vrot.slane %v7072, %v7092
    %v7094 = vlaneseq
    %v7095 = vshrl.u32 %v7094, 7
    %v7096 = vsub.s32 5, %v7095
    %v7097 = vrot.slane %v7072, %v7096
    %v7098 = vlaneseq
    %v7099 = vshrl.u32 %v7098, 7
    %v7100 = vsub.s32 6, %v7099
    %v7101 = vrot.slane %v7072, %v7100
    %v7102 = vlaneseq
    %v7103 = vshrl.u32 %v7102, 7
    %v7104 = vsub.s32 7, %v7103
    %v7105 = vrot.slane %v7072, %v7104
    %v7114 = vmul.f32 %v7064, %v7077
    %v7115 = vmul.f32 %v7065, %v7081
    %v7116 = vmul.f32 %v7066, %v7085
    %v7117 = vmul.f32 %v7067, %v7089
    %v7118 = vmul.f32 %v7068, %v7093
    %v7119 = vmul.f32 %v7069, %v7097
    %v7120 = vmul.f32 %v7070, %v7101
    %v7121 = vmul.f32 %v7071, %v7105
    %vm7122 = vcmask 1041408
    %v7123 = vsel %vm7122, %v7114, 0.0
    %v7124 = vsel %vm7122, %v7115, 0.0
    %v7125 = vadd.f32 %v7123, %v7124
    %v7126 = vsel %vm7122, %v7116, 0.0
    %v7127 = vadd.f32 %v7125, %v7126
    %v7128 = vsel %vm7122, %v7117, 0.0
    %v7129 = vadd.f32 %v7127, %v7128
    %v7130 = vsel %vm7122, %v7118, 0.0
    %v7131 = vadd.f32 %v7129, %v7130
    %v7132 = vsel %vm7122, %v7119, 0.0
    %v7133 = vadd.f32 %v7131, %v7132
    %v7134 = vsel %vm7122, %v7120, 0.0
    %v7135 = vadd.f32 %v7133, %v7134
    %v7136 = vsel %vm7122, %v7121, 0.0
    %v7137 = vadd.f32 %v7135, %v7136
    %7138 = vadd.xlane.f32.xlu0 %v7137
    %v7139 = vpop.xlane.xlu0 %7138
    %v7140 = vld [vmem:[#allocation2] sm:$0x1]
    %v7142 = vlaneseq
    %v7143 = vshrl.u32 %v7142, 7
    %v7144 = vsub.s32 0, %v7143
    %v7145 = vrot.slane %v7140, %v7144
    %v7147 = vadd.f32 %v7139, %v7145
    %vm7148 = vcmask 1024
    %7149 = vst.msk [vmem:[%s19] sm:$0x3] %vm7148, %v7147
    %v7150 = vld [vmem:[%s2] sm:$0x3]
    %v7151 = vmax.f32 %v7147, 0.0
    %v7152 = vmul.f32 %v7147, %v7150
    %v7153 = vsub.f32 %v7151, %v7152
    %v7154 = vand.u32 2147483647, %v7147
    %v7155 = vsub.f32 0.0, %v7154
    %v7156 = vmul.f32 %v7155, 1.442695
    %v7157 = vpow.pop %v7156
    %v7158 = vadd.f32 %v7157, 1.0
    %v7159 = vlog2.pop %v7158
    %v7160 = vmul.f32 %v7159, 0.6931472
    %v7161 = vmul.f32 -0.5, %v7157
    %v7162 = vadd.f32 %v7161, 1.0
    %v7163 = vmul.f32 %v7162, %v7157
    %v7164 = vand.u32 2147483647, %v7157
    %vm7165 = vcmp.lt.f32.partialorder %v7164, 0.0004427343
    %v7166 = vsel %vm7165, %v7163, %v7160
    %v7167 = vadd.f32 %v7153, %v7166
    %7168 = vst.msk [vmem:[%s20] sm:$0x3] %vm7148, %v7167
    // Predicated region
    $region86: #{efficientnet_tabular_forward.3} parent=1 // pred_check
      _
    $region87: #{efficientnet_tabular_forward.3} parent=1 // pred_check_branch
      %7170 = sbr.rel (0) target = $region89
    $region88: #{efficientnet_tabular_forward.3} parent=1 // pred_region
      _
    $region89: #{efficientnet_tabular_forward.3} parent=1 // pred_fallthru
      _
    // Predicated region
    $region90: #{efficientnet_tabular_forward.3} parent=1 // pred_check
      _
    $region91: #{efficientnet_tabular_forward.3} parent=1 // pred_check_branch
      %7172 = sbr.rel (0) target = $region93
    $region92: #{efficientnet_tabular_forward.3} parent=1 // pred_region
      _
    $region93: #{efficientnet_tabular_forward.3} parent=1 // pred_fallthru
      _
    // Predicated region
    $region94: #{efficientnet_tabular_forward.3} parent=1 // pred_check
      _
    $region95: #{efficientnet_tabular_forward.3} parent=1 // pred_check_branch
      %7174 = sbr.rel (0) target = $region97
    $region96: #{efficientnet_tabular_forward.3} parent=1 // pred_region
      _
    $region97: #{efficientnet_tabular_forward.3} parent=1 // pred_fallthru
      _
    // Predicated region
    $region98: #{efficientnet_tabular_forward.3} parent=1 // pred_check
      _
    $region99: #{efficientnet_tabular_forward.3} parent=1 // pred_check_branch
      %7176 = sbr.rel (0) target = $region101
    $region100: #{efficientnet_tabular_forward.3} parent=1 // pred_region
      _
    $region101: #{efficientnet_tabular_forward.3} parent=1 // pred_fallthru
      _
    %7177 = vsyncpa [#allocation4], 1
    %7178 = vsyncpa [#allocation6], 1

</llo_original>
